<compile_context>
chip_gen: v7x
topology: tpu7x:2x2x1
jax: 0.10.0
libtpu: 0.0.40
codegen_flags: <defaults>
</compile_context>

<pallas_src>
import jax
import jax.numpy as jnp
from jax import lax
from jax.experimental import pallas as pl
from jax.experimental.pallas import tpu as pltpu


def _round_up(x, m):
    return ((x + m - 1) // m) * m


def _make_kernel(T, Bp, Hp):
    def kernel(nsteps_ref, lens_ref, x_ref,
               wih_f_ref, whh_f_ref, b_f_ref,
               wih_b_ref, whh_b_ref, b_b_ref,
               wfc_f_ref, wfc_b_ref, bfc_ref,
               out_ref,
               hf, cf, hb, cb, gxf, gxb):
        n_steps = nsteps_ref[0]          # max(sent_len), scalar in SMEM
        lens = lens_ref[...]             # (Bp, 1) int32

        # ---- Hoisted input projections (one MXU matmul / direction, bias folded).
        x_all = x_ref[...]               # (T*Bp, E)
        gxf[...] = (jnp.dot(x_all, wih_f_ref[...],
                            preferred_element_type=jnp.float32) + b_f_ref[...])
        gxb[...] = (jnp.dot(x_all, wih_b_ref[...],
                            preferred_element_type=jnp.float32) + b_b_ref[...])

        hf[...] = jnp.zeros_like(hf)
        cf[...] = jnp.zeros_like(cf)
        hb[...] = jnp.zeros_like(hb)
        cb[...] = jnp.zeros_like(cb)

        def gates_to_hc(gates, c):
            # PyTorch gate order: i, f, g, o -- each slice is a full 128-lane block.
            i = jax.nn.sigmoid(gates[:, 0:Hp])
            f = jax.nn.sigmoid(gates[:, Hp:2 * Hp])
            g = jnp.tanh(gates[:, 2 * Hp:3 * Hp])
            o = jax.nn.sigmoid(gates[:, 3 * Hp:4 * Hp])
            c_new = f * c + i * g
            h_new = o * jnp.tanh(c_new)
            return h_new, c_new

        # ---- Fused fwd/bwd recurrence, unrolled, bounded by max(sent_len).
        def step(s, carry):
            @pl.when(s < n_steps)
            def _():
                t_f = s
                t_b = n_steps - 1 - s
                row_f = pl.multiple_of(t_f * Bp, Bp)
                row_b = pl.multiple_of(t_b * Bp, Bp)
                gates_f = gxf[pl.ds(row_f, Bp), :] + jnp.dot(
                    hf[...], whh_f_ref[...], preferred_element_type=jnp.float32)
                gates_b = gxb[pl.ds(row_b, Bp), :] + jnp.dot(
                    hb[...], whh_b_ref[...], preferred_element_type=jnp.float32)
                hf_new, cf_new = gates_to_hc(gates_f, cf[...])
                hb_new, cb_new = gates_to_hc(gates_b, cb[...])
                vf = lens > t_f          # (Bp, 1) validity masks, broadcast to (Bp, Hp)
                vb = lens > t_b
                hf[...] = jnp.where(vf, hf_new, hf[...])
                cf[...] = jnp.where(vf, cf_new, cf[...])
                hb[...] = jnp.where(vb, hb_new, hb[...])
                cb[...] = jnp.where(vb, cb_new, cb[...])
            return carry

        lax.fori_loop(0, T, step, 0, unroll=True)

        # fc(concat(h_fwd, h_bwd)) == h_fwd @ Wfc[:H] + h_bwd @ Wfc[H:] + b
        out_ref[...] = (jnp.dot(hf[...], wfc_f_ref[...],
                                preferred_element_type=jnp.float32)
                        + jnp.dot(hb[...], wfc_b_ref[...],
                                  preferred_element_type=jnp.float32)
                        + bfc_ref[...])

    return kernel


def lstm_encoder(sent, sent_len, params):
    T, B, E = sent.shape
    H = params['whh_f'].shape[0]
    Bp = _round_up(max(B, 8), 8)          # >= 8 sublanes
    Hp = _round_up(H, 128)                # lane-dense gate slices & output
    f32 = jnp.float32

    # ---- weight padding / re-layout (layout plumbing, done once in the wrapper).
    def pad_gate_cols(w, rows_out):
        # (R, 4H) -> (rows_out, 4Hp), gate g placed at columns [g*Hp, g*Hp+H)
        out = jnp.zeros((rows_out, 4 * Hp), f32)
        R = w.shape[0]
        for g in range(4):
            out = out.at[:R, g * Hp:g * Hp + H].set(w[:, g * H:(g + 1) * H])
        return out

    wih_f = pad_gate_cols(params['wih_f'], E)
    wih_b = pad_gate_cols(params['wih_b'], E)
    whh_f = pad_gate_cols(params['whh_f'], Hp)
    whh_b = pad_gate_cols(params['whh_b'], Hp)
    b_f = pad_gate_cols(params['b_f'], 1)
    b_b = pad_gate_cols(params['b_b'], 1)

    def pad_fc(w):                        # (H, H) -> (Hp, Hp)
        return jnp.zeros((Hp, Hp), f32).at[:H, :H].set(w)

    wfc_f = pad_fc(params['wfc'][0:H, :])
    wfc_b = pad_fc(params['wfc'][H:2 * H, :])
    bfc = jnp.zeros((1, Hp), f32).at[:, :H].set(params['bfc'])

    # ---- pad batch to Bp and flatten time into sublanes: (T, B, E) -> (T*Bp, E)
    sent_p = jnp.zeros((T, Bp, E), f32).at[:, :B, :].set(sent.astype(f32))
    x_all = sent_p.reshape(T * Bp, E)

    lens = jnp.zeros((Bp, 1), jnp.int32).at[:B, 0].set(sent_len.astype(jnp.int32))
    n_steps = jnp.max(sent_len).astype(jnp.int32).reshape(1)

    kernel = _make_kernel(T, Bp, Hp)
    smem = pl.BlockSpec(memory_space=pltpu.MemorySpace.SMEM)
    vmem = pl.BlockSpec(memory_space=pltpu.MemorySpace.VMEM)

    out = pl.pallas_call(
        kernel,
        out_shape=jax.ShapeDtypeStruct((Bp, Hp), f32),
        in_specs=[smem] + [vmem] * 11,
        out_specs=vmem,
        scratch_shapes=[pltpu.VMEM((Bp, Hp), f32)] * 4
                     + [pltpu.VMEM((T * Bp, 4 * Hp), f32)] * 2,
        compiler_params=pltpu.CompilerParams(vmem_limit_bytes=64 * 1024 * 1024),
    )(n_steps, lens, x_all,
      wih_f, whh_f, b_f,
      wih_b, whh_b, b_b,
      wfc_f, wfc_b, bfc)

    return out[:B, :H]


def init_params(key, emb_dim, hidden_dim):
    k = 1.0 / jnp.sqrt(hidden_dim)
    keys = jax.random.split(key, 10)

    def u(kk, shape):
        return jax.random.uniform(kk, shape, jnp.float32, -k, k)

    # Weights stored pre-transposed for x @ W:  W_ih: (E, 4H), W_hh: (H, 4H)
    return {
        'wih_f': u(keys[0], (emb_dim, 4 * hidden_dim)),
        'whh_f': u(keys[1], (hidden_dim, 4 * hidden_dim)),
        'b_f':   u(keys[2], (1, 4 * hidden_dim)) + u(keys[3], (1, 4 * hidden_dim)),
        'wih_b': u(keys[4], (emb_dim, 4 * hidden_dim)),
        'whh_b': u(keys[5], (hidden_dim, 4 * hidden_dim)),
        'b_b':   u(keys[6], (1, 4 * hidden_dim)) + u(keys[7], (1, 4 * hidden_dim)),
        'wfc':   u(keys[8], (2 * hidden_dim, hidden_dim)),
        'bfc':   u(keys[9], (1, hidden_dim)),
    }


def reference(sent, sent_len, params):
    """Pure-JAX reference of the same semantics (for verification)."""
    T, B, E = sent.shape
    H = params['whh_f'].shape[0]
    lens = sent_len.reshape(B, 1).astype(jnp.int32)

    def cell(x, h, c, wih, whh, b):
        gates = x @ wih + h @ whh + b
        i = jax.nn.sigmoid(gates[:, 0:H])
        f = jax.nn.sigmoid(gates[:, H:2 * H])
        g = jnp.tanh(gates[:, 2 * H:3 * H])
        o = jax.nn.sigmoid(gates[:, 3 * H:4 * H])
        c_new = f * c + i * g
        return o * jnp.tanh(c_new), c_new

    hf = jnp.zeros((B, H)); cf = jnp.zeros((B, H))
    hb = jnp.zeros((B, H)); cb = jnp.zeros((B, H))
    for t in range(T):
        h_new, c_new = cell(sent[t], hf, cf, params['wih_f'], params['whh_f'], params['b_f'])
        valid = lens > t
        hf = jnp.where(valid, h_new, hf)
        cf = jnp.where(valid, c_new, cf)
    for s in range(T):
        t = T - 1 - s
        h_new, c_new = cell(sent[t], hb, cb, params['wih_b'], params['whh_b'], params['b_b'])
        valid = lens > t
        hb = jnp.where(valid, h_new, hb)
        cb = jnp.where(valid, c_new, cb)
    cat = jnp.concatenate([hf, hb], axis=1)
    return cat @ params['wfc'] + params['bfc']


if __name__ == "__main__":
    T, B, E, H = 8, 4, 16, 32   # seq=8, batch=4, word_emb_dim=16, enc_lstm_dim=32
    key = jax.random.PRNGKey(0)
    k_sent, k_params = jax.random.split(key)

    sent = jax.random.normal(k_sent, (T, B, E), jnp.float32)
    sent_len = jnp.array([8, 5, 3, 6], dtype=jnp.int32)
    params = init_params(k_params, E, H)

    emb = lstm_encoder(sent, sent_len, params)
    emb = jax.block_until_ready(emb)

    ref = reference(sent, sent_len, params)
    assert emb.shape == (B, H)
    assert jnp.allclose(emb, ref, rtol=1e-2, atol=1e-2), "mismatch vs reference"

    print("KERNEL_OK")
</pallas_src>

<mosaic_0001>
module attributes {stable_mosaic.version = 11 : i64} {
  func.func @kernel(%arg0: memref<1xi32, #tpu.memory_space<smem>>, %arg1: memref<8x1xi32, #tpu.memory_space<vmem>>, %arg2: memref<64x16xf32, #tpu.memory_space<vmem>>, %arg3: memref<16x512xf32, #tpu.memory_space<vmem>>, %arg4: memref<128x512xf32, #tpu.memory_space<vmem>>, %arg5: memref<1x512xf32, #tpu.memory_space<vmem>>, %arg6: memref<16x512xf32, #tpu.memory_space<vmem>>, %arg7: memref<128x512xf32, #tpu.memory_space<vmem>>, %arg8: memref<1x512xf32, #tpu.memory_space<vmem>>, %arg9: memref<128x128xf32, #tpu.memory_space<vmem>>, %arg10: memref<128x128xf32, #tpu.memory_space<vmem>>, %arg11: memref<1x128xf32, #tpu.memory_space<vmem>>, %arg12: memref<8x128xf32, #tpu.memory_space<vmem>>, %arg13: memref<8x128xf32, #tpu.memory_space<vmem>>, %arg14: memref<8x128xf32, #tpu.memory_space<vmem>>, %arg15: memref<8x128xf32, #tpu.memory_space<vmem>>, %arg16: memref<8x128xf32, #tpu.memory_space<vmem>>, %arg17: memref<64x512xf32, #tpu.memory_space<vmem>>, %arg18: memref<64x512xf32, #tpu.memory_space<vmem>>) attributes {dimension_semantics = [], scalar_prefetch = 0 : i64, scratch_operands = 6 : i64, tpu.core_type = #tpu.core_type<tc>} {
    %c0 = arith.constant 0 : index
    %0 = memref.load %arg0[%c0] : memref<1xi32, #tpu.memory_space<smem>>
    %c0_0 = arith.constant 0 : index
    %c0_1 = arith.constant 0 : index
    %1 = vector.load %arg1[%c0_0, %c0_1] : memref<8x1xi32, #tpu.memory_space<vmem>>, vector<8x1xi32>
    %c0_2 = arith.constant 0 : index
    %c0_3 = arith.constant 0 : index
    %2 = vector.load %arg2[%c0_2, %c0_3] : memref<64x16xf32, #tpu.memory_space<vmem>>, vector<64x16xf32>
    %c0_4 = arith.constant 0 : index
    %c0_5 = arith.constant 0 : index
    %3 = vector.load %arg3[%c0_4, %c0_5] : memref<16x512xf32, #tpu.memory_space<vmem>>, vector<16x512xf32>
    %cst = arith.constant dense<0.000000e+00> : vector<64x512xf32>
    %4 = tpu.matmul %2, %3, %cst {dimension_numbers = #tpu.dot_dimension_numbers<[1], [0], [0], [1], [0, 0, 1, 1], [], []>} : vector<64x16xf32>, vector<16x512xf32>, vector<64x512xf32> -> vector<64x512xf32>
    %c0_6 = arith.constant 0 : index
    %c0_7 = arith.constant 0 : index
    %5 = vector.load %arg5[%c0_6, %c0_7] : memref<1x512xf32, #tpu.memory_space<vmem>>, vector<1x512xf32>
    %6 = vector.broadcast %5 : vector<1x512xf32> to vector<64x512xf32>
    %7 = arith.addf %4, %6 : vector<64x512xf32>
    %c0_8 = arith.constant 0 : index
    %c0_9 = arith.constant 0 : index
    %8 = vector.load %arg17[%c0_8, %c0_9] : memref<64x512xf32, #tpu.memory_space<vmem>>, vector<64x512xf32>
    tpu.vector_store %arg17[%c0_8, %c0_9], %7 {strides = array<i32>} : memref<64x512xf32, #tpu.memory_space<vmem>>, vector<64x512xf32>,
    %c0_10 = arith.constant 0 : index
    %c0_11 = arith.constant 0 : index
    %9 = vector.load %arg6[%c0_10, %c0_11] : memref<16x512xf32, #tpu.memory_space<vmem>>, vector<16x512xf32>
    %cst_12 = arith.constant dense<0.000000e+00> : vector<64x512xf32>
    %10 = tpu.matmul %2, %9, %cst_12 {dimension_numbers = #tpu.dot_dimension_numbers<[1], [0], [0], [1], [0, 0, 1, 1], [], []>} : vector<64x16xf32>, vector<16x512xf32>, vector<64x512xf32> -> vector<64x512xf32>
    %c0_13 = arith.constant 0 : index
    %c0_14 = arith.constant 0 : index
    %11 = vector.load %arg8[%c0_13, %c0_14] : memref<1x512xf32, #tpu.memory_space<vmem>>, vector<1x512xf32>
    %12 = vector.broadcast %11 : vector<1x512xf32> to vector<64x512xf32>
    %13 = arith.addf %10, %12 : vector<64x512xf32>
    %c0_15 = arith.constant 0 : index
    %c0_16 = arith.constant 0 : index
    %14 = vector.load %arg18[%c0_15, %c0_16] : memref<64x512xf32, #tpu.memory_space<vmem>>, vector<64x512xf32>
    tpu.vector_store %arg18[%c0_15, %c0_16], %13 {strides = array<i32>} : memref<64x512xf32, #tpu.memory_space<vmem>>, vector<64x512xf32>,
    %cst_17 = arith.constant 0.000000e+00 : f32
    %15 = vector.broadcast %cst_17 : f32 to vector<8x128xf32>
    %c0_18 = arith.constant 0 : index
    %c0_19 = arith.constant 0 : index
    %16 = vector.load %arg13[%c0_18, %c0_19] : memref<8x128xf32, #tpu.memory_space<vmem>>, vector<8x128xf32>
    tpu.vector_store %arg13[%c0_18, %c0_19], %15 {strides = array<i32>} : memref<8x128xf32, #tpu.memory_space<vmem>>, vector<8x128xf32>,
    %cst_20 = arith.constant 0.000000e+00 : f32
    %17 = vector.broadcast %cst_20 : f32 to vector<8x128xf32>
    %c0_21 = arith.constant 0 : index
    %c0_22 = arith.constant 0 : index
    %18 = vector.load %arg14[%c0_21, %c0_22] : memref<8x128xf32, #tpu.memory_space<vmem>>, vector<8x128xf32>
    tpu.vector_store %arg14[%c0_21, %c0_22], %17 {strides = array<i32>} : memref<8x128xf32, #tpu.memory_space<vmem>>, vector<8x128xf32>,
    %cst_23 = arith.constant 0.000000e+00 : f32
    %19 = vector.broadcast %cst_23 : f32 to vector<8x128xf32>
    %c0_24 = arith.constant 0 : index
    %c0_25 = arith.constant 0 : index
    %20 = vector.load %arg15[%c0_24, %c0_25] : memref<8x128xf32, #tpu.memory_space<vmem>>, vector<8x128xf32>
    tpu.vector_store %arg15[%c0_24, %c0_25], %19 {strides = array<i32>} : memref<8x128xf32, #tpu.memory_space<vmem>>, vector<8x128xf32>,
    %cst_26 = arith.constant 0.000000e+00 : f32
    %21 = vector.broadcast %cst_26 : f32 to vector<8x128xf32>
    %c0_27 = arith.constant 0 : index
    %c0_28 = arith.constant 0 : index
    %22 = vector.load %arg16[%c0_27, %c0_28] : memref<8x128xf32, #tpu.memory_space<vmem>>, vector<8x128xf32>
    tpu.vector_store %arg16[%c0_27, %c0_28], %21 {strides = array<i32>} : memref<8x128xf32, #tpu.memory_space<vmem>>, vector<8x128xf32>,
    %c0_i32 = arith.constant 0 : i32
    %23 = arith.cmpi slt, %c0_i32, %0 : i32
    %24 = arith.extui %23 : i1 to i32
    %c0_i32_29 = arith.constant 0 : i32
    %25 = arith.cmpi ne, %24, %c0_i32_29 : i32
    scf.if %25 {
      %c1_i32_51 = arith.constant 1 : i32
      %58 = arith.subi %0, %c1_i32_51 : i32
      %59 = arith.subi %58, %c0_i32 : i32
      %c8_i32_52 = arith.constant 8 : i32
      %60 = arith.muli %c0_i32, %c8_i32_52 : i32
      %61 = tpu.assume_multiple %60, 8 : i32
      %c8_i32_53 = arith.constant 8 : i32
      %62 = arith.muli %59, %c8_i32_53 : i32
      %63 = tpu.assume_multiple %62, 8 : i32
      %64 = arith.index_cast %61 : i32 to index
      %c0_54 = arith.constant 0 : index
      %65 = vector.load %arg17[%64, %c0_54] : memref<64x512xf32, #tpu.memory_space<vmem>>, vector<8x512xf32>
      %c0_55 = arith.constant 0 : index
      %c0_56 = arith.constant 0 : index
      %66 = vector.load %arg13[%c0_55, %c0_56] : memref<8x128xf32, #tpu.memory_space<vmem>>, vector<8x128xf32>
      %c0_57 = arith.constant 0 : index
      %c0_58 = arith.constant 0 : index
      %67 = vector.load %arg4[%c0_57, %c0_58] : memref<128x512xf32, #tpu.memory_space<vmem>>, vector<128x512xf32>
      %cst_59 = arith.constant dense<0.000000e+00> : vector<8x512xf32>
      %68 = tpu.matmul %66, %67, %cst_59 {dimension_numbers = #tpu.dot_dimension_numbers<[1], [0], [0], [1], [0, 0, 1, 1], [], []>} : vector<8x128xf32>, vector<128x512xf32>, vector<8x512xf32> -> vector<8x512xf32>
      %69 = arith.addf %65, %68 : vector<8x512xf32>
      %70 = arith.index_cast %63 : i32 to index
      %c0_60 = arith.constant 0 : index
      %71 = vector.load %arg18[%70, %c0_60] : memref<64x512xf32, #tpu.memory_space<vmem>>, vector<8x512xf32>
      %c0_61 = arith.constant 0 : index
      %c0_62 = arith.constant 0 : index
      %72 = vector.load %arg15[%c0_61, %c0_62] : memref<8x128xf32, #tpu.memory_space<vmem>>, vector<8x128xf32>
      %c0_63 = arith.constant 0 : index
      %c0_64 = arith.constant 0 : index
      %73 = vector.load %arg7[%c0_63, %c0_64] : memref<128x512xf32, #tpu.memory_space<vmem>>, vector<128x512xf32>
      %cst_65 = arith.constant dense<0.000000e+00> : vector<8x512xf32>
      %74 = tpu.matmul %72, %73, %cst_65 {dimension_numbers = #tpu.dot_dimension_numbers<[1], [0], [0], [1], [0, 0, 1, 1], [], []>} : vector<8x128xf32>, vector<128x512xf32>, vector<8x512xf32> -> vector<8x512xf32>
      %75 = arith.addf %71, %74 : vector<8x512xf32>
      %c0_66 = arith.constant 0 : index
      %c0_67 = arith.constant 0 : index
      %76 = vector.load %arg14[%c0_66, %c0_67] : memref<8x128xf32, #tpu.memory_space<vmem>>, vector<8x128xf32>
      %77 = vector.extract_strided_slice %69 {offsets = [0, 0], sizes = [8, 128], strides = [1, 1]} : vector<8x512xf32> to vector<8x128xf32>
      %78 = arith.negf %77 : vector<8x128xf32>
      %79 = math.exp %78 : vector<8x128xf32>
      %cst_68 = arith.constant 1.000000e+00 : f32
      %80 = vector.broadcast %cst_68 : f32 to vector<8x128xf32>
      %81 = arith.addf %80, %79 : vector<8x128xf32>
      %82 = arith.divf %80, %81 : vector<8x128xf32>
      %83 = vector.extract_strided_slice %69 {offsets = [0, 128], sizes = [8, 128], strides = [1, 1]} : vector<8x512xf32> to vector<8x128xf32>
      %84 = arith.negf %83 : vector<8x128xf32>
      %85 = math.exp %84 : vector<8x128xf32>
      %cst_69 = arith.constant 1.000000e+00 : f32
      %86 = vector.broadcast %cst_69 : f32 to vector<8x128xf32>
      %87 = arith.addf %86, %85 : vector<8x128xf32>
      %88 = arith.divf %86, %87 : vector<8x128xf32>
      %89 = vector.extract_strided_slice %69 {offsets = [0, 256], sizes = [8, 128], strides = [1, 1]} : vector<8x512xf32> to vector<8x128xf32>
      %90 = math.tanh %89 : vector<8x128xf32>
      %91 = vector.extract_strided_slice %69 {offsets = [0, 384], sizes = [8, 128], strides = [1, 1]} : vector<8x512xf32> to vector<8x128xf32>
      %92 = arith.negf %91 : vector<8x128xf32>
      %93 = math.exp %92 : vector<8x128xf32>
      %cst_70 = arith.constant 1.000000e+00 : f32
      %94 = vector.broadcast %cst_70 : f32 to vector<8x128xf32>
      %95 = arith.addf %94, %93 : vector<8x128xf32>
      %96 = arith.divf %94, %95 : vector<8x128xf32>
      %97 = arith.mulf %88, %76 : vector<8x128xf32>
      %98 = arith.mulf %82, %90 : vector<8x128xf32>
      %99 = arith.addf %97, %98 : vector<8x128xf32>
      %100 = math.tanh %99 : vector<8x128xf32>
      %101 = arith.mulf %96, %100 : vector<8x128xf32>
      %c0_71 = arith.constant 0 : index
      %c0_72 = arith.constant 0 : index
      %102 = vector.load %arg16[%c0_71, %c0_72] : memref<8x128xf32, #tpu.memory_space<vmem>>, vector<8x128xf32>
      %103 = vector.extract_strided_slice %75 {offsets = [0, 0], sizes = [8, 128], strides = [1, 1]} : vector<8x512xf32> to vector<8x128xf32>
      %104 = arith.negf %103 : vector<8x128xf32>
      %105 = math.exp %104 : vector<8x128xf32>
      %cst_73 = arith.constant 1.000000e+00 : f32
      %106 = vector.broadcast %cst_73 : f32 to vector<8x128xf32>
      %107 = arith.addf %106, %105 : vector<8x128xf32>
      %108 = arith.divf %106, %107 : vector<8x128xf32>
      %109 = vector.extract_strided_slice %75 {offsets = [0, 128], sizes = [8, 128], strides = [1, 1]} : vector<8x512xf32> to vector<8x128xf32>
      %110 = arith.negf %109 : vector<8x128xf32>
      %111 = math.exp %110 : vector<8x128xf32>
      %cst_74 = arith.constant 1.000000e+00 : f32
      %112 = vector.broadcast %cst_74 : f32 to vector<8x128xf32>
      %113 = arith.addf %112, %111 : vector<8x128xf32>
      %114 = arith.divf %112, %113 : vector<8x128xf32>
      %115 = vector.extract_strided_slice %75 {offsets = [0, 256], sizes = [8, 128], strides = [1, 1]} : vector<8x512xf32> to vector<8x128xf32>
      %116 = math.tanh %115 : vector<8x128xf32>
      %117 = vector.extract_strided_slice %75 {offsets = [0, 384], sizes = [8, 128], strides = [1, 1]} : vector<8x512xf32> to vector<8x128xf32>
      %118 = arith.negf %117 : vector<8x128xf32>
      %119 = math.exp %118 : vector<8x128xf32>
      %cst_75 = arith.constant 1.000000e+00 : f32
      %120 = vector.broadcast %cst_75 : f32 to vector<8x128xf32>
      %121 = arith.addf %120, %119 : vector<8x128xf32>
      %122 = arith.divf %120, %121 : vector<8x128xf32>
      %123 = arith.mulf %114, %102 : vector<8x128xf32>
      %124 = arith.mulf %108, %116 : vector<8x128xf32>
      %125 = arith.addf %123, %124 : vector<8x128xf32>
      %126 = math.tanh %125 : vector<8x128xf32>
      %127 = arith.mulf %122, %126 : vector<8x128xf32>
      %128 = vector.broadcast %c0_i32 : i32 to vector<8x1xi32>
      %129 = arith.cmpi sgt, %1, %128 : vector<8x1xi32>
      %130 = vector.broadcast %59 : i32 to vector<8x1xi32>
      %131 = arith.cmpi sgt, %1, %130 : vector<8x1xi32>
      %c0_76 = arith.constant 0 : index
      %c0_77 = arith.constant 0 : index
      %132 = vector.load %arg13[%c0_76, %c0_77] : memref<8x128xf32, #tpu.memory_space<vmem>>, vector<8x128xf32>
      %133 = vector.shape_cast %129 : vector<8x1xi1> to vector<8x1xi1>
      %134 = vector.broadcast %133 : vector<8x1xi1> to vector<8x128xi1>
      %135 = arith.select %134, %101, %132 : vector<8x128xi1>, vector<8x128xf32>
      %c0_78 = arith.constant 0 : index
      %c0_79 = arith.constant 0 : index
      %136 = vector.load %arg13[%c0_78, %c0_79] : memref<8x128xf32, #tpu.memory_space<vmem>>, vector<8x128xf32>
      tpu.vector_store %arg13[%c0_78, %c0_79], %135 {strides = array<i32>} : memref<8x128xf32, #tpu.memory_space<vmem>>, vector<8x128xf32>,
      %c0_80 = arith.constant 0 : index
      %c0_81 = arith.constant 0 : index
      %137 = vector.load %arg14[%c0_80, %c0_81] : memref<8x128xf32, #tpu.memory_space<vmem>>, vector<8x128xf32>
      %138 = vector.shape_cast %129 : vector<8x1xi1> to vector<8x1xi1>
      %139 = vector.broadcast %138 : vector<8x1xi1> to vector<8x128xi1>
      %140 = arith.select %139, %99, %137 : vector<8x128xi1>, vector<8x128xf32>
      %c0_82 = arith.constant 0 : index
      %c0_83 = arith.constant 0 : index
      %141 = vector.load %arg14[%c0_82, %c0_83] : memref<8x128xf32, #tpu.memory_space<vmem>>, vector<8x128xf32>
      tpu.vector_store %arg14[%c0_82, %c0_83], %140 {strides = array<i32>} : memref<8x128xf32, #tpu.memory_space<vmem>>, vector<8x128xf32>,
      %c0_84 = arith.constant 0 : index
      %c0_85 = arith.constant 0 : index
      %142 = vector.load %arg15[%c0_84, %c0_85] : memref<8x128xf32, #tpu.memory_space<vmem>>, vector<8x128xf32>
      %143 = vector.shape_cast %131 : vector<8x1xi1> to vector<8x1xi1>
      %144 = vector.broadcast %143 : vector<8x1xi1> to vector<8x128xi1>
      %145 = arith.select %144, %127, %142 : vector<8x128xi1>, vector<8x128xf32>
      %c0_86 = arith.constant 0 : index
      %c0_87 = arith.constant 0 : index
      %146 = vector.load %arg15[%c0_86, %c0_87] : memref<8x128xf32, #tpu.memory_space<vmem>>, vector<8x128xf32>
      tpu.vector_store %arg15[%c0_86, %c0_87], %145 {strides = array<i32>} : memref<8x128xf32, #tpu.memory_space<vmem>>, vector<8x128xf32>,
      %c0_88 = arith.constant 0 : index
      %c0_89 = arith.constant 0 : index
      %147 = vector.load %arg16[%c0_88, %c0_89] : memref<8x128xf32, #tpu.memory_space<vmem>>, vector<8x128xf32>
      %148 = vector.shape_cast %131 : vector<8x1xi1> to vector<8x1xi1>
      %149 = vector.broadcast %148 : vector<8x1xi1> to vector<8x128xi1>
      %150 = arith.select %149, %125, %147 : vector<8x128xi1>, vector<8x128xf32>
      %c0_90 = arith.constant 0 : index
      %c0_91 = arith.constant 0 : index
      %151 = vector.load %arg16[%c0_90, %c0_91] : memref<8x128xf32, #tpu.memory_space<vmem>>, vector<8x128xf32>
      tpu.vector_store %arg16[%c0_90, %c0_91], %150 {strides = array<i32>} : memref<8x128xf32, #tpu.memory_space<vmem>>, vector<8x128xf32>,
    } else {
    }
    %c1_i32 = arith.constant 1 : i32
    %26 = arith.cmpi slt, %c1_i32, %0 : i32
    %27 = arith.extui %26 : i1 to i32
    %c0_i32_30 = arith.constant 0 : i32
    %28 = arith.cmpi ne, %27, %c0_i32_30 : i32
    scf.if %28 {
      %c1_i32_51 = arith.constant 1 : i32
      %58 = arith.subi %0, %c1_i32_51 : i32
      %59 = arith.subi %58, %c1_i32 : i32
      %c8_i32_52 = arith.constant 8 : i32
      %60 = arith.muli %c1_i32, %c8_i32_52 : i32
      %61 = tpu.assume_multiple %60, 8 : i32
      %c8_i32_53 = arith.constant 8 : i32
      %62 = arith.muli %59, %c8_i32_53 : i32
      %63 = tpu.assume_multiple %62, 8 : i32
      %64 = arith.index_cast %61 : i32 to index
      %c0_54 = arith.constant 0 : index
      %65 = vector.load %arg17[%64, %c0_54] : memref<64x512xf32, #tpu.memory_space<vmem>>, vector<8x512xf32>
      %c0_55 = arith.constant 0 : index
      %c0_56 = arith.constant 0 : index
      %66 = vector.load %arg13[%c0_55, %c0_56] : memref<8x128xf32, #tpu.memory_space<vmem>>, vector<8x128xf32>
      %c0_57 = arith.constant 0 : index
      %c0_58 = arith.constant 0 : index
      %67 = vector.load %arg4[%c0_57, %c0_58] : memref<128x512xf32, #tpu.memory_space<vmem>>, vector<128x512xf32>
      %cst_59 = arith.constant dense<0.000000e+00> : vector<8x512xf32>
      %68 = tpu.matmul %66, %67, %cst_59 {dimension_numbers = #tpu.dot_dimension_numbers<[1], [0], [0], [1], [0, 0, 1, 1], [], []>} : vector<8x128xf32>, vector<128x512xf32>, vector<8x512xf32> -> vector<8x512xf32>
      %69 = arith.addf %65, %68 : vector<8x512xf32>
      %70 = arith.index_cast %63 : i32 to index
      %c0_60 = arith.constant 0 : index
      %71 = vector.load %arg18[%70, %c0_60] : memref<64x512xf32, #tpu.memory_space<vmem>>, vector<8x512xf32>
      %c0_61 = arith.constant 0 : index
      %c0_62 = arith.constant 0 : index
      %72 = vector.load %arg15[%c0_61, %c0_62] : memref<8x128xf32, #tpu.memory_space<vmem>>, vector<8x128xf32>
      %c0_63 = arith.constant 0 : index
      %c0_64 = arith.constant 0 : index
      %73 = vector.load %arg7[%c0_63, %c0_64] : memref<128x512xf32, #tpu.memory_space<vmem>>, vector<128x512xf32>
      %cst_65 = arith.constant dense<0.000000e+00> : vector<8x512xf32>
      %74 = tpu.matmul %72, %73, %cst_65 {dimension_numbers = #tpu.dot_dimension_numbers<[1], [0], [0], [1], [0, 0, 1, 1], [], []>} : vector<8x128xf32>, vector<128x512xf32>, vector<8x512xf32> -> vector<8x512xf32>
      %75 = arith.addf %71, %74 : vector<8x512xf32>
      %c0_66 = arith.constant 0 : index
      %c0_67 = arith.constant 0 : index
      %76 = vector.load %arg14[%c0_66, %c0_67] : memref<8x128xf32, #tpu.memory_space<vmem>>, vector<8x128xf32>
      %77 = vector.extract_strided_slice %69 {offsets = [0, 0], sizes = [8, 128], strides = [1, 1]} : vector<8x512xf32> to vector<8x128xf32>
      %78 = arith.negf %77 : vector<8x128xf32>
      %79 = math.exp %78 : vector<8x128xf32>
      %cst_68 = arith.constant 1.000000e+00 : f32
      %80 = vector.broadcast %cst_68 : f32 to vector<8x128xf32>
      %81 = arith.addf %80, %79 : vector<8x128xf32>
      %82 = arith.divf %80, %81 : vector<8x128xf32>
      %83 = vector.extract_strided_slice %69 {offsets = [0, 128], sizes = [8, 128], strides = [1, 1]} : vector<8x512xf32> to vector<8x128xf32>
      %84 = arith.negf %83 : vector<8x128xf32>
      %85 = math.exp %84 : vector<8x128xf32>
      %cst_69 = arith.constant 1.000000e+00 : f32
      %86 = vector.broadcast %cst_69 : f32 to vector<8x128xf32>
      %87 = arith.addf %86, %85 : vector<8x128xf32>
      %88 = arith.divf %86, %87 : vector<8x128xf32>
      %89 = vector.extract_strided_slice %69 {offsets = [0, 256], sizes = [8, 128], strides = [1, 1]} : vector<8x512xf32> to vector<8x128xf32>
      %90 = math.tanh %89 : vector<8x128xf32>
      %91 = vector.extract_strided_slice %69 {offsets = [0, 384], sizes = [8, 128], strides = [1, 1]} : vector<8x512xf32> to vector<8x128xf32>
      %92 = arith.negf %91 : vector<8x128xf32>
      %93 = math.exp %92 : vector<8x128xf32>
      %cst_70 = arith.constant 1.000000e+00 : f32
      %94 = vector.broadcast %cst_70 : f32 to vector<8x128xf32>
      %95 = arith.addf %94, %93 : vector<8x128xf32>
      %96 = arith.divf %94, %95 : vector<8x128xf32>
      %97 = arith.mulf %88, %76 : vector<8x128xf32>
      %98 = arith.mulf %82, %90 : vector<8x128xf32>
      %99 = arith.addf %97, %98 : vector<8x128xf32>
      %100 = math.tanh %99 : vector<8x128xf32>
      %101 = arith.mulf %96, %100 : vector<8x128xf32>
      %c0_71 = arith.constant 0 : index
      %c0_72 = arith.constant 0 : index
      %102 = vector.load %arg16[%c0_71, %c0_72] : memref<8x128xf32, #tpu.memory_space<vmem>>, vector<8x128xf32>
      %103 = vector.extract_strided_slice %75 {offsets = [0, 0], sizes = [8, 128], strides = [1, 1]} : vector<8x512xf32> to vector<8x128xf32>
      %104 = arith.negf %103 : vector<8x128xf32>
      %105 = math.exp %104 : vector<8x128xf32>
      %cst_73 = arith.constant 1.000000e+00 : f32
      %106 = vector.broadcast %cst_73 : f32 to vector<8x128xf32>
      %107 = arith.addf %106, %105 : vector<8x128xf32>
      %108 = arith.divf %106, %107 : vector<8x128xf32>
      %109 = vector.extract_strided_slice %75 {offsets = [0, 128], sizes = [8, 128], strides = [1, 1]} : vector<8x512xf32> to vector<8x128xf32>
      %110 = arith.negf %109 : vector<8x128xf32>
      %111 = math.exp %110 : vector<8x128xf32>
      %cst_74 = arith.constant 1.000000e+00 : f32
      %112 = vector.broadcast %cst_74 : f32 to vector<8x128xf32>
      %113 = arith.addf %112, %111 : vector<8x128xf32>
      %114 = arith.divf %112, %113 : vector<8x128xf32>
      %115 = vector.extract_strided_slice %75 {offsets = [0, 256], sizes = [8, 128], strides = [1, 1]} : vector<8x512xf32> to vector<8x128xf32>
      %116 = math.tanh %115 : vector<8x128xf32>
      %117 = vector.extract_strided_slice %75 {offsets = [0, 384], sizes = [8, 128], strides = [1, 1]} : vector<8x512xf32> to vector<8x128xf32>
      %118 = arith.negf %117 : vector<8x128xf32>
      %119 = math.exp %118 : vector<8x128xf32>
      %cst_75 = arith.constant 1.000000e+00 : f32
      %120 = vector.broadcast %cst_75 : f32 to vector<8x128xf32>
      %121 = arith.addf %120, %119 : vector<8x128xf32>
      %122 = arith.divf %120, %121 : vector<8x128xf32>
      %123 = arith.mulf %114, %102 : vector<8x128xf32>
      %124 = arith.mulf %108, %116 : vector<8x128xf32>
      %125 = arith.addf %123, %124 : vector<8x128xf32>
      %126 = math.tanh %125 : vector<8x128xf32>
      %127 = arith.mulf %122, %126 : vector<8x128xf32>
      %128 = vector.broadcast %c1_i32 : i32 to vector<8x1xi32>
      %129 = arith.cmpi sgt, %1, %128 : vector<8x1xi32>
      %130 = vector.broadcast %59 : i32 to vector<8x1xi32>
      %131 = arith.cmpi sgt, %1, %130 : vector<8x1xi32>
      %c0_76 = arith.constant 0 : index
      %c0_77 = arith.constant 0 : index
      %132 = vector.load %arg13[%c0_76, %c0_77] : memref<8x128xf32, #tpu.memory_space<vmem>>, vector<8x128xf32>
      %133 = vector.shape_cast %129 : vector<8x1xi1> to vector<8x1xi1>
      %134 = vector.broadcast %133 : vector<8x1xi1> to vector<8x128xi1>
      %135 = arith.select %134, %101, %132 : vector<8x128xi1>, vector<8x128xf32>
      %c0_78 = arith.constant 0 : index
      %c0_79 = arith.constant 0 : index
      %136 = vector.load %arg13[%c0_78, %c0_79] : memref<8x128xf32, #tpu.memory_space<vmem>>, vector<8x128xf32>
      tpu.vector_store %arg13[%c0_78, %c0_79], %135 {strides = array<i32>} : memref<8x128xf32, #tpu.memory_space<vmem>>, vector<8x128xf32>,
      %c0_80 = arith.constant 0 : index
      %c0_81 = arith.constant 0 : index
      %137 = vector.load %arg14[%c0_80, %c0_81] : memref<8x128xf32, #tpu.memory_space<vmem>>, vector<8x128xf32>
      %138 = vector.shape_cast %129 : vector<8x1xi1> to vector<8x1xi1>
      %139 = vector.broadcast %138 : vector<8x1xi1> to vector<8x128xi1>
      %140 = arith.select %139, %99, %137 : vector<8x128xi1>, vector<8x128xf32>
      %c0_82 = arith.constant 0 : index
      %c0_83 = arith.constant 0 : index
      %141 = vector.load %arg14[%c0_82, %c0_83] : memref<8x128xf32, #tpu.memory_space<vmem>>, vector<8x128xf32>
      tpu.vector_store %arg14[%c0_82, %c0_83], %140 {strides = array<i32>} : memref<8x128xf32, #tpu.memory_space<vmem>>, vector<8x128xf32>,
      %c0_84 = arith.constant 0 : index
      %c0_85 = arith.constant 0 : index
      %142 = vector.load %arg15[%c0_84, %c0_85] : memref<8x128xf32, #tpu.memory_space<vmem>>, vector<8x128xf32>
      %143 = vector.shape_cast %131 : vector<8x1xi1> to vector<8x1xi1>
      %144 = vector.broadcast %143 : vector<8x1xi1> to vector<8x128xi1>
      %145 = arith.select %144, %127, %142 : vector<8x128xi1>, vector<8x128xf32>
      %c0_86 = arith.constant 0 : index
      %c0_87 = arith.constant 0 : index
      %146 = vector.load %arg15[%c0_86, %c0_87] : memref<8x128xf32, #tpu.memory_space<vmem>>, vector<8x128xf32>
      tpu.vector_store %arg15[%c0_86, %c0_87], %145 {strides = array<i32>} : memref<8x128xf32, #tpu.memory_space<vmem>>, vector<8x128xf32>,
      %c0_88 = arith.constant 0 : index
      %c0_89 = arith.constant 0 : index
      %147 = vector.load %arg16[%c0_88, %c0_89] : memref<8x128xf32, #tpu.memory_space<vmem>>, vector<8x128xf32>
      %148 = vector.shape_cast %131 : vector<8x1xi1> to vector<8x1xi1>
      %149 = vector.broadcast %148 : vector<8x1xi1> to vector<8x128xi1>
      %150 = arith.select %149, %125, %147 : vector<8x128xi1>, vector<8x128xf32>
      %c0_90 = arith.constant 0 : index
      %c0_91 = arith.constant 0 : index
      %151 = vector.load %arg16[%c0_90, %c0_91] : memref<8x128xf32, #tpu.memory_space<vmem>>, vector<8x128xf32>
      tpu.vector_store %arg16[%c0_90, %c0_91], %150 {strides = array<i32>} : memref<8x128xf32, #tpu.memory_space<vmem>>, vector<8x128xf32>,
    } else {
    }
    %c2_i32 = arith.constant 2 : i32
    %29 = arith.cmpi slt, %c2_i32, %0 : i32
    %30 = arith.extui %29 : i1 to i32
    %c0_i32_31 = arith.constant 0 : i32
    %31 = arith.cmpi ne, %30, %c0_i32_31 : i32
    scf.if %31 {
      %c1_i32_51 = arith.constant 1 : i32
      %58 = arith.subi %0, %c1_i32_51 : i32
      %59 = arith.subi %58, %c2_i32 : i32
      %c8_i32_52 = arith.constant 8 : i32
      %60 = arith.muli %c2_i32, %c8_i32_52 : i32
      %61 = tpu.assume_multiple %60, 8 : i32
      %c8_i32_53 = arith.constant 8 : i32
      %62 = arith.muli %59, %c8_i32_53 : i32
      %63 = tpu.assume_multiple %62, 8 : i32
      %64 = arith.index_cast %61 : i32 to index
      %c0_54 = arith.constant 0 : index
      %65 = vector.load %arg17[%64, %c0_54] : memref<64x512xf32, #tpu.memory_space<vmem>>, vector<8x512xf32>
      %c0_55 = arith.constant 0 : index
      %c0_56 = arith.constant 0 : index
      %66 = vector.load %arg13[%c0_55, %c0_56] : memref<8x128xf32, #tpu.memory_space<vmem>>, vector<8x128xf32>
      %c0_57 = arith.constant 0 : index
      %c0_58 = arith.constant 0 : index
      %67 = vector.load %arg4[%c0_57, %c0_58] : memref<128x512xf32, #tpu.memory_space<vmem>>, vector<128x512xf32>
      %cst_59 = arith.constant dense<0.000000e+00> : vector<8x512xf32>
      %68 = tpu.matmul %66, %67, %cst_59 {dimension_numbers = #tpu.dot_dimension_numbers<[1], [0], [0], [1], [0, 0, 1, 1], [], []>} : vector<8x128xf32>, vector<128x512xf32>, vector<8x512xf32> -> vector<8x512xf32>
      %69 = arith.addf %65, %68 : vector<8x512xf32>
      %70 = arith.index_cast %63 : i32 to index
      %c0_60 = arith.constant 0 : index
      %71 = vector.load %arg18[%70, %c0_60] : memref<64x512xf32, #tpu.memory_space<vmem>>, vector<8x512xf32>
      %c0_61 = arith.constant 0 : index
      %c0_62 = arith.constant 0 : index
      %72 = vector.load %arg15[%c0_61, %c0_62] : memref<8x128xf32, #tpu.memory_space<vmem>>, vector<8x128xf32>
      %c0_63 = arith.constant 0 : index
      %c0_64 = arith.constant 0 : index
      %73 = vector.load %arg7[%c0_63, %c0_64] : memref<128x512xf32, #tpu.memory_space<vmem>>, vector<128x512xf32>
      %cst_65 = arith.constant dense<0.000000e+00> : vector<8x512xf32>
      %74 = tpu.matmul %72, %73, %cst_65 {dimension_numbers = #tpu.dot_dimension_numbers<[1], [0], [0], [1], [0, 0, 1, 1], [], []>} : vector<8x128xf32>, vector<128x512xf32>, vector<8x512xf32> -> vector<8x512xf32>
      %75 = arith.addf %71, %74 : vector<8x512xf32>
      %c0_66 = arith.constant 0 : index
      %c0_67 = arith.constant 0 : index
      %76 = vector.load %arg14[%c0_66, %c0_67] : memref<8x128xf32, #tpu.memory_space<vmem>>, vector<8x128xf32>
      %77 = vector.extract_strided_slice %69 {offsets = [0, 0], sizes = [8, 128], strides = [1, 1]} : vector<8x512xf32> to vector<8x128xf32>
      %78 = arith.negf %77 : vector<8x128xf32>
      %79 = math.exp %78 : vector<8x128xf32>
      %cst_68 = arith.constant 1.000000e+00 : f32
      %80 = vector.broadcast %cst_68 : f32 to vector<8x128xf32>
      %81 = arith.addf %80, %79 : vector<8x128xf32>
      %82 = arith.divf %80, %81 : vector<8x128xf32>
      %83 = vector.extract_strided_slice %69 {offsets = [0, 128], sizes = [8, 128], strides = [1, 1]} : vector<8x512xf32> to vector<8x128xf32>
      %84 = arith.negf %83 : vector<8x128xf32>
      %85 = math.exp %84 : vector<8x128xf32>
      %cst_69 = arith.constant 1.000000e+00 : f32
      %86 = vector.broadcast %cst_69 : f32 to vector<8x128xf32>
      %87 = arith.addf %86, %85 : vector<8x128xf32>
      %88 = arith.divf %86, %87 : vector<8x128xf32>
      %89 = vector.extract_strided_slice %69 {offsets = [0, 256], sizes = [8, 128], strides = [1, 1]} : vector<8x512xf32> to vector<8x128xf32>
      %90 = math.tanh %89 : vector<8x128xf32>
      %91 = vector.extract_strided_slice %69 {offsets = [0, 384], sizes = [8, 128], strides = [1, 1]} : vector<8x512xf32> to vector<8x128xf32>
      %92 = arith.negf %91 : vector<8x128xf32>
      %93 = math.exp %92 : vector<8x128xf32>
      %cst_70 = arith.constant 1.000000e+00 : f32
      %94 = vector.broadcast %cst_70 : f32 to vector<8x128xf32>
      %95 = arith.addf %94, %93 : vector<8x128xf32>
      %96 = arith.divf %94, %95 : vector<8x128xf32>
      %97 = arith.mulf %88, %76 : vector<8x128xf32>
      %98 = arith.mulf %82, %90 : vector<8x128xf32>
      %99 = arith.addf %97, %98 : vector<8x128xf32>
      %100 = math.tanh %99 : vector<8x128xf32>
      %101 = arith.mulf %96, %100 : vector<8x128xf32>
      %c0_71 = arith.constant 0 : index
      %c0_72 = arith.constant 0 : index
      %102 = vector.load %arg16[%c0_71, %c0_72] : memref<8x128xf32, #tpu.memory_space<vmem>>, vector<8x128xf32>
      %103 = vector.extract_strided_slice %75 {offsets = [0, 0], sizes = [8, 128], strides = [1, 1]} : vector<8x512xf32> to vector<8x128xf32>
      %104 = arith.negf %103 : vector<8x128xf32>
      %105 = math.exp %104 : vector<8x128xf32>
      %cst_73 = arith.constant 1.000000e+00 : f32
      %106 = vector.broadcast %cst_73 : f32 to vector<8x128xf32>
      %107 = arith.addf %106, %105 : vector<8x128xf32>
      %108 = arith.divf %106, %107 : vector<8x128xf32>
      %109 = vector.extract_strided_slice %75 {offsets = [0, 128], sizes = [8, 128], strides = [1, 1]} : vector<8x512xf32> to vector<8x128xf32>
      %110 = arith.negf %109 : vector<8x128xf32>
      %111 = math.exp %110 : vector<8x128xf32>
      %cst_74 = arith.constant 1.000000e+00 : f32
      %112 = vector.broadcast %cst_74 : f32 to vector<8x128xf32>
      %113 = arith.addf %112, %111 : vector<8x128xf32>
      %114 = arith.divf %112, %113 : vector<8x128xf32>
      %115 = vector.extract_strided_slice %75 {offsets = [0, 256], sizes = [8, 128], strides = [1, 1]} : vector<8x512xf32> to vector<8x128xf32>
      %116 = math.tanh %115 : vector<8x128xf32>
      %117 = vector.extract_strided_slice %75 {offsets = [0, 384], sizes = [8, 128], strides = [1, 1]} : vector<8x512xf32> to vector<8x128xf32>
      %118 = arith.negf %117 : vector<8x128xf32>
      %119 = math.exp %118 : vector<8x128xf32>
      %cst_75 = arith.constant 1.000000e+00 : f32
      %120 = vector.broadcast %cst_75 : f32 to vector<8x128xf32>
      %121 = arith.addf %120, %119 : vector<8x128xf32>
      %122 = arith.divf %120, %121 : vector<8x128xf32>
      %123 = arith.mulf %114, %102 : vector<8x128xf32>
      %124 = arith.mulf %108, %116 : vector<8x128xf32>
      %125 = arith.addf %123, %124 : vector<8x128xf32>
      %126 = math.tanh %125 : vector<8x128xf32>
      %127 = arith.mulf %122, %126 : vector<8x128xf32>
      %128 = vector.broadcast %c2_i32 : i32 to vector<8x1xi32>
      %129 = arith.cmpi sgt, %1, %128 : vector<8x1xi32>
      %130 = vector.broadcast %59 : i32 to vector<8x1xi32>
      %131 = arith.cmpi sgt, %1, %130 : vector<8x1xi32>
      %c0_76 = arith.constant 0 : index
      %c0_77 = arith.constant 0 : index
      %132 = vector.load %arg13[%c0_76, %c0_77] : memref<8x128xf32, #tpu.memory_space<vmem>>, vector<8x128xf32>
      %133 = vector.shape_cast %129 : vector<8x1xi1> to vector<8x1xi1>
      %134 = vector.broadcast %133 : vector<8x1xi1> to vector<8x128xi1>
      %135 = arith.select %134, %101, %132 : vector<8x128xi1>, vector<8x128xf32>
      %c0_78 = arith.constant 0 : index
      %c0_79 = arith.constant 0 : index
      %136 = vector.load %arg13[%c0_78, %c0_79] : memref<8x128xf32, #tpu.memory_space<vmem>>, vector<8x128xf32>
      tpu.vector_store %arg13[%c0_78, %c0_79], %135 {strides = array<i32>} : memref<8x128xf32, #tpu.memory_space<vmem>>, vector<8x128xf32>,
      %c0_80 = arith.constant 0 : index
      %c0_81 = arith.constant 0 : index
      %137 = vector.load %arg14[%c0_80, %c0_81] : memref<8x128xf32, #tpu.memory_space<vmem>>, vector<8x128xf32>
      %138 = vector.shape_cast %129 : vector<8x1xi1> to vector<8x1xi1>
      %139 = vector.broadcast %138 : vector<8x1xi1> to vector<8x128xi1>
      %140 = arith.select %139, %99, %137 : vector<8x128xi1>, vector<8x128xf32>
      %c0_82 = arith.constant 0 : index
      %c0_83 = arith.constant 0 : index
      %141 = vector.load %arg14[%c0_82, %c0_83] : memref<8x128xf32, #tpu.memory_space<vmem>>, vector<8x128xf32>
      tpu.vector_store %arg14[%c0_82, %c0_83], %140 {strides = array<i32>} : memref<8x128xf32, #tpu.memory_space<vmem>>, vector<8x128xf32>,
      %c0_84 = arith.constant 0 : index
      %c0_85 = arith.constant 0 : index
      %142 = vector.load %arg15[%c0_84, %c0_85] : memref<8x128xf32, #tpu.memory_space<vmem>>, vector<8x128xf32>
      %143 = vector.shape_cast %131 : vector<8x1xi1> to vector<8x1xi1>
      %144 = vector.broadcast %143 : vector<8x1xi1> to vector<8x128xi1>
      %145 = arith.select %144, %127, %142 : vector<8x128xi1>, vector<8x128xf32>
      %c0_86 = arith.constant 0 : index
      %c0_87 = arith.constant 0 : index
      %146 = vector.load %arg15[%c0_86, %c0_87] : memref<8x128xf32, #tpu.memory_space<vmem>>, vector<8x128xf32>
      tpu.vector_store %arg15[%c0_86, %c0_87], %145 {strides = array<i32>} : memref<8x128xf32, #tpu.memory_space<vmem>>, vector<8x128xf32>,
      %c0_88 = arith.constant 0 : index
      %c0_89 = arith.constant 0 : index
      %147 = vector.load %arg16[%c0_88, %c0_89] : memref<8x128xf32, #tpu.memory_space<vmem>>, vector<8x128xf32>
      %148 = vector.shape_cast %131 : vector<8x1xi1> to vector<8x1xi1>
      %149 = vector.broadcast %148 : vector<8x1xi1> to vector<8x128xi1>
      %150 = arith.select %149, %125, %147 : vector<8x128xi1>, vector<8x128xf32>
      %c0_90 = arith.constant 0 : index
      %c0_91 = arith.constant 0 : index
      %151 = vector.load %arg16[%c0_90, %c0_91] : memref<8x128xf32, #tpu.memory_space<vmem>>, vector<8x128xf32>
      tpu.vector_store %arg16[%c0_90, %c0_91], %150 {strides = array<i32>} : memref<8x128xf32, #tpu.memory_space<vmem>>, vector<8x128xf32>,
    } else {
    }
    %c3_i32 = arith.constant 3 : i32
    %32 = arith.cmpi slt, %c3_i32, %0 : i32
    %33 = arith.extui %32 : i1 to i32
    %c0_i32_32 = arith.constant 0 : i32
    %34 = arith.cmpi ne, %33, %c0_i32_32 : i32
    scf.if %34 {
      %c1_i32_51 = arith.constant 1 : i32
      %58 = arith.subi %0, %c1_i32_51 : i32
      %59 = arith.subi %58, %c3_i32 : i32
      %c8_i32_52 = arith.constant 8 : i32
      %60 = arith.muli %c3_i32, %c8_i32_52 : i32
      %61 = tpu.assume_multiple %60, 8 : i32
      %c8_i32_53 = arith.constant 8 : i32
      %62 = arith.muli %59, %c8_i32_53 : i32
      %63 = tpu.assume_multiple %62, 8 : i32
      %64 = arith.index_cast %61 : i32 to index
      %c0_54 = arith.constant 0 : index
      %65 = vector.load %arg17[%64, %c0_54] : memref<64x512xf32, #tpu.memory_space<vmem>>, vector<8x512xf32>
      %c0_55 = arith.constant 0 : index
      %c0_56 = arith.constant 0 : index
      %66 = vector.load %arg13[%c0_55, %c0_56] : memref<8x128xf32, #tpu.memory_space<vmem>>, vector<8x128xf32>
      %c0_57 = arith.constant 0 : index
      %c0_58 = arith.constant 0 : index
      %67 = vector.load %arg4[%c0_57, %c0_58] : memref<128x512xf32, #tpu.memory_space<vmem>>, vector<128x512xf32>
      %cst_59 = arith.constant dense<0.000000e+00> : vector<8x512xf32>
      %68 = tpu.matmul %66, %67, %cst_59 {dimension_numbers = #tpu.dot_dimension_numbers<[1], [0], [0], [1], [0, 0, 1, 1], [], []>} : vector<8x128xf32>, vector<128x512xf32>, vector<8x512xf32> -> vector<8x512xf32>
      %69 = arith.addf %65, %68 : vector<8x512xf32>
      %70 = arith.index_cast %63 : i32 to index
      %c0_60 = arith.constant 0 : index
      %71 = vector.load %arg18[%70, %c0_60] : memref<64x512xf32, #tpu.memory_space<vmem>>, vector<8x512xf32>
      %c0_61 = arith.constant 0 : index
      %c0_62 = arith.constant 0 : index
      %72 = vector.load %arg15[%c0_61, %c0_62] : memref<8x128xf32, #tpu.memory_space<vmem>>, vector<8x128xf32>
      %c0_63 = arith.constant 0 : index
      %c0_64 = arith.constant 0 : index
      %73 = vector.load %arg7[%c0_63, %c0_64] : memref<128x512xf32, #tpu.memory_space<vmem>>, vector<128x512xf32>
      %cst_65 = arith.constant dense<0.000000e+00> : vector<8x512xf32>
      %74 = tpu.matmul %72, %73, %cst_65 {dimension_numbers = #tpu.dot_dimension_numbers<[1], [0], [0], [1], [0, 0, 1, 1], [], []>} : vector<8x128xf32>, vector<128x512xf32>, vector<8x512xf32> -> vector<8x512xf32>
      %75 = arith.addf %71, %74 : vector<8x512xf32>
      %c0_66 = arith.constant 0 : index
      %c0_67 = arith.constant 0 : index
      %76 = vector.load %arg14[%c0_66, %c0_67] : memref<8x128xf32, #tpu.memory_space<vmem>>, vector<8x128xf32>
      %77 = vector.extract_strided_slice %69 {offsets = [0, 0], sizes = [8, 128], strides = [1, 1]} : vector<8x512xf32> to vector<8x128xf32>
      %78 = arith.negf %77 : vector<8x128xf32>
      %79 = math.exp %78 : vector<8x128xf32>
      %cst_68 = arith.constant 1.000000e+00 : f32
      %80 = vector.broadcast %cst_68 : f32 to vector<8x128xf32>
      %81 = arith.addf %80, %79 : vector<8x128xf32>
      %82 = arith.divf %80, %81 : vector<8x128xf32>
      %83 = vector.extract_strided_slice %69 {offsets = [0, 128], sizes = [8, 128], strides = [1, 1]} : vector<8x512xf32> to vector<8x128xf32>
      %84 = arith.negf %83 : vector<8x128xf32>
      %85 = math.exp %84 : vector<8x128xf32>
      %cst_69 = arith.constant 1.000000e+00 : f32
      %86 = vector.broadcast %cst_69 : f32 to vector<8x128xf32>
      %87 = arith.addf %86, %85 : vector<8x128xf32>
      %88 = arith.divf %86, %87 : vector<8x128xf32>
      %89 = vector.extract_strided_slice %69 {offsets = [0, 256], sizes = [8, 128], strides = [1, 1]} : vector<8x512xf32> to vector<8x128xf32>
      %90 = math.tanh %89 : vector<8x128xf32>
      %91 = vector.extract_strided_slice %69 {offsets = [0, 384], sizes = [8, 128], strides = [1, 1]} : vector<8x512xf32> to vector<8x128xf32>
      %92 = arith.negf %91 : vector<8x128xf32>
      %93 = math.exp %92 : vector<8x128xf32>
      %cst_70 = arith.constant 1.000000e+00 : f32
      %94 = vector.broadcast %cst_70 : f32 to vector<8x128xf32>
      %95 = arith.addf %94, %93 : vector<8x128xf32>
      %96 = arith.divf %94, %95 : vector<8x128xf32>
      %97 = arith.mulf %88, %76 : vector<8x128xf32>
      %98 = arith.mulf %82, %90 : vector<8x128xf32>
      %99 = arith.addf %97, %98 : vector<8x128xf32>
      %100 = math.tanh %99 : vector<8x128xf32>
      %101 = arith.mulf %96, %100 : vector<8x128xf32>
      %c0_71 = arith.constant 0 : index
      %c0_72 = arith.constant 0 : index
      %102 = vector.load %arg16[%c0_71, %c0_72] : memref<8x128xf32, #tpu.memory_space<vmem>>, vector<8x128xf32>
      %103 = vector.extract_strided_slice %75 {offsets = [0, 0], sizes = [8, 128], strides = [1, 1]} : vector<8x512xf32> to vector<8x128xf32>
      %104 = arith.negf %103 : vector<8x128xf32>
      %105 = math.exp %104 : vector<8x128xf32>
      %cst_73 = arith.constant 1.000000e+00 : f32
      %106 = vector.broadcast %cst_73 : f32 to vector<8x128xf32>
      %107 = arith.addf %106, %105 : vector<8x128xf32>
      %108 = arith.divf %106, %107 : vector<8x128xf32>
      %109 = vector.extract_strided_slice %75 {offsets = [0, 128], sizes = [8, 128], strides = [1, 1]} : vector<8x512xf32> to vector<8x128xf32>
      %110 = arith.negf %109 : vector<8x128xf32>
      %111 = math.exp %110 : vector<8x128xf32>
      %cst_74 = arith.constant 1.000000e+00 : f32
      %112 = vector.broadcast %cst_74 : f32 to vector<8x128xf32>
      %113 = arith.addf %112, %111 : vector<8x128xf32>
      %114 = arith.divf %112, %113 : vector<8x128xf32>
      %115 = vector.extract_strided_slice %75 {offsets = [0, 256], sizes = [8, 128], strides = [1, 1]} : vector<8x512xf32> to vector<8x128xf32>
      %116 = math.tanh %115 : vector<8x128xf32>
      %117 = vector.extract_strided_slice %75 {offsets = [0, 384], sizes = [8, 128], strides = [1, 1]} : vector<8x512xf32> to vector<8x128xf32>
      %118 = arith.negf %117 : vector<8x128xf32>
      %119 = math.exp %118 : vector<8x128xf32>
      %cst_75 = arith.constant 1.000000e+00 : f32
      %120 = vector.broadcast %cst_75 : f32 to vector<8x128xf32>
      %121 = arith.addf %120, %119 : vector<8x128xf32>
      %122 = arith.divf %120, %121 : vector<8x128xf32>
      %123 = arith.mulf %114, %102 : vector<8x128xf32>
      %124 = arith.mulf %108, %116 : vector<8x128xf32>
      %125 = arith.addf %123, %124 : vector<8x128xf32>
      %126 = math.tanh %125 : vector<8x128xf32>
      %127 = arith.mulf %122, %126 : vector<8x128xf32>
      %128 = vector.broadcast %c3_i32 : i32 to vector<8x1xi32>
      %129 = arith.cmpi sgt, %1, %128 : vector<8x1xi32>
      %130 = vector.broadcast %59 : i32 to vector<8x1xi32>
      %131 = arith.cmpi sgt, %1, %130 : vector<8x1xi32>
      %c0_76 = arith.constant 0 : index
      %c0_77 = arith.constant 0 : index
      %132 = vector.load %arg13[%c0_76, %c0_77] : memref<8x128xf32, #tpu.memory_space<vmem>>, vector<8x128xf32>
      %133 = vector.shape_cast %129 : vector<8x1xi1> to vector<8x1xi1>
      %134 = vector.broadcast %133 : vector<8x1xi1> to vector<8x128xi1>
      %135 = arith.select %134, %101, %132 : vector<8x128xi1>, vector<8x128xf32>
      %c0_78 = arith.constant 0 : index
      %c0_79 = arith.constant 0 : index
      %136 = vector.load %arg13[%c0_78, %c0_79] : memref<8x128xf32, #tpu.memory_space<vmem>>, vector<8x128xf32>
      tpu.vector_store %arg13[%c0_78, %c0_79], %135 {strides = array<i32>} : memref<8x128xf32, #tpu.memory_space<vmem>>, vector<8x128xf32>,
      %c0_80 = arith.constant 0 : index
      %c0_81 = arith.constant 0 : index
      %137 = vector.load %arg14[%c0_80, %c0_81] : memref<8x128xf32, #tpu.memory_space<vmem>>, vector<8x128xf32>
      %138 = vector.shape_cast %129 : vector<8x1xi1> to vector<8x1xi1>
      %139 = vector.broadcast %138 : vector<8x1xi1> to vector<8x128xi1>
      %140 = arith.select %139, %99, %137 : vector<8x128xi1>, vector<8x128xf32>
      %c0_82 = arith.constant 0 : index
      %c0_83 = arith.constant 0 : index
      %141 = vector.load %arg14[%c0_82, %c0_83] : memref<8x128xf32, #tpu.memory_space<vmem>>, vector<8x128xf32>
      tpu.vector_store %arg14[%c0_82, %c0_83], %140 {strides = array<i32>} : memref<8x128xf32, #tpu.memory_space<vmem>>, vector<8x128xf32>,
      %c0_84 = arith.constant 0 : index
      %c0_85 = arith.constant 0 : index
      %142 = vector.load %arg15[%c0_84, %c0_85] : memref<8x128xf32, #tpu.memory_space<vmem>>, vector<8x128xf32>
      %143 = vector.shape_cast %131 : vector<8x1xi1> to vector<8x1xi1>
      %144 = vector.broadcast %143 : vector<8x1xi1> to vector<8x128xi1>
      %145 = arith.select %144, %127, %142 : vector<8x128xi1>, vector<8x128xf32>
      %c0_86 = arith.constant 0 : index
      %c0_87 = arith.constant 0 : index
      %146 = vector.load %arg15[%c0_86, %c0_87] : memref<8x128xf32, #tpu.memory_space<vmem>>, vector<8x128xf32>
      tpu.vector_store %arg15[%c0_86, %c0_87], %145 {strides = array<i32>} : memref<8x128xf32, #tpu.memory_space<vmem>>, vector<8x128xf32>,
      %c0_88 = arith.constant 0 : index
      %c0_89 = arith.constant 0 : index
      %147 = vector.load %arg16[%c0_88, %c0_89] : memref<8x128xf32, #tpu.memory_space<vmem>>, vector<8x128xf32>
      %148 = vector.shape_cast %131 : vector<8x1xi1> to vector<8x1xi1>
      %149 = vector.broadcast %148 : vector<8x1xi1> to vector<8x128xi1>
      %150 = arith.select %149, %125, %147 : vector<8x128xi1>, vector<8x128xf32>
      %c0_90 = arith.constant 0 : index
      %c0_91 = arith.constant 0 : index
      %151 = vector.load %arg16[%c0_90, %c0_91] : memref<8x128xf32, #tpu.memory_space<vmem>>, vector<8x128xf32>
      tpu.vector_store %arg16[%c0_90, %c0_91], %150 {strides = array<i32>} : memref<8x128xf32, #tpu.memory_space<vmem>>, vector<8x128xf32>,
    } else {
    }
    %c4_i32 = arith.constant 4 : i32
    %35 = arith.cmpi slt, %c4_i32, %0 : i32
    %36 = arith.extui %35 : i1 to i32
    %c0_i32_33 = arith.constant 0 : i32
    %37 = arith.cmpi ne, %36, %c0_i32_33 : i32
    scf.if %37 {
      %c1_i32_51 = arith.constant 1 : i32
      %58 = arith.subi %0, %c1_i32_51 : i32
      %59 = arith.subi %58, %c4_i32 : i32
      %c8_i32_52 = arith.constant 8 : i32
      %60 = arith.muli %c4_i32, %c8_i32_52 : i32
      %61 = tpu.assume_multiple %60, 8 : i32
      %c8_i32_53 = arith.constant 8 : i32
      %62 = arith.muli %59, %c8_i32_53 : i32
      %63 = tpu.assume_multiple %62, 8 : i32
      %64 = arith.index_cast %61 : i32 to index
      %c0_54 = arith.constant 0 : index
      %65 = vector.load %arg17[%64, %c0_54] : memref<64x512xf32, #tpu.memory_space<vmem>>, vector<8x512xf32>
      %c0_55 = arith.constant 0 : index
      %c0_56 = arith.constant 0 : index
      %66 = vector.load %arg13[%c0_55, %c0_56] : memref<8x128xf32, #tpu.memory_space<vmem>>, vector<8x128xf32>
      %c0_57 = arith.constant 0 : index
      %c0_58 = arith.constant 0 : index
      %67 = vector.load %arg4[%c0_57, %c0_58] : memref<128x512xf32, #tpu.memory_space<vmem>>, vector<128x512xf32>
      %cst_59 = arith.constant dense<0.000000e+00> : vector<8x512xf32>
      %68 = tpu.matmul %66, %67, %cst_59 {dimension_numbers = #tpu.dot_dimension_numbers<[1], [0], [0], [1], [0, 0, 1, 1], [], []>} : vector<8x128xf32>, vector<128x512xf32>, vector<8x512xf32> -> vector<8x512xf32>
      %69 = arith.addf %65, %68 : vector<8x512xf32>
      %70 = arith.index_cast %63 : i32 to index
      %c0_60 = arith.constant 0 : index
      %71 = vector.load %arg18[%70, %c0_60] : memref<64x512xf32, #tpu.memory_space<vmem>>, vector<8x512xf32>
      %c0_61 = arith.constant 0 : index
      %c0_62 = arith.constant 0 : index
      %72 = vector.load %arg15[%c0_61, %c0_62] : memref<8x128xf32, #tpu.memory_space<vmem>>, vector<8x128xf32>
      %c0_63 = arith.constant 0 : index
      %c0_64 = arith.constant 0 : index
      %73 = vector.load %arg7[%c0_63, %c0_64] : memref<128x512xf32, #tpu.memory_space<vmem>>, vector<128x512xf32>
      %cst_65 = arith.constant dense<0.000000e+00> : vector<8x512xf32>
      %74 = tpu.matmul %72, %73, %cst_65 {dimension_numbers = #tpu.dot_dimension_numbers<[1], [0], [0], [1], [0, 0, 1, 1], [], []>} : vector<8x128xf32>, vector<128x512xf32>, vector<8x512xf32> -> vector<8x512xf32>
      %75 = arith.addf %71, %74 : vector<8x512xf32>
      %c0_66 = arith.constant 0 : index
      %c0_67 = arith.constant 0 : index
      %76 = vector.load %arg14[%c0_66, %c0_67] : memref<8x128xf32, #tpu.memory_space<vmem>>, vector<8x128xf32>
      %77 = vector.extract_strided_slice %69 {offsets = [0, 0], sizes = [8, 128], strides = [1, 1]} : vector<8x512xf32> to vector<8x128xf32>
      %78 = arith.negf %77 : vector<8x128xf32>
      %79 = math.exp %78 : vector<8x128xf32>
      %cst_68 = arith.constant 1.000000e+00 : f32
      %80 = vector.broadcast %cst_68 : f32 to vector<8x128xf32>
      %81 = arith.addf %80, %79 : vector<8x128xf32>
      %82 = arith.divf %80, %81 : vector<8x128xf32>
      %83 = vector.extract_strided_slice %69 {offsets = [0, 128], sizes = [8, 128], strides = [1, 1]} : vector<8x512xf32> to vector<8x128xf32>
      %84 = arith.negf %83 : vector<8x128xf32>
      %85 = math.exp %84 : vector<8x128xf32>
      %cst_69 = arith.constant 1.000000e+00 : f32
      %86 = vector.broadcast %cst_69 : f32 to vector<8x128xf32>
      %87 = arith.addf %86, %85 : vector<8x128xf32>
      %88 = arith.divf %86, %87 : vector<8x128xf32>
      %89 = vector.extract_strided_slice %69 {offsets = [0, 256], sizes = [8, 128], strides = [1, 1]} : vector<8x512xf32> to vector<8x128xf32>
      %90 = math.tanh %89 : vector<8x128xf32>
      %91 = vector.extract_strided_slice %69 {offsets = [0, 384], sizes = [8, 128], strides = [1, 1]} : vector<8x512xf32> to vector<8x128xf32>
      %92 = arith.negf %91 : vector<8x128xf32>
      %93 = math.exp %92 : vector<8x128xf32>
      %cst_70 = arith.constant 1.000000e+00 : f32
      %94 = vector.broadcast %cst_70 : f32 to vector<8x128xf32>
      %95 = arith.addf %94, %93 : vector<8x128xf32>
      %96 = arith.divf %94, %95 : vector<8x128xf32>
      %97 = arith.mulf %88, %76 : vector<8x128xf32>
      %98 = arith.mulf %82, %90 : vector<8x128xf32>
      %99 = arith.addf %97, %98 : vector<8x128xf32>
      %100 = math.tanh %99 : vector<8x128xf32>
      %101 = arith.mulf %96, %100 : vector<8x128xf32>
      %c0_71 = arith.constant 0 : index
      %c0_72 = arith.constant 0 : index
      %102 = vector.load %arg16[%c0_71, %c0_72] : memref<8x128xf32, #tpu.memory_space<vmem>>, vector<8x128xf32>
      %103 = vector.extract_strided_slice %75 {offsets = [0, 0], sizes = [8, 128], strides = [1, 1]} : vector<8x512xf32> to vector<8x128xf32>
      %104 = arith.negf %103 : vector<8x128xf32>
      %105 = math.exp %104 : vector<8x128xf32>
      %cst_73 = arith.constant 1.000000e+00 : f32
      %106 = vector.broadcast %cst_73 : f32 to vector<8x128xf32>
      %107 = arith.addf %106, %105 : vector<8x128xf32>
      %108 = arith.divf %106, %107 : vector<8x128xf32>
      %109 = vector.extract_strided_slice %75 {offsets = [0, 128], sizes = [8, 128], strides = [1, 1]} : vector<8x512xf32> to vector<8x128xf32>
      %110 = arith.negf %109 : vector<8x128xf32>
      %111 = math.exp %110 : vector<8x128xf32>
      %cst_74 = arith.constant 1.000000e+00 : f32
      %112 = vector.broadcast %cst_74 : f32 to vector<8x128xf32>
      %113 = arith.addf %112, %111 : vector<8x128xf32>
      %114 = arith.divf %112, %113 : vector<8x128xf32>
      %115 = vector.extract_strided_slice %75 {offsets = [0, 256], sizes = [8, 128], strides = [1, 1]} : vector<8x512xf32> to vector<8x128xf32>
      %116 = math.tanh %115 : vector<8x128xf32>
      %117 = vector.extract_strided_slice %75 {offsets = [0, 384], sizes = [8, 128], strides = [1, 1]} : vector<8x512xf32> to vector<8x128xf32>
      %118 = arith.negf %117 : vector<8x128xf32>
      %119 = math.exp %118 : vector<8x128xf32>
      %cst_75 = arith.constant 1.000000e+00 : f32
      %120 = vector.broadcast %cst_75 : f32 to vector<8x128xf32>
      %121 = arith.addf %120, %119 : vector<8x128xf32>
      %122 = arith.divf %120, %121 : vector<8x128xf32>
      %123 = arith.mulf %114, %102 : vector<8x128xf32>
      %124 = arith.mulf %108, %116 : vector<8x128xf32>
      %125 = arith.addf %123, %124 : vector<8x128xf32>
      %126 = math.tanh %125 : vector<8x128xf32>
      %127 = arith.mulf %122, %126 : vector<8x128xf32>
      %128 = vector.broadcast %c4_i32 : i32 to vector<8x1xi32>
      %129 = arith.cmpi sgt, %1, %128 : vector<8x1xi32>
      %130 = vector.broadcast %59 : i32 to vector<8x1xi32>
      %131 = arith.cmpi sgt, %1, %130 : vector<8x1xi32>
      %c0_76 = arith.constant 0 : index
      %c0_77 = arith.constant 0 : index
      %132 = vector.load %arg13[%c0_76, %c0_77] : memref<8x128xf32, #tpu.memory_space<vmem>>, vector<8x128xf32>
      %133 = vector.shape_cast %129 : vector<8x1xi1> to vector<8x1xi1>
      %134 = vector.broadcast %133 : vector<8x1xi1> to vector<8x128xi1>
      %135 = arith.select %134, %101, %132 : vector<8x128xi1>, vector<8x128xf32>
      %c0_78 = arith.constant 0 : index
      %c0_79 = arith.constant 0 : index
      %136 = vector.load %arg13[%c0_78, %c0_79] : memref<8x128xf32, #tpu.memory_space<vmem>>, vector<8x128xf32>
      tpu.vector_store %arg13[%c0_78, %c0_79], %135 {strides = array<i32>} : memref<8x128xf32, #tpu.memory_space<vmem>>, vector<8x128xf32>,
      %c0_80 = arith.constant 0 : index
      %c0_81 = arith.constant 0 : index
      %137 = vector.load %arg14[%c0_80, %c0_81] : memref<8x128xf32, #tpu.memory_space<vmem>>, vector<8x128xf32>
      %138 = vector.shape_cast %129 : vector<8x1xi1> to vector<8x1xi1>
      %139 = vector.broadcast %138 : vector<8x1xi1> to vector<8x128xi1>
      %140 = arith.select %139, %99, %137 : vector<8x128xi1>, vector<8x128xf32>
      %c0_82 = arith.constant 0 : index
      %c0_83 = arith.constant 0 : index
      %141 = vector.load %arg14[%c0_82, %c0_83] : memref<8x128xf32, #tpu.memory_space<vmem>>, vector<8x128xf32>
      tpu.vector_store %arg14[%c0_82, %c0_83], %140 {strides = array<i32>} : memref<8x128xf32, #tpu.memory_space<vmem>>, vector<8x128xf32>,
      %c0_84 = arith.constant 0 : index
      %c0_85 = arith.constant 0 : index
      %142 = vector.load %arg15[%c0_84, %c0_85] : memref<8x128xf32, #tpu.memory_space<vmem>>, vector<8x128xf32>
      %143 = vector.shape_cast %131 : vector<8x1xi1> to vector<8x1xi1>
      %144 = vector.broadcast %143 : vector<8x1xi1> to vector<8x128xi1>
      %145 = arith.select %144, %127, %142 : vector<8x128xi1>, vector<8x128xf32>
      %c0_86 = arith.constant 0 : index
      %c0_87 = arith.constant 0 : index
      %146 = vector.load %arg15[%c0_86, %c0_87] : memref<8x128xf32, #tpu.memory_space<vmem>>, vector<8x128xf32>
      tpu.vector_store %arg15[%c0_86, %c0_87], %145 {strides = array<i32>} : memref<8x128xf32, #tpu.memory_space<vmem>>, vector<8x128xf32>,
      %c0_88 = arith.constant 0 : index
      %c0_89 = arith.constant 0 : index
      %147 = vector.load %arg16[%c0_88, %c0_89] : memref<8x128xf32, #tpu.memory_space<vmem>>, vector<8x128xf32>
      %148 = vector.shape_cast %131 : vector<8x1xi1> to vector<8x1xi1>
      %149 = vector.broadcast %148 : vector<8x1xi1> to vector<8x128xi1>
      %150 = arith.select %149, %125, %147 : vector<8x128xi1>, vector<8x128xf32>
      %c0_90 = arith.constant 0 : index
      %c0_91 = arith.constant 0 : index
      %151 = vector.load %arg16[%c0_90, %c0_91] : memref<8x128xf32, #tpu.memory_space<vmem>>, vector<8x128xf32>
      tpu.vector_store %arg16[%c0_90, %c0_91], %150 {strides = array<i32>} : memref<8x128xf32, #tpu.memory_space<vmem>>, vector<8x128xf32>,
    } else {
    }
    %c5_i32 = arith.constant 5 : i32
    %38 = arith.cmpi slt, %c5_i32, %0 : i32
    %39 = arith.extui %38 : i1 to i32
    %c0_i32_34 = arith.constant 0 : i32
    %40 = arith.cmpi ne, %39, %c0_i32_34 : i32
    scf.if %40 {
      %c1_i32_51 = arith.constant 1 : i32
      %58 = arith.subi %0, %c1_i32_51 : i32
      %59 = arith.subi %58, %c5_i32 : i32
      %c8_i32_52 = arith.constant 8 : i32
      %60 = arith.muli %c5_i32, %c8_i32_52 : i32
      %61 = tpu.assume_multiple %60, 8 : i32
      %c8_i32_53 = arith.constant 8 : i32
      %62 = arith.muli %59, %c8_i32_53 : i32
      %63 = tpu.assume_multiple %62, 8 : i32
      %64 = arith.index_cast %61 : i32 to index
      %c0_54 = arith.constant 0 : index
      %65 = vector.load %arg17[%64, %c0_54] : memref<64x512xf32, #tpu.memory_space<vmem>>, vector<8x512xf32>
      %c0_55 = arith.constant 0 : index
      %c0_56 = arith.constant 0 : index
      %66 = vector.load %arg13[%c0_55, %c0_56] : memref<8x128xf32, #tpu.memory_space<vmem>>, vector<8x128xf32>
      %c0_57 = arith.constant 0 : index
      %c0_58 = arith.constant 0 : index
      %67 = vector.load %arg4[%c0_57, %c0_58] : memref<128x512xf32, #tpu.memory_space<vmem>>, vector<128x512xf32>
      %cst_59 = arith.constant dense<0.000000e+00> : vector<8x512xf32>
      %68 = tpu.matmul %66, %67, %cst_59 {dimension_numbers = #tpu.dot_dimension_numbers<[1], [0], [0], [1], [0, 0, 1, 1], [], []>} : vector<8x128xf32>, vector<128x512xf32>, vector<8x512xf32> -> vector<8x512xf32>
      %69 = arith.addf %65, %68 : vector<8x512xf32>
      %70 = arith.index_cast %63 : i32 to index
      %c0_60 = arith.constant 0 : index
      %71 = vector.load %arg18[%70, %c0_60] : memref<64x512xf32, #tpu.memory_space<vmem>>, vector<8x512xf32>
      %c0_61 = arith.constant 0 : index
      %c0_62 = arith.constant 0 : index
      %72 = vector.load %arg15[%c0_61, %c0_62] : memref<8x128xf32, #tpu.memory_space<vmem>>, vector<8x128xf32>
      %c0_63 = arith.constant 0 : index
      %c0_64 = arith.constant 0 : index
      %73 = vector.load %arg7[%c0_63, %c0_64] : memref<128x512xf32, #tpu.memory_space<vmem>>, vector<128x512xf32>
      %cst_65 = arith.constant dense<0.000000e+00> : vector<8x512xf32>
      %74 = tpu.matmul %72, %73, %cst_65 {dimension_numbers = #tpu.dot_dimension_numbers<[1], [0], [0], [1], [0, 0, 1, 1], [], []>} : vector<8x128xf32>, vector<128x512xf32>, vector<8x512xf32> -> vector<8x512xf32>
      %75 = arith.addf %71, %74 : vector<8x512xf32>
      %c0_66 = arith.constant 0 : index
      %c0_67 = arith.constant 0 : index
      %76 = vector.load %arg14[%c0_66, %c0_67] : memref<8x128xf32, #tpu.memory_space<vmem>>, vector<8x128xf32>
      %77 = vector.extract_strided_slice %69 {offsets = [0, 0], sizes = [8, 128], strides = [1, 1]} : vector<8x512xf32> to vector<8x128xf32>
      %78 = arith.negf %77 : vector<8x128xf32>
      %79 = math.exp %78 : vector<8x128xf32>
      %cst_68 = arith.constant 1.000000e+00 : f32
      %80 = vector.broadcast %cst_68 : f32 to vector<8x128xf32>
      %81 = arith.addf %80, %79 : vector<8x128xf32>
      %82 = arith.divf %80, %81 : vector<8x128xf32>
      %83 = vector.extract_strided_slice %69 {offsets = [0, 128], sizes = [8, 128], strides = [1, 1]} : vector<8x512xf32> to vector<8x128xf32>
      %84 = arith.negf %83 : vector<8x128xf32>
      %85 = math.exp %84 : vector<8x128xf32>
      %cst_69 = arith.constant 1.000000e+00 : f32
      %86 = vector.broadcast %cst_69 : f32 to vector<8x128xf32>
      %87 = arith.addf %86, %85 : vector<8x128xf32>
      %88 = arith.divf %86, %87 : vector<8x128xf32>
      %89 = vector.extract_strided_slice %69 {offsets = [0, 256], sizes = [8, 128], strides = [1, 1]} : vector<8x512xf32> to vector<8x128xf32>
      %90 = math.tanh %89 : vector<8x128xf32>
      %91 = vector.extract_strided_slice %69 {offsets = [0, 384], sizes = [8, 128], strides = [1, 1]} : vector<8x512xf32> to vector<8x128xf32>
      %92 = arith.negf %91 : vector<8x128xf32>
      %93 = math.exp %92 : vector<8x128xf32>
      %cst_70 = arith.constant 1.000000e+00 : f32
      %94 = vector.broadcast %cst_70 : f32 to vector<8x128xf32>
      %95 = arith.addf %94, %93 : vector<8x128xf32>
      %96 = arith.divf %94, %95 : vector<8x128xf32>
      %97 = arith.mulf %88, %76 : vector<8x128xf32>
      %98 = arith.mulf %82, %90 : vector<8x128xf32>
      %99 = arith.addf %97, %98 : vector<8x128xf32>
      %100 = math.tanh %99 : vector<8x128xf32>
      %101 = arith.mulf %96, %100 : vector<8x128xf32>
      %c0_71 = arith.constant 0 : index
      %c0_72 = arith.constant 0 : index
      %102 = vector.load %arg16[%c0_71, %c0_72] : memref<8x128xf32, #tpu.memory_space<vmem>>, vector<8x128xf32>
      %103 = vector.extract_strided_slice %75 {offsets = [0, 0], sizes = [8, 128], strides = [1, 1]} : vector<8x512xf32> to vector<8x128xf32>
      %104 = arith.negf %103 : vector<8x128xf32>
      %105 = math.exp %104 : vector<8x128xf32>
      %cst_73 = arith.constant 1.000000e+00 : f32
      %106 = vector.broadcast %cst_73 : f32 to vector<8x128xf32>
      %107 = arith.addf %106, %105 : vector<8x128xf32>
      %108 = arith.divf %106, %107 : vector<8x128xf32>
      %109 = vector.extract_strided_slice %75 {offsets = [0, 128], sizes = [8, 128], strides = [1, 1]} : vector<8x512xf32> to vector<8x128xf32>
      %110 = arith.negf %109 : vector<8x128xf32>
      %111 = math.exp %110 : vector<8x128xf32>
      %cst_74 = arith.constant 1.000000e+00 : f32
      %112 = vector.broadcast %cst_74 : f32 to vector<8x128xf32>
      %113 = arith.addf %112, %111 : vector<8x128xf32>
      %114 = arith.divf %112, %113 : vector<8x128xf32>
      %115 = vector.extract_strided_slice %75 {offsets = [0, 256], sizes = [8, 128], strides = [1, 1]} : vector<8x512xf32> to vector<8x128xf32>
      %116 = math.tanh %115 : vector<8x128xf32>
      %117 = vector.extract_strided_slice %75 {offsets = [0, 384], sizes = [8, 128], strides = [1, 1]} : vector<8x512xf32> to vector<8x128xf32>
      %118 = arith.negf %117 : vector<8x128xf32>
      %119 = math.exp %118 : vector<8x128xf32>
      %cst_75 = arith.constant 1.000000e+00 : f32
      %120 = vector.broadcast %cst_75 : f32 to vector<8x128xf32>
      %121 = arith.addf %120, %119 : vector<8x128xf32>
      %122 = arith.divf %120, %121 : vector<8x128xf32>
      %123 = arith.mulf %114, %102 : vector<8x128xf32>
      %124 = arith.mulf %108, %116 : vector<8x128xf32>
      %125 = arith.addf %123, %124 : vector<8x128xf32>
      %126 = math.tanh %125 : vector<8x128xf32>
      %127 = arith.mulf %122, %126 : vector<8x128xf32>
      %128 = vector.broadcast %c5_i32 : i32 to vector<8x1xi32>
      %129 = arith.cmpi sgt, %1, %128 : vector<8x1xi32>
      %130 = vector.broadcast %59 : i32 to vector<8x1xi32>
      %131 = arith.cmpi sgt, %1, %130 : vector<8x1xi32>
      %c0_76 = arith.constant 0 : index
      %c0_77 = arith.constant 0 : index
      %132 = vector.load %arg13[%c0_76, %c0_77] : memref<8x128xf32, #tpu.memory_space<vmem>>, vector<8x128xf32>
      %133 = vector.shape_cast %129 : vector<8x1xi1> to vector<8x1xi1>
      %134 = vector.broadcast %133 : vector<8x1xi1> to vector<8x128xi1>
      %135 = arith.select %134, %101, %132 : vector<8x128xi1>, vector<8x128xf32>
      %c0_78 = arith.constant 0 : index
      %c0_79 = arith.constant 0 : index
      %136 = vector.load %arg13[%c0_78, %c0_79] : memref<8x128xf32, #tpu.memory_space<vmem>>, vector<8x128xf32>
      tpu.vector_store %arg13[%c0_78, %c0_79], %135 {strides = array<i32>} : memref<8x128xf32, #tpu.memory_space<vmem>>, vector<8x128xf32>,
      %c0_80 = arith.constant 0 : index
      %c0_81 = arith.constant 0 : index
      %137 = vector.load %arg14[%c0_80, %c0_81] : memref<8x128xf32, #tpu.memory_space<vmem>>, vector<8x128xf32>
      %138 = vector.shape_cast %129 : vector<8x1xi1> to vector<8x1xi1>
      %139 = vector.broadcast %138 : vector<8x1xi1> to vector<8x128xi1>
      %140 = arith.select %139, %99, %137 : vector<8x128xi1>, vector<8x128xf32>
      %c0_82 = arith.constant 0 : index
      %c0_83 = arith.constant 0 : index
      %141 = vector.load %arg14[%c0_82, %c0_83] : memref<8x128xf32, #tpu.memory_space<vmem>>, vector<8x128xf32>
      tpu.vector_store %arg14[%c0_82, %c0_83], %140 {strides = array<i32>} : memref<8x128xf32, #tpu.memory_space<vmem>>, vector<8x128xf32>,
      %c0_84 = arith.constant 0 : index
      %c0_85 = arith.constant 0 : index
      %142 = vector.load %arg15[%c0_84, %c0_85] : memref<8x128xf32, #tpu.memory_space<vmem>>, vector<8x128xf32>
      %143 = vector.shape_cast %131 : vector<8x1xi1> to vector<8x1xi1>
      %144 = vector.broadcast %143 : vector<8x1xi1> to vector<8x128xi1>
      %145 = arith.select %144, %127, %142 : vector<8x128xi1>, vector<8x128xf32>
      %c0_86 = arith.constant 0 : index
      %c0_87 = arith.constant 0 : index
      %146 = vector.load %arg15[%c0_86, %c0_87] : memref<8x128xf32, #tpu.memory_space<vmem>>, vector<8x128xf32>
      tpu.vector_store %arg15[%c0_86, %c0_87], %145 {strides = array<i32>} : memref<8x128xf32, #tpu.memory_space<vmem>>, vector<8x128xf32>,
      %c0_88 = arith.constant 0 : index
      %c0_89 = arith.constant 0 : index
      %147 = vector.load %arg16[%c0_88, %c0_89] : memref<8x128xf32, #tpu.memory_space<vmem>>, vector<8x128xf32>
      %148 = vector.shape_cast %131 : vector<8x1xi1> to vector<8x1xi1>
      %149 = vector.broadcast %148 : vector<8x1xi1> to vector<8x128xi1>
      %150 = arith.select %149, %125, %147 : vector<8x128xi1>, vector<8x128xf32>
      %c0_90 = arith.constant 0 : index
      %c0_91 = arith.constant 0 : index
      %151 = vector.load %arg16[%c0_90, %c0_91] : memref<8x128xf32, #tpu.memory_space<vmem>>, vector<8x128xf32>
      tpu.vector_store %arg16[%c0_90, %c0_91], %150 {strides = array<i32>} : memref<8x128xf32, #tpu.memory_space<vmem>>, vector<8x128xf32>,
    } else {
    }
    %c6_i32 = arith.constant 6 : i32
    %41 = arith.cmpi slt, %c6_i32, %0 : i32
    %42 = arith.extui %41 : i1 to i32
    %c0_i32_35 = arith.constant 0 : i32
    %43 = arith.cmpi ne, %42, %c0_i32_35 : i32
    scf.if %43 {
      %c1_i32_51 = arith.constant 1 : i32
      %58 = arith.subi %0, %c1_i32_51 : i32
      %59 = arith.subi %58, %c6_i32 : i32
      %c8_i32_52 = arith.constant 8 : i32
      %60 = arith.muli %c6_i32, %c8_i32_52 : i32
      %61 = tpu.assume_multiple %60, 8 : i32
      %c8_i32_53 = arith.constant 8 : i32
      %62 = arith.muli %59, %c8_i32_53 : i32
      %63 = tpu.assume_multiple %62, 8 : i32
      %64 = arith.index_cast %61 : i32 to index
      %c0_54 = arith.constant 0 : index
      %65 = vector.load %arg17[%64, %c0_54] : memref<64x512xf32, #tpu.memory_space<vmem>>, vector<8x512xf32>
      %c0_55 = arith.constant 0 : index
      %c0_56 = arith.constant 0 : index
      %66 = vector.load %arg13[%c0_55, %c0_56] : memref<8x128xf32, #tpu.memory_space<vmem>>, vector<8x128xf32>
      %c0_57 = arith.constant 0 : index
      %c0_58 = arith.constant 0 : index
      %67 = vector.load %arg4[%c0_57, %c0_58] : memref<128x512xf32, #tpu.memory_space<vmem>>, vector<128x512xf32>
      %cst_59 = arith.constant dense<0.000000e+00> : vector<8x512xf32>
      %68 = tpu.matmul %66, %67, %cst_59 {dimension_numbers = #tpu.dot_dimension_numbers<[1], [0], [0], [1], [0, 0, 1, 1], [], []>} : vector<8x128xf32>, vector<128x512xf32>, vector<8x512xf32> -> vector<8x512xf32>
      %69 = arith.addf %65, %68 : vector<8x512xf32>
      %70 = arith.index_cast %63 : i32 to index
      %c0_60 = arith.constant 0 : index
      %71 = vector.load %arg18[%70, %c0_60] : memref<64x512xf32, #tpu.memory_space<vmem>>, vector<8x512xf32>
      %c0_61 = arith.constant 0 : index
      %c0_62 = arith.constant 0 : index
      %72 = vector.load %arg15[%c0_61, %c0_62] : memref<8x128xf32, #tpu.memory_space<vmem>>, vector<8x128xf32>
      %c0_63 = arith.constant 0 : index
      %c0_64 = arith.constant 0 : index
      %73 = vector.load %arg7[%c0_63, %c0_64] : memref<128x512xf32, #tpu.memory_space<vmem>>, vector<128x512xf32>
      %cst_65 = arith.constant dense<0.000000e+00> : vector<8x512xf32>
      %74 = tpu.matmul %72, %73, %cst_65 {dimension_numbers = #tpu.dot_dimension_numbers<[1], [0], [0], [1], [0, 0, 1, 1], [], []>} : vector<8x128xf32>, vector<128x512xf32>, vector<8x512xf32> -> vector<8x512xf32>
      %75 = arith.addf %71, %74 : vector<8x512xf32>
      %c0_66 = arith.constant 0 : index
      %c0_67 = arith.constant 0 : index
      %76 = vector.load %arg14[%c0_66, %c0_67] : memref<8x128xf32, #tpu.memory_space<vmem>>, vector<8x128xf32>
      %77 = vector.extract_strided_slice %69 {offsets = [0, 0], sizes = [8, 128], strides = [1, 1]} : vector<8x512xf32> to vector<8x128xf32>
      %78 = arith.negf %77 : vector<8x128xf32>
      %79 = math.exp %78 : vector<8x128xf32>
      %cst_68 = arith.constant 1.000000e+00 : f32
      %80 = vector.broadcast %cst_68 : f32 to vector<8x128xf32>
      %81 = arith.addf %80, %79 : vector<8x128xf32>
      %82 = arith.divf %80, %81 : vector<8x128xf32>
      %83 = vector.extract_strided_slice %69 {offsets = [0, 128], sizes = [8, 128], strides = [1, 1]} : vector<8x512xf32> to vector<8x128xf32>
      %84 = arith.negf %83 : vector<8x128xf32>
      %85 = math.exp %84 : vector<8x128xf32>
      %cst_69 = arith.constant 1.000000e+00 : f32
      %86 = vector.broadcast %cst_69 : f32 to vector<8x128xf32>
      %87 = arith.addf %86, %85 : vector<8x128xf32>
      %88 = arith.divf %86, %87 : vector<8x128xf32>
      %89 = vector.extract_strided_slice %69 {offsets = [0, 256], sizes = [8, 128], strides = [1, 1]} : vector<8x512xf32> to vector<8x128xf32>
      %90 = math.tanh %89 : vector<8x128xf32>
      %91 = vector.extract_strided_slice %69 {offsets = [0, 384], sizes = [8, 128], strides = [1, 1]} : vector<8x512xf32> to vector<8x128xf32>
      %92 = arith.negf %91 : vector<8x128xf32>
      %93 = math.exp %92 : vector<8x128xf32>
      %cst_70 = arith.constant 1.000000e+00 : f32
      %94 = vector.broadcast %cst_70 : f32 to vector<8x128xf32>
      %95 = arith.addf %94, %93 : vector<8x128xf32>
      %96 = arith.divf %94, %95 : vector<8x128xf32>
      %97 = arith.mulf %88, %76 : vector<8x128xf32>
      %98 = arith.mulf %82, %90 : vector<8x128xf32>
      %99 = arith.addf %97, %98 : vector<8x128xf32>
      %100 = math.tanh %99 : vector<8x128xf32>
      %101 = arith.mulf %96, %100 : vector<8x128xf32>
      %c0_71 = arith.constant 0 : index
      %c0_72 = arith.constant 0 : index
      %102 = vector.load %arg16[%c0_71, %c0_72] : memref<8x128xf32, #tpu.memory_space<vmem>>, vector<8x128xf32>
      %103 = vector.extract_strided_slice %75 {offsets = [0, 0], sizes = [8, 128], strides = [1, 1]} : vector<8x512xf32> to vector<8x128xf32>
      %104 = arith.negf %103 : vector<8x128xf32>
      %105 = math.exp %104 : vector<8x128xf32>
      %cst_73 = arith.constant 1.000000e+00 : f32
      %106 = vector.broadcast %cst_73 : f32 to vector<8x128xf32>
      %107 = arith.addf %106, %105 : vector<8x128xf32>
      %108 = arith.divf %106, %107 : vector<8x128xf32>
      %109 = vector.extract_strided_slice %75 {offsets = [0, 128], sizes = [8, 128], strides = [1, 1]} : vector<8x512xf32> to vector<8x128xf32>
      %110 = arith.negf %109 : vector<8x128xf32>
      %111 = math.exp %110 : vector<8x128xf32>
      %cst_74 = arith.constant 1.000000e+00 : f32
      %112 = vector.broadcast %cst_74 : f32 to vector<8x128xf32>
      %113 = arith.addf %112, %111 : vector<8x128xf32>
      %114 = arith.divf %112, %113 : vector<8x128xf32>
      %115 = vector.extract_strided_slice %75 {offsets = [0, 256], sizes = [8, 128], strides = [1, 1]} : vector<8x512xf32> to vector<8x128xf32>
      %116 = math.tanh %115 : vector<8x128xf32>
      %117 = vector.extract_strided_slice %75 {offsets = [0, 384], sizes = [8, 128], strides = [1, 1]} : vector<8x512xf32> to vector<8x128xf32>
      %118 = arith.negf %117 : vector<8x128xf32>
      %119 = math.exp %118 : vector<8x128xf32>
      %cst_75 = arith.constant 1.000000e+00 : f32
      %120 = vector.broadcast %cst_75 : f32 to vector<8x128xf32>
      %121 = arith.addf %120, %119 : vector<8x128xf32>
      %122 = arith.divf %120, %121 : vector<8x128xf32>
      %123 = arith.mulf %114, %102 : vector<8x128xf32>
      %124 = arith.mulf %108, %116 : vector<8x128xf32>
      %125 = arith.addf %123, %124 : vector<8x128xf32>
      %126 = math.tanh %125 : vector<8x128xf32>
      %127 = arith.mulf %122, %126 : vector<8x128xf32>
      %128 = vector.broadcast %c6_i32 : i32 to vector<8x1xi32>
      %129 = arith.cmpi sgt, %1, %128 : vector<8x1xi32>
      %130 = vector.broadcast %59 : i32 to vector<8x1xi32>
      %131 = arith.cmpi sgt, %1, %130 : vector<8x1xi32>
      %c0_76 = arith.constant 0 : index
      %c0_77 = arith.constant 0 : index
      %132 = vector.load %arg13[%c0_76, %c0_77] : memref<8x128xf32, #tpu.memory_space<vmem>>, vector<8x128xf32>
      %133 = vector.shape_cast %129 : vector<8x1xi1> to vector<8x1xi1>
      %134 = vector.broadcast %133 : vector<8x1xi1> to vector<8x128xi1>
      %135 = arith.select %134, %101, %132 : vector<8x128xi1>, vector<8x128xf32>
      %c0_78 = arith.constant 0 : index
      %c0_79 = arith.constant 0 : index
      %136 = vector.load %arg13[%c0_78, %c0_79] : memref<8x128xf32, #tpu.memory_space<vmem>>, vector<8x128xf32>
      tpu.vector_store %arg13[%c0_78, %c0_79], %135 {strides = array<i32>} : memref<8x128xf32, #tpu.memory_space<vmem>>, vector<8x128xf32>,
      %c0_80 = arith.constant 0 : index
      %c0_81 = arith.constant 0 : index
      %137 = vector.load %arg14[%c0_80, %c0_81] : memref<8x128xf32, #tpu.memory_space<vmem>>, vector<8x128xf32>
      %138 = vector.shape_cast %129 : vector<8x1xi1> to vector<8x1xi1>
      %139 = vector.broadcast %138 : vector<8x1xi1> to vector<8x128xi1>
      %140 = arith.select %139, %99, %137 : vector<8x128xi1>, vector<8x128xf32>
      %c0_82 = arith.constant 0 : index
      %c0_83 = arith.constant 0 : index
      %141 = vector.load %arg14[%c0_82, %c0_83] : memref<8x128xf32, #tpu.memory_space<vmem>>, vector<8x128xf32>
      tpu.vector_store %arg14[%c0_82, %c0_83], %140 {strides = array<i32>} : memref<8x128xf32, #tpu.memory_space<vmem>>, vector<8x128xf32>,
      %c0_84 = arith.constant 0 : index
      %c0_85 = arith.constant 0 : index
      %142 = vector.load %arg15[%c0_84, %c0_85] : memref<8x128xf32, #tpu.memory_space<vmem>>, vector<8x128xf32>
      %143 = vector.shape_cast %131 : vector<8x1xi1> to vector<8x1xi1>
      %144 = vector.broadcast %143 : vector<8x1xi1> to vector<8x128xi1>
      %145 = arith.select %144, %127, %142 : vector<8x128xi1>, vector<8x128xf32>
      %c0_86 = arith.constant 0 : index
      %c0_87 = arith.constant 0 : index
      %146 = vector.load %arg15[%c0_86, %c0_87] : memref<8x128xf32, #tpu.memory_space<vmem>>, vector<8x128xf32>
      tpu.vector_store %arg15[%c0_86, %c0_87], %145 {strides = array<i32>} : memref<8x128xf32, #tpu.memory_space<vmem>>, vector<8x128xf32>,
      %c0_88 = arith.constant 0 : index
      %c0_89 = arith.constant 0 : index
      %147 = vector.load %arg16[%c0_88, %c0_89] : memref<8x128xf32, #tpu.memory_space<vmem>>, vector<8x128xf32>
      %148 = vector.shape_cast %131 : vector<8x1xi1> to vector<8x1xi1>
      %149 = vector.broadcast %148 : vector<8x1xi1> to vector<8x128xi1>
      %150 = arith.select %149, %125, %147 : vector<8x128xi1>, vector<8x128xf32>
      %c0_90 = arith.constant 0 : index
      %c0_91 = arith.constant 0 : index
      %151 = vector.load %arg16[%c0_90, %c0_91] : memref<8x128xf32, #tpu.memory_space<vmem>>, vector<8x128xf32>
      tpu.vector_store %arg16[%c0_90, %c0_91], %150 {strides = array<i32>} : memref<8x128xf32, #tpu.memory_space<vmem>>, vector<8x128xf32>,
    } else {
    }
    %c7_i32 = arith.constant 7 : i32
    %44 = arith.cmpi slt, %c7_i32, %0 : i32
    %45 = arith.extui %44 : i1 to i32
    %c0_i32_36 = arith.constant 0 : i32
    %46 = arith.cmpi ne, %45, %c0_i32_36 : i32
    scf.if %46 {
      %c1_i32_51 = arith.constant 1 : i32
      %58 = arith.subi %0, %c1_i32_51 : i32
      %59 = arith.subi %58, %c7_i32 : i32
      %c8_i32_52 = arith.constant 8 : i32
      %60 = arith.muli %c7_i32, %c8_i32_52 : i32
      %61 = tpu.assume_multiple %60, 8 : i32
      %c8_i32_53 = arith.constant 8 : i32
      %62 = arith.muli %59, %c8_i32_53 : i32
      %63 = tpu.assume_multiple %62, 8 : i32
      %64 = arith.index_cast %61 : i32 to index
      %c0_54 = arith.constant 0 : index
      %65 = vector.load %arg17[%64, %c0_54] : memref<64x512xf32, #tpu.memory_space<vmem>>, vector<8x512xf32>
      %c0_55 = arith.constant 0 : index
      %c0_56 = arith.constant 0 : index
      %66 = vector.load %arg13[%c0_55, %c0_56] : memref<8x128xf32, #tpu.memory_space<vmem>>, vector<8x128xf32>
      %c0_57 = arith.constant 0 : index
      %c0_58 = arith.constant 0 : index
      %67 = vector.load %arg4[%c0_57, %c0_58] : memref<128x512xf32, #tpu.memory_space<vmem>>, vector<128x512xf32>
      %cst_59 = arith.constant dense<0.000000e+00> : vector<8x512xf32>
      %68 = tpu.matmul %66, %67, %cst_59 {dimension_numbers = #tpu.dot_dimension_numbers<[1], [0], [0], [1], [0, 0, 1, 1], [], []>} : vector<8x128xf32>, vector<128x512xf32>, vector<8x512xf32> -> vector<8x512xf32>
      %69 = arith.addf %65, %68 : vector<8x512xf32>
      %70 = arith.index_cast %63 : i32 to index
      %c0_60 = arith.constant 0 : index
      %71 = vector.load %arg18[%70, %c0_60] : memref<64x512xf32, #tpu.memory_space<vmem>>, vector<8x512xf32>
      %c0_61 = arith.constant 0 : index
      %c0_62 = arith.constant 0 : index
      %72 = vector.load %arg15[%c0_61, %c0_62] : memref<8x128xf32, #tpu.memory_space<vmem>>, vector<8x128xf32>
      %c0_63 = arith.constant 0 : index
      %c0_64 = arith.constant 0 : index
      %73 = vector.load %arg7[%c0_63, %c0_64] : memref<128x512xf32, #tpu.memory_space<vmem>>, vector<128x512xf32>
      %cst_65 = arith.constant dense<0.000000e+00> : vector<8x512xf32>
      %74 = tpu.matmul %72, %73, %cst_65 {dimension_numbers = #tpu.dot_dimension_numbers<[1], [0], [0], [1], [0, 0, 1, 1], [], []>} : vector<8x128xf32>, vector<128x512xf32>, vector<8x512xf32> -> vector<8x512xf32>
      %75 = arith.addf %71, %74 : vector<8x512xf32>
      %c0_66 = arith.constant 0 : index
      %c0_67 = arith.constant 0 : index
      %76 = vector.load %arg14[%c0_66, %c0_67] : memref<8x128xf32, #tpu.memory_space<vmem>>, vector<8x128xf32>
      %77 = vector.extract_strided_slice %69 {offsets = [0, 0], sizes = [8, 128], strides = [1, 1]} : vector<8x512xf32> to vector<8x128xf32>
      %78 = arith.negf %77 : vector<8x128xf32>
      %79 = math.exp %78 : vector<8x128xf32>
      %cst_68 = arith.constant 1.000000e+00 : f32
      %80 = vector.broadcast %cst_68 : f32 to vector<8x128xf32>
      %81 = arith.addf %80, %79 : vector<8x128xf32>
      %82 = arith.divf %80, %81 : vector<8x128xf32>
      %83 = vector.extract_strided_slice %69 {offsets = [0, 128], sizes = [8, 128], strides = [1, 1]} : vector<8x512xf32> to vector<8x128xf32>
      %84 = arith.negf %83 : vector<8x128xf32>
      %85 = math.exp %84 : vector<8x128xf32>
      %cst_69 = arith.constant 1.000000e+00 : f32
      %86 = vector.broadcast %cst_69 : f32 to vector<8x128xf32>
      %87 = arith.addf %86, %85 : vector<8x128xf32>
      %88 = arith.divf %86, %87 : vector<8x128xf32>
      %89 = vector.extract_strided_slice %69 {offsets = [0, 256], sizes = [8, 128], strides = [1, 1]} : vector<8x512xf32> to vector<8x128xf32>
      %90 = math.tanh %89 : vector<8x128xf32>
      %91 = vector.extract_strided_slice %69 {offsets = [0, 384], sizes = [8, 128], strides = [1, 1]} : vector<8x512xf32> to vector<8x128xf32>
      %92 = arith.negf %91 : vector<8x128xf32>
      %93 = math.exp %92 : vector<8x128xf32>
      %cst_70 = arith.constant 1.000000e+00 : f32
      %94 = vector.broadcast %cst_70 : f32 to vector<8x128xf32>
      %95 = arith.addf %94, %93 : vector<8x128xf32>
      %96 = arith.divf %94, %95 : vector<8x128xf32>
      %97 = arith.mulf %88, %76 : vector<8x128xf32>
      %98 = arith.mulf %82, %90 : vector<8x128xf32>
      %99 = arith.addf %97, %98 : vector<8x128xf32>
      %100 = math.tanh %99 : vector<8x128xf32>
      %101 = arith.mulf %96, %100 : vector<8x128xf32>
      %c0_71 = arith.constant 0 : index
      %c0_72 = arith.constant 0 : index
      %102 = vector.load %arg16[%c0_71, %c0_72] : memref<8x128xf32, #tpu.memory_space<vmem>>, vector<8x128xf32>
      %103 = vector.extract_strided_slice %75 {offsets = [0, 0], sizes = [8, 128], strides = [1, 1]} : vector<8x512xf32> to vector<8x128xf32>
      %104 = arith.negf %103 : vector<8x128xf32>
      %105 = math.exp %104 : vector<8x128xf32>
      %cst_73 = arith.constant 1.000000e+00 : f32
      %106 = vector.broadcast %cst_73 : f32 to vector<8x128xf32>
      %107 = arith.addf %106, %105 : vector<8x128xf32>
      %108 = arith.divf %106, %107 : vector<8x128xf32>
      %109 = vector.extract_strided_slice %75 {offsets = [0, 128], sizes = [8, 128], strides = [1, 1]} : vector<8x512xf32> to vector<8x128xf32>
      %110 = arith.negf %109 : vector<8x128xf32>
      %111 = math.exp %110 : vector<8x128xf32>
      %cst_74 = arith.constant 1.000000e+00 : f32
      %112 = vector.broadcast %cst_74 : f32 to vector<8x128xf32>
      %113 = arith.addf %112, %111 : vector<8x128xf32>
      %114 = arith.divf %112, %113 : vector<8x128xf32>
      %115 = vector.extract_strided_slice %75 {offsets = [0, 256], sizes = [8, 128], strides = [1, 1]} : vector<8x512xf32> to vector<8x128xf32>
      %116 = math.tanh %115 : vector<8x128xf32>
      %117 = vector.extract_strided_slice %75 {offsets = [0, 384], sizes = [8, 128], strides = [1, 1]} : vector<8x512xf32> to vector<8x128xf32>
      %118 = arith.negf %117 : vector<8x128xf32>
      %119 = math.exp %118 : vector<8x128xf32>
      %cst_75 = arith.constant 1.000000e+00 : f32
      %120 = vector.broadcast %cst_75 : f32 to vector<8x128xf32>
      %121 = arith.addf %120, %119 : vector<8x128xf32>
      %122 = arith.divf %120, %121 : vector<8x128xf32>
      %123 = arith.mulf %114, %102 : vector<8x128xf32>
      %124 = arith.mulf %108, %116 : vector<8x128xf32>
      %125 = arith.addf %123, %124 : vector<8x128xf32>
      %126 = math.tanh %125 : vector<8x128xf32>
      %127 = arith.mulf %122, %126 : vector<8x128xf32>
      %128 = vector.broadcast %c7_i32 : i32 to vector<8x1xi32>
      %129 = arith.cmpi sgt, %1, %128 : vector<8x1xi32>
      %130 = vector.broadcast %59 : i32 to vector<8x1xi32>
      %131 = arith.cmpi sgt, %1, %130 : vector<8x1xi32>
      %c0_76 = arith.constant 0 : index
      %c0_77 = arith.constant 0 : index
      %132 = vector.load %arg13[%c0_76, %c0_77] : memref<8x128xf32, #tpu.memory_space<vmem>>, vector<8x128xf32>
      %133 = vector.shape_cast %129 : vector<8x1xi1> to vector<8x1xi1>
      %134 = vector.broadcast %133 : vector<8x1xi1> to vector<8x128xi1>
      %135 = arith.select %134, %101, %132 : vector<8x128xi1>, vector<8x128xf32>
      %c0_78 = arith.constant 0 : index
      %c0_79 = arith.constant 0 : index
      %136 = vector.load %arg13[%c0_78, %c0_79] : memref<8x128xf32, #tpu.memory_space<vmem>>, vector<8x128xf32>
      tpu.vector_store %arg13[%c0_78, %c0_79], %135 {strides = array<i32>} : memref<8x128xf32, #tpu.memory_space<vmem>>, vector<8x128xf32>,
      %c0_80 = arith.constant 0 : index
      %c0_81 = arith.constant 0 : index
      %137 = vector.load %arg14[%c0_80, %c0_81] : memref<8x128xf32, #tpu.memory_space<vmem>>, vector<8x128xf32>
      %138 = vector.shape_cast %129 : vector<8x1xi1> to vector<8x1xi1>
      %139 = vector.broadcast %138 : vector<8x1xi1> to vector<8x128xi1>
      %140 = arith.select %139, %99, %137 : vector<8x128xi1>, vector<8x128xf32>
      %c0_82 = arith.constant 0 : index
      %c0_83 = arith.constant 0 : index
      %141 = vector.load %arg14[%c0_82, %c0_83] : memref<8x128xf32, #tpu.memory_space<vmem>>, vector<8x128xf32>
      tpu.vector_store %arg14[%c0_82, %c0_83], %140 {strides = array<i32>} : memref<8x128xf32, #tpu.memory_space<vmem>>, vector<8x128xf32>,
      %c0_84 = arith.constant 0 : index
      %c0_85 = arith.constant 0 : index
      %142 = vector.load %arg15[%c0_84, %c0_85] : memref<8x128xf32, #tpu.memory_space<vmem>>, vector<8x128xf32>
      %143 = vector.shape_cast %131 : vector<8x1xi1> to vector<8x1xi1>
      %144 = vector.broadcast %143 : vector<8x1xi1> to vector<8x128xi1>
      %145 = arith.select %144, %127, %142 : vector<8x128xi1>, vector<8x128xf32>
      %c0_86 = arith.constant 0 : index
      %c0_87 = arith.constant 0 : index
      %146 = vector.load %arg15[%c0_86, %c0_87] : memref<8x128xf32, #tpu.memory_space<vmem>>, vector<8x128xf32>
      tpu.vector_store %arg15[%c0_86, %c0_87], %145 {strides = array<i32>} : memref<8x128xf32, #tpu.memory_space<vmem>>, vector<8x128xf32>,
      %c0_88 = arith.constant 0 : index
      %c0_89 = arith.constant 0 : index
      %147 = vector.load %arg16[%c0_88, %c0_89] : memref<8x128xf32, #tpu.memory_space<vmem>>, vector<8x128xf32>
      %148 = vector.shape_cast %131 : vector<8x1xi1> to vector<8x1xi1>
      %149 = vector.broadcast %148 : vector<8x1xi1> to vector<8x128xi1>
      %150 = arith.select %149, %125, %147 : vector<8x128xi1>, vector<8x128xf32>
      %c0_90 = arith.constant 0 : index
      %c0_91 = arith.constant 0 : index
      %151 = vector.load %arg16[%c0_90, %c0_91] : memref<8x128xf32, #tpu.memory_space<vmem>>, vector<8x128xf32>
      tpu.vector_store %arg16[%c0_90, %c0_91], %150 {strides = array<i32>} : memref<8x128xf32, #tpu.memory_space<vmem>>, vector<8x128xf32>,
    } else {
    }
    %c8_i32 = arith.constant 8 : i32
    %c0_37 = arith.constant 0 : index
    %c0_38 = arith.constant 0 : index
    %47 = vector.load %arg13[%c0_37, %c0_38] : memref<8x128xf32, #tpu.memory_space<vmem>>, vector<8x128xf32>
    %c0_39 = arith.constant 0 : index
    %c0_40 = arith.constant 0 : index
    %48 = vector.load %arg9[%c0_39, %c0_40] : memref<128x128xf32, #tpu.memory_space<vmem>>, vector<128x128xf32>
    %cst_41 = arith.constant dense<0.000000e+00> : vector<8x128xf32>
    %49 = tpu.matmul %47, %48, %cst_41 {dimension_numbers = #tpu.dot_dimension_numbers<[1], [0], [0], [1], [0, 0, 1, 1], [], []>} : vector<8x128xf32>, vector<128x128xf32>, vector<8x128xf32> -> vector<8x128xf32>
    %c0_42 = arith.constant 0 : index
    %c0_43 = arith.constant 0 : index
    %50 = vector.load %arg15[%c0_42, %c0_43] : memref<8x128xf32, #tpu.memory_space<vmem>>, vector<8x128xf32>
    %c0_44 = arith.constant 0 : index
    %c0_45 = arith.constant 0 : index
    %51 = vector.load %arg10[%c0_44, %c0_45] : memref<128x128xf32, #tpu.memory_space<vmem>>, vector<128x128xf32>
    %cst_46 = arith.constant dense<0.000000e+00> : vector<8x128xf32>
    %52 = tpu.matmul %50, %51, %cst_46 {dimension_numbers = #tpu.dot_dimension_numbers<[1], [0], [0], [1], [0, 0, 1, 1], [], []>} : vector<8x128xf32>, vector<128x128xf32>, vector<8x128xf32> -> vector<8x128xf32>
    %53 = arith.addf %49, %52 : vector<8x128xf32>
    %c0_47 = arith.constant 0 : index
    %c0_48 = arith.constant 0 : index
    %54 = vector.load %arg11[%c0_47, %c0_48] : memref<1x128xf32, #tpu.memory_space<vmem>>, vector<1x128xf32>
    %55 = vector.broadcast %54 : vector<1x128xf32> to vector<8x128xf32>
    %56 = arith.addf %53, %55 : vector<8x128xf32>
    %c0_49 = arith.constant 0 : index
    %c0_50 = arith.constant 0 : index
    %57 = vector.load %arg12[%c0_49, %c0_50] : memref<8x128xf32, #tpu.memory_space<vmem>>, vector<8x128xf32>
    tpu.vector_store %arg12[%c0_49, %c0_50], %56 {strides = array<i32>} : memref<8x128xf32, #tpu.memory_space<vmem>>, vector<8x128xf32>,
    return
  }
}

</mosaic_0001>

<llo_original>
// kernel: tpu_custom_call.1
$region0: #{tpu_custom_call.1}
  #allocation0 [shape = 'u32[]', space=smem, size = 0x4, offset = 0x4, fixed_abs, tag = 'smem constant byte address 0x4 - core index']
  #allocation1 [shape = 'u32[144,128]{1,0:T(1,128)}', space=vmem, size = 0x12000, scoped, tag = 'internal scratch']
  #allocation2 [shape = 'f32[8,128]{1,0:T(8,128)}', space=vmem, size = 0x1000, scoped, tag = 'scratch operand']
  #allocation3 [shape = 'f32[8,128]{1,0:T(8,128)}', space=vmem, size = 0x1000, scoped, tag = 'scratch operand']
  #allocation4 [shape = 'f32[8,128]{1,0:T(8,128)}', space=vmem, size = 0x1000, scoped, tag = 'scratch operand']
  #allocation5 [shape = 'f32[8,128]{1,0:T(8,128)}', space=vmem, size = 0x1000, scoped, tag = 'scratch operand']
  #allocation6 [shape = 'f32[64,512]{1,0:T(8,128)}', space=vmem, size = 0x20000, scoped, tag = 'scratch operand']
  #allocation7 [shape = 'f32[64,512]{1,0:T(8,128)}', space=vmem, size = 0x20000, scoped, tag = 'scratch operand']
  #allocation8 [shape = 's32[1]{0:T(128)S(6)}', space=smem, size = 0x200, scoped, tag = 'scoped memory for tpu_custom_call.1']
  %s0 = inlined_call_operand.<no memory space> [shape: s32[1], index: 0, kind: input, shape index: {}]
  %s1 = inlined_call_operand.hbm [shape: s32[8,1], index: 1, kind: input, shape index: {}]
  %s2 = inlined_call_operand.hbm [shape: f32[64,16], index: 2, kind: input, shape index: {}]
  %s3 = inlined_call_operand.hbm [shape: f32[16,512], index: 3, kind: input, shape index: {}]
  %s4 = inlined_call_operand.hbm [shape: f32[128,512], index: 4, kind: input, shape index: {}]
  %s5 = inlined_call_operand.hbm [shape: f32[1,512], index: 5, kind: input, shape index: {}]
  %s6 = inlined_call_operand.hbm [shape: f32[16,512], index: 6, kind: input, shape index: {}]
  %s7 = inlined_call_operand.hbm [shape: f32[128,512], index: 7, kind: input, shape index: {}]
  %s8 = inlined_call_operand.hbm [shape: f32[1,512], index: 8, kind: input, shape index: {}]
  %s9 = inlined_call_operand.hbm [shape: f32[128,128], index: 9, kind: input, shape index: {}]
  %s10 = inlined_call_operand.hbm [shape: f32[128,128], index: 10, kind: input, shape index: {}]
  %s11 = inlined_call_operand.hbm [shape: f32[1,128], index: 11, kind: input, shape index: {}]
  %s12 = inlined_call_operand.hbm [shape: f32[8,128], index: 12, kind: output, shape index: {}]
  %s13 = sld [smem:[#allocation0]]
  $region134: #{tpu_custom_call.1} parent=0
    _
  %s15 = ssub.s32 1, %s13
  %s16 = scalar_select 0, %s15, %s13
  %17 = sst [smem:[#allocation8]] %s0
  $region1: #{tpu_custom_call.1} parent=0
    #allocation9 [shape = 'u8[4096]{0}', space=vmem, size = 0x1000, scoped, tag = 'input window, operand 1, single buffered']
    #allocation10 [shape = 's32[1]{0}', space=sflag, size = 0x4, scoped, tag = 'scoped memory for tpu_custom_call.1']
    #allocation11 [shape = 's32[1]{0}', space=sflag, size = 0x4, scoped, tag = 'scoped memory for tpu_custom_call.1']
    #allocation12 [shape = 'u8[32768]{0}', space=vmem, size = 0x8000, scoped, tag = 'input window, operand 2, single buffered']
    #allocation13 [shape = 's32[1]{0}', space=sflag, size = 0x4, scoped, tag = 'scoped memory for tpu_custom_call.1']
    #allocation14 [shape = 'u8[32768]{0}', space=vmem, size = 0x8000, scoped, tag = 'input window, operand 3, single buffered']
    #allocation15 [shape = 'u8[262144]{0}', space=vmem, size = 0x40000, scoped, tag = 'input window, operand 4, single buffered']
    #allocation16 [shape = 's32[1]{0}', space=sflag, size = 0x4, scoped, tag = 'scoped memory for tpu_custom_call.1']
    #allocation17 [shape = 'u8[2048]{0}', space=vmem, size = 0x800, scoped, tag = 'input window, operand 5, single buffered']
    #allocation18 [shape = 'u8[32768]{0}', space=vmem, size = 0x8000, scoped, tag = 'input window, operand 6, single buffered']
    #allocation19 [shape = 's32[1]{0}', space=sflag, size = 0x4, scoped, tag = 'scoped memory for tpu_custom_call.1']
    #allocation20 [shape = 'u8[262144]{0}', space=vmem, size = 0x40000, scoped, tag = 'input window, operand 7, single buffered']
    #allocation21 [shape = 'u8[2048]{0}', space=vmem, size = 0x800, scoped, tag = 'input window, operand 8, single buffered']
    #allocation22 [shape = 's32[1]{0}', space=sflag, size = 0x4, scoped, tag = 'scoped memory for tpu_custom_call.1']
    #allocation23 [shape = 'u8[65536]{0}', space=vmem, size = 0x10000, scoped, tag = 'input window, operand 9, single buffered']
    #allocation24 [shape = 'u8[65536]{0}', space=vmem, size = 0x10000, scoped, tag = 'input window, operand 10, single buffered']
    #allocation25 [shape = 's32[1]{0}', space=sflag, size = 0x4, scoped, tag = 'scoped memory for tpu_custom_call.1']
    #allocation26 [shape = 'u8[512]{0}', space=vmem, size = 0x400, scoped, tag = 'input window, operand 11, single buffered']
    #allocation27 [shape = 'u8[4096]{0}', space=vmem, size = 0x1000, scoped, tag = 'output window, operand 0, single buffered']
    %18 = vsyncpa [#allocation10], 0
    %19 = vsyncpa [#allocation13], 0
    %20 = vsyncpa [#allocation16], 0
    %21 = vsyncpa [#allocation19], 0
    %22 = vsyncpa [#allocation22], 0
    %23 = vsyncpa [#allocation25], 0
    %24 = vsyncpa [#allocation11], 0
    // Predicated region
    $region2: #{tpu_custom_call.1} parent=1 // pred_check
      _
    $region3: #{tpu_custom_call.1} parent=1 // pred_check_branch
      %26 = sbr.rel (0) target = $region5
    $region4: #{tpu_custom_call.1} parent=1 // pred_region
      _
    $region5: #{tpu_custom_call.1} parent=1 // pred_fallthru
      _
    // Predicated region
    $region6: #{tpu_custom_call.1} parent=1 // pred_check
      _
    $region7: #{tpu_custom_call.1} parent=1 // pred_check_branch
      %28 = sbr.rel (0) target = $region9
    $region8: #{tpu_custom_call.1} parent=1 // pred_region
      %s30 = ssub.s32 128, 128
      %31 = vsyncadd [#allocation10], %s30
      %s33 = sshll.u32 [#allocation9], 4
      %s34 = int_to_ptr.vmem [resolvable:$true] %s33
      %36 = dma.hbm_to_vmem [thread:$0]  %s1, 128, %s34, [#allocation10]
    $region9: #{tpu_custom_call.1} parent=1 // pred_fallthru
      _
    // Predicated region
    $region10: #{tpu_custom_call.1} parent=1 // pred_check
      _
    $region11: #{tpu_custom_call.1} parent=1 // pred_check_branch
      %38 = sbr.rel (0) target = $region13
    $region12: #{tpu_custom_call.1} parent=1 // pred_region
      %s40 = ssub.s32 1024, 1024
      %41 = vsyncadd [#allocation13], %s40
      %s42 = sshll.u32 [#allocation12], 4
      %s43 = int_to_ptr.vmem [resolvable:$true] %s42
      %48 = dma.hbm_to_vmem [thread:$0]  %s2, 1024, %s43, [#allocation13], 128, 128, 8
    $region13: #{tpu_custom_call.1} parent=1 // pred_fallthru
      _
    // Predicated region
    $region14: #{tpu_custom_call.1} parent=1 // pred_check
      _
    $region15: #{tpu_custom_call.1} parent=1 // pred_check_branch
      %50 = sbr.rel (0) target = $region17
    $region16: #{tpu_custom_call.1} parent=1 // pred_region
      %s52 = ssub.s32 1024, 1024
      %53 = vsyncadd [#allocation13], %s52
      %s54 = sshll.u32 [#allocation14], 4
      %s55 = int_to_ptr.vmem [resolvable:$true] %s54
      %60 = dma.hbm_to_vmem [thread:$0]  %s3, 1024, %s55, [#allocation13], 512, 512, 32
    $region17: #{tpu_custom_call.1} parent=1 // pred_fallthru
      _
    // Predicated region
    $region18: #{tpu_custom_call.1} parent=1 // pred_check
      _
    $region19: #{tpu_custom_call.1} parent=1 // pred_check_branch
      %62 = sbr.rel (0) target = $region21
    $region20: #{tpu_custom_call.1} parent=1 // pred_region
      %s64 = ssub.s32 8192, 8192
      %65 = vsyncadd [#allocation16], %s64
      %s66 = sshll.u32 [#allocation15], 4
      %s67 = int_to_ptr.vmem [resolvable:$true] %s66
      %72 = dma.hbm_to_vmem [thread:$0]  %s4, 8192, %s67, [#allocation16], 512, 512, 32
    $region21: #{tpu_custom_call.1} parent=1 // pred_fallthru
      _
    // Predicated region
    $region22: #{tpu_custom_call.1} parent=1 // pred_check
      _
    $region23: #{tpu_custom_call.1} parent=1 // pred_check_branch
      %74 = sbr.rel (0) target = $region25
    $region24: #{tpu_custom_call.1} parent=1 // pred_region
      %s76 = ssub.s32 64, 64
      %77 = vsyncadd [#allocation16], %s76
      %s79 = sshll.u32 [#allocation17], 4
      %s80 = int_to_ptr.vmem [resolvable:$true] %s79
      %82 = dma.hbm_to_vmem [thread:$0]  %s5, 64, %s80, [#allocation16]
    $region25: #{tpu_custom_call.1} parent=1 // pred_fallthru
      _
    // Predicated region
    $region26: #{tpu_custom_call.1} parent=1 // pred_check
      _
    $region27: #{tpu_custom_call.1} parent=1 // pred_check_branch
      %84 = sbr.rel (0) target = $region29
    $region28: #{tpu_custom_call.1} parent=1 // pred_region
      %s86 = ssub.s32 1024, 1024
      %87 = vsyncadd [#allocation19], %s86
      %s88 = sshll.u32 [#allocation18], 4
      %s89 = int_to_ptr.vmem [resolvable:$true] %s88
      %94 = dma.hbm_to_vmem [thread:$0]  %s6, 1024, %s89, [#allocation19], 512, 512, 32
    $region29: #{tpu_custom_call.1} parent=1 // pred_fallthru
      _
    // Predicated region
    $region30: #{tpu_custom_call.1} parent=1 // pred_check
      _
    $region31: #{tpu_custom_call.1} parent=1 // pred_check_branch
      %96 = sbr.rel (0) target = $region33
    $region32: #{tpu_custom_call.1} parent=1 // pred_region
      %s98 = ssub.s32 8192, 8192
      %99 = vsyncadd [#allocation19], %s98
      %s100 = sshll.u32 [#allocation20], 4
      %s101 = int_to_ptr.vmem [resolvable:$true] %s100
      %106 = dma.hbm_to_vmem [thread:$0]  %s7, 8192, %s101, [#allocation19], 512, 512, 32
    $region33: #{tpu_custom_call.1} parent=1 // pred_fallthru
      _
    // Predicated region
    $region34: #{tpu_custom_call.1} parent=1 // pred_check
      _
    $region35: #{tpu_custom_call.1} parent=1 // pred_check_branch
      %108 = sbr.rel (0) target = $region37
    $region36: #{tpu_custom_call.1} parent=1 // pred_region
      %s110 = ssub.s32 64, 64
      %111 = vsyncadd [#allocation22], %s110
      %s113 = sshll.u32 [#allocation21], 4
      %s114 = int_to_ptr.vmem [resolvable:$true] %s113
      %116 = dma.hbm_to_vmem [thread:$0]  %s8, 64, %s114, [#allocation22]
    $region37: #{tpu_custom_call.1} parent=1 // pred_fallthru
      _
    // Predicated region
    $region38: #{tpu_custom_call.1} parent=1 // pred_check
      _
    $region39: #{tpu_custom_call.1} parent=1 // pred_check_branch
      %118 = sbr.rel (0) target = $region41
    $region40: #{tpu_custom_call.1} parent=1 // pred_region
      %s120 = ssub.s32 2048, 2048
      %121 = vsyncadd [#allocation22], %s120
      %s122 = sshll.u32 [#allocation23], 4
      %s123 = int_to_ptr.vmem [resolvable:$true] %s122
      %128 = dma.hbm_to_vmem [thread:$0]  %s9, 2048, %s123, [#allocation22], 128, 128, 8
    $region41: #{tpu_custom_call.1} parent=1 // pred_fallthru
      _
    // Predicated region
    $region42: #{tpu_custom_call.1} parent=1 // pred_check
      _
    $region43: #{tpu_custom_call.1} parent=1 // pred_check_branch
      %130 = sbr.rel (0) target = $region45
    $region44: #{tpu_custom_call.1} parent=1 // pred_region
      %s132 = ssub.s32 2048, 2048
      %133 = vsyncadd [#allocation25], %s132
      %s134 = sshll.u32 [#allocation24], 4
      %s135 = int_to_ptr.vmem [resolvable:$true] %s134
      %140 = dma.hbm_to_vmem [thread:$0]  %s10, 2048, %s135, [#allocation25], 128, 128, 8
    $region45: #{tpu_custom_call.1} parent=1 // pred_fallthru
      _
    // Predicated region
    $region46: #{tpu_custom_call.1} parent=1 // pred_check
      _
    $region47: #{tpu_custom_call.1} parent=1 // pred_check_branch
      %142 = sbr.rel (0) target = $region49
    $region48: #{tpu_custom_call.1} parent=1 // pred_region
      %s144 = ssub.s32 16, 16
      %145 = vsyncadd [#allocation25], %s144
      %s147 = sshll.u32 [#allocation26], 4
      %s148 = int_to_ptr.vmem [resolvable:$true] %s147
      %150 = dma.hbm_to_vmem [thread:$0]  %s11, 16, %s148, [#allocation25]
    $region49: #{tpu_custom_call.1} parent=1 // pred_fallthru
      _
    // Predicated region
    $region50: #{tpu_custom_call.1} parent=1 // pred_check
      _
    $region51: #{tpu_custom_call.1} parent=1 // pred_check_branch
      %152 = sbr.rel (0) target = $region53
    $region52: #{tpu_custom_call.1} parent=1 // pred_region
      %153 = dma.done [#allocation10], 128
    $region53: #{tpu_custom_call.1} parent=1 // pred_fallthru
      _
    // Predicated region
    $region54: #{tpu_custom_call.1} parent=1 // pred_check
      _
    $region55: #{tpu_custom_call.1} parent=1 // pred_check_branch
      %155 = sbr.rel (0) target = $region57
    $region56: #{tpu_custom_call.1} parent=1 // pred_region
      %156 = dma.done [#allocation13], 1024
    $region57: #{tpu_custom_call.1} parent=1 // pred_fallthru
      _
    // Predicated region
    $region58: #{tpu_custom_call.1} parent=1 // pred_check
      _
    $region59: #{tpu_custom_call.1} parent=1 // pred_check_branch
      %158 = sbr.rel (0) target = $region61
    $region60: #{tpu_custom_call.1} parent=1 // pred_region
      %159 = dma.done [#allocation13], 1024
    $region61: #{tpu_custom_call.1} parent=1 // pred_fallthru
      _
    // Predicated region
    $region62: #{tpu_custom_call.1} parent=1 // pred_check
      _
    $region63: #{tpu_custom_call.1} parent=1 // pred_check_branch
      %161 = sbr.rel (0) target = $region65
    $region64: #{tpu_custom_call.1} parent=1 // pred_region
      %162 = dma.done [#allocation16], 8192
    $region65: #{tpu_custom_call.1} parent=1 // pred_fallthru
      _
    // Predicated region
    $region66: #{tpu_custom_call.1} parent=1 // pred_check
      _
    $region67: #{tpu_custom_call.1} parent=1 // pred_check_branch
      %164 = sbr.rel (0) target = $region69
    $region68: #{tpu_custom_call.1} parent=1 // pred_region
      %165 = dma.done [#allocation16], 64
    $region69: #{tpu_custom_call.1} parent=1 // pred_fallthru
      _
    // Predicated region
    $region70: #{tpu_custom_call.1} parent=1 // pred_check
      _
    $region71: #{tpu_custom_call.1} parent=1 // pred_check_branch
      %167 = sbr.rel (0) target = $region73
    $region72: #{tpu_custom_call.1} parent=1 // pred_region
      %168 = dma.done [#allocation19], 1024
    $region73: #{tpu_custom_call.1} parent=1 // pred_fallthru
      _
    // Predicated region
    $region74: #{tpu_custom_call.1} parent=1 // pred_check
      _
    $region75: #{tpu_custom_call.1} parent=1 // pred_check_branch
      %170 = sbr.rel (0) target = $region77
    $region76: #{tpu_custom_call.1} parent=1 // pred_region
      %171 = dma.done [#allocation19], 8192
    $region77: #{tpu_custom_call.1} parent=1 // pred_fallthru
      _
    // Predicated region
    $region78: #{tpu_custom_call.1} parent=1 // pred_check
      _
    $region79: #{tpu_custom_call.1} parent=1 // pred_check_branch
      %173 = sbr.rel (0) target = $region81
    $region80: #{tpu_custom_call.1} parent=1 // pred_region
      %174 = dma.done [#allocation22], 64
    $region81: #{tpu_custom_call.1} parent=1 // pred_fallthru
      _
    // Predicated region
    $region82: #{tpu_custom_call.1} parent=1 // pred_check
      _
    $region83: #{tpu_custom_call.1} parent=1 // pred_check_branch
      %176 = sbr.rel (0) target = $region85
    $region84: #{tpu_custom_call.1} parent=1 // pred_region
      %177 = dma.done [#allocation22], 2048
    $region85: #{tpu_custom_call.1} parent=1 // pred_fallthru
      _
    // Predicated region
    $region86: #{tpu_custom_call.1} parent=1 // pred_check
      _
    $region87: #{tpu_custom_call.1} parent=1 // pred_check_branch
      %179 = sbr.rel (0) target = $region89
    $region88: #{tpu_custom_call.1} parent=1 // pred_region
      %180 = dma.done [#allocation25], 2048
    $region89: #{tpu_custom_call.1} parent=1 // pred_fallthru
      _
    // Predicated region
    $region90: #{tpu_custom_call.1} parent=1 // pred_check
      _
    $region91: #{tpu_custom_call.1} parent=1 // pred_check_branch
      %182 = sbr.rel (0) target = $region93
    $region92: #{tpu_custom_call.1} parent=1 // pred_region
      %183 = dma.done [#allocation25], 16
    $region93: #{tpu_custom_call.1} parent=1 // pred_fallthru
      _
    %s184 = sld [smem:[#allocation8]]
    %v185 = vld [vmem:[#allocation9] sm:$0xff]
    %v186 = vld [vmem:[#allocation12] sm:$0xff]
    %v187 = vld [vmem:[#allocation12 + $0x8] sm:$0xff]
    %v188 = vld [vmem:[#allocation12 + $0x10] sm:$0xff]
    %v189 = vld [vmem:[#allocation12 + $0x18] sm:$0xff]
    %v190 = vld [vmem:[#allocation12 + $0x20] sm:$0xff]
    %v191 = vld [vmem:[#allocation12 + $0x28] sm:$0xff]
    %v192 = vld [vmem:[#allocation12 + $0x30] sm:$0xff]
    %v193 = vld [vmem:[#allocation12 + $0x38] sm:$0xff]
    %v194 = vld [vmem:[#allocation14] sm:$0xff]
    %v195 = vld [vmem:[#allocation14 + $0x8] sm:$0xff]
    %v196 = vld [vmem:[#allocation14 + $0x10] sm:$0xff]
    %v197 = vld [vmem:[#allocation14 + $0x18] sm:$0xff]
    %v198 = vld [vmem:[#allocation14 + $0x20] sm:$0xff]
    %v199 = vld [vmem:[#allocation14 + $0x28] sm:$0xff]
    %v200 = vld [vmem:[#allocation14 + $0x30] sm:$0xff]
    %v201 = vld [vmem:[#allocation14 + $0x38] sm:$0xff]
    %v202 = vld [vmem:[#allocation17] sm:$0xf]
    %v204 = vlaneseq
    %v205 = vshrl.u32 %v204, 7
    %v206 = vsub.s32 0, %v205
    %v207 = vrot.slane %v202, %v206
    %v208 = vlaneseq
    %v209 = vshrl.u32 %v208, 7
    %v210 = vsub.s32 1, %v209
    %v211 = vrot.slane %v202, %v210
    %v212 = vlaneseq
    %v213 = vshrl.u32 %v212, 7
    %v214 = vsub.s32 2, %v213
    %v215 = vrot.slane %v202, %v214
    %v216 = vlaneseq
    %v217 = vshrl.u32 %v216, 7
    %v218 = vsub.s32 3, %v217
    %v219 = vrot.slane %v202, %v218
    %vm224 = vcmask 130048
    %v226 = vsel %vm224, %v186, 0
    %v229 = vsel %vm224, %v187, 0
    %v232 = vsel %vm224, %v188, 0
    %v235 = vsel %vm224, %v189, 0
    %v238 = vsel %vm224, %v190, 0
    %v241 = vsel %vm224, %v191, 0
    %v244 = vsel %vm224, %v192, 0
    %v247 = vsel %vm224, %v193, 0
    %249 = vmatprep.subr.mxu0 %v195
    %250 = vmatpush1.msra.mxu0 %v194
    %251 = vmatprep.subr.mxu0 %v199
    %252 = vmatpush1.msra.mxu0 %v198
    %253 = vmatprep.subr.mxu0 0.0
    %254 = vmatpush1.msra.mxu0 0.0
    %255 = vmatprep.subr.mxu0 0.0
    %256 = vmatpush1.msra.mxu0 0.0
    %257 = vmatprep.subr.mxu0 0.0
    %258 = vmatpush1.msra.mxu0 0.0
    %259 = vmatprep.subr.mxu0 0.0
    %260 = vmatpush1.msra.mxu0 0.0
    %261 = vmatprep.subr.mxu0 0.0
    %262 = vmatpush1.msra.mxu0 0.0
    %263 = vmatprep.subr.mxu0 0.0
    %264 = vmatpush1.msra.mxu0 0.0
    %265 = vmatprep.subr.mxu0 0.0
    %266 = vmatpush1.msra.mxu0 0.0
    %267 = vmatprep.subr.mxu0 0.0
    %268 = vmatpush1.msra.mxu0 0.0
    %269 = vmatprep.subr.mxu0 0.0
    %270 = vmatpush1.msra.mxu0 0.0
    %271 = vmatprep.subr.mxu0 0.0
    %272 = vmatpush1.msra.mxu0 0.0
    %273 = vmatprep.subr.mxu0 0.0
    %274 = vmatpush1.msra.mxu0 0.0
    %275 = vmatprep.subr.mxu0 0.0
    %276 = vmatpush1.msra.mxu0 0.0
    %277 = vmatprep.subr.mxu0 0.0
    %278 = vmatpush1.msra.mxu0 0.0
    %279 = vmatprep.subr.mxu0 0.0
    %280 = vmatpush1.msra.mxu0 0.0
    %281 = vmatprep.subr.mxu0 0.0
    %282 = vmatpush1.msra.mxu0 0.0
    %283 = vmatprep.subr.mxu0 0.0
    %284 = vmatpush1.msra.mxu0 0.0
    %285 = vmatprep.subr.mxu0 0.0
    %286 = vmatpush1.msra.mxu0 0.0
    %287 = vmatprep.subr.mxu0 0.0
    %288 = vmatpush1.msra.mxu0 0.0
    %289 = vmatprep.subr.mxu0 0.0
    %290 = vmatpush1.msra.mxu0 0.0
    %291 = vmatprep.subr.mxu0 0.0
    %292 = vmatpush1.msra.mxu0 0.0
    %293 = vmatprep.subr.mxu0 0.0
    %294 = vmatpush1.msra.mxu0 0.0
    %295 = vmatprep.subr.mxu0 0.0
    %296 = vmatpush1.msra.mxu0 0.0
    %297 = vmatprep.subr.mxu0 0.0
    %298 = vmatpush1.msra.mxu0 0.0
    %299 = vmatprep.subr.mxu0 0.0
    %300 = vmatpush1.msra.mxu0 0.0
    %301 = vmatprep.subr.mxu0 0.0
    %302 = vmatpush1.msra.mxu0 0.0
    %303 = vmatprep.subr.mxu0 0.0
    %304 = vmatpush1.msra.mxu0 0.0
    %305 = vmatprep.subr.mxu0 0.0
    %306 = vmatpush1.msra.mxu0 0.0
    %307 = vmatprep.subr.mxu0 0.0
    %308 = vmatpush1.msra.mxu0 0.0
    %309 = vmatprep.subr.mxu0 0.0
    %310 = vmatpush1.msra.mxu0 0.0
    %311 = vmatprep.subr.mxu0 0.0
    %312 = vmatpush1.msra.mxu0 0.0
    %313 = vmatprep.mubr.f32.mxu0 0.0
    %314 = vmatmul.mubr.f32.gmra.mrb[0].mxu0 %v226
    %v315 = vpop.f32.mrb[0].mxu0
    %v316 = vadd.f32 %v207, %v315
    %v317 = vpop.f32.mrb[0].mxu0
    %v318 = vadd.f32 %v211, %v317
    %319 = vmatprep.mubr.f32.mxu0 0.0
    %320 = vmatmul.mubr.f32.gmra.mrb[0].mxu0 %v229
    %v321 = vpop.f32.mrb[0].mxu0
    %v322 = vadd.f32 %v207, %v321
    %v323 = vpop.f32.mrb[0].mxu0
    %v324 = vadd.f32 %v211, %v323
    %325 = vmatprep.mubr.f32.mxu0 0.0
    %326 = vmatmul.mubr.f32.gmra.mrb[0].mxu0 %v232
    %v327 = vpop.f32.mrb[0].mxu0
    %v328 = vadd.f32 %v207, %v327
    %v329 = vpop.f32.mrb[0].mxu0
    %v330 = vadd.f32 %v211, %v329
    %331 = vmatprep.mubr.f32.mxu0 0.0
    %332 = vmatmul.mubr.f32.gmra.mrb[0].mxu0 %v235
    %v333 = vpop.f32.mrb[0].mxu0
    %v334 = vadd.f32 %v207, %v333
    %v335 = vpop.f32.mrb[0].mxu0
    %v336 = vadd.f32 %v211, %v335
    %337 = vmatprep.mubr.f32.mxu0 0.0
    %338 = vmatmul.mubr.f32.gmra.mrb[0].mxu0 %v238
    %v339 = vpop.f32.mrb[0].mxu0
    %v340 = vadd.f32 %v207, %v339
    %v341 = vpop.f32.mrb[0].mxu0
    %v342 = vadd.f32 %v211, %v341
    %343 = vmatprep.mubr.f32.mxu0 0.0
    %344 = vmatmul.mubr.f32.gmra.mrb[0].mxu0 %v241
    %v345 = vpop.f32.mrb[0].mxu0
    %v346 = vadd.f32 %v207, %v345
    %v347 = vpop.f32.mrb[0].mxu0
    %v348 = vadd.f32 %v211, %v347
    %349 = vmatprep.mubr.f32.mxu0 0.0
    %350 = vmatmul.mubr.f32.gmra.mrb[0].mxu0 %v244
    %v351 = vpop.f32.mrb[0].mxu0
    %v352 = vadd.f32 %v207, %v351
    %v353 = vpop.f32.mrb[0].mxu0
    %v354 = vadd.f32 %v211, %v353
    %355 = vmatprep.mubr.f32.mxu0 0.0
    %356 = vmatmul.mubr.f32.gmra.mrb[0].mxu0 %v247
    %v357 = vpop.f32.mrb[0].mxu0
    %v358 = vadd.f32 %v207, %v357
    %v359 = vpop.f32.mrb[0].mxu0
    %v360 = vadd.f32 %v211, %v359
    %361 = vdwg.mxu0
    %362 = vmatprep.subr.mxu0 %v197
    %363 = vmatpush1.msra.mxu0 %v196
    %364 = vmatprep.subr.mxu0 %v201
    %365 = vmatpush1.msra.mxu0 %v200
    %366 = vmatprep.subr.mxu0 0.0
    %367 = vmatpush1.msra.mxu0 0.0
    %368 = vmatprep.subr.mxu0 0.0
    %369 = vmatpush1.msra.mxu0 0.0
    %370 = vmatprep.subr.mxu0 0.0
    %371 = vmatpush1.msra.mxu0 0.0
    %372 = vmatprep.subr.mxu0 0.0
    %373 = vmatpush1.msra.mxu0 0.0
    %374 = vmatprep.subr.mxu0 0.0
    %375 = vmatpush1.msra.mxu0 0.0
    %376 = vmatprep.subr.mxu0 0.0
    %377 = vmatpush1.msra.mxu0 0.0
    %378 = vmatprep.subr.mxu0 0.0
    %379 = vmatpush1.msra.mxu0 0.0
    %380 = vmatprep.subr.mxu0 0.0
    %381 = vmatpush1.msra.mxu0 0.0
    %382 = vmatprep.subr.mxu0 0.0
    %383 = vmatpush1.msra.mxu0 0.0
    %384 = vmatprep.subr.mxu0 0.0
    %385 = vmatpush1.msra.mxu0 0.0
    %386 = vmatprep.subr.mxu0 0.0
    %387 = vmatpush1.msra.mxu0 0.0
    %388 = vmatprep.subr.mxu0 0.0
    %389 = vmatpush1.msra.mxu0 0.0
    %390 = vmatprep.subr.mxu0 0.0
    %391 = vmatpush1.msra.mxu0 0.0
    %392 = vmatprep.subr.mxu0 0.0
    %393 = vmatpush1.msra.mxu0 0.0
    %394 = vmatprep.subr.mxu0 0.0
    %395 = vmatpush1.msra.mxu0 0.0
    %396 = vmatprep.subr.mxu0 0.0
    %397 = vmatpush1.msra.mxu0 0.0
    %398 = vmatprep.subr.mxu0 0.0
    %399 = vmatpush1.msra.mxu0 0.0
    %400 = vmatprep.subr.mxu0 0.0
    %401 = vmatpush1.msra.mxu0 0.0
    %402 = vmatprep.subr.mxu0 0.0
    %403 = vmatpush1.msra.mxu0 0.0
    %404 = vmatprep.subr.mxu0 0.0
    %405 = vmatpush1.msra.mxu0 0.0
    %406 = vmatprep.subr.mxu0 0.0
    %407 = vmatpush1.msra.mxu0 0.0
    %408 = vmatprep.subr.mxu0 0.0
    %409 = vmatpush1.msra.mxu0 0.0
    %410 = vmatprep.subr.mxu0 0.0
    %411 = vmatpush1.msra.mxu0 0.0
    %412 = vmatprep.subr.mxu0 0.0
    %413 = vmatpush1.msra.mxu0 0.0
    %414 = vmatprep.subr.mxu0 0.0
    %415 = vmatpush1.msra.mxu0 0.0
    %416 = vmatprep.subr.mxu0 0.0
    %417 = vmatpush1.msra.mxu0 0.0
    %418 = vmatprep.subr.mxu0 0.0
    %419 = vmatpush1.msra.mxu0 0.0
    %420 = vmatprep.subr.mxu0 0.0
    %421 = vmatpush1.msra.mxu0 0.0
    %422 = vmatprep.subr.mxu0 0.0
    %423 = vmatpush1.msra.mxu0 0.0
    %424 = vmatprep.subr.mxu0 0.0
    %425 = vmatpush1.msra.mxu0 0.0
    %426 = vmatprep.mubr.f32.mxu0 0.0
    %427 = vmatmul.mubr.f32.gmra.mrb[0].mxu0 %v226
    %v428 = vpop.f32.mrb[0].mxu0
    %v429 = vadd.f32 %v215, %v428
    %v430 = vpop.f32.mrb[0].mxu0
    %v431 = vadd.f32 %v219, %v430
    %432 = vmatprep.mubr.f32.mxu0 0.0
    %433 = vmatmul.mubr.f32.gmra.mrb[0].mxu0 %v229
    %v434 = vpop.f32.mrb[0].mxu0
    %v435 = vadd.f32 %v215, %v434
    %v436 = vpop.f32.mrb[0].mxu0
    %v437 = vadd.f32 %v219, %v436
    %438 = vmatprep.mubr.f32.mxu0 0.0
    %439 = vmatmul.mubr.f32.gmra.mrb[0].mxu0 %v232
    %v440 = vpop.f32.mrb[0].mxu0
    %v441 = vadd.f32 %v215, %v440
    %v442 = vpop.f32.mrb[0].mxu0
    %v443 = vadd.f32 %v219, %v442
    %444 = vmatprep.mubr.f32.mxu0 0.0
    %445 = vmatmul.mubr.f32.gmra.mrb[0].mxu0 %v235
    %v446 = vpop.f32.mrb[0].mxu0
    %v447 = vadd.f32 %v215, %v446
    %v448 = vpop.f32.mrb[0].mxu0
    %v449 = vadd.f32 %v219, %v448
    %450 = vmatprep.mubr.f32.mxu0 0.0
    %451 = vmatmul.mubr.f32.gmra.mrb[0].mxu0 %v238
    %v452 = vpop.f32.mrb[0].mxu0
    %v453 = vadd.f32 %v215, %v452
    %v454 = vpop.f32.mrb[0].mxu0
    %v455 = vadd.f32 %v219, %v454
    %456 = vmatprep.mubr.f32.mxu0 0.0
    %457 = vmatmul.mubr.f32.gmra.mrb[0].mxu0 %v241
    %v458 = vpop.f32.mrb[0].mxu0
    %v459 = vadd.f32 %v215, %v458
    %v460 = vpop.f32.mrb[0].mxu0
    %v461 = vadd.f32 %v219, %v460
    %462 = vmatprep.mubr.f32.mxu0 0.0
    %463 = vmatmul.mubr.f32.gmra.mrb[0].mxu0 %v244
    %v464 = vpop.f32.mrb[0].mxu0
    %v465 = vadd.f32 %v215, %v464
    %v466 = vpop.f32.mrb[0].mxu0
    %v467 = vadd.f32 %v219, %v466
    %468 = vmatprep.mubr.f32.mxu0 0.0
    %469 = vmatmul.mubr.f32.gmra.mrb[0].mxu0 %v247
    %v470 = vpop.f32.mrb[0].mxu0
    %v471 = vadd.f32 %v215, %v470
    %v472 = vpop.f32.mrb[0].mxu0
    %v473 = vadd.f32 %v219, %v472
    %474 = vdwg.mxu0
    %475 = vst [vmem:[#allocation6] sm:$0xff] %v316
    %476 = vst [vmem:[#allocation6 + $0x8] sm:$0xff] %v318
    %477 = vst [vmem:[#allocation6 + $0x10] sm:$0xff] %v429
    %478 = vst [vmem:[#allocation6 + $0x18] sm:$0xff] %v431
    %479 = vst [vmem:[#allocation6 + $0x20] sm:$0xff] %v322
    %480 = vst [vmem:[#allocation6 + $0x28] sm:$0xff] %v324
    %481 = vst [vmem:[#allocation6 + $0x30] sm:$0xff] %v435
    %482 = vst [vmem:[#allocation6 + $0x38] sm:$0xff] %v437
    %483 = vst [vmem:[#allocation6 + $0x40] sm:$0xff] %v328
    %484 = vst [vmem:[#allocation6 + $0x48] sm:$0xff] %v330
    %485 = vst [vmem:[#allocation6 + $0x50] sm:$0xff] %v441
    %486 = vst [vmem:[#allocation6 + $0x58] sm:$0xff] %v443
    %487 = vst [vmem:[#allocation6 + $0x60] sm:$0xff] %v334
    %488 = vst [vmem:[#allocation6 + $0x68] sm:$0xff] %v336
    %489 = vst [vmem:[#allocation6 + $0x70] sm:$0xff] %v447
    %490 = vst [vmem:[#allocation6 + $0x78] sm:$0xff] %v449
    %491 = vst [vmem:[#allocation6 + $0x80] sm:$0xff] %v340
    %492 = vst [vmem:[#allocation6 + $0x88] sm:$0xff] %v342
    %493 = vst [vmem:[#allocation6 + $0x90] sm:$0xff] %v453
    %494 = vst [vmem:[#allocation6 + $0x98] sm:$0xff] %v455
    %495 = vst [vmem:[#allocation6 + $0xa0] sm:$0xff] %v346
    %496 = vst [vmem:[#allocation6 + $0xa8] sm:$0xff] %v348
    %497 = vst [vmem:[#allocation6 + $0xb0] sm:$0xff] %v459
    %498 = vst [vmem:[#allocation6 + $0xb8] sm:$0xff] %v461
    %499 = vst [vmem:[#allocation6 + $0xc0] sm:$0xff] %v352
    %500 = vst [vmem:[#allocation6 + $0xc8] sm:$0xff] %v354
    %501 = vst [vmem:[#allocation6 + $0xd0] sm:$0xff] %v465
    %502 = vst [vmem:[#allocation6 + $0xd8] sm:$0xff] %v467
    %503 = vst [vmem:[#allocation6 + $0xe0] sm:$0xff] %v358
    %504 = vst [vmem:[#allocation6 + $0xe8] sm:$0xff] %v360
    %505 = vst [vmem:[#allocation6 + $0xf0] sm:$0xff] %v471
    %506 = vst [vmem:[#allocation6 + $0xf8] sm:$0xff] %v473
    %v507 = vld [vmem:[#allocation18] sm:$0xff]
    %v508 = vld [vmem:[#allocation18 + $0x8] sm:$0xff]
    %v509 = vld [vmem:[#allocation18 + $0x10] sm:$0xff]
    %v510 = vld [vmem:[#allocation18 + $0x18] sm:$0xff]
    %v511 = vld [vmem:[#allocation18 + $0x20] sm:$0xff]
    %v512 = vld [vmem:[#allocation18 + $0x28] sm:$0xff]
    %v513 = vld [vmem:[#allocation18 + $0x30] sm:$0xff]
    %v514 = vld [vmem:[#allocation18 + $0x38] sm:$0xff]
    %v515 = vld [vmem:[#allocation21] sm:$0xf]
    %v517 = vlaneseq
    %v518 = vshrl.u32 %v517, 7
    %v519 = vsub.s32 0, %v518
    %v520 = vrot.slane %v515, %v519
    %v521 = vlaneseq
    %v522 = vshrl.u32 %v521, 7
    %v523 = vsub.s32 1, %v522
    %v524 = vrot.slane %v515, %v523
    %v525 = vlaneseq
    %v526 = vshrl.u32 %v525, 7
    %v527 = vsub.s32 2, %v526
    %v528 = vrot.slane %v515, %v527
    %v529 = vlaneseq
    %v530 = vshrl.u32 %v529, 7
    %v531 = vsub.s32 3, %v530
    %v532 = vrot.slane %v515, %v531
    %537 = vmatprep.subr.mxu0 %v508
    %538 = vmatpush1.msra.mxu0 %v507
    %539 = vmatprep.subr.mxu0 %v512
    %540 = vmatpush1.msra.mxu0 %v511
    %541 = vmatprep.subr.mxu0 0.0
    %542 = vmatpush1.msra.mxu0 0.0
    %543 = vmatprep.subr.mxu0 0.0
    %544 = vmatpush1.msra.mxu0 0.0
    %545 = vmatprep.subr.mxu0 0.0
    %546 = vmatpush1.msra.mxu0 0.0
    %547 = vmatprep.subr.mxu0 0.0
    %548 = vmatpush1.msra.mxu0 0.0
    %549 = vmatprep.subr.mxu0 0.0
    %550 = vmatpush1.msra.mxu0 0.0
    %551 = vmatprep.subr.mxu0 0.0
    %552 = vmatpush1.msra.mxu0 0.0
    %553 = vmatprep.subr.mxu0 0.0
    %554 = vmatpush1.msra.mxu0 0.0
    %555 = vmatprep.subr.mxu0 0.0
    %556 = vmatpush1.msra.mxu0 0.0
    %557 = vmatprep.subr.mxu0 0.0
    %558 = vmatpush1.msra.mxu0 0.0
    %559 = vmatprep.subr.mxu0 0.0
    %560 = vmatpush1.msra.mxu0 0.0
    %561 = vmatprep.subr.mxu0 0.0
    %562 = vmatpush1.msra.mxu0 0.0
    %563 = vmatprep.subr.mxu0 0.0
    %564 = vmatpush1.msra.mxu0 0.0
    %565 = vmatprep.subr.mxu0 0.0
    %566 = vmatpush1.msra.mxu0 0.0
    %567 = vmatprep.subr.mxu0 0.0
    %568 = vmatpush1.msra.mxu0 0.0
    %569 = vmatprep.subr.mxu0 0.0
    %570 = vmatpush1.msra.mxu0 0.0
    %571 = vmatprep.subr.mxu0 0.0
    %572 = vmatpush1.msra.mxu0 0.0
    %573 = vmatprep.subr.mxu0 0.0
    %574 = vmatpush1.msra.mxu0 0.0
    %575 = vmatprep.subr.mxu0 0.0
    %576 = vmatpush1.msra.mxu0 0.0
    %577 = vmatprep.subr.mxu0 0.0
    %578 = vmatpush1.msra.mxu0 0.0
    %579 = vmatprep.subr.mxu0 0.0
    %580 = vmatpush1.msra.mxu0 0.0
    %581 = vmatprep.subr.mxu0 0.0
    %582 = vmatpush1.msra.mxu0 0.0
    %583 = vmatprep.subr.mxu0 0.0
    %584 = vmatpush1.msra.mxu0 0.0
    %585 = vmatprep.subr.mxu0 0.0
    %586 = vmatpush1.msra.mxu0 0.0
    %587 = vmatprep.subr.mxu0 0.0
    %588 = vmatpush1.msra.mxu0 0.0
    %589 = vmatprep.subr.mxu0 0.0
    %590 = vmatpush1.msra.mxu0 0.0
    %591 = vmatprep.subr.mxu0 0.0
    %592 = vmatpush1.msra.mxu0 0.0
    %593 = vmatprep.subr.mxu0 0.0
    %594 = vmatpush1.msra.mxu0 0.0
    %595 = vmatprep.subr.mxu0 0.0
    %596 = vmatpush1.msra.mxu0 0.0
    %597 = vmatprep.subr.mxu0 0.0
    %598 = vmatpush1.msra.mxu0 0.0
    %599 = vmatprep.subr.mxu0 0.0
    %600 = vmatpush1.msra.mxu0 0.0
    %601 = vmatprep.mubr.f32.mxu0 0.0
    %602 = vmatmul.mubr.f32.gmra.mrb[0].mxu0 %v226
    %v603 = vpop.f32.mrb[0].mxu0
    %v604 = vadd.f32 %v520, %v603
    %v605 = vpop.f32.mrb[0].mxu0
    %v606 = vadd.f32 %v524, %v605
    %607 = vmatprep.mubr.f32.mxu0 0.0
    %608 = vmatmul.mubr.f32.gmra.mrb[0].mxu0 %v229
    %v609 = vpop.f32.mrb[0].mxu0
    %v610 = vadd.f32 %v520, %v609
    %v611 = vpop.f32.mrb[0].mxu0
    %v612 = vadd.f32 %v524, %v611
    %613 = vmatprep.mubr.f32.mxu0 0.0
    %614 = vmatmul.mubr.f32.gmra.mrb[0].mxu0 %v232
    %v615 = vpop.f32.mrb[0].mxu0
    %v616 = vadd.f32 %v520, %v615
    %v617 = vpop.f32.mrb[0].mxu0
    %v618 = vadd.f32 %v524, %v617
    %619 = vmatprep.mubr.f32.mxu0 0.0
    %620 = vmatmul.mubr.f32.gmra.mrb[0].mxu0 %v235
    %v621 = vpop.f32.mrb[0].mxu0
    %v622 = vadd.f32 %v520, %v621
    %v623 = vpop.f32.mrb[0].mxu0
    %v624 = vadd.f32 %v524, %v623
    %625 = vmatprep.mubr.f32.mxu0 0.0
    %626 = vmatmul.mubr.f32.gmra.mrb[0].mxu0 %v238
    %v627 = vpop.f32.mrb[0].mxu0
    %v628 = vadd.f32 %v520, %v627
    %v629 = vpop.f32.mrb[0].mxu0
    %v630 = vadd.f32 %v524, %v629
    %631 = vmatprep.mubr.f32.mxu0 0.0
    %632 = vmatmul.mubr.f32.gmra.mrb[0].mxu0 %v241
    %v633 = vpop.f32.mrb[0].mxu0
    %v634 = vadd.f32 %v520, %v633
    %v635 = vpop.f32.mrb[0].mxu0
    %v636 = vadd.f32 %v524, %v635
    %637 = vmatprep.mubr.f32.mxu0 0.0
    %638 = vmatmul.mubr.f32.gmra.mrb[0].mxu0 %v244
    %v639 = vpop.f32.mrb[0].mxu0
    %v640 = vadd.f32 %v520, %v639
    %v641 = vpop.f32.mrb[0].mxu0
    %v642 = vadd.f32 %v524, %v641
    %643 = vmatprep.mubr.f32.mxu0 0.0
    %644 = vmatmul.mubr.f32.gmra.mrb[0].mxu0 %v247
    %v645 = vpop.f32.mrb[0].mxu0
    %v646 = vadd.f32 %v520, %v645
    %v647 = vpop.f32.mrb[0].mxu0
    %v648 = vadd.f32 %v524, %v647
    %649 = vdwg.mxu0
    %650 = vmatprep.subr.mxu0 %v510
    %651 = vmatpush1.msra.mxu0 %v509
    %652 = vmatprep.subr.mxu0 %v514
    %653 = vmatpush1.msra.mxu0 %v513
    %654 = vmatprep.subr.mxu0 0.0
    %655 = vmatpush1.msra.mxu0 0.0
    %656 = vmatprep.subr.mxu0 0.0
    %657 = vmatpush1.msra.mxu0 0.0
    %658 = vmatprep.subr.mxu0 0.0
    %659 = vmatpush1.msra.mxu0 0.0
    %660 = vmatprep.subr.mxu0 0.0
    %661 = vmatpush1.msra.mxu0 0.0
    %662 = vmatprep.subr.mxu0 0.0
    %663 = vmatpush1.msra.mxu0 0.0
    %664 = vmatprep.subr.mxu0 0.0
    %665 = vmatpush1.msra.mxu0 0.0
    %666 = vmatprep.subr.mxu0 0.0
    %667 = vmatpush1.msra.mxu0 0.0
    %668 = vmatprep.subr.mxu0 0.0
    %669 = vmatpush1.msra.mxu0 0.0
    %670 = vmatprep.subr.mxu0 0.0
    %671 = vmatpush1.msra.mxu0 0.0
    %672 = vmatprep.subr.mxu0 0.0
    %673 = vmatpush1.msra.mxu0 0.0
    %674 = vmatprep.subr.mxu0 0.0
    %675 = vmatpush1.msra.mxu0 0.0
    %676 = vmatprep.subr.mxu0 0.0
    %677 = vmatpush1.msra.mxu0 0.0
    %678 = vmatprep.subr.mxu0 0.0
    %679 = vmatpush1.msra.mxu0 0.0
    %680 = vmatprep.subr.mxu0 0.0
    %681 = vmatpush1.msra.mxu0 0.0
    %682 = vmatprep.subr.mxu0 0.0
    %683 = vmatpush1.msra.mxu0 0.0
    %684 = vmatprep.subr.mxu0 0.0
    %685 = vmatpush1.msra.mxu0 0.0
    %686 = vmatprep.subr.mxu0 0.0
    %687 = vmatpush1.msra.mxu0 0.0
    %688 = vmatprep.subr.mxu0 0.0
    %689 = vmatpush1.msra.mxu0 0.0
    %690 = vmatprep.subr.mxu0 0.0
    %691 = vmatpush1.msra.mxu0 0.0
    %692 = vmatprep.subr.mxu0 0.0
    %693 = vmatpush1.msra.mxu0 0.0
    %694 = vmatprep.subr.mxu0 0.0
    %695 = vmatpush1.msra.mxu0 0.0
    %696 = vmatprep.subr.mxu0 0.0
    %697 = vmatpush1.msra.mxu0 0.0
    %698 = vmatprep.subr.mxu0 0.0
    %699 = vmatpush1.msra.mxu0 0.0
    %700 = vmatprep.subr.mxu0 0.0
    %701 = vmatpush1.msra.mxu0 0.0
    %702 = vmatprep.subr.mxu0 0.0
    %703 = vmatpush1.msra.mxu0 0.0
    %704 = vmatprep.subr.mxu0 0.0
    %705 = vmatpush1.msra.mxu0 0.0
    %706 = vmatprep.subr.mxu0 0.0
    %707 = vmatpush1.msra.mxu0 0.0
    %708 = vmatprep.subr.mxu0 0.0
    %709 = vmatpush1.msra.mxu0 0.0
    %710 = vmatprep.subr.mxu0 0.0
    %711 = vmatpush1.msra.mxu0 0.0
    %712 = vmatprep.subr.mxu0 0.0
    %713 = vmatpush1.msra.mxu0 0.0
    %714 = vmatprep.mubr.f32.mxu0 0.0
    %715 = vmatmul.mubr.f32.gmra.mrb[0].mxu0 %v226
    %v716 = vpop.f32.mrb[0].mxu0
    %v717 = vadd.f32 %v528, %v716
    %v718 = vpop.f32.mrb[0].mxu0
    %v719 = vadd.f32 %v532, %v718
    %720 = vmatprep.mubr.f32.mxu0 0.0
    %721 = vmatmul.mubr.f32.gmra.mrb[0].mxu0 %v229
    %v722 = vpop.f32.mrb[0].mxu0
    %v723 = vadd.f32 %v528, %v722
    %v724 = vpop.f32.mrb[0].mxu0
    %v725 = vadd.f32 %v532, %v724
    %726 = vmatprep.mubr.f32.mxu0 0.0
    %727 = vmatmul.mubr.f32.gmra.mrb[0].mxu0 %v232
    %v728 = vpop.f32.mrb[0].mxu0
    %v729 = vadd.f32 %v528, %v728
    %v730 = vpop.f32.mrb[0].mxu0
    %v731 = vadd.f32 %v532, %v730
    %732 = vmatprep.mubr.f32.mxu0 0.0
    %733 = vmatmul.mubr.f32.gmra.mrb[0].mxu0 %v235
    %v734 = vpop.f32.mrb[0].mxu0
    %v735 = vadd.f32 %v528, %v734
    %v736 = vpop.f32.mrb[0].mxu0
    %v737 = vadd.f32 %v532, %v736
    %738 = vmatprep.mubr.f32.mxu0 0.0
    %739 = vmatmul.mubr.f32.gmra.mrb[0].mxu0 %v238
    %v740 = vpop.f32.mrb[0].mxu0
    %v741 = vadd.f32 %v528, %v740
    %v742 = vpop.f32.mrb[0].mxu0
    %v743 = vadd.f32 %v532, %v742
    %744 = vmatprep.mubr.f32.mxu0 0.0
    %745 = vmatmul.mubr.f32.gmra.mrb[0].mxu0 %v241
    %v746 = vpop.f32.mrb[0].mxu0
    %v747 = vadd.f32 %v528, %v746
    %v748 = vpop.f32.mrb[0].mxu0
    %v749 = vadd.f32 %v532, %v748
    %750 = vmatprep.mubr.f32.mxu0 0.0
    %751 = vmatmul.mubr.f32.gmra.mrb[0].mxu0 %v244
    %v752 = vpop.f32.mrb[0].mxu0
    %v753 = vadd.f32 %v528, %v752
    %v754 = vpop.f32.mrb[0].mxu0
    %v755 = vadd.f32 %v532, %v754
    %756 = vmatprep.mubr.f32.mxu0 0.0
    %757 = vmatmul.mubr.f32.gmra.mrb[0].mxu0 %v247
    %v758 = vpop.f32.mrb[0].mxu0
    %v759 = vadd.f32 %v528, %v758
    %v760 = vpop.f32.mrb[0].mxu0
    %v761 = vadd.f32 %v532, %v760
    %762 = vdwg.mxu0
    %763 = vst [vmem:[#allocation7] sm:$0xff] %v604
    %764 = vst [vmem:[#allocation7 + $0x8] sm:$0xff] %v606
    %765 = vst [vmem:[#allocation7 + $0x10] sm:$0xff] %v717
    %766 = vst [vmem:[#allocation7 + $0x18] sm:$0xff] %v719
    %767 = vst [vmem:[#allocation7 + $0x20] sm:$0xff] %v610
    %768 = vst [vmem:[#allocation7 + $0x28] sm:$0xff] %v612
    %769 = vst [vmem:[#allocation7 + $0x30] sm:$0xff] %v723
    %770 = vst [vmem:[#allocation7 + $0x38] sm:$0xff] %v725
    %771 = vst [vmem:[#allocation7 + $0x40] sm:$0xff] %v616
    %772 = vst [vmem:[#allocation7 + $0x48] sm:$0xff] %v618
    %773 = vst [vmem:[#allocation7 + $0x50] sm:$0xff] %v729
    %774 = vst [vmem:[#allocation7 + $0x58] sm:$0xff] %v731
    %775 = vst [vmem:[#allocation7 + $0x60] sm:$0xff] %v622
    %776 = vst [vmem:[#allocation7 + $0x68] sm:$0xff] %v624
    %777 = vst [vmem:[#allocation7 + $0x70] sm:$0xff] %v735
    %778 = vst [vmem:[#allocation7 + $0x78] sm:$0xff] %v737
    %779 = vst [vmem:[#allocation7 + $0x80] sm:$0xff] %v628
    %780 = vst [vmem:[#allocation7 + $0x88] sm:$0xff] %v630
    %781 = vst [vmem:[#allocation7 + $0x90] sm:$0xff] %v741
    %782 = vst [vmem:[#allocation7 + $0x98] sm:$0xff] %v743
    %783 = vst [vmem:[#allocation7 + $0xa0] sm:$0xff] %v634
    %784 = vst [vmem:[#allocation7 + $0xa8] sm:$0xff] %v636
    %785 = vst [vmem:[#allocation7 + $0xb0] sm:$0xff] %v747
    %786 = vst [vmem:[#allocation7 + $0xb8] sm:$0xff] %v749
    %787 = vst [vmem:[#allocation7 + $0xc0] sm:$0xff] %v640
    %788 = vst [vmem:[#allocation7 + $0xc8] sm:$0xff] %v642
    %789 = vst [vmem:[#allocation7 + $0xd0] sm:$0xff] %v753
    %790 = vst [vmem:[#allocation7 + $0xd8] sm:$0xff] %v755
    %791 = vst [vmem:[#allocation7 + $0xe0] sm:$0xff] %v646
    %792 = vst [vmem:[#allocation7 + $0xe8] sm:$0xff] %v648
    %793 = vst [vmem:[#allocation7 + $0xf0] sm:$0xff] %v759
    %794 = vst [vmem:[#allocation7 + $0xf8] sm:$0xff] %v761
    %795 = vst [vmem:[#allocation2] sm:$0xff] 0.0
    %796 = vst [vmem:[#allocation3] sm:$0xff] 0.0
    %797 = vst [vmem:[#allocation4] sm:$0xff] 0.0
    %798 = vst [vmem:[#allocation5] sm:$0xff] 0.0
    %p799 = scmp.gt.s32.totalorder %s184, 0
    // Predicated region
    $region94: #{tpu_custom_call.1} parent=1 // pred_check
      %p800 = pneg %p799
    $region95: #{tpu_custom_call.1} parent=1 // pred_check_branch
      %802 = sbr.rel (%p800) target = $region97
    $region96: #{tpu_custom_call.1} parent=1 // pred_region
      %s803 = ssub.s32 %s184, 1
      %s804 = smul.u32 %s803, 8
      %s805 = smul.u32 0, 4
      %s806 = smul.addr %s805, 8
      %s807 = scalar_lea.vmem [#allocation6], %s806
      %v808 = vld [vmem:[%s807] sm:$0xff]
      %v809 = vld [vmem:[%s807 + $0x8] sm:$0xff]
      %v810 = vld [vmem:[%s807 + $0x10] sm:$0xff]
      %v811 = vld [vmem:[%s807 + $0x18] sm:$0xff]
      %v812 = vld [vmem:[#allocation2] sm:$0xff]
      %v813 = vld [vmem:[#allocation15] sm:$0xff]
      %v814 = vld [vmem:[#allocation15 + $0x8] sm:$0xff]
      %v815 = vld [vmem:[#allocation15 + $0x10] sm:$0xff]
      %v816 = vld [vmem:[#allocation15 + $0x18] sm:$0xff]
      %v817 = vld [vmem:[#allocation15 + $0x20] sm:$0xff]
      %v818 = vld [vmem:[#allocation15 + $0x28] sm:$0xff]
      %v819 = vld [vmem:[#allocation15 + $0x30] sm:$0xff]
      %v820 = vld [vmem:[#allocation15 + $0x38] sm:$0xff]
      %v821 = vld [vmem:[#allocation15 + $0x40] sm:$0xff]
      %v822 = vld [vmem:[#allocation15 + $0x48] sm:$0xff]
      %v823 = vld [vmem:[#allocation15 + $0x50] sm:$0xff]
      %v824 = vld [vmem:[#allocation15 + $0x58] sm:$0xff]
      %v825 = vld [vmem:[#allocation15 + $0x60] sm:$0xff]
      %v826 = vld [vmem:[#allocation15 + $0x68] sm:$0xff]
      %v827 = vld [vmem:[#allocation15 + $0x70] sm:$0xff]
      %v828 = vld [vmem:[#allocation15 + $0x78] sm:$0xff]
      %v829 = vld [vmem:[#allocation15 + $0x80] sm:$0xff]
      %v830 = vld [vmem:[#allocation15 + $0x88] sm:$0xff]
      %v831 = vld [vmem:[#allocation15 + $0x90] sm:$0xff]
      %v832 = vld [vmem:[#allocation15 + $0x98] sm:$0xff]
      %v833 = vld [vmem:[#allocation15 + $0xa0] sm:$0xff]
      %v834 = vld [vmem:[#allocation15 + $0xa8] sm:$0xff]
      %v835 = vld [vmem:[#allocation15 + $0xb0] sm:$0xff]
      %v836 = vld [vmem:[#allocation15 + $0xb8] sm:$0xff]
      %v837 = vld [vmem:[#allocation15 + $0xc0] sm:$0xff]
      %v838 = vld [vmem:[#allocation15 + $0xc8] sm:$0xff]
      %v839 = vld [vmem:[#allocation15 + $0xd0] sm:$0xff]
      %v840 = vld [vmem:[#allocation15 + $0xd8] sm:$0xff]
      %v841 = vld [vmem:[#allocation15 + $0xe0] sm:$0xff]
      %v842 = vld [vmem:[#allocation15 + $0xe8] sm:$0xff]
      %v843 = vld [vmem:[#allocation15 + $0xf0] sm:$0xff]
      %v844 = vld [vmem:[#allocation15 + $0xf8] sm:$0xff]
      %v845 = vld [vmem:[#allocation15 + $0x100] sm:$0xff]
      %v846 = vld [vmem:[#allocation15 + $0x108] sm:$0xff]
      %v847 = vld [vmem:[#allocation15 + $0x110] sm:$0xff]
      %v848 = vld [vmem:[#allocation15 + $0x118] sm:$0xff]
      %v849 = vld [vmem:[#allocation15 + $0x120] sm:$0xff]
      %v850 = vld [vmem:[#allocation15 + $0x128] sm:$0xff]
      %v851 = vld [vmem:[#allocation15 + $0x130] sm:$0xff]
      %v852 = vld [vmem:[#allocation15 + $0x138] sm:$0xff]
      %v853 = vld [vmem:[#allocation15 + $0x140] sm:$0xff]
      %v854 = vld [vmem:[#allocation15 + $0x148] sm:$0xff]
      %v855 = vld [vmem:[#allocation15 + $0x150] sm:$0xff]
      %v856 = vld [vmem:[#allocation15 + $0x158] sm:$0xff]
      %v857 = vld [vmem:[#allocation15 + $0x160] sm:$0xff]
      %v858 = vld [vmem:[#allocation15 + $0x168] sm:$0xff]
      %v859 = vld [vmem:[#allocation15 + $0x170] sm:$0xff]
      %v860 = vld [vmem:[#allocation15 + $0x178] sm:$0xff]
      %v861 = vld [vmem:[#allocation15 + $0x180] sm:$0xff]
      %v862 = vld [vmem:[#allocation15 + $0x188] sm:$0xff]
      %v863 = vld [vmem:[#allocation15 + $0x190] sm:$0xff]
      %v864 = vld [vmem:[#allocation15 + $0x198] sm:$0xff]
      %v865 = vld [vmem:[#allocation15 + $0x1a0] sm:$0xff]
      %v866 = vld [vmem:[#allocation15 + $0x1a8] sm:$0xff]
      %v867 = vld [vmem:[#allocation15 + $0x1b0] sm:$0xff]
      %v868 = vld [vmem:[#allocation15 + $0x1b8] sm:$0xff]
      %v869 = vld [vmem:[#allocation15 + $0x1c0] sm:$0xff]
      %v870 = vld [vmem:[#allocation15 + $0x1c8] sm:$0xff]
      %v871 = vld [vmem:[#allocation15 + $0x1d0] sm:$0xff]
      %v872 = vld [vmem:[#allocation15 + $0x1d8] sm:$0xff]
      %v873 = vld [vmem:[#allocation15 + $0x1e0] sm:$0xff]
      %v874 = vld [vmem:[#allocation15 + $0x1e8] sm:$0xff]
      %v875 = vld [vmem:[#allocation15 + $0x1f0] sm:$0xff]
      %v876 = vld [vmem:[#allocation15 + $0x1f8] sm:$0xff]
      %877 = vmatprep.subr.mxu0 %v814
      %878 = vmatpush1.msra.mxu0 %v813
      %879 = vmatprep.subr.mxu0 %v818
      %880 = vmatpush1.msra.mxu0 %v817
      %881 = vmatprep.subr.mxu0 %v822
      %882 = vmatpush1.msra.mxu0 %v821
      %883 = vmatprep.subr.mxu0 %v826
      %884 = vmatpush1.msra.mxu0 %v825
      %885 = vmatprep.subr.mxu0 %v830
      %886 = vmatpush1.msra.mxu0 %v829
      %887 = vmatprep.subr.mxu0 %v834
      %888 = vmatpush1.msra.mxu0 %v833
      %889 = vmatprep.subr.mxu0 %v838
      %890 = vmatpush1.msra.mxu0 %v837
      %891 = vmatprep.subr.mxu0 %v842
      %892 = vmatpush1.msra.mxu0 %v841
      %893 = vmatprep.subr.mxu0 %v846
      %894 = vmatpush1.msra.mxu0 %v845
      %895 = vmatprep.subr.mxu0 %v850
      %896 = vmatpush1.msra.mxu0 %v849
      %897 = vmatprep.subr.mxu0 %v854
      %898 = vmatpush1.msra.mxu0 %v853
      %899 = vmatprep.subr.mxu0 %v858
      %900 = vmatpush1.msra.mxu0 %v857
      %901 = vmatprep.subr.mxu0 %v862
      %902 = vmatpush1.msra.mxu0 %v861
      %903 = vmatprep.subr.mxu0 %v866
      %904 = vmatpush1.msra.mxu0 %v865
      %905 = vmatprep.subr.mxu0 %v870
      %906 = vmatpush1.msra.mxu0 %v869
      %907 = vmatprep.subr.mxu0 %v874
      %908 = vmatpush1.msra.mxu0 %v873
      %909 = vmatprep.subr.mxu0 0.0
      %910 = vmatpush1.msra.mxu0 0.0
      %911 = vmatprep.subr.mxu0 0.0
      %912 = vmatpush1.msra.mxu0 0.0
      %913 = vmatprep.subr.mxu0 0.0
      %914 = vmatpush1.msra.mxu0 0.0
      %915 = vmatprep.subr.mxu0 0.0
      %916 = vmatpush1.msra.mxu0 0.0
      %917 = vmatprep.subr.mxu0 0.0
      %918 = vmatpush1.msra.mxu0 0.0
      %919 = vmatprep.subr.mxu0 0.0
      %920 = vmatpush1.msra.mxu0 0.0
      %921 = vmatprep.subr.mxu0 0.0
      %922 = vmatpush1.msra.mxu0 0.0
      %923 = vmatprep.subr.mxu0 0.0
      %924 = vmatpush1.msra.mxu0 0.0
      %925 = vmatprep.subr.mxu0 0.0
      %926 = vmatpush1.msra.mxu0 0.0
      %927 = vmatprep.subr.mxu0 0.0
      %928 = vmatpush1.msra.mxu0 0.0
      %929 = vmatprep.subr.mxu0 0.0
      %930 = vmatpush1.msra.mxu0 0.0
      %931 = vmatprep.subr.mxu0 0.0
      %932 = vmatpush1.msra.mxu0 0.0
      %933 = vmatprep.subr.mxu0 0.0
      %934 = vmatpush1.msra.mxu0 0.0
      %935 = vmatprep.subr.mxu0 0.0
      %936 = vmatpush1.msra.mxu0 0.0
      %937 = vmatprep.subr.mxu0 0.0
      %938 = vmatpush1.msra.mxu0 0.0
      %939 = vmatprep.subr.mxu0 0.0
      %940 = vmatpush1.msra.mxu0 0.0
      %941 = vmatprep.mubr.f32.mxu0 0.0
      %942 = vmatmul.mubr.f32.gmra.mrb[0].mxu0 %v812
      %v943 = vpop.f32.mrb[0].mxu0
      %v944 = vadd.f32 0.0, %v943
      %v945 = vpop.f32.mrb[0].mxu0
      %v946 = vadd.f32 0.0, %v945
      %947 = vdwg.mxu0
      %948 = vmatprep.subr.mxu0 %v816
      %949 = vmatpush1.msra.mxu0 %v815
      %950 = vmatprep.subr.mxu0 %v820
      %951 = vmatpush1.msra.mxu0 %v819
      %952 = vmatprep.subr.mxu0 %v824
      %953 = vmatpush1.msra.mxu0 %v823
      %954 = vmatprep.subr.mxu0 %v828
      %955 = vmatpush1.msra.mxu0 %v827
      %956 = vmatprep.subr.mxu0 %v832
      %957 = vmatpush1.msra.mxu0 %v831
      %958 = vmatprep.subr.mxu0 %v836
      %959 = vmatpush1.msra.mxu0 %v835
      %960 = vmatprep.subr.mxu0 %v840
      %961 = vmatpush1.msra.mxu0 %v839
      %962 = vmatprep.subr.mxu0 %v844
      %963 = vmatpush1.msra.mxu0 %v843
      %964 = vmatprep.subr.mxu0 %v848
      %965 = vmatpush1.msra.mxu0 %v847
      %966 = vmatprep.subr.mxu0 %v852
      %967 = vmatpush1.msra.mxu0 %v851
      %968 = vmatprep.subr.mxu0 %v856
      %969 = vmatpush1.msra.mxu0 %v855
      %970 = vmatprep.subr.mxu0 %v860
      %971 = vmatpush1.msra.mxu0 %v859
      %972 = vmatprep.subr.mxu0 %v864
      %973 = vmatpush1.msra.mxu0 %v863
      %974 = vmatprep.subr.mxu0 %v868
      %975 = vmatpush1.msra.mxu0 %v867
      %976 = vmatprep.subr.mxu0 %v872
      %977 = vmatpush1.msra.mxu0 %v871
      %978 = vmatprep.subr.mxu0 %v876
      %979 = vmatpush1.msra.mxu0 %v875
      %980 = vmatprep.subr.mxu0 0.0
      %981 = vmatpush1.msra.mxu0 0.0
      %982 = vmatprep.subr.mxu0 0.0
      %983 = vmatpush1.msra.mxu0 0.0
      %984 = vmatprep.subr.mxu0 0.0
      %985 = vmatpush1.msra.mxu0 0.0
      %986 = vmatprep.subr.mxu0 0.0
      %987 = vmatpush1.msra.mxu0 0.0
      %988 = vmatprep.subr.mxu0 0.0
      %989 = vmatpush1.msra.mxu0 0.0
      %990 = vmatprep.subr.mxu0 0.0
      %991 = vmatpush1.msra.mxu0 0.0
      %992 = vmatprep.subr.mxu0 0.0
      %993 = vmatpush1.msra.mxu0 0.0
      %994 = vmatprep.subr.mxu0 0.0
      %995 = vmatpush1.msra.mxu0 0.0
      %996 = vmatprep.subr.mxu0 0.0
      %997 = vmatpush1.msra.mxu0 0.0
      %998 = vmatprep.subr.mxu0 0.0
      %999 = vmatpush1.msra.mxu0 0.0
      %1000 = vmatprep.subr.mxu0 0.0
      %1001 = vmatpush1.msra.mxu0 0.0
      %1002 = vmatprep.subr.mxu0 0.0
      %1003 = vmatpush1.msra.mxu0 0.0
      %1004 = vmatprep.subr.mxu0 0.0
      %1005 = vmatpush1.msra.mxu0 0.0
      %1006 = vmatprep.subr.mxu0 0.0
      %1007 = vmatpush1.msra.mxu0 0.0
      %1008 = vmatprep.subr.mxu0 0.0
      %1009 = vmatpush1.msra.mxu0 0.0
      %1010 = vmatprep.subr.mxu0 0.0
      %1011 = vmatpush1.msra.mxu0 0.0
      %1012 = vmatprep.mubr.f32.mxu0 0.0
      %1013 = vmatmul.mubr.f32.gmra.mrb[0].mxu0 %v812
      %v1014 = vpop.f32.mrb[0].mxu0
      %v1015 = vadd.f32 0.0, %v1014
      %v1016 = vpop.f32.mrb[0].mxu0
      %v1017 = vadd.f32 0.0, %v1016
      %1018 = vdwg.mxu0
      %v1019 = vadd.f32 %v808, %v944
      %v1020 = vadd.f32 %v809, %v946
      %v1021 = vadd.f32 %v810, %v1015
      %v1022 = vadd.f32 %v811, %v1017
      %s1023 = sshra.s32 %s804, 3
      %s1024 = sand.u32 %s804, 7
      %s1025 = smul.u32 %s1023, 4
      %s1026 = smul.addr %s1025, 8
      %s1027 = scalar_lea.vmem [#allocation7], %s1026
      %v1028 = vld [vmem:[%s1027] sm:$0xff]
      %v1029 = vld [vmem:[%s1027 + $0x8] sm:$0xff]
      %v1030 = vld [vmem:[%s1027 + $0x10] sm:$0xff]
      %v1031 = vld [vmem:[%s1027 + $0x18] sm:$0xff]
      %v1032 = vld [vmem:[#allocation4] sm:$0xff]
      %v1033 = vld [vmem:[#allocation20] sm:$0xff]
      %v1034 = vld [vmem:[#allocation20 + $0x8] sm:$0xff]
      %v1035 = vld [vmem:[#allocation20 + $0x10] sm:$0xff]
      %v1036 = vld [vmem:[#allocation20 + $0x18] sm:$0xff]
      %v1037 = vld [vmem:[#allocation20 + $0x20] sm:$0xff]
      %v1038 = vld [vmem:[#allocation20 + $0x28] sm:$0xff]
      %v1039 = vld [vmem:[#allocation20 + $0x30] sm:$0xff]
      %v1040 = vld [vmem:[#allocation20 + $0x38] sm:$0xff]
      %v1041 = vld [vmem:[#allocation20 + $0x40] sm:$0xff]
      %v1042 = vld [vmem:[#allocation20 + $0x48] sm:$0xff]
      %v1043 = vld [vmem:[#allocation20 + $0x50] sm:$0xff]
      %v1044 = vld [vmem:[#allocation20 + $0x58] sm:$0xff]
      %v1045 = vld [vmem:[#allocation20 + $0x60] sm:$0xff]
      %v1046 = vld [vmem:[#allocation20 + $0x68] sm:$0xff]
      %v1047 = vld [vmem:[#allocation20 + $0x70] sm:$0xff]
      %v1048 = vld [vmem:[#allocation20 + $0x78] sm:$0xff]
      %v1049 = vld [vmem:[#allocation20 + $0x80] sm:$0xff]
      %v1050 = vld [vmem:[#allocation20 + $0x88] sm:$0xff]
      %v1051 = vld [vmem:[#allocation20 + $0x90] sm:$0xff]
      %v1052 = vld [vmem:[#allocation20 + $0x98] sm:$0xff]
      %v1053 = vld [vmem:[#allocation20 + $0xa0] sm:$0xff]
      %v1054 = vld [vmem:[#allocation20 + $0xa8] sm:$0xff]
      %v1055 = vld [vmem:[#allocation20 + $0xb0] sm:$0xff]
      %v1056 = vld [vmem:[#allocation20 + $0xb8] sm:$0xff]
      %v1057 = vld [vmem:[#allocation20 + $0xc0] sm:$0xff]
      %v1058 = vld [vmem:[#allocation20 + $0xc8] sm:$0xff]
      %v1059 = vld [vmem:[#allocation20 + $0xd0] sm:$0xff]
      %v1060 = vld [vmem:[#allocation20 + $0xd8] sm:$0xff]
      %v1061 = vld [vmem:[#allocation20 + $0xe0] sm:$0xff]
      %v1062 = vld [vmem:[#allocation20 + $0xe8] sm:$0xff]
      %v1063 = vld [vmem:[#allocation20 + $0xf0] sm:$0xff]
      %v1064 = vld [vmem:[#allocation20 + $0xf8] sm:$0xff]
      %v1065 = vld [vmem:[#allocation20 + $0x100] sm:$0xff]
      %v1066 = vld [vmem:[#allocation20 + $0x108] sm:$0xff]
      %v1067 = vld [vmem:[#allocation20 + $0x110] sm:$0xff]
      %v1068 = vld [vmem:[#allocation20 + $0x118] sm:$0xff]
      %v1069 = vld [vmem:[#allocation20 + $0x120] sm:$0xff]
      %v1070 = vld [vmem:[#allocation20 + $0x128] sm:$0xff]
      %v1071 = vld [vmem:[#allocation20 + $0x130] sm:$0xff]
      %v1072 = vld [vmem:[#allocation20 + $0x138] sm:$0xff]
      %v1073 = vld [vmem:[#allocation20 + $0x140] sm:$0xff]
      %v1074 = vld [vmem:[#allocation20 + $0x148] sm:$0xff]
      %v1075 = vld [vmem:[#allocation20 + $0x150] sm:$0xff]
      %v1076 = vld [vmem:[#allocation20 + $0x158] sm:$0xff]
      %v1077 = vld [vmem:[#allocation20 + $0x160] sm:$0xff]
      %v1078 = vld [vmem:[#allocation20 + $0x168] sm:$0xff]
      %v1079 = vld [vmem:[#allocation20 + $0x170] sm:$0xff]
      %v1080 = vld [vmem:[#allocation20 + $0x178] sm:$0xff]
      %v1081 = vld [vmem:[#allocation20 + $0x180] sm:$0xff]
      %v1082 = vld [vmem:[#allocation20 + $0x188] sm:$0xff]
      %v1083 = vld [vmem:[#allocation20 + $0x190] sm:$0xff]
      %v1084 = vld [vmem:[#allocation20 + $0x198] sm:$0xff]
      %v1085 = vld [vmem:[#allocation20 + $0x1a0] sm:$0xff]
      %v1086 = vld [vmem:[#allocation20 + $0x1a8] sm:$0xff]
      %v1087 = vld [vmem:[#allocation20 + $0x1b0] sm:$0xff]
      %v1088 = vld [vmem:[#allocation20 + $0x1b8] sm:$0xff]
      %v1089 = vld [vmem:[#allocation20 + $0x1c0] sm:$0xff]
      %v1090 = vld [vmem:[#allocation20 + $0x1c8] sm:$0xff]
      %v1091 = vld [vmem:[#allocation20 + $0x1d0] sm:$0xff]
      %v1092 = vld [vmem:[#allocation20 + $0x1d8] sm:$0xff]
      %v1093 = vld [vmem:[#allocation20 + $0x1e0] sm:$0xff]
      %v1094 = vld [vmem:[#allocation20 + $0x1e8] sm:$0xff]
      %v1095 = vld [vmem:[#allocation20 + $0x1f0] sm:$0xff]
      %v1096 = vld [vmem:[#allocation20 + $0x1f8] sm:$0xff]
      %1097 = vmatprep.subr.mxu0 %v1034
      %1098 = vmatpush1.msra.mxu0 %v1033
      %1099 = vmatprep.subr.mxu0 %v1038
      %1100 = vmatpush1.msra.mxu0 %v1037
      %1101 = vmatprep.subr.mxu0 %v1042
      %1102 = vmatpush1.msra.mxu0 %v1041
      %1103 = vmatprep.subr.mxu0 %v1046
      %1104 = vmatpush1.msra.mxu0 %v1045
      %1105 = vmatprep.subr.mxu0 %v1050
      %1106 = vmatpush1.msra.mxu0 %v1049
      %1107 = vmatprep.subr.mxu0 %v1054
      %1108 = vmatpush1.msra.mxu0 %v1053
      %1109 = vmatprep.subr.mxu0 %v1058
      %1110 = vmatpush1.msra.mxu0 %v1057
      %1111 = vmatprep.subr.mxu0 %v1062
      %1112 = vmatpush1.msra.mxu0 %v1061
      %1113 = vmatprep.subr.mxu0 %v1066
      %1114 = vmatpush1.msra.mxu0 %v1065
      %1115 = vmatprep.subr.mxu0 %v1070
      %1116 = vmatpush1.msra.mxu0 %v1069
      %1117 = vmatprep.subr.mxu0 %v1074
      %1118 = vmatpush1.msra.mxu0 %v1073
      %1119 = vmatprep.subr.mxu0 %v1078
      %1120 = vmatpush1.msra.mxu0 %v1077
      %1121 = vmatprep.subr.mxu0 %v1082
      %1122 = vmatpush1.msra.mxu0 %v1081
      %1123 = vmatprep.subr.mxu0 %v1086
      %1124 = vmatpush1.msra.mxu0 %v1085
      %1125 = vmatprep.subr.mxu0 %v1090
      %1126 = vmatpush1.msra.mxu0 %v1089
      %1127 = vmatprep.subr.mxu0 %v1094
      %1128 = vmatpush1.msra.mxu0 %v1093
      %1129 = vmatprep.subr.mxu0 0.0
      %1130 = vmatpush1.msra.mxu0 0.0
      %1131 = vmatprep.subr.mxu0 0.0
      %1132 = vmatpush1.msra.mxu0 0.0
      %1133 = vmatprep.subr.mxu0 0.0
      %1134 = vmatpush1.msra.mxu0 0.0
      %1135 = vmatprep.subr.mxu0 0.0
      %1136 = vmatpush1.msra.mxu0 0.0
      %1137 = vmatprep.subr.mxu0 0.0
      %1138 = vmatpush1.msra.mxu0 0.0
      %1139 = vmatprep.subr.mxu0 0.0
      %1140 = vmatpush1.msra.mxu0 0.0
      %1141 = vmatprep.subr.mxu0 0.0
      %1142 = vmatpush1.msra.mxu0 0.0
      %1143 = vmatprep.subr.mxu0 0.0
      %1144 = vmatpush1.msra.mxu0 0.0
      %1145 = vmatprep.subr.mxu0 0.0
      %1146 = vmatpush1.msra.mxu0 0.0
      %1147 = vmatprep.subr.mxu0 0.0
      %1148 = vmatpush1.msra.mxu0 0.0
      %1149 = vmatprep.subr.mxu0 0.0
      %1150 = vmatpush1.msra.mxu0 0.0
      %1151 = vmatprep.subr.mxu0 0.0
      %1152 = vmatpush1.msra.mxu0 0.0
      %1153 = vmatprep.subr.mxu0 0.0
      %1154 = vmatpush1.msra.mxu0 0.0
      %1155 = vmatprep.subr.mxu0 0.0
      %1156 = vmatpush1.msra.mxu0 0.0
      %1157 = vmatprep.subr.mxu0 0.0
      %1158 = vmatpush1.msra.mxu0 0.0
      %1159 = vmatprep.subr.mxu0 0.0
      %1160 = vmatpush1.msra.mxu0 0.0
      %1161 = vmatprep.mubr.f32.mxu0 0.0
      %1162 = vmatmul.mubr.f32.gmra.mrb[0].mxu0 %v1032
      %v1163 = vpop.f32.mrb[0].mxu0
      %v1164 = vadd.f32 0.0, %v1163
      %v1165 = vpop.f32.mrb[0].mxu0
      %v1166 = vadd.f32 0.0, %v1165
      %1167 = vdwg.mxu0
      %1168 = vmatprep.subr.mxu0 %v1036
      %1169 = vmatpush1.msra.mxu0 %v1035
      %1170 = vmatprep.subr.mxu0 %v1040
      %1171 = vmatpush1.msra.mxu0 %v1039
      %1172 = vmatprep.subr.mxu0 %v1044
      %1173 = vmatpush1.msra.mxu0 %v1043
      %1174 = vmatprep.subr.mxu0 %v1048
      %1175 = vmatpush1.msra.mxu0 %v1047
      %1176 = vmatprep.subr.mxu0 %v1052
      %1177 = vmatpush1.msra.mxu0 %v1051
      %1178 = vmatprep.subr.mxu0 %v1056
      %1179 = vmatpush1.msra.mxu0 %v1055
      %1180 = vmatprep.subr.mxu0 %v1060
      %1181 = vmatpush1.msra.mxu0 %v1059
      %1182 = vmatprep.subr.mxu0 %v1064
      %1183 = vmatpush1.msra.mxu0 %v1063
      %1184 = vmatprep.subr.mxu0 %v1068
      %1185 = vmatpush1.msra.mxu0 %v1067
      %1186 = vmatprep.subr.mxu0 %v1072
      %1187 = vmatpush1.msra.mxu0 %v1071
      %1188 = vmatprep.subr.mxu0 %v1076
      %1189 = vmatpush1.msra.mxu0 %v1075
      %1190 = vmatprep.subr.mxu0 %v1080
      %1191 = vmatpush1.msra.mxu0 %v1079
      %1192 = vmatprep.subr.mxu0 %v1084
      %1193 = vmatpush1.msra.mxu0 %v1083
      %1194 = vmatprep.subr.mxu0 %v1088
      %1195 = vmatpush1.msra.mxu0 %v1087
      %1196 = vmatprep.subr.mxu0 %v1092
      %1197 = vmatpush1.msra.mxu0 %v1091
      %1198 = vmatprep.subr.mxu0 %v1096
      %1199 = vmatpush1.msra.mxu0 %v1095
      %1200 = vmatprep.subr.mxu0 0.0
      %1201 = vmatpush1.msra.mxu0 0.0
      %1202 = vmatprep.subr.mxu0 0.0
      %1203 = vmatpush1.msra.mxu0 0.0
      %1204 = vmatprep.subr.mxu0 0.0
      %1205 = vmatpush1.msra.mxu0 0.0
      %1206 = vmatprep.subr.mxu0 0.0
      %1207 = vmatpush1.msra.mxu0 0.0
      %1208 = vmatprep.subr.mxu0 0.0
      %1209 = vmatpush1.msra.mxu0 0.0
      %1210 = vmatprep.subr.mxu0 0.0
      %1211 = vmatpush1.msra.mxu0 0.0
      %1212 = vmatprep.subr.mxu0 0.0
      %1213 = vmatpush1.msra.mxu0 0.0
      %1214 = vmatprep.subr.mxu0 0.0
      %1215 = vmatpush1.msra.mxu0 0.0
      %1216 = vmatprep.subr.mxu0 0.0
      %1217 = vmatpush1.msra.mxu0 0.0
      %1218 = vmatprep.subr.mxu0 0.0
      %1219 = vmatpush1.msra.mxu0 0.0
      %1220 = vmatprep.subr.mxu0 0.0
      %1221 = vmatpush1.msra.mxu0 0.0
      %1222 = vmatprep.subr.mxu0 0.0
      %1223 = vmatpush1.msra.mxu0 0.0
      %1224 = vmatprep.subr.mxu0 0.0
      %1225 = vmatpush1.msra.mxu0 0.0
      %1226 = vmatprep.subr.mxu0 0.0
      %1227 = vmatpush1.msra.mxu0 0.0
      %1228 = vmatprep.subr.mxu0 0.0
      %1229 = vmatpush1.msra.mxu0 0.0
      %1230 = vmatprep.subr.mxu0 0.0
      %1231 = vmatpush1.msra.mxu0 0.0
      %1232 = vmatprep.mubr.f32.mxu0 0.0
      %1233 = vmatmul.mubr.f32.gmra.mrb[0].mxu0 %v1032
      %v1234 = vpop.f32.mrb[0].mxu0
      %v1235 = vadd.f32 0.0, %v1234
      %v1236 = vpop.f32.mrb[0].mxu0
      %v1237 = vadd.f32 0.0, %v1236
      %1238 = vdwg.mxu0
      %v1239 = vadd.f32 %v1028, %v1164
      %v1240 = vadd.f32 %v1029, %v1166
      %v1241 = vadd.f32 %v1030, %v1235
      %v1242 = vadd.f32 %v1031, %v1237
      %v1243 = vld [vmem:[#allocation3] sm:$0xff]
      %v1244 = vxor.u32 %v1019, 2147483648
      %v1245 = vmul.f32 %v1244, 1.442695
      %v1246 = vpow.pop %v1245
      %v1247 = vadd.f32 %v1246, 1.0
      %v1248 = vrcp.pop %v1247
      %v1249 = vmul.f32 1.0, %v1248
      %v1250 = vxor.u32 %v1020, 2147483648
      %v1251 = vmul.f32 %v1250, 1.442695
      %v1252 = vpow.pop %v1251
      %v1253 = vadd.f32 %v1252, 1.0
      %v1254 = vrcp.pop %v1253
      %v1255 = vmul.f32 1.0, %v1254
      %v1256 = vtanh.pop %v1021
      %v1257 = vxor.u32 %v1022, 2147483648
      %v1258 = vmul.f32 %v1257, 1.442695
      %v1259 = vpow.pop %v1258
      %v1260 = vadd.f32 %v1259, 1.0
      %v1261 = vrcp.pop %v1260
      %v1262 = vmul.f32 1.0, %v1261
      %v1263 = vmul.f32 %v1255, %v1243
      %v1264 = vmul.f32 %v1249, %v1256
      %v1265 = vadd.f32 %v1263, %v1264
      %v1266 = vtanh.pop %v1265
      %v1267 = vmul.f32 %v1262, %v1266
      %v1268 = vld [vmem:[#allocation5] sm:$0xff]
      %v1269 = vxor.u32 %v1239, 2147483648
      %v1270 = vmul.f32 %v1269, 1.442695
      %v1271 = vpow.pop %v1270
      %v1272 = vadd.f32 %v1271, 1.0
      %v1273 = vrcp.pop %v1272
      %v1274 = vmul.f32 1.0, %v1273
      %v1275 = vxor.u32 %v1240, 2147483648
      %v1276 = vmul.f32 %v1275, 1.442695
      %v1277 = vpow.pop %v1276
      %v1278 = vadd.f32 %v1277, 1.0
      %v1279 = vrcp.pop %v1278
      %v1280 = vmul.f32 1.0, %v1279
      %v1281 = vtanh.pop %v1241
      %v1282 = vxor.u32 %v1242, 2147483648
      %v1283 = vmul.f32 %v1282, 1.442695
      %v1284 = vpow.pop %v1283
      %v1285 = vadd.f32 %v1284, 1.0
      %v1286 = vrcp.pop %v1285
      %v1287 = vmul.f32 1.0, %v1286
      %v1288 = vmul.f32 %v1280, %v1268
      %v1289 = vmul.f32 %v1274, %v1281
      %v1290 = vadd.f32 %v1288, %v1289
      %v1291 = vtanh.pop %v1290
      %v1292 = vmul.f32 %v1287, %v1291
      %vm1293 = vcmp.gt.s32.totalorder %v185, 0
      %v1294 = vstv %s803
      %vm1295 = vcmp.gt.s32.totalorder %v185, %v1294
      %v1296 = vsel %vm1293, 1, 0
      %1297 = vset.pattern.permute.xlu0 0
      %1298 = vperm.xlu0 %1297, %v1296
      %v1299 = vpop.permute.xlu0 %1298
      %vm1300 = vcmp.eq.s32.totalorder %v1299, 1
      %v1301 = vsel %vm1300, %v1267, %v812
      %1302 = vst [vmem:[#allocation2] sm:$0xff] %v1301
      %v1303 = vld [vmem:[#allocation3] sm:$0xff]
      %v1304 = vsel %vm1300, %v1265, %v1303
      %1305 = vst [vmem:[#allocation3] sm:$0xff] %v1304
      %v1306 = vld [vmem:[#allocation4] sm:$0xff]
      %v1307 = vsel %vm1295, 1, 0
      %1308 = vset.pattern.permute.xlu0 0
      %1309 = vperm.xlu0 %1308, %v1307
      %v1310 = vpop.permute.xlu0 %1309
      %vm1311 = vcmp.eq.s32.totalorder %v1310, 1
      %v1312 = vsel %vm1311, %v1292, %v1306
      %1313 = vst [vmem:[#allocation4] sm:$0xff] %v1312
      %v1314 = vld [vmem:[#allocation5] sm:$0xff]
      %v1315 = vsel %vm1311, %v1290, %v1314
      %1316 = vst [vmem:[#allocation5] sm:$0xff] %v1315
    $region97: #{tpu_custom_call.1} parent=1 // pred_fallthru
      _
    %p1317 = scmp.gt.s32.totalorder %s184, 1
    // Predicated region
    $region98: #{tpu_custom_call.1} parent=1 // pred_check
      %p1318 = pneg %p1317
    $region99: #{tpu_custom_call.1} parent=1 // pred_check_branch
      %1320 = sbr.rel (%p1318) target = $region101
    $region100: #{tpu_custom_call.1} parent=1 // pred_region
      %s1321 = ssub.s32 %s184, 2
      %s1322 = smul.u32 %s1321, 8
      %s1323 = smul.u32 1, 4
      %s1324 = smul.addr %s1323, 8
      %s1325 = scalar_lea.vmem [#allocation6], %s1324
      %v1326 = vld [vmem:[%s1325] sm:$0xff]
      %v1327 = vld [vmem:[%s1325 + $0x8] sm:$0xff]
      %v1328 = vld [vmem:[%s1325 + $0x10] sm:$0xff]
      %v1329 = vld [vmem:[%s1325 + $0x18] sm:$0xff]
      %v1330 = vld [vmem:[#allocation2] sm:$0xff]
      %v1331 = vld [vmem:[#allocation15] sm:$0xff]
      %v1332 = vld [vmem:[#allocation15 + $0x8] sm:$0xff]
      %v1333 = vld [vmem:[#allocation15 + $0x10] sm:$0xff]
      %v1334 = vld [vmem:[#allocation15 + $0x18] sm:$0xff]
      %v1335 = vld [vmem:[#allocation15 + $0x20] sm:$0xff]
      %v1336 = vld [vmem:[#allocation15 + $0x28] sm:$0xff]
      %v1337 = vld [vmem:[#allocation15 + $0x30] sm:$0xff]
      %v1338 = vld [vmem:[#allocation15 + $0x38] sm:$0xff]
      %v1339 = vld [vmem:[#allocation15 + $0x40] sm:$0xff]
      %v1340 = vld [vmem:[#allocation15 + $0x48] sm:$0xff]
      %v1341 = vld [vmem:[#allocation15 + $0x50] sm:$0xff]
      %v1342 = vld [vmem:[#allocation15 + $0x58] sm:$0xff]
      %v1343 = vld [vmem:[#allocation15 + $0x60] sm:$0xff]
      %v1344 = vld [vmem:[#allocation15 + $0x68] sm:$0xff]
      %v1345 = vld [vmem:[#allocation15 + $0x70] sm:$0xff]
      %v1346 = vld [vmem:[#allocation15 + $0x78] sm:$0xff]
      %v1347 = vld [vmem:[#allocation15 + $0x80] sm:$0xff]
      %v1348 = vld [vmem:[#allocation15 + $0x88] sm:$0xff]
      %v1349 = vld [vmem:[#allocation15 + $0x90] sm:$0xff]
      %v1350 = vld [vmem:[#allocation15 + $0x98] sm:$0xff]
      %v1351 = vld [vmem:[#allocation15 + $0xa0] sm:$0xff]
      %v1352 = vld [vmem:[#allocation15 + $0xa8] sm:$0xff]
      %v1353 = vld [vmem:[#allocation15 + $0xb0] sm:$0xff]
      %v1354 = vld [vmem:[#allocation15 + $0xb8] sm:$0xff]
      %v1355 = vld [vmem:[#allocation15 + $0xc0] sm:$0xff]
      %v1356 = vld [vmem:[#allocation15 + $0xc8] sm:$0xff]
      %v1357 = vld [vmem:[#allocation15 + $0xd0] sm:$0xff]
      %v1358 = vld [vmem:[#allocation15 + $0xd8] sm:$0xff]
      %v1359 = vld [vmem:[#allocation15 + $0xe0] sm:$0xff]
      %v1360 = vld [vmem:[#allocation15 + $0xe8] sm:$0xff]
      %v1361 = vld [vmem:[#allocation15 + $0xf0] sm:$0xff]
      %v1362 = vld [vmem:[#allocation15 + $0xf8] sm:$0xff]
      %v1363 = vld [vmem:[#allocation15 + $0x100] sm:$0xff]
      %v1364 = vld [vmem:[#allocation15 + $0x108] sm:$0xff]
      %v1365 = vld [vmem:[#allocation15 + $0x110] sm:$0xff]
      %v1366 = vld [vmem:[#allocation15 + $0x118] sm:$0xff]
      %v1367 = vld [vmem:[#allocation15 + $0x120] sm:$0xff]
      %v1368 = vld [vmem:[#allocation15 + $0x128] sm:$0xff]
      %v1369 = vld [vmem:[#allocation15 + $0x130] sm:$0xff]
      %v1370 = vld [vmem:[#allocation15 + $0x138] sm:$0xff]
      %v1371 = vld [vmem:[#allocation15 + $0x140] sm:$0xff]
      %v1372 = vld [vmem:[#allocation15 + $0x148] sm:$0xff]
      %v1373 = vld [vmem:[#allocation15 + $0x150] sm:$0xff]
      %v1374 = vld [vmem:[#allocation15 + $0x158] sm:$0xff]
      %v1375 = vld [vmem:[#allocation15 + $0x160] sm:$0xff]
      %v1376 = vld [vmem:[#allocation15 + $0x168] sm:$0xff]
      %v1377 = vld [vmem:[#allocation15 + $0x170] sm:$0xff]
      %v1378 = vld [vmem:[#allocation15 + $0x178] sm:$0xff]
      %v1379 = vld [vmem:[#allocation15 + $0x180] sm:$0xff]
      %v1380 = vld [vmem:[#allocation15 + $0x188] sm:$0xff]
      %v1381 = vld [vmem:[#allocation15 + $0x190] sm:$0xff]
      %v1382 = vld [vmem:[#allocation15 + $0x198] sm:$0xff]
      %v1383 = vld [vmem:[#allocation15 + $0x1a0] sm:$0xff]
      %v1384 = vld [vmem:[#allocation15 + $0x1a8] sm:$0xff]
      %v1385 = vld [vmem:[#allocation15 + $0x1b0] sm:$0xff]
      %v1386 = vld [vmem:[#allocation15 + $0x1b8] sm:$0xff]
      %v1387 = vld [vmem:[#allocation15 + $0x1c0] sm:$0xff]
      %v1388 = vld [vmem:[#allocation15 + $0x1c8] sm:$0xff]
      %v1389 = vld [vmem:[#allocation15 + $0x1d0] sm:$0xff]
      %v1390 = vld [vmem:[#allocation15 + $0x1d8] sm:$0xff]
      %v1391 = vld [vmem:[#allocation15 + $0x1e0] sm:$0xff]
      %v1392 = vld [vmem:[#allocation15 + $0x1e8] sm:$0xff]
      %v1393 = vld [vmem:[#allocation15 + $0x1f0] sm:$0xff]
      %v1394 = vld [vmem:[#allocation15 + $0x1f8] sm:$0xff]
      %1395 = vmatprep.subr.mxu0 %v1332
      %1396 = vmatpush1.msra.mxu0 %v1331
      %1397 = vmatprep.subr.mxu0 %v1336
      %1398 = vmatpush1.msra.mxu0 %v1335
      %1399 = vmatprep.subr.mxu0 %v1340
      %1400 = vmatpush1.msra.mxu0 %v1339
      %1401 = vmatprep.subr.mxu0 %v1344
      %1402 = vmatpush1.msra.mxu0 %v1343
      %1403 = vmatprep.subr.mxu0 %v1348
      %1404 = vmatpush1.msra.mxu0 %v1347
      %1405 = vmatprep.subr.mxu0 %v1352
      %1406 = vmatpush1.msra.mxu0 %v1351
      %1407 = vmatprep.subr.mxu0 %v1356
      %1408 = vmatpush1.msra.mxu0 %v1355
      %1409 = vmatprep.subr.mxu0 %v1360
      %1410 = vmatpush1.msra.mxu0 %v1359
      %1411 = vmatprep.subr.mxu0 %v1364
      %1412 = vmatpush1.msra.mxu0 %v1363
      %1413 = vmatprep.subr.mxu0 %v1368
      %1414 = vmatpush1.msra.mxu0 %v1367
      %1415 = vmatprep.subr.mxu0 %v1372
      %1416 = vmatpush1.msra.mxu0 %v1371
      %1417 = vmatprep.subr.mxu0 %v1376
      %1418 = vmatpush1.msra.mxu0 %v1375
      %1419 = vmatprep.subr.mxu0 %v1380
      %1420 = vmatpush1.msra.mxu0 %v1379
      %1421 = vmatprep.subr.mxu0 %v1384
      %1422 = vmatpush1.msra.mxu0 %v1383
      %1423 = vmatprep.subr.mxu0 %v1388
      %1424 = vmatpush1.msra.mxu0 %v1387
      %1425 = vmatprep.subr.mxu0 %v1392
      %1426 = vmatpush1.msra.mxu0 %v1391
      %1427 = vmatprep.subr.mxu0 0.0
      %1428 = vmatpush1.msra.mxu0 0.0
      %1429 = vmatprep.subr.mxu0 0.0
      %1430 = vmatpush1.msra.mxu0 0.0
      %1431 = vmatprep.subr.mxu0 0.0
      %1432 = vmatpush1.msra.mxu0 0.0
      %1433 = vmatprep.subr.mxu0 0.0
      %1434 = vmatpush1.msra.mxu0 0.0
      %1435 = vmatprep.subr.mxu0 0.0
      %1436 = vmatpush1.msra.mxu0 0.0
      %1437 = vmatprep.subr.mxu0 0.0
      %1438 = vmatpush1.msra.mxu0 0.0
      %1439 = vmatprep.subr.mxu0 0.0
      %1440 = vmatpush1.msra.mxu0 0.0
      %1441 = vmatprep.subr.mxu0 0.0
      %1442 = vmatpush1.msra.mxu0 0.0
      %1443 = vmatprep.subr.mxu0 0.0
      %1444 = vmatpush1.msra.mxu0 0.0
      %1445 = vmatprep.subr.mxu0 0.0
      %1446 = vmatpush1.msra.mxu0 0.0
      %1447 = vmatprep.subr.mxu0 0.0
      %1448 = vmatpush1.msra.mxu0 0.0
      %1449 = vmatprep.subr.mxu0 0.0
      %1450 = vmatpush1.msra.mxu0 0.0
      %1451 = vmatprep.subr.mxu0 0.0
      %1452 = vmatpush1.msra.mxu0 0.0
      %1453 = vmatprep.subr.mxu0 0.0
      %1454 = vmatpush1.msra.mxu0 0.0
      %1455 = vmatprep.subr.mxu0 0.0
      %1456 = vmatpush1.msra.mxu0 0.0
      %1457 = vmatprep.subr.mxu0 0.0
      %1458 = vmatpush1.msra.mxu0 0.0
      %1459 = vmatprep.mubr.f32.mxu0 0.0
      %1460 = vmatmul.mubr.f32.gmra.mrb[0].mxu0 %v1330
      %v1461 = vpop.f32.mrb[0].mxu0
      %v1462 = vadd.f32 0.0, %v1461
      %v1463 = vpop.f32.mrb[0].mxu0
      %v1464 = vadd.f32 0.0, %v1463
      %1465 = vdwg.mxu0
      %1466 = vmatprep.subr.mxu0 %v1334
      %1467 = vmatpush1.msra.mxu0 %v1333
      %1468 = vmatprep.subr.mxu0 %v1338
      %1469 = vmatpush1.msra.mxu0 %v1337
      %1470 = vmatprep.subr.mxu0 %v1342
      %1471 = vmatpush1.msra.mxu0 %v1341
      %1472 = vmatprep.subr.mxu0 %v1346
      %1473 = vmatpush1.msra.mxu0 %v1345
      %1474 = vmatprep.subr.mxu0 %v1350
      %1475 = vmatpush1.msra.mxu0 %v1349
      %1476 = vmatprep.subr.mxu0 %v1354
      %1477 = vmatpush1.msra.mxu0 %v1353
      %1478 = vmatprep.subr.mxu0 %v1358
      %1479 = vmatpush1.msra.mxu0 %v1357
      %1480 = vmatprep.subr.mxu0 %v1362
      %1481 = vmatpush1.msra.mxu0 %v1361
      %1482 = vmatprep.subr.mxu0 %v1366
      %1483 = vmatpush1.msra.mxu0 %v1365
      %1484 = vmatprep.subr.mxu0 %v1370
      %1485 = vmatpush1.msra.mxu0 %v1369
      %1486 = vmatprep.subr.mxu0 %v1374
      %1487 = vmatpush1.msra.mxu0 %v1373
      %1488 = vmatprep.subr.mxu0 %v1378
      %1489 = vmatpush1.msra.mxu0 %v1377
      %1490 = vmatprep.subr.mxu0 %v1382
      %1491 = vmatpush1.msra.mxu0 %v1381
      %1492 = vmatprep.subr.mxu0 %v1386
      %1493 = vmatpush1.msra.mxu0 %v1385
      %1494 = vmatprep.subr.mxu0 %v1390
      %1495 = vmatpush1.msra.mxu0 %v1389
      %1496 = vmatprep.subr.mxu0 %v1394
      %1497 = vmatpush1.msra.mxu0 %v1393
      %1498 = vmatprep.subr.mxu0 0.0
      %1499 = vmatpush1.msra.mxu0 0.0
      %1500 = vmatprep.subr.mxu0 0.0
      %1501 = vmatpush1.msra.mxu0 0.0
      %1502 = vmatprep.subr.mxu0 0.0
      %1503 = vmatpush1.msra.mxu0 0.0
      %1504 = vmatprep.subr.mxu0 0.0
      %1505 = vmatpush1.msra.mxu0 0.0
      %1506 = vmatprep.subr.mxu0 0.0
      %1507 = vmatpush1.msra.mxu0 0.0
      %1508 = vmatprep.subr.mxu0 0.0
      %1509 = vmatpush1.msra.mxu0 0.0
      %1510 = vmatprep.subr.mxu0 0.0
      %1511 = vmatpush1.msra.mxu0 0.0
      %1512 = vmatprep.subr.mxu0 0.0
      %1513 = vmatpush1.msra.mxu0 0.0
      %1514 = vmatprep.subr.mxu0 0.0
      %1515 = vmatpush1.msra.mxu0 0.0
      %1516 = vmatprep.subr.mxu0 0.0
      %1517 = vmatpush1.msra.mxu0 0.0
      %1518 = vmatprep.subr.mxu0 0.0
      %1519 = vmatpush1.msra.mxu0 0.0
      %1520 = vmatprep.subr.mxu0 0.0
      %1521 = vmatpush1.msra.mxu0 0.0
      %1522 = vmatprep.subr.mxu0 0.0
      %1523 = vmatpush1.msra.mxu0 0.0
      %1524 = vmatprep.subr.mxu0 0.0
      %1525 = vmatpush1.msra.mxu0 0.0
      %1526 = vmatprep.subr.mxu0 0.0
      %1527 = vmatpush1.msra.mxu0 0.0
      %1528 = vmatprep.subr.mxu0 0.0
      %1529 = vmatpush1.msra.mxu0 0.0
      %1530 = vmatprep.mubr.f32.mxu0 0.0
      %1531 = vmatmul.mubr.f32.gmra.mrb[0].mxu0 %v1330
      %v1532 = vpop.f32.mrb[0].mxu0
      %v1533 = vadd.f32 0.0, %v1532
      %v1534 = vpop.f32.mrb[0].mxu0
      %v1535 = vadd.f32 0.0, %v1534
      %1536 = vdwg.mxu0
      %v1537 = vadd.f32 %v1326, %v1462
      %v1538 = vadd.f32 %v1327, %v1464
      %v1539 = vadd.f32 %v1328, %v1533
      %v1540 = vadd.f32 %v1329, %v1535
      %s1541 = sshra.s32 %s1322, 3
      %s1542 = sand.u32 %s1322, 7
      %s1543 = smul.u32 %s1541, 4
      %s1544 = smul.addr %s1543, 8
      %s1545 = scalar_lea.vmem [#allocation7], %s1544
      %v1546 = vld [vmem:[%s1545] sm:$0xff]
      %v1547 = vld [vmem:[%s1545 + $0x8] sm:$0xff]
      %v1548 = vld [vmem:[%s1545 + $0x10] sm:$0xff]
      %v1549 = vld [vmem:[%s1545 + $0x18] sm:$0xff]
      %v1550 = vld [vmem:[#allocation4] sm:$0xff]
      %v1551 = vld [vmem:[#allocation20] sm:$0xff]
      %v1552 = vld [vmem:[#allocation20 + $0x8] sm:$0xff]
      %v1553 = vld [vmem:[#allocation20 + $0x10] sm:$0xff]
      %v1554 = vld [vmem:[#allocation20 + $0x18] sm:$0xff]
      %v1555 = vld [vmem:[#allocation20 + $0x20] sm:$0xff]
      %v1556 = vld [vmem:[#allocation20 + $0x28] sm:$0xff]
      %v1557 = vld [vmem:[#allocation20 + $0x30] sm:$0xff]
      %v1558 = vld [vmem:[#allocation20 + $0x38] sm:$0xff]
      %v1559 = vld [vmem:[#allocation20 + $0x40] sm:$0xff]
      %v1560 = vld [vmem:[#allocation20 + $0x48] sm:$0xff]
      %v1561 = vld [vmem:[#allocation20 + $0x50] sm:$0xff]
      %v1562 = vld [vmem:[#allocation20 + $0x58] sm:$0xff]
      %v1563 = vld [vmem:[#allocation20 + $0x60] sm:$0xff]
      %v1564 = vld [vmem:[#allocation20 + $0x68] sm:$0xff]
      %v1565 = vld [vmem:[#allocation20 + $0x70] sm:$0xff]
      %v1566 = vld [vmem:[#allocation20 + $0x78] sm:$0xff]
      %v1567 = vld [vmem:[#allocation20 + $0x80] sm:$0xff]
      %v1568 = vld [vmem:[#allocation20 + $0x88] sm:$0xff]
      %v1569 = vld [vmem:[#allocation20 + $0x90] sm:$0xff]
      %v1570 = vld [vmem:[#allocation20 + $0x98] sm:$0xff]
      %v1571 = vld [vmem:[#allocation20 + $0xa0] sm:$0xff]
      %v1572 = vld [vmem:[#allocation20 + $0xa8] sm:$0xff]
      %v1573 = vld [vmem:[#allocation20 + $0xb0] sm:$0xff]
      %v1574 = vld [vmem:[#allocation20 + $0xb8] sm:$0xff]
      %v1575 = vld [vmem:[#allocation20 + $0xc0] sm:$0xff]
      %v1576 = vld [vmem:[#allocation20 + $0xc8] sm:$0xff]
      %v1577 = vld [vmem:[#allocation20 + $0xd0] sm:$0xff]
      %v1578 = vld [vmem:[#allocation20 + $0xd8] sm:$0xff]
      %v1579 = vld [vmem:[#allocation20 + $0xe0] sm:$0xff]
      %v1580 = vld [vmem:[#allocation20 + $0xe8] sm:$0xff]
      %v1581 = vld [vmem:[#allocation20 + $0xf0] sm:$0xff]
      %v1582 = vld [vmem:[#allocation20 + $0xf8] sm:$0xff]
      %v1583 = vld [vmem:[#allocation20 + $0x100] sm:$0xff]
      %v1584 = vld [vmem:[#allocation20 + $0x108] sm:$0xff]
      %v1585 = vld [vmem:[#allocation20 + $0x110] sm:$0xff]
      %v1586 = vld [vmem:[#allocation20 + $0x118] sm:$0xff]
      %v1587 = vld [vmem:[#allocation20 + $0x120] sm:$0xff]
      %v1588 = vld [vmem:[#allocation20 + $0x128] sm:$0xff]
      %v1589 = vld [vmem:[#allocation20 + $0x130] sm:$0xff]
      %v1590 = vld [vmem:[#allocation20 + $0x138] sm:$0xff]
      %v1591 = vld [vmem:[#allocation20 + $0x140] sm:$0xff]
      %v1592 = vld [vmem:[#allocation20 + $0x148] sm:$0xff]
      %v1593 = vld [vmem:[#allocation20 + $0x150] sm:$0xff]
      %v1594 = vld [vmem:[#allocation20 + $0x158] sm:$0xff]
      %v1595 = vld [vmem:[#allocation20 + $0x160] sm:$0xff]
      %v1596 = vld [vmem:[#allocation20 + $0x168] sm:$0xff]
      %v1597 = vld [vmem:[#allocation20 + $0x170] sm:$0xff]
      %v1598 = vld [vmem:[#allocation20 + $0x178] sm:$0xff]
      %v1599 = vld [vmem:[#allocation20 + $0x180] sm:$0xff]
      %v1600 = vld [vmem:[#allocation20 + $0x188] sm:$0xff]
      %v1601 = vld [vmem:[#allocation20 + $0x190] sm:$0xff]
      %v1602 = vld [vmem:[#allocation20 + $0x198] sm:$0xff]
      %v1603 = vld [vmem:[#allocation20 + $0x1a0] sm:$0xff]
      %v1604 = vld [vmem:[#allocation20 + $0x1a8] sm:$0xff]
      %v1605 = vld [vmem:[#allocation20 + $0x1b0] sm:$0xff]
      %v1606 = vld [vmem:[#allocation20 + $0x1b8] sm:$0xff]
      %v1607 = vld [vmem:[#allocation20 + $0x1c0] sm:$0xff]
      %v1608 = vld [vmem:[#allocation20 + $0x1c8] sm:$0xff]
      %v1609 = vld [vmem:[#allocation20 + $0x1d0] sm:$0xff]
      %v1610 = vld [vmem:[#allocation20 + $0x1d8] sm:$0xff]
      %v1611 = vld [vmem:[#allocation20 + $0x1e0] sm:$0xff]
      %v1612 = vld [vmem:[#allocation20 + $0x1e8] sm:$0xff]
      %v1613 = vld [vmem:[#allocation20 + $0x1f0] sm:$0xff]
      %v1614 = vld [vmem:[#allocation20 + $0x1f8] sm:$0xff]
      %1615 = vmatprep.subr.mxu0 %v1552
      %1616 = vmatpush1.msra.mxu0 %v1551
      %1617 = vmatprep.subr.mxu0 %v1556
      %1618 = vmatpush1.msra.mxu0 %v1555
      %1619 = vmatprep.subr.mxu0 %v1560
      %1620 = vmatpush1.msra.mxu0 %v1559
      %1621 = vmatprep.subr.mxu0 %v1564
      %1622 = vmatpush1.msra.mxu0 %v1563
      %1623 = vmatprep.subr.mxu0 %v1568
      %1624 = vmatpush1.msra.mxu0 %v1567
      %1625 = vmatprep.subr.mxu0 %v1572
      %1626 = vmatpush1.msra.mxu0 %v1571
      %1627 = vmatprep.subr.mxu0 %v1576
      %1628 = vmatpush1.msra.mxu0 %v1575
      %1629 = vmatprep.subr.mxu0 %v1580
      %1630 = vmatpush1.msra.mxu0 %v1579
      %1631 = vmatprep.subr.mxu0 %v1584
      %1632 = vmatpush1.msra.mxu0 %v1583
      %1633 = vmatprep.subr.mxu0 %v1588
      %1634 = vmatpush1.msra.mxu0 %v1587
      %1635 = vmatprep.subr.mxu0 %v1592
      %1636 = vmatpush1.msra.mxu0 %v1591
      %1637 = vmatprep.subr.mxu0 %v1596
      %1638 = vmatpush1.msra.mxu0 %v1595
      %1639 = vmatprep.subr.mxu0 %v1600
      %1640 = vmatpush1.msra.mxu0 %v1599
      %1641 = vmatprep.subr.mxu0 %v1604
      %1642 = vmatpush1.msra.mxu0 %v1603
      %1643 = vmatprep.subr.mxu0 %v1608
      %1644 = vmatpush1.msra.mxu0 %v1607
      %1645 = vmatprep.subr.mxu0 %v1612
      %1646 = vmatpush1.msra.mxu0 %v1611
      %1647 = vmatprep.subr.mxu0 0.0
      %1648 = vmatpush1.msra.mxu0 0.0
      %1649 = vmatprep.subr.mxu0 0.0
      %1650 = vmatpush1.msra.mxu0 0.0
      %1651 = vmatprep.subr.mxu0 0.0
      %1652 = vmatpush1.msra.mxu0 0.0
      %1653 = vmatprep.subr.mxu0 0.0
      %1654 = vmatpush1.msra.mxu0 0.0
      %1655 = vmatprep.subr.mxu0 0.0
      %1656 = vmatpush1.msra.mxu0 0.0
      %1657 = vmatprep.subr.mxu0 0.0
      %1658 = vmatpush1.msra.mxu0 0.0
      %1659 = vmatprep.subr.mxu0 0.0
      %1660 = vmatpush1.msra.mxu0 0.0
      %1661 = vmatprep.subr.mxu0 0.0
      %1662 = vmatpush1.msra.mxu0 0.0
      %1663 = vmatprep.subr.mxu0 0.0
      %1664 = vmatpush1.msra.mxu0 0.0
      %1665 = vmatprep.subr.mxu0 0.0
      %1666 = vmatpush1.msra.mxu0 0.0
      %1667 = vmatprep.subr.mxu0 0.0
      %1668 = vmatpush1.msra.mxu0 0.0
      %1669 = vmatprep.subr.mxu0 0.0
      %1670 = vmatpush1.msra.mxu0 0.0
      %1671 = vmatprep.subr.mxu0 0.0
      %1672 = vmatpush1.msra.mxu0 0.0
      %1673 = vmatprep.subr.mxu0 0.0
      %1674 = vmatpush1.msra.mxu0 0.0
      %1675 = vmatprep.subr.mxu0 0.0
      %1676 = vmatpush1.msra.mxu0 0.0
      %1677 = vmatprep.subr.mxu0 0.0
      %1678 = vmatpush1.msra.mxu0 0.0
      %1679 = vmatprep.mubr.f32.mxu0 0.0
      %1680 = vmatmul.mubr.f32.gmra.mrb[0].mxu0 %v1550
      %v1681 = vpop.f32.mrb[0].mxu0
      %v1682 = vadd.f32 0.0, %v1681
      %v1683 = vpop.f32.mrb[0].mxu0
      %v1684 = vadd.f32 0.0, %v1683
      %1685 = vdwg.mxu0
      %1686 = vmatprep.subr.mxu0 %v1554
      %1687 = vmatpush1.msra.mxu0 %v1553
      %1688 = vmatprep.subr.mxu0 %v1558
      %1689 = vmatpush1.msra.mxu0 %v1557
      %1690 = vmatprep.subr.mxu0 %v1562
      %1691 = vmatpush1.msra.mxu0 %v1561
      %1692 = vmatprep.subr.mxu0 %v1566
      %1693 = vmatpush1.msra.mxu0 %v1565
      %1694 = vmatprep.subr.mxu0 %v1570
      %1695 = vmatpush1.msra.mxu0 %v1569
      %1696 = vmatprep.subr.mxu0 %v1574
      %1697 = vmatpush1.msra.mxu0 %v1573
      %1698 = vmatprep.subr.mxu0 %v1578
      %1699 = vmatpush1.msra.mxu0 %v1577
      %1700 = vmatprep.subr.mxu0 %v1582
      %1701 = vmatpush1.msra.mxu0 %v1581
      %1702 = vmatprep.subr.mxu0 %v1586
      %1703 = vmatpush1.msra.mxu0 %v1585
      %1704 = vmatprep.subr.mxu0 %v1590
      %1705 = vmatpush1.msra.mxu0 %v1589
      %1706 = vmatprep.subr.mxu0 %v1594
      %1707 = vmatpush1.msra.mxu0 %v1593
      %1708 = vmatprep.subr.mxu0 %v1598
      %1709 = vmatpush1.msra.mxu0 %v1597
      %1710 = vmatprep.subr.mxu0 %v1602
      %1711 = vmatpush1.msra.mxu0 %v1601
      %1712 = vmatprep.subr.mxu0 %v1606
      %1713 = vmatpush1.msra.mxu0 %v1605
      %1714 = vmatprep.subr.mxu0 %v1610
      %1715 = vmatpush1.msra.mxu0 %v1609
      %1716 = vmatprep.subr.mxu0 %v1614
      %1717 = vmatpush1.msra.mxu0 %v1613
      %1718 = vmatprep.subr.mxu0 0.0
      %1719 = vmatpush1.msra.mxu0 0.0
      %1720 = vmatprep.subr.mxu0 0.0
      %1721 = vmatpush1.msra.mxu0 0.0
      %1722 = vmatprep.subr.mxu0 0.0
      %1723 = vmatpush1.msra.mxu0 0.0
      %1724 = vmatprep.subr.mxu0 0.0
      %1725 = vmatpush1.msra.mxu0 0.0
      %1726 = vmatprep.subr.mxu0 0.0
      %1727 = vmatpush1.msra.mxu0 0.0
      %1728 = vmatprep.subr.mxu0 0.0
      %1729 = vmatpush1.msra.mxu0 0.0
      %1730 = vmatprep.subr.mxu0 0.0
      %1731 = vmatpush1.msra.mxu0 0.0
      %1732 = vmatprep.subr.mxu0 0.0
      %1733 = vmatpush1.msra.mxu0 0.0
      %1734 = vmatprep.subr.mxu0 0.0
      %1735 = vmatpush1.msra.mxu0 0.0
      %1736 = vmatprep.subr.mxu0 0.0
      %1737 = vmatpush1.msra.mxu0 0.0
      %1738 = vmatprep.subr.mxu0 0.0
      %1739 = vmatpush1.msra.mxu0 0.0
      %1740 = vmatprep.subr.mxu0 0.0
      %1741 = vmatpush1.msra.mxu0 0.0
      %1742 = vmatprep.subr.mxu0 0.0
      %1743 = vmatpush1.msra.mxu0 0.0
      %1744 = vmatprep.subr.mxu0 0.0
      %1745 = vmatpush1.msra.mxu0 0.0
      %1746 = vmatprep.subr.mxu0 0.0
      %1747 = vmatpush1.msra.mxu0 0.0
      %1748 = vmatprep.subr.mxu0 0.0
      %1749 = vmatpush1.msra.mxu0 0.0
      %1750 = vmatprep.mubr.f32.mxu0 0.0
      %1751 = vmatmul.mubr.f32.gmra.mrb[0].mxu0 %v1550
      %v1752 = vpop.f32.mrb[0].mxu0
      %v1753 = vadd.f32 0.0, %v1752
      %v1754 = vpop.f32.mrb[0].mxu0
      %v1755 = vadd.f32 0.0, %v1754
      %1756 = vdwg.mxu0
      %v1757 = vadd.f32 %v1546, %v1682
      %v1758 = vadd.f32 %v1547, %v1684
      %v1759 = vadd.f32 %v1548, %v1753
      %v1760 = vadd.f32 %v1549, %v1755
      %v1761 = vld [vmem:[#allocation3] sm:$0xff]
      %v1762 = vxor.u32 %v1537, 2147483648
      %v1763 = vmul.f32 %v1762, 1.442695
      %v1764 = vpow.pop %v1763
      %v1765 = vadd.f32 %v1764, 1.0
      %v1766 = vrcp.pop %v1765
      %v1767 = vmul.f32 1.0, %v1766
      %v1768 = vxor.u32 %v1538, 2147483648
      %v1769 = vmul.f32 %v1768, 1.442695
      %v1770 = vpow.pop %v1769
      %v1771 = vadd.f32 %v1770, 1.0
      %v1772 = vrcp.pop %v1771
      %v1773 = vmul.f32 1.0, %v1772
      %v1774 = vtanh.pop %v1539
      %v1775 = vxor.u32 %v1540, 2147483648
      %v1776 = vmul.f32 %v1775, 1.442695
      %v1777 = vpow.pop %v1776
      %v1778 = vadd.f32 %v1777, 1.0
      %v1779 = vrcp.pop %v1778
      %v1780 = vmul.f32 1.0, %v1779
      %v1781 = vmul.f32 %v1773, %v1761
      %v1782 = vmul.f32 %v1767, %v1774
      %v1783 = vadd.f32 %v1781, %v1782
      %v1784 = vtanh.pop %v1783
      %v1785 = vmul.f32 %v1780, %v1784
      %v1786 = vld [vmem:[#allocation5] sm:$0xff]
      %v1787 = vxor.u32 %v1757, 2147483648
      %v1788 = vmul.f32 %v1787, 1.442695
      %v1789 = vpow.pop %v1788
      %v1790 = vadd.f32 %v1789, 1.0
      %v1791 = vrcp.pop %v1790
      %v1792 = vmul.f32 1.0, %v1791
      %v1793 = vxor.u32 %v1758, 2147483648
      %v1794 = vmul.f32 %v1793, 1.442695
      %v1795 = vpow.pop %v1794
      %v1796 = vadd.f32 %v1795, 1.0
      %v1797 = vrcp.pop %v1796
      %v1798 = vmul.f32 1.0, %v1797
      %v1799 = vtanh.pop %v1759
      %v1800 = vxor.u32 %v1760, 2147483648
      %v1801 = vmul.f32 %v1800, 1.442695
      %v1802 = vpow.pop %v1801
      %v1803 = vadd.f32 %v1802, 1.0
      %v1804 = vrcp.pop %v1803
      %v1805 = vmul.f32 1.0, %v1804
      %v1806 = vmul.f32 %v1798, %v1786
      %v1807 = vmul.f32 %v1792, %v1799
      %v1808 = vadd.f32 %v1806, %v1807
      %v1809 = vtanh.pop %v1808
      %v1810 = vmul.f32 %v1805, %v1809
      %vm1811 = vcmp.gt.s32.totalorder %v185, 1
      %v1812 = vstv %s1321
      %vm1813 = vcmp.gt.s32.totalorder %v185, %v1812
      %v1814 = vsel %vm1811, 1, 0
      %1815 = vset.pattern.permute.xlu0 0
      %1816 = vperm.xlu0 %1815, %v1814
      %v1817 = vpop.permute.xlu0 %1816
      %vm1818 = vcmp.eq.s32.totalorder %v1817, 1
      %v1819 = vsel %vm1818, %v1785, %v1330
      %1820 = vst [vmem:[#allocation2] sm:$0xff] %v1819
      %v1821 = vld [vmem:[#allocation3] sm:$0xff]
      %v1822 = vsel %vm1818, %v1783, %v1821
      %1823 = vst [vmem:[#allocation3] sm:$0xff] %v1822
      %v1824 = vld [vmem:[#allocation4] sm:$0xff]
      %v1825 = vsel %vm1813, 1, 0
      %1826 = vset.pattern.permute.xlu0 0
      %1827 = vperm.xlu0 %1826, %v1825
      %v1828 = vpop.permute.xlu0 %1827
      %vm1829 = vcmp.eq.s32.totalorder %v1828, 1
      %v1830 = vsel %vm1829, %v1810, %v1824
      %1831 = vst [vmem:[#allocation4] sm:$0xff] %v1830
      %v1832 = vld [vmem:[#allocation5] sm:$0xff]
      %v1833 = vsel %vm1829, %v1808, %v1832
      %1834 = vst [vmem:[#allocation5] sm:$0xff] %v1833
    $region101: #{tpu_custom_call.1} parent=1 // pred_fallthru
      _
    %p1835 = scmp.gt.s32.totalorder %s184, 2
    // Predicated region
    $region102: #{tpu_custom_call.1} parent=1 // pred_check
      %p1836 = pneg %p1835
    $region103: #{tpu_custom_call.1} parent=1 // pred_check_branch
      %1838 = sbr.rel (%p1836) target = $region105
    $region104: #{tpu_custom_call.1} parent=1 // pred_region
      %s1839 = ssub.s32 %s184, 3
      %s1840 = smul.u32 %s1839, 8
      %s1841 = smul.u32 2, 4
      %s1842 = smul.addr %s1841, 8
      %s1843 = scalar_lea.vmem [#allocation6], %s1842
      %v1844 = vld [vmem:[%s1843] sm:$0xff]
      %v1845 = vld [vmem:[%s1843 + $0x8] sm:$0xff]
      %v1846 = vld [vmem:[%s1843 + $0x10] sm:$0xff]
      %v1847 = vld [vmem:[%s1843 + $0x18] sm:$0xff]
      %v1848 = vld [vmem:[#allocation2] sm:$0xff]
      %v1849 = vld [vmem:[#allocation15] sm:$0xff]
      %v1850 = vld [vmem:[#allocation15 + $0x8] sm:$0xff]
      %v1851 = vld [vmem:[#allocation15 + $0x10] sm:$0xff]
      %v1852 = vld [vmem:[#allocation15 + $0x18] sm:$0xff]
      %v1853 = vld [vmem:[#allocation15 + $0x20] sm:$0xff]
      %v1854 = vld [vmem:[#allocation15 + $0x28] sm:$0xff]
      %v1855 = vld [vmem:[#allocation15 + $0x30] sm:$0xff]
      %v1856 = vld [vmem:[#allocation15 + $0x38] sm:$0xff]
      %v1857 = vld [vmem:[#allocation15 + $0x40] sm:$0xff]
      %v1858 = vld [vmem:[#allocation15 + $0x48] sm:$0xff]
      %v1859 = vld [vmem:[#allocation15 + $0x50] sm:$0xff]
      %v1860 = vld [vmem:[#allocation15 + $0x58] sm:$0xff]
      %v1861 = vld [vmem:[#allocation15 + $0x60] sm:$0xff]
      %v1862 = vld [vmem:[#allocation15 + $0x68] sm:$0xff]
      %v1863 = vld [vmem:[#allocation15 + $0x70] sm:$0xff]
      %v1864 = vld [vmem:[#allocation15 + $0x78] sm:$0xff]
      %v1865 = vld [vmem:[#allocation15 + $0x80] sm:$0xff]
      %v1866 = vld [vmem:[#allocation15 + $0x88] sm:$0xff]
      %v1867 = vld [vmem:[#allocation15 + $0x90] sm:$0xff]
      %v1868 = vld [vmem:[#allocation15 + $0x98] sm:$0xff]
      %v1869 = vld [vmem:[#allocation15 + $0xa0] sm:$0xff]
      %v1870 = vld [vmem:[#allocation15 + $0xa8] sm:$0xff]
      %v1871 = vld [vmem:[#allocation15 + $0xb0] sm:$0xff]
      %v1872 = vld [vmem:[#allocation15 + $0xb8] sm:$0xff]
      %v1873 = vld [vmem:[#allocation15 + $0xc0] sm:$0xff]
      %v1874 = vld [vmem:[#allocation15 + $0xc8] sm:$0xff]
      %v1875 = vld [vmem:[#allocation15 + $0xd0] sm:$0xff]
      %v1876 = vld [vmem:[#allocation15 + $0xd8] sm:$0xff]
      %v1877 = vld [vmem:[#allocation15 + $0xe0] sm:$0xff]
      %v1878 = vld [vmem:[#allocation15 + $0xe8] sm:$0xff]
      %v1879 = vld [vmem:[#allocation15 + $0xf0] sm:$0xff]
      %v1880 = vld [vmem:[#allocation15 + $0xf8] sm:$0xff]
      %v1881 = vld [vmem:[#allocation15 + $0x100] sm:$0xff]
      %v1882 = vld [vmem:[#allocation15 + $0x108] sm:$0xff]
      %v1883 = vld [vmem:[#allocation15 + $0x110] sm:$0xff]
      %v1884 = vld [vmem:[#allocation15 + $0x118] sm:$0xff]
      %v1885 = vld [vmem:[#allocation15 + $0x120] sm:$0xff]
      %v1886 = vld [vmem:[#allocation15 + $0x128] sm:$0xff]
      %v1887 = vld [vmem:[#allocation15 + $0x130] sm:$0xff]
      %v1888 = vld [vmem:[#allocation15 + $0x138] sm:$0xff]
      %v1889 = vld [vmem:[#allocation15 + $0x140] sm:$0xff]
      %v1890 = vld [vmem:[#allocation15 + $0x148] sm:$0xff]
      %v1891 = vld [vmem:[#allocation15 + $0x150] sm:$0xff]
      %v1892 = vld [vmem:[#allocation15 + $0x158] sm:$0xff]
      %v1893 = vld [vmem:[#allocation15 + $0x160] sm:$0xff]
      %v1894 = vld [vmem:[#allocation15 + $0x168] sm:$0xff]
      %v1895 = vld [vmem:[#allocation15 + $0x170] sm:$0xff]
      %v1896 = vld [vmem:[#allocation15 + $0x178] sm:$0xff]
      %v1897 = vld [vmem:[#allocation15 + $0x180] sm:$0xff]
      %v1898 = vld [vmem:[#allocation15 + $0x188] sm:$0xff]
      %v1899 = vld [vmem:[#allocation15 + $0x190] sm:$0xff]
      %v1900 = vld [vmem:[#allocation15 + $0x198] sm:$0xff]
      %v1901 = vld [vmem:[#allocation15 + $0x1a0] sm:$0xff]
      %v1902 = vld [vmem:[#allocation15 + $0x1a8] sm:$0xff]
      %v1903 = vld [vmem:[#allocation15 + $0x1b0] sm:$0xff]
      %v1904 = vld [vmem:[#allocation15 + $0x1b8] sm:$0xff]
      %v1905 = vld [vmem:[#allocation15 + $0x1c0] sm:$0xff]
      %v1906 = vld [vmem:[#allocation15 + $0x1c8] sm:$0xff]
      %v1907 = vld [vmem:[#allocation15 + $0x1d0] sm:$0xff]
      %v1908 = vld [vmem:[#allocation15 + $0x1d8] sm:$0xff]
      %v1909 = vld [vmem:[#allocation15 + $0x1e0] sm:$0xff]
      %v1910 = vld [vmem:[#allocation15 + $0x1e8] sm:$0xff]
      %v1911 = vld [vmem:[#allocation15 + $0x1f0] sm:$0xff]
      %v1912 = vld [vmem:[#allocation15 + $0x1f8] sm:$0xff]
      %1913 = vmatprep.subr.mxu0 %v1850
      %1914 = vmatpush1.msra.mxu0 %v1849
      %1915 = vmatprep.subr.mxu0 %v1854
      %1916 = vmatpush1.msra.mxu0 %v1853
      %1917 = vmatprep.subr.mxu0 %v1858
      %1918 = vmatpush1.msra.mxu0 %v1857
      %1919 = vmatprep.subr.mxu0 %v1862
      %1920 = vmatpush1.msra.mxu0 %v1861
      %1921 = vmatprep.subr.mxu0 %v1866
      %1922 = vmatpush1.msra.mxu0 %v1865
      %1923 = vmatprep.subr.mxu0 %v1870
      %1924 = vmatpush1.msra.mxu0 %v1869
      %1925 = vmatprep.subr.mxu0 %v1874
      %1926 = vmatpush1.msra.mxu0 %v1873
      %1927 = vmatprep.subr.mxu0 %v1878
      %1928 = vmatpush1.msra.mxu0 %v1877
      %1929 = vmatprep.subr.mxu0 %v1882
      %1930 = vmatpush1.msra.mxu0 %v1881
      %1931 = vmatprep.subr.mxu0 %v1886
      %1932 = vmatpush1.msra.mxu0 %v1885
      %1933 = vmatprep.subr.mxu0 %v1890
      %1934 = vmatpush1.msra.mxu0 %v1889
      %1935 = vmatprep.subr.mxu0 %v1894
      %1936 = vmatpush1.msra.mxu0 %v1893
      %1937 = vmatprep.subr.mxu0 %v1898
      %1938 = vmatpush1.msra.mxu0 %v1897
      %1939 = vmatprep.subr.mxu0 %v1902
      %1940 = vmatpush1.msra.mxu0 %v1901
      %1941 = vmatprep.subr.mxu0 %v1906
      %1942 = vmatpush1.msra.mxu0 %v1905
      %1943 = vmatprep.subr.mxu0 %v1910
      %1944 = vmatpush1.msra.mxu0 %v1909
      %1945 = vmatprep.subr.mxu0 0.0
      %1946 = vmatpush1.msra.mxu0 0.0
      %1947 = vmatprep.subr.mxu0 0.0
      %1948 = vmatpush1.msra.mxu0 0.0
      %1949 = vmatprep.subr.mxu0 0.0
      %1950 = vmatpush1.msra.mxu0 0.0
      %1951 = vmatprep.subr.mxu0 0.0
      %1952 = vmatpush1.msra.mxu0 0.0
      %1953 = vmatprep.subr.mxu0 0.0
      %1954 = vmatpush1.msra.mxu0 0.0
      %1955 = vmatprep.subr.mxu0 0.0
      %1956 = vmatpush1.msra.mxu0 0.0
      %1957 = vmatprep.subr.mxu0 0.0
      %1958 = vmatpush1.msra.mxu0 0.0
      %1959 = vmatprep.subr.mxu0 0.0
      %1960 = vmatpush1.msra.mxu0 0.0
      %1961 = vmatprep.subr.mxu0 0.0
      %1962 = vmatpush1.msra.mxu0 0.0
      %1963 = vmatprep.subr.mxu0 0.0
      %1964 = vmatpush1.msra.mxu0 0.0
      %1965 = vmatprep.subr.mxu0 0.0
      %1966 = vmatpush1.msra.mxu0 0.0
      %1967 = vmatprep.subr.mxu0 0.0
      %1968 = vmatpush1.msra.mxu0 0.0
      %1969 = vmatprep.subr.mxu0 0.0
      %1970 = vmatpush1.msra.mxu0 0.0
      %1971 = vmatprep.subr.mxu0 0.0
      %1972 = vmatpush1.msra.mxu0 0.0
      %1973 = vmatprep.subr.mxu0 0.0
      %1974 = vmatpush1.msra.mxu0 0.0
      %1975 = vmatprep.subr.mxu0 0.0
      %1976 = vmatpush1.msra.mxu0 0.0
      %1977 = vmatprep.mubr.f32.mxu0 0.0
      %1978 = vmatmul.mubr.f32.gmra.mrb[0].mxu0 %v1848
      %v1979 = vpop.f32.mrb[0].mxu0
      %v1980 = vadd.f32 0.0, %v1979
      %v1981 = vpop.f32.mrb[0].mxu0
      %v1982 = vadd.f32 0.0, %v1981
      %1983 = vdwg.mxu0
      %1984 = vmatprep.subr.mxu0 %v1852
      %1985 = vmatpush1.msra.mxu0 %v1851
      %1986 = vmatprep.subr.mxu0 %v1856
      %1987 = vmatpush1.msra.mxu0 %v1855
      %1988 = vmatprep.subr.mxu0 %v1860
      %1989 = vmatpush1.msra.mxu0 %v1859
      %1990 = vmatprep.subr.mxu0 %v1864
      %1991 = vmatpush1.msra.mxu0 %v1863
      %1992 = vmatprep.subr.mxu0 %v1868
      %1993 = vmatpush1.msra.mxu0 %v1867
      %1994 = vmatprep.subr.mxu0 %v1872
      %1995 = vmatpush1.msra.mxu0 %v1871
      %1996 = vmatprep.subr.mxu0 %v1876
      %1997 = vmatpush1.msra.mxu0 %v1875
      %1998 = vmatprep.subr.mxu0 %v1880
      %1999 = vmatpush1.msra.mxu0 %v1879
      %2000 = vmatprep.subr.mxu0 %v1884
      %2001 = vmatpush1.msra.mxu0 %v1883
      %2002 = vmatprep.subr.mxu0 %v1888
      %2003 = vmatpush1.msra.mxu0 %v1887
      %2004 = vmatprep.subr.mxu0 %v1892
      %2005 = vmatpush1.msra.mxu0 %v1891
      %2006 = vmatprep.subr.mxu0 %v1896
      %2007 = vmatpush1.msra.mxu0 %v1895
      %2008 = vmatprep.subr.mxu0 %v1900
      %2009 = vmatpush1.msra.mxu0 %v1899
      %2010 = vmatprep.subr.mxu0 %v1904
      %2011 = vmatpush1.msra.mxu0 %v1903
      %2012 = vmatprep.subr.mxu0 %v1908
      %2013 = vmatpush1.msra.mxu0 %v1907
      %2014 = vmatprep.subr.mxu0 %v1912
      %2015 = vmatpush1.msra.mxu0 %v1911
      %2016 = vmatprep.subr.mxu0 0.0
      %2017 = vmatpush1.msra.mxu0 0.0
      %2018 = vmatprep.subr.mxu0 0.0
      %2019 = vmatpush1.msra.mxu0 0.0
      %2020 = vmatprep.subr.mxu0 0.0
      %2021 = vmatpush1.msra.mxu0 0.0
      %2022 = vmatprep.subr.mxu0 0.0
      %2023 = vmatpush1.msra.mxu0 0.0
      %2024 = vmatprep.subr.mxu0 0.0
      %2025 = vmatpush1.msra.mxu0 0.0
      %2026 = vmatprep.subr.mxu0 0.0
      %2027 = vmatpush1.msra.mxu0 0.0
      %2028 = vmatprep.subr.mxu0 0.0
      %2029 = vmatpush1.msra.mxu0 0.0
      %2030 = vmatprep.subr.mxu0 0.0
      %2031 = vmatpush1.msra.mxu0 0.0
      %2032 = vmatprep.subr.mxu0 0.0
      %2033 = vmatpush1.msra.mxu0 0.0
      %2034 = vmatprep.subr.mxu0 0.0
      %2035 = vmatpush1.msra.mxu0 0.0
      %2036 = vmatprep.subr.mxu0 0.0
      %2037 = vmatpush1.msra.mxu0 0.0
      %2038 = vmatprep.subr.mxu0 0.0
      %2039 = vmatpush1.msra.mxu0 0.0
      %2040 = vmatprep.subr.mxu0 0.0
      %2041 = vmatpush1.msra.mxu0 0.0
      %2042 = vmatprep.subr.mxu0 0.0
      %2043 = vmatpush1.msra.mxu0 0.0
      %2044 = vmatprep.subr.mxu0 0.0
      %2045 = vmatpush1.msra.mxu0 0.0
      %2046 = vmatprep.subr.mxu0 0.0
      %2047 = vmatpush1.msra.mxu0 0.0
      %2048 = vmatprep.mubr.f32.mxu0 0.0
      %2049 = vmatmul.mubr.f32.gmra.mrb[0].mxu0 %v1848
      %v2050 = vpop.f32.mrb[0].mxu0
      %v2051 = vadd.f32 0.0, %v2050
      %v2052 = vpop.f32.mrb[0].mxu0
      %v2053 = vadd.f32 0.0, %v2052
      %2054 = vdwg.mxu0
      %v2055 = vadd.f32 %v1844, %v1980
      %v2056 = vadd.f32 %v1845, %v1982
      %v2057 = vadd.f32 %v1846, %v2051
      %v2058 = vadd.f32 %v1847, %v2053
      %s2059 = sshra.s32 %s1840, 3
      %s2060 = sand.u32 %s1840, 7
      %s2061 = smul.u32 %s2059, 4
      %s2062 = smul.addr %s2061, 8
      %s2063 = scalar_lea.vmem [#allocation7], %s2062
      %v2064 = vld [vmem:[%s2063] sm:$0xff]
      %v2065 = vld [vmem:[%s2063 + $0x8] sm:$0xff]
      %v2066 = vld [vmem:[%s2063 + $0x10] sm:$0xff]
      %v2067 = vld [vmem:[%s2063 + $0x18] sm:$0xff]
      %v2068 = vld [vmem:[#allocation4] sm:$0xff]
      %v2069 = vld [vmem:[#allocation20] sm:$0xff]
      %v2070 = vld [vmem:[#allocation20 + $0x8] sm:$0xff]
      %v2071 = vld [vmem:[#allocation20 + $0x10] sm:$0xff]
      %v2072 = vld [vmem:[#allocation20 + $0x18] sm:$0xff]
      %v2073 = vld [vmem:[#allocation20 + $0x20] sm:$0xff]
      %v2074 = vld [vmem:[#allocation20 + $0x28] sm:$0xff]
      %v2075 = vld [vmem:[#allocation20 + $0x30] sm:$0xff]
      %v2076 = vld [vmem:[#allocation20 + $0x38] sm:$0xff]
      %v2077 = vld [vmem:[#allocation20 + $0x40] sm:$0xff]
      %v2078 = vld [vmem:[#allocation20 + $0x48] sm:$0xff]
      %v2079 = vld [vmem:[#allocation20 + $0x50] sm:$0xff]
      %v2080 = vld [vmem:[#allocation20 + $0x58] sm:$0xff]
      %v2081 = vld [vmem:[#allocation20 + $0x60] sm:$0xff]
      %v2082 = vld [vmem:[#allocation20 + $0x68] sm:$0xff]
      %v2083 = vld [vmem:[#allocation20 + $0x70] sm:$0xff]
      %v2084 = vld [vmem:[#allocation20 + $0x78] sm:$0xff]
      %v2085 = vld [vmem:[#allocation20 + $0x80] sm:$0xff]
      %v2086 = vld [vmem:[#allocation20 + $0x88] sm:$0xff]
      %v2087 = vld [vmem:[#allocation20 + $0x90] sm:$0xff]
      %v2088 = vld [vmem:[#allocation20 + $0x98] sm:$0xff]
      %v2089 = vld [vmem:[#allocation20 + $0xa0] sm:$0xff]
      %v2090 = vld [vmem:[#allocation20 + $0xa8] sm:$0xff]
      %v2091 = vld [vmem:[#allocation20 + $0xb0] sm:$0xff]
      %v2092 = vld [vmem:[#allocation20 + $0xb8] sm:$0xff]
      %v2093 = vld [vmem:[#allocation20 + $0xc0] sm:$0xff]
      %v2094 = vld [vmem:[#allocation20 + $0xc8] sm:$0xff]
      %v2095 = vld [vmem:[#allocation20 + $0xd0] sm:$0xff]
      %v2096 = vld [vmem:[#allocation20 + $0xd8] sm:$0xff]
      %v2097 = vld [vmem:[#allocation20 + $0xe0] sm:$0xff]
      %v2098 = vld [vmem:[#allocation20 + $0xe8] sm:$0xff]
      %v2099 = vld [vmem:[#allocation20 + $0xf0] sm:$0xff]
      %v2100 = vld [vmem:[#allocation20 + $0xf8] sm:$0xff]
      %v2101 = vld [vmem:[#allocation20 + $0x100] sm:$0xff]
      %v2102 = vld [vmem:[#allocation20 + $0x108] sm:$0xff]
      %v2103 = vld [vmem:[#allocation20 + $0x110] sm:$0xff]
      %v2104 = vld [vmem:[#allocation20 + $0x118] sm:$0xff]
      %v2105 = vld [vmem:[#allocation20 + $0x120] sm:$0xff]
      %v2106 = vld [vmem:[#allocation20 + $0x128] sm:$0xff]
      %v2107 = vld [vmem:[#allocation20 + $0x130] sm:$0xff]
      %v2108 = vld [vmem:[#allocation20 + $0x138] sm:$0xff]
      %v2109 = vld [vmem:[#allocation20 + $0x140] sm:$0xff]
      %v2110 = vld [vmem:[#allocation20 + $0x148] sm:$0xff]
      %v2111 = vld [vmem:[#allocation20 + $0x150] sm:$0xff]
      %v2112 = vld [vmem:[#allocation20 + $0x158] sm:$0xff]
      %v2113 = vld [vmem:[#allocation20 + $0x160] sm:$0xff]
      %v2114 = vld [vmem:[#allocation20 + $0x168] sm:$0xff]
      %v2115 = vld [vmem:[#allocation20 + $0x170] sm:$0xff]
      %v2116 = vld [vmem:[#allocation20 + $0x178] sm:$0xff]
      %v2117 = vld [vmem:[#allocation20 + $0x180] sm:$0xff]
      %v2118 = vld [vmem:[#allocation20 + $0x188] sm:$0xff]
      %v2119 = vld [vmem:[#allocation20 + $0x190] sm:$0xff]
      %v2120 = vld [vmem:[#allocation20 + $0x198] sm:$0xff]
      %v2121 = vld [vmem:[#allocation20 + $0x1a0] sm:$0xff]
      %v2122 = vld [vmem:[#allocation20 + $0x1a8] sm:$0xff]
      %v2123 = vld [vmem:[#allocation20 + $0x1b0] sm:$0xff]
      %v2124 = vld [vmem:[#allocation20 + $0x1b8] sm:$0xff]
      %v2125 = vld [vmem:[#allocation20 + $0x1c0] sm:$0xff]
      %v2126 = vld [vmem:[#allocation20 + $0x1c8] sm:$0xff]
      %v2127 = vld [vmem:[#allocation20 + $0x1d0] sm:$0xff]
      %v2128 = vld [vmem:[#allocation20 + $0x1d8] sm:$0xff]
      %v2129 = vld [vmem:[#allocation20 + $0x1e0] sm:$0xff]
      %v2130 = vld [vmem:[#allocation20 + $0x1e8] sm:$0xff]
      %v2131 = vld [vmem:[#allocation20 + $0x1f0] sm:$0xff]
      %v2132 = vld [vmem:[#allocation20 + $0x1f8] sm:$0xff]
      %2133 = vmatprep.subr.mxu0 %v2070
      %2134 = vmatpush1.msra.mxu0 %v2069
      %2135 = vmatprep.subr.mxu0 %v2074
      %2136 = vmatpush1.msra.mxu0 %v2073
      %2137 = vmatprep.subr.mxu0 %v2078
      %2138 = vmatpush1.msra.mxu0 %v2077
      %2139 = vmatprep.subr.mxu0 %v2082
      %2140 = vmatpush1.msra.mxu0 %v2081
      %2141 = vmatprep.subr.mxu0 %v2086
      %2142 = vmatpush1.msra.mxu0 %v2085
      %2143 = vmatprep.subr.mxu0 %v2090
      %2144 = vmatpush1.msra.mxu0 %v2089
      %2145 = vmatprep.subr.mxu0 %v2094
      %2146 = vmatpush1.msra.mxu0 %v2093
      %2147 = vmatprep.subr.mxu0 %v2098
      %2148 = vmatpush1.msra.mxu0 %v2097
      %2149 = vmatprep.subr.mxu0 %v2102
      %2150 = vmatpush1.msra.mxu0 %v2101
      %2151 = vmatprep.subr.mxu0 %v2106
      %2152 = vmatpush1.msra.mxu0 %v2105
      %2153 = vmatprep.subr.mxu0 %v2110
      %2154 = vmatpush1.msra.mxu0 %v2109
      %2155 = vmatprep.subr.mxu0 %v2114
      %2156 = vmatpush1.msra.mxu0 %v2113
      %2157 = vmatprep.subr.mxu0 %v2118
      %2158 = vmatpush1.msra.mxu0 %v2117
      %2159 = vmatprep.subr.mxu0 %v2122
      %2160 = vmatpush1.msra.mxu0 %v2121
      %2161 = vmatprep.subr.mxu0 %v2126
      %2162 = vmatpush1.msra.mxu0 %v2125
      %2163 = vmatprep.subr.mxu0 %v2130
      %2164 = vmatpush1.msra.mxu0 %v2129
      %2165 = vmatprep.subr.mxu0 0.0
      %2166 = vmatpush1.msra.mxu0 0.0
      %2167 = vmatprep.subr.mxu0 0.0
      %2168 = vmatpush1.msra.mxu0 0.0
      %2169 = vmatprep.subr.mxu0 0.0
      %2170 = vmatpush1.msra.mxu0 0.0
      %2171 = vmatprep.subr.mxu0 0.0
      %2172 = vmatpush1.msra.mxu0 0.0
      %2173 = vmatprep.subr.mxu0 0.0
      %2174 = vmatpush1.msra.mxu0 0.0
      %2175 = vmatprep.subr.mxu0 0.0
      %2176 = vmatpush1.msra.mxu0 0.0
      %2177 = vmatprep.subr.mxu0 0.0
      %2178 = vmatpush1.msra.mxu0 0.0
      %2179 = vmatprep.subr.mxu0 0.0
      %2180 = vmatpush1.msra.mxu0 0.0
      %2181 = vmatprep.subr.mxu0 0.0
      %2182 = vmatpush1.msra.mxu0 0.0
      %2183 = vmatprep.subr.mxu0 0.0
      %2184 = vmatpush1.msra.mxu0 0.0
      %2185 = vmatprep.subr.mxu0 0.0
      %2186 = vmatpush1.msra.mxu0 0.0
      %2187 = vmatprep.subr.mxu0 0.0
      %2188 = vmatpush1.msra.mxu0 0.0
      %2189 = vmatprep.subr.mxu0 0.0
      %2190 = vmatpush1.msra.mxu0 0.0
      %2191 = vmatprep.subr.mxu0 0.0
      %2192 = vmatpush1.msra.mxu0 0.0
      %2193 = vmatprep.subr.mxu0 0.0
      %2194 = vmatpush1.msra.mxu0 0.0
      %2195 = vmatprep.subr.mxu0 0.0
      %2196 = vmatpush1.msra.mxu0 0.0
      %2197 = vmatprep.mubr.f32.mxu0 0.0
      %2198 = vmatmul.mubr.f32.gmra.mrb[0].mxu0 %v2068
      %v2199 = vpop.f32.mrb[0].mxu0
      %v2200 = vadd.f32 0.0, %v2199
      %v2201 = vpop.f32.mrb[0].mxu0
      %v2202 = vadd.f32 0.0, %v2201
      %2203 = vdwg.mxu0
      %2204 = vmatprep.subr.mxu0 %v2072
      %2205 = vmatpush1.msra.mxu0 %v2071
      %2206 = vmatprep.subr.mxu0 %v2076
      %2207 = vmatpush1.msra.mxu0 %v2075
      %2208 = vmatprep.subr.mxu0 %v2080
      %2209 = vmatpush1.msra.mxu0 %v2079
      %2210 = vmatprep.subr.mxu0 %v2084
      %2211 = vmatpush1.msra.mxu0 %v2083
      %2212 = vmatprep.subr.mxu0 %v2088
      %2213 = vmatpush1.msra.mxu0 %v2087
      %2214 = vmatprep.subr.mxu0 %v2092
      %2215 = vmatpush1.msra.mxu0 %v2091
      %2216 = vmatprep.subr.mxu0 %v2096
      %2217 = vmatpush1.msra.mxu0 %v2095
      %2218 = vmatprep.subr.mxu0 %v2100
      %2219 = vmatpush1.msra.mxu0 %v2099
      %2220 = vmatprep.subr.mxu0 %v2104
      %2221 = vmatpush1.msra.mxu0 %v2103
      %2222 = vmatprep.subr.mxu0 %v2108
      %2223 = vmatpush1.msra.mxu0 %v2107
      %2224 = vmatprep.subr.mxu0 %v2112
      %2225 = vmatpush1.msra.mxu0 %v2111
      %2226 = vmatprep.subr.mxu0 %v2116
      %2227 = vmatpush1.msra.mxu0 %v2115
      %2228 = vmatprep.subr.mxu0 %v2120
      %2229 = vmatpush1.msra.mxu0 %v2119
      %2230 = vmatprep.subr.mxu0 %v2124
      %2231 = vmatpush1.msra.mxu0 %v2123
      %2232 = vmatprep.subr.mxu0 %v2128
      %2233 = vmatpush1.msra.mxu0 %v2127
      %2234 = vmatprep.subr.mxu0 %v2132
      %2235 = vmatpush1.msra.mxu0 %v2131
      %2236 = vmatprep.subr.mxu0 0.0
      %2237 = vmatpush1.msra.mxu0 0.0
      %2238 = vmatprep.subr.mxu0 0.0
      %2239 = vmatpush1.msra.mxu0 0.0
      %2240 = vmatprep.subr.mxu0 0.0
      %2241 = vmatpush1.msra.mxu0 0.0
      %2242 = vmatprep.subr.mxu0 0.0
      %2243 = vmatpush1.msra.mxu0 0.0
      %2244 = vmatprep.subr.mxu0 0.0
      %2245 = vmatpush1.msra.mxu0 0.0
      %2246 = vmatprep.subr.mxu0 0.0
      %2247 = vmatpush1.msra.mxu0 0.0
      %2248 = vmatprep.subr.mxu0 0.0
      %2249 = vmatpush1.msra.mxu0 0.0
      %2250 = vmatprep.subr.mxu0 0.0
      %2251 = vmatpush1.msra.mxu0 0.0
      %2252 = vmatprep.subr.mxu0 0.0
      %2253 = vmatpush1.msra.mxu0 0.0
      %2254 = vmatprep.subr.mxu0 0.0
      %2255 = vmatpush1.msra.mxu0 0.0
      %2256 = vmatprep.subr.mxu0 0.0
      %2257 = vmatpush1.msra.mxu0 0.0
      %2258 = vmatprep.subr.mxu0 0.0
      %2259 = vmatpush1.msra.mxu0 0.0
      %2260 = vmatprep.subr.mxu0 0.0
      %2261 = vmatpush1.msra.mxu0 0.0
      %2262 = vmatprep.subr.mxu0 0.0
      %2263 = vmatpush1.msra.mxu0 0.0
      %2264 = vmatprep.subr.mxu0 0.0
      %2265 = vmatpush1.msra.mxu0 0.0
      %2266 = vmatprep.subr.mxu0 0.0
      %2267 = vmatpush1.msra.mxu0 0.0
      %2268 = vmatprep.mubr.f32.mxu0 0.0
      %2269 = vmatmul.mubr.f32.gmra.mrb[0].mxu0 %v2068
      %v2270 = vpop.f32.mrb[0].mxu0
      %v2271 = vadd.f32 0.0, %v2270
      %v2272 = vpop.f32.mrb[0].mxu0
      %v2273 = vadd.f32 0.0, %v2272
      %2274 = vdwg.mxu0
      %v2275 = vadd.f32 %v2064, %v2200
      %v2276 = vadd.f32 %v2065, %v2202
      %v2277 = vadd.f32 %v2066, %v2271
      %v2278 = vadd.f32 %v2067, %v2273
      %v2279 = vld [vmem:[#allocation3] sm:$0xff]
      %v2280 = vxor.u32 %v2055, 2147483648
      %v2281 = vmul.f32 %v2280, 1.442695
      %v2282 = vpow.pop %v2281
      %v2283 = vadd.f32 %v2282, 1.0
      %v2284 = vrcp.pop %v2283
      %v2285 = vmul.f32 1.0, %v2284
      %v2286 = vxor.u32 %v2056, 2147483648
      %v2287 = vmul.f32 %v2286, 1.442695
      %v2288 = vpow.pop %v2287
      %v2289 = vadd.f32 %v2288, 1.0
      %v2290 = vrcp.pop %v2289
      %v2291 = vmul.f32 1.0, %v2290
      %v2292 = vtanh.pop %v2057
      %v2293 = vxor.u32 %v2058, 2147483648
      %v2294 = vmul.f32 %v2293, 1.442695
      %v2295 = vpow.pop %v2294
      %v2296 = vadd.f32 %v2295, 1.0
      %v2297 = vrcp.pop %v2296
      %v2298 = vmul.f32 1.0, %v2297
      %v2299 = vmul.f32 %v2291, %v2279
      %v2300 = vmul.f32 %v2285, %v2292
      %v2301 = vadd.f32 %v2299, %v2300
      %v2302 = vtanh.pop %v2301
      %v2303 = vmul.f32 %v2298, %v2302
      %v2304 = vld [vmem:[#allocation5] sm:$0xff]
      %v2305 = vxor.u32 %v2275, 2147483648
      %v2306 = vmul.f32 %v2305, 1.442695
      %v2307 = vpow.pop %v2306
      %v2308 = vadd.f32 %v2307, 1.0
      %v2309 = vrcp.pop %v2308
      %v2310 = vmul.f32 1.0, %v2309
      %v2311 = vxor.u32 %v2276, 2147483648
      %v2312 = vmul.f32 %v2311, 1.442695
      %v2313 = vpow.pop %v2312
      %v2314 = vadd.f32 %v2313, 1.0
      %v2315 = vrcp.pop %v2314
      %v2316 = vmul.f32 1.0, %v2315
      %v2317 = vtanh.pop %v2277
      %v2318 = vxor.u32 %v2278, 2147483648
      %v2319 = vmul.f32 %v2318, 1.442695
      %v2320 = vpow.pop %v2319
      %v2321 = vadd.f32 %v2320, 1.0
      %v2322 = vrcp.pop %v2321
      %v2323 = vmul.f32 1.0, %v2322
      %v2324 = vmul.f32 %v2316, %v2304
      %v2325 = vmul.f32 %v2310, %v2317
      %v2326 = vadd.f32 %v2324, %v2325
      %v2327 = vtanh.pop %v2326
      %v2328 = vmul.f32 %v2323, %v2327
      %vm2329 = vcmp.gt.s32.totalorder %v185, 2
      %v2330 = vstv %s1839
      %vm2331 = vcmp.gt.s32.totalorder %v185, %v2330
      %v2332 = vsel %vm2329, 1, 0
      %2333 = vset.pattern.permute.xlu0 0
      %2334 = vperm.xlu0 %2333, %v2332
      %v2335 = vpop.permute.xlu0 %2334
      %vm2336 = vcmp.eq.s32.totalorder %v2335, 1
      %v2337 = vsel %vm2336, %v2303, %v1848
      %2338 = vst [vmem:[#allocation2] sm:$0xff] %v2337
      %v2339 = vld [vmem:[#allocation3] sm:$0xff]
      %v2340 = vsel %vm2336, %v2301, %v2339
      %2341 = vst [vmem:[#allocation3] sm:$0xff] %v2340
      %v2342 = vld [vmem:[#allocation4] sm:$0xff]
      %v2343 = vsel %vm2331, 1, 0
      %2344 = vset.pattern.permute.xlu0 0
      %2345 = vperm.xlu0 %2344, %v2343
      %v2346 = vpop.permute.xlu0 %2345
      %vm2347 = vcmp.eq.s32.totalorder %v2346, 1
      %v2348 = vsel %vm2347, %v2328, %v2342
      %2349 = vst [vmem:[#allocation4] sm:$0xff] %v2348
      %v2350 = vld [vmem:[#allocation5] sm:$0xff]
      %v2351 = vsel %vm2347, %v2326, %v2350
      %2352 = vst [vmem:[#allocation5] sm:$0xff] %v2351
    $region105: #{tpu_custom_call.1} parent=1 // pred_fallthru
      _
    %p2353 = scmp.gt.s32.totalorder %s184, 3
    // Predicated region
    $region106: #{tpu_custom_call.1} parent=1 // pred_check
      %p2354 = pneg %p2353
    $region107: #{tpu_custom_call.1} parent=1 // pred_check_branch
      %2356 = sbr.rel (%p2354) target = $region109
    $region108: #{tpu_custom_call.1} parent=1 // pred_region
      %s2357 = ssub.s32 %s184, 4
      %s2358 = smul.u32 %s2357, 8
      %s2359 = smul.u32 3, 4
      %s2360 = smul.addr %s2359, 8
      %s2361 = scalar_lea.vmem [#allocation6], %s2360
      %v2362 = vld [vmem:[%s2361] sm:$0xff]
      %v2363 = vld [vmem:[%s2361 + $0x8] sm:$0xff]
      %v2364 = vld [vmem:[%s2361 + $0x10] sm:$0xff]
      %v2365 = vld [vmem:[%s2361 + $0x18] sm:$0xff]
      %v2366 = vld [vmem:[#allocation2] sm:$0xff]
      %v2367 = vld [vmem:[#allocation15] sm:$0xff]
      %v2368 = vld [vmem:[#allocation15 + $0x8] sm:$0xff]
      %v2369 = vld [vmem:[#allocation15 + $0x10] sm:$0xff]
      %v2370 = vld [vmem:[#allocation15 + $0x18] sm:$0xff]
      %v2371 = vld [vmem:[#allocation15 + $0x20] sm:$0xff]
      %v2372 = vld [vmem:[#allocation15 + $0x28] sm:$0xff]
      %v2373 = vld [vmem:[#allocation15 + $0x30] sm:$0xff]
      %v2374 = vld [vmem:[#allocation15 + $0x38] sm:$0xff]
      %v2375 = vld [vmem:[#allocation15 + $0x40] sm:$0xff]
      %v2376 = vld [vmem:[#allocation15 + $0x48] sm:$0xff]
      %v2377 = vld [vmem:[#allocation15 + $0x50] sm:$0xff]
      %v2378 = vld [vmem:[#allocation15 + $0x58] sm:$0xff]
      %v2379 = vld [vmem:[#allocation15 + $0x60] sm:$0xff]
      %v2380 = vld [vmem:[#allocation15 + $0x68] sm:$0xff]
      %v2381 = vld [vmem:[#allocation15 + $0x70] sm:$0xff]
      %v2382 = vld [vmem:[#allocation15 + $0x78] sm:$0xff]
      %v2383 = vld [vmem:[#allocation15 + $0x80] sm:$0xff]
      %v2384 = vld [vmem:[#allocation15 + $0x88] sm:$0xff]
      %v2385 = vld [vmem:[#allocation15 + $0x90] sm:$0xff]
      %v2386 = vld [vmem:[#allocation15 + $0x98] sm:$0xff]
      %v2387 = vld [vmem:[#allocation15 + $0xa0] sm:$0xff]
      %v2388 = vld [vmem:[#allocation15 + $0xa8] sm:$0xff]
      %v2389 = vld [vmem:[#allocation15 + $0xb0] sm:$0xff]
      %v2390 = vld [vmem:[#allocation15 + $0xb8] sm:$0xff]
      %v2391 = vld [vmem:[#allocation15 + $0xc0] sm:$0xff]
      %v2392 = vld [vmem:[#allocation15 + $0xc8] sm:$0xff]
      %v2393 = vld [vmem:[#allocation15 + $0xd0] sm:$0xff]
      %v2394 = vld [vmem:[#allocation15 + $0xd8] sm:$0xff]
      %v2395 = vld [vmem:[#allocation15 + $0xe0] sm:$0xff]
      %v2396 = vld [vmem:[#allocation15 + $0xe8] sm:$0xff]
      %v2397 = vld [vmem:[#allocation15 + $0xf0] sm:$0xff]
      %v2398 = vld [vmem:[#allocation15 + $0xf8] sm:$0xff]
      %v2399 = vld [vmem:[#allocation15 + $0x100] sm:$0xff]
      %v2400 = vld [vmem:[#allocation15 + $0x108] sm:$0xff]
      %v2401 = vld [vmem:[#allocation15 + $0x110] sm:$0xff]
      %v2402 = vld [vmem:[#allocation15 + $0x118] sm:$0xff]
      %v2403 = vld [vmem:[#allocation15 + $0x120] sm:$0xff]
      %v2404 = vld [vmem:[#allocation15 + $0x128] sm:$0xff]
      %v2405 = vld [vmem:[#allocation15 + $0x130] sm:$0xff]
      %v2406 = vld [vmem:[#allocation15 + $0x138] sm:$0xff]
      %v2407 = vld [vmem:[#allocation15 + $0x140] sm:$0xff]
      %v2408 = vld [vmem:[#allocation15 + $0x148] sm:$0xff]
      %v2409 = vld [vmem:[#allocation15 + $0x150] sm:$0xff]
      %v2410 = vld [vmem:[#allocation15 + $0x158] sm:$0xff]
      %v2411 = vld [vmem:[#allocation15 + $0x160] sm:$0xff]
      %v2412 = vld [vmem:[#allocation15 + $0x168] sm:$0xff]
      %v2413 = vld [vmem:[#allocation15 + $0x170] sm:$0xff]
      %v2414 = vld [vmem:[#allocation15 + $0x178] sm:$0xff]
      %v2415 = vld [vmem:[#allocation15 + $0x180] sm:$0xff]
      %v2416 = vld [vmem:[#allocation15 + $0x188] sm:$0xff]
      %v2417 = vld [vmem:[#allocation15 + $0x190] sm:$0xff]
      %v2418 = vld [vmem:[#allocation15 + $0x198] sm:$0xff]
      %v2419 = vld [vmem:[#allocation15 + $0x1a0] sm:$0xff]
      %v2420 = vld [vmem:[#allocation15 + $0x1a8] sm:$0xff]
      %v2421 = vld [vmem:[#allocation15 + $0x1b0] sm:$0xff]
      %v2422 = vld [vmem:[#allocation15 + $0x1b8] sm:$0xff]
      %v2423 = vld [vmem:[#allocation15 + $0x1c0] sm:$0xff]
      %v2424 = vld [vmem:[#allocation15 + $0x1c8] sm:$0xff]
      %v2425 = vld [vmem:[#allocation15 + $0x1d0] sm:$0xff]
      %v2426 = vld [vmem:[#allocation15 + $0x1d8] sm:$0xff]
      %v2427 = vld [vmem:[#allocation15 + $0x1e0] sm:$0xff]
      %v2428 = vld [vmem:[#allocation15 + $0x1e8] sm:$0xff]
      %v2429 = vld [vmem:[#allocation15 + $0x1f0] sm:$0xff]
      %v2430 = vld [vmem:[#allocation15 + $0x1f8] sm:$0xff]
      %2431 = vmatprep.subr.mxu0 %v2368
      %2432 = vmatpush1.msra.mxu0 %v2367
      %2433 = vmatprep.subr.mxu0 %v2372
      %2434 = vmatpush1.msra.mxu0 %v2371
      %2435 = vmatprep.subr.mxu0 %v2376
      %2436 = vmatpush1.msra.mxu0 %v2375
      %2437 = vmatprep.subr.mxu0 %v2380
      %2438 = vmatpush1.msra.mxu0 %v2379
      %2439 = vmatprep.subr.mxu0 %v2384
      %2440 = vmatpush1.msra.mxu0 %v2383
      %2441 = vmatprep.subr.mxu0 %v2388
      %2442 = vmatpush1.msra.mxu0 %v2387
      %2443 = vmatprep.subr.mxu0 %v2392
      %2444 = vmatpush1.msra.mxu0 %v2391
      %2445 = vmatprep.subr.mxu0 %v2396
      %2446 = vmatpush1.msra.mxu0 %v2395
      %2447 = vmatprep.subr.mxu0 %v2400
      %2448 = vmatpush1.msra.mxu0 %v2399
      %2449 = vmatprep.subr.mxu0 %v2404
      %2450 = vmatpush1.msra.mxu0 %v2403
      %2451 = vmatprep.subr.mxu0 %v2408
      %2452 = vmatpush1.msra.mxu0 %v2407
      %2453 = vmatprep.subr.mxu0 %v2412
      %2454 = vmatpush1.msra.mxu0 %v2411
      %2455 = vmatprep.subr.mxu0 %v2416
      %2456 = vmatpush1.msra.mxu0 %v2415
      %2457 = vmatprep.subr.mxu0 %v2420
      %2458 = vmatpush1.msra.mxu0 %v2419
      %2459 = vmatprep.subr.mxu0 %v2424
      %2460 = vmatpush1.msra.mxu0 %v2423
      %2461 = vmatprep.subr.mxu0 %v2428
      %2462 = vmatpush1.msra.mxu0 %v2427
      %2463 = vmatprep.subr.mxu0 0.0
      %2464 = vmatpush1.msra.mxu0 0.0
      %2465 = vmatprep.subr.mxu0 0.0
      %2466 = vmatpush1.msra.mxu0 0.0
      %2467 = vmatprep.subr.mxu0 0.0
      %2468 = vmatpush1.msra.mxu0 0.0
      %2469 = vmatprep.subr.mxu0 0.0
      %2470 = vmatpush1.msra.mxu0 0.0
      %2471 = vmatprep.subr.mxu0 0.0
      %2472 = vmatpush1.msra.mxu0 0.0
      %2473 = vmatprep.subr.mxu0 0.0
      %2474 = vmatpush1.msra.mxu0 0.0
      %2475 = vmatprep.subr.mxu0 0.0
      %2476 = vmatpush1.msra.mxu0 0.0
      %2477 = vmatprep.subr.mxu0 0.0
      %2478 = vmatpush1.msra.mxu0 0.0
      %2479 = vmatprep.subr.mxu0 0.0
      %2480 = vmatpush1.msra.mxu0 0.0
      %2481 = vmatprep.subr.mxu0 0.0
      %2482 = vmatpush1.msra.mxu0 0.0
      %2483 = vmatprep.subr.mxu0 0.0
      %2484 = vmatpush1.msra.mxu0 0.0
      %2485 = vmatprep.subr.mxu0 0.0
      %2486 = vmatpush1.msra.mxu0 0.0
      %2487 = vmatprep.subr.mxu0 0.0
      %2488 = vmatpush1.msra.mxu0 0.0
      %2489 = vmatprep.subr.mxu0 0.0
      %2490 = vmatpush1.msra.mxu0 0.0
      %2491 = vmatprep.subr.mxu0 0.0
      %2492 = vmatpush1.msra.mxu0 0.0
      %2493 = vmatprep.subr.mxu0 0.0
      %2494 = vmatpush1.msra.mxu0 0.0
      %2495 = vmatprep.mubr.f32.mxu0 0.0
      %2496 = vmatmul.mubr.f32.gmra.mrb[0].mxu0 %v2366
      %v2497 = vpop.f32.mrb[0].mxu0
      %v2498 = vadd.f32 0.0, %v2497
      %v2499 = vpop.f32.mrb[0].mxu0
      %v2500 = vadd.f32 0.0, %v2499
      %2501 = vdwg.mxu0
      %2502 = vmatprep.subr.mxu0 %v2370
      %2503 = vmatpush1.msra.mxu0 %v2369
      %2504 = vmatprep.subr.mxu0 %v2374
      %2505 = vmatpush1.msra.mxu0 %v2373
      %2506 = vmatprep.subr.mxu0 %v2378
      %2507 = vmatpush1.msra.mxu0 %v2377
      %2508 = vmatprep.subr.mxu0 %v2382
      %2509 = vmatpush1.msra.mxu0 %v2381
      %2510 = vmatprep.subr.mxu0 %v2386
      %2511 = vmatpush1.msra.mxu0 %v2385
      %2512 = vmatprep.subr.mxu0 %v2390
      %2513 = vmatpush1.msra.mxu0 %v2389
      %2514 = vmatprep.subr.mxu0 %v2394
      %2515 = vmatpush1.msra.mxu0 %v2393
      %2516 = vmatprep.subr.mxu0 %v2398
      %2517 = vmatpush1.msra.mxu0 %v2397
      %2518 = vmatprep.subr.mxu0 %v2402
      %2519 = vmatpush1.msra.mxu0 %v2401
      %2520 = vmatprep.subr.mxu0 %v2406
      %2521 = vmatpush1.msra.mxu0 %v2405
      %2522 = vmatprep.subr.mxu0 %v2410
      %2523 = vmatpush1.msra.mxu0 %v2409
      %2524 = vmatprep.subr.mxu0 %v2414
      %2525 = vmatpush1.msra.mxu0 %v2413
      %2526 = vmatprep.subr.mxu0 %v2418
      %2527 = vmatpush1.msra.mxu0 %v2417
      %2528 = vmatprep.subr.mxu0 %v2422
      %2529 = vmatpush1.msra.mxu0 %v2421
      %2530 = vmatprep.subr.mxu0 %v2426
      %2531 = vmatpush1.msra.mxu0 %v2425
      %2532 = vmatprep.subr.mxu0 %v2430
      %2533 = vmatpush1.msra.mxu0 %v2429
      %2534 = vmatprep.subr.mxu0 0.0
      %2535 = vmatpush1.msra.mxu0 0.0
      %2536 = vmatprep.subr.mxu0 0.0
      %2537 = vmatpush1.msra.mxu0 0.0
      %2538 = vmatprep.subr.mxu0 0.0
      %2539 = vmatpush1.msra.mxu0 0.0
      %2540 = vmatprep.subr.mxu0 0.0
      %2541 = vmatpush1.msra.mxu0 0.0
      %2542 = vmatprep.subr.mxu0 0.0
      %2543 = vmatpush1.msra.mxu0 0.0
      %2544 = vmatprep.subr.mxu0 0.0
      %2545 = vmatpush1.msra.mxu0 0.0
      %2546 = vmatprep.subr.mxu0 0.0
      %2547 = vmatpush1.msra.mxu0 0.0
      %2548 = vmatprep.subr.mxu0 0.0
      %2549 = vmatpush1.msra.mxu0 0.0
      %2550 = vmatprep.subr.mxu0 0.0
      %2551 = vmatpush1.msra.mxu0 0.0
      %2552 = vmatprep.subr.mxu0 0.0
      %2553 = vmatpush1.msra.mxu0 0.0
      %2554 = vmatprep.subr.mxu0 0.0
      %2555 = vmatpush1.msra.mxu0 0.0
      %2556 = vmatprep.subr.mxu0 0.0
      %2557 = vmatpush1.msra.mxu0 0.0
      %2558 = vmatprep.subr.mxu0 0.0
      %2559 = vmatpush1.msra.mxu0 0.0
      %2560 = vmatprep.subr.mxu0 0.0
      %2561 = vmatpush1.msra.mxu0 0.0
      %2562 = vmatprep.subr.mxu0 0.0
      %2563 = vmatpush1.msra.mxu0 0.0
      %2564 = vmatprep.subr.mxu0 0.0
      %2565 = vmatpush1.msra.mxu0 0.0
      %2566 = vmatprep.mubr.f32.mxu0 0.0
      %2567 = vmatmul.mubr.f32.gmra.mrb[0].mxu0 %v2366
      %v2568 = vpop.f32.mrb[0].mxu0
      %v2569 = vadd.f32 0.0, %v2568
      %v2570 = vpop.f32.mrb[0].mxu0
      %v2571 = vadd.f32 0.0, %v2570
      %2572 = vdwg.mxu0
      %v2573 = vadd.f32 %v2362, %v2498
      %v2574 = vadd.f32 %v2363, %v2500
      %v2575 = vadd.f32 %v2364, %v2569
      %v2576 = vadd.f32 %v2365, %v2571
      %s2577 = sshra.s32 %s2358, 3
      %s2578 = sand.u32 %s2358, 7
      %s2579 = smul.u32 %s2577, 4
      %s2580 = smul.addr %s2579, 8
      %s2581 = scalar_lea.vmem [#allocation7], %s2580
      %v2582 = vld [vmem:[%s2581] sm:$0xff]
      %v2583 = vld [vmem:[%s2581 + $0x8] sm:$0xff]
      %v2584 = vld [vmem:[%s2581 + $0x10] sm:$0xff]
      %v2585 = vld [vmem:[%s2581 + $0x18] sm:$0xff]
      %v2586 = vld [vmem:[#allocation4] sm:$0xff]
      %v2587 = vld [vmem:[#allocation20] sm:$0xff]
      %v2588 = vld [vmem:[#allocation20 + $0x8] sm:$0xff]
      %v2589 = vld [vmem:[#allocation20 + $0x10] sm:$0xff]
      %v2590 = vld [vmem:[#allocation20 + $0x18] sm:$0xff]
      %v2591 = vld [vmem:[#allocation20 + $0x20] sm:$0xff]
      %v2592 = vld [vmem:[#allocation20 + $0x28] sm:$0xff]
      %v2593 = vld [vmem:[#allocation20 + $0x30] sm:$0xff]
      %v2594 = vld [vmem:[#allocation20 + $0x38] sm:$0xff]
      %v2595 = vld [vmem:[#allocation20 + $0x40] sm:$0xff]
      %v2596 = vld [vmem:[#allocation20 + $0x48] sm:$0xff]
      %v2597 = vld [vmem:[#allocation20 + $0x50] sm:$0xff]
      %v2598 = vld [vmem:[#allocation20 + $0x58] sm:$0xff]
      %v2599 = vld [vmem:[#allocation20 + $0x60] sm:$0xff]
      %v2600 = vld [vmem:[#allocation20 + $0x68] sm:$0xff]
      %v2601 = vld [vmem:[#allocation20 + $0x70] sm:$0xff]
      %v2602 = vld [vmem:[#allocation20 + $0x78] sm:$0xff]
      %v2603 = vld [vmem:[#allocation20 + $0x80] sm:$0xff]
      %v2604 = vld [vmem:[#allocation20 + $0x88] sm:$0xff]
      %v2605 = vld [vmem:[#allocation20 + $0x90] sm:$0xff]
      %v2606 = vld [vmem:[#allocation20 + $0x98] sm:$0xff]
      %v2607 = vld [vmem:[#allocation20 + $0xa0] sm:$0xff]
      %v2608 = vld [vmem:[#allocation20 + $0xa8] sm:$0xff]
      %v2609 = vld [vmem:[#allocation20 + $0xb0] sm:$0xff]
      %v2610 = vld [vmem:[#allocation20 + $0xb8] sm:$0xff]
      %v2611 = vld [vmem:[#allocation20 + $0xc0] sm:$0xff]
      %v2612 = vld [vmem:[#allocation20 + $0xc8] sm:$0xff]
      %v2613 = vld [vmem:[#allocation20 + $0xd0] sm:$0xff]
      %v2614 = vld [vmem:[#allocation20 + $0xd8] sm:$0xff]
      %v2615 = vld [vmem:[#allocation20 + $0xe0] sm:$0xff]
      %v2616 = vld [vmem:[#allocation20 + $0xe8] sm:$0xff]
      %v2617 = vld [vmem:[#allocation20 + $0xf0] sm:$0xff]
      %v2618 = vld [vmem:[#allocation20 + $0xf8] sm:$0xff]
      %v2619 = vld [vmem:[#allocation20 + $0x100] sm:$0xff]
      %v2620 = vld [vmem:[#allocation20 + $0x108] sm:$0xff]
      %v2621 = vld [vmem:[#allocation20 + $0x110] sm:$0xff]
      %v2622 = vld [vmem:[#allocation20 + $0x118] sm:$0xff]
      %v2623 = vld [vmem:[#allocation20 + $0x120] sm:$0xff]
      %v2624 = vld [vmem:[#allocation20 + $0x128] sm:$0xff]
      %v2625 = vld [vmem:[#allocation20 + $0x130] sm:$0xff]
      %v2626 = vld [vmem:[#allocation20 + $0x138] sm:$0xff]
      %v2627 = vld [vmem:[#allocation20 + $0x140] sm:$0xff]
      %v2628 = vld [vmem:[#allocation20 + $0x148] sm:$0xff]
      %v2629 = vld [vmem:[#allocation20 + $0x150] sm:$0xff]
      %v2630 = vld [vmem:[#allocation20 + $0x158] sm:$0xff]
      %v2631 = vld [vmem:[#allocation20 + $0x160] sm:$0xff]
      %v2632 = vld [vmem:[#allocation20 + $0x168] sm:$0xff]
      %v2633 = vld [vmem:[#allocation20 + $0x170] sm:$0xff]
      %v2634 = vld [vmem:[#allocation20 + $0x178] sm:$0xff]
      %v2635 = vld [vmem:[#allocation20 + $0x180] sm:$0xff]
      %v2636 = vld [vmem:[#allocation20 + $0x188] sm:$0xff]
      %v2637 = vld [vmem:[#allocation20 + $0x190] sm:$0xff]
      %v2638 = vld [vmem:[#allocation20 + $0x198] sm:$0xff]
      %v2639 = vld [vmem:[#allocation20 + $0x1a0] sm:$0xff]
      %v2640 = vld [vmem:[#allocation20 + $0x1a8] sm:$0xff]
      %v2641 = vld [vmem:[#allocation20 + $0x1b0] sm:$0xff]
      %v2642 = vld [vmem:[#allocation20 + $0x1b8] sm:$0xff]
      %v2643 = vld [vmem:[#allocation20 + $0x1c0] sm:$0xff]
      %v2644 = vld [vmem:[#allocation20 + $0x1c8] sm:$0xff]
      %v2645 = vld [vmem:[#allocation20 + $0x1d0] sm:$0xff]
      %v2646 = vld [vmem:[#allocation20 + $0x1d8] sm:$0xff]
      %v2647 = vld [vmem:[#allocation20 + $0x1e0] sm:$0xff]
      %v2648 = vld [vmem:[#allocation20 + $0x1e8] sm:$0xff]
      %v2649 = vld [vmem:[#allocation20 + $0x1f0] sm:$0xff]
      %v2650 = vld [vmem:[#allocation20 + $0x1f8] sm:$0xff]
      %2651 = vmatprep.subr.mxu0 %v2588
      %2652 = vmatpush1.msra.mxu0 %v2587
      %2653 = vmatprep.subr.mxu0 %v2592
      %2654 = vmatpush1.msra.mxu0 %v2591
      %2655 = vmatprep.subr.mxu0 %v2596
      %2656 = vmatpush1.msra.mxu0 %v2595
      %2657 = vmatprep.subr.mxu0 %v2600
      %2658 = vmatpush1.msra.mxu0 %v2599
      %2659 = vmatprep.subr.mxu0 %v2604
      %2660 = vmatpush1.msra.mxu0 %v2603
      %2661 = vmatprep.subr.mxu0 %v2608
      %2662 = vmatpush1.msra.mxu0 %v2607
      %2663 = vmatprep.subr.mxu0 %v2612
      %2664 = vmatpush1.msra.mxu0 %v2611
      %2665 = vmatprep.subr.mxu0 %v2616
      %2666 = vmatpush1.msra.mxu0 %v2615
      %2667 = vmatprep.subr.mxu0 %v2620
      %2668 = vmatpush1.msra.mxu0 %v2619
      %2669 = vmatprep.subr.mxu0 %v2624
      %2670 = vmatpush1.msra.mxu0 %v2623
      %2671 = vmatprep.subr.mxu0 %v2628
      %2672 = vmatpush1.msra.mxu0 %v2627
      %2673 = vmatprep.subr.mxu0 %v2632
      %2674 = vmatpush1.msra.mxu0 %v2631
      %2675 = vmatprep.subr.mxu0 %v2636
      %2676 = vmatpush1.msra.mxu0 %v2635
      %2677 = vmatprep.subr.mxu0 %v2640
      %2678 = vmatpush1.msra.mxu0 %v2639
      %2679 = vmatprep.subr.mxu0 %v2644
      %2680 = vmatpush1.msra.mxu0 %v2643
      %2681 = vmatprep.subr.mxu0 %v2648
      %2682 = vmatpush1.msra.mxu0 %v2647
      %2683 = vmatprep.subr.mxu0 0.0
      %2684 = vmatpush1.msra.mxu0 0.0
      %2685 = vmatprep.subr.mxu0 0.0
      %2686 = vmatpush1.msra.mxu0 0.0
      %2687 = vmatprep.subr.mxu0 0.0
      %2688 = vmatpush1.msra.mxu0 0.0
      %2689 = vmatprep.subr.mxu0 0.0
      %2690 = vmatpush1.msra.mxu0 0.0
      %2691 = vmatprep.subr.mxu0 0.0
      %2692 = vmatpush1.msra.mxu0 0.0
      %2693 = vmatprep.subr.mxu0 0.0
      %2694 = vmatpush1.msra.mxu0 0.0
      %2695 = vmatprep.subr.mxu0 0.0
      %2696 = vmatpush1.msra.mxu0 0.0
      %2697 = vmatprep.subr.mxu0 0.0
      %2698 = vmatpush1.msra.mxu0 0.0
      %2699 = vmatprep.subr.mxu0 0.0
      %2700 = vmatpush1.msra.mxu0 0.0
      %2701 = vmatprep.subr.mxu0 0.0
      %2702 = vmatpush1.msra.mxu0 0.0
      %2703 = vmatprep.subr.mxu0 0.0
      %2704 = vmatpush1.msra.mxu0 0.0
      %2705 = vmatprep.subr.mxu0 0.0
      %2706 = vmatpush1.msra.mxu0 0.0
      %2707 = vmatprep.subr.mxu0 0.0
      %2708 = vmatpush1.msra.mxu0 0.0
      %2709 = vmatprep.subr.mxu0 0.0
      %2710 = vmatpush1.msra.mxu0 0.0
      %2711 = vmatprep.subr.mxu0 0.0
      %2712 = vmatpush1.msra.mxu0 0.0
      %2713 = vmatprep.subr.mxu0 0.0
      %2714 = vmatpush1.msra.mxu0 0.0
      %2715 = vmatprep.mubr.f32.mxu0 0.0
      %2716 = vmatmul.mubr.f32.gmra.mrb[0].mxu0 %v2586
      %v2717 = vpop.f32.mrb[0].mxu0
      %v2718 = vadd.f32 0.0, %v2717
      %v2719 = vpop.f32.mrb[0].mxu0
      %v2720 = vadd.f32 0.0, %v2719
      %2721 = vdwg.mxu0
      %2722 = vmatprep.subr.mxu0 %v2590
      %2723 = vmatpush1.msra.mxu0 %v2589
      %2724 = vmatprep.subr.mxu0 %v2594
      %2725 = vmatpush1.msra.mxu0 %v2593
      %2726 = vmatprep.subr.mxu0 %v2598
      %2727 = vmatpush1.msra.mxu0 %v2597
      %2728 = vmatprep.subr.mxu0 %v2602
      %2729 = vmatpush1.msra.mxu0 %v2601
      %2730 = vmatprep.subr.mxu0 %v2606
      %2731 = vmatpush1.msra.mxu0 %v2605
      %2732 = vmatprep.subr.mxu0 %v2610
      %2733 = vmatpush1.msra.mxu0 %v2609
      %2734 = vmatprep.subr.mxu0 %v2614
      %2735 = vmatpush1.msra.mxu0 %v2613
      %2736 = vmatprep.subr.mxu0 %v2618
      %2737 = vmatpush1.msra.mxu0 %v2617
      %2738 = vmatprep.subr.mxu0 %v2622
      %2739 = vmatpush1.msra.mxu0 %v2621
      %2740 = vmatprep.subr.mxu0 %v2626
      %2741 = vmatpush1.msra.mxu0 %v2625
      %2742 = vmatprep.subr.mxu0 %v2630
      %2743 = vmatpush1.msra.mxu0 %v2629
      %2744 = vmatprep.subr.mxu0 %v2634
      %2745 = vmatpush1.msra.mxu0 %v2633
      %2746 = vmatprep.subr.mxu0 %v2638
      %2747 = vmatpush1.msra.mxu0 %v2637
      %2748 = vmatprep.subr.mxu0 %v2642
      %2749 = vmatpush1.msra.mxu0 %v2641
      %2750 = vmatprep.subr.mxu0 %v2646
      %2751 = vmatpush1.msra.mxu0 %v2645
      %2752 = vmatprep.subr.mxu0 %v2650
      %2753 = vmatpush1.msra.mxu0 %v2649
      %2754 = vmatprep.subr.mxu0 0.0
      %2755 = vmatpush1.msra.mxu0 0.0
      %2756 = vmatprep.subr.mxu0 0.0
      %2757 = vmatpush1.msra.mxu0 0.0
      %2758 = vmatprep.subr.mxu0 0.0
      %2759 = vmatpush1.msra.mxu0 0.0
      %2760 = vmatprep.subr.mxu0 0.0
      %2761 = vmatpush1.msra.mxu0 0.0
      %2762 = vmatprep.subr.mxu0 0.0
      %2763 = vmatpush1.msra.mxu0 0.0
      %2764 = vmatprep.subr.mxu0 0.0
      %2765 = vmatpush1.msra.mxu0 0.0
      %2766 = vmatprep.subr.mxu0 0.0
      %2767 = vmatpush1.msra.mxu0 0.0
      %2768 = vmatprep.subr.mxu0 0.0
      %2769 = vmatpush1.msra.mxu0 0.0
      %2770 = vmatprep.subr.mxu0 0.0
      %2771 = vmatpush1.msra.mxu0 0.0
      %2772 = vmatprep.subr.mxu0 0.0
      %2773 = vmatpush1.msra.mxu0 0.0
      %2774 = vmatprep.subr.mxu0 0.0
      %2775 = vmatpush1.msra.mxu0 0.0
      %2776 = vmatprep.subr.mxu0 0.0
      %2777 = vmatpush1.msra.mxu0 0.0
      %2778 = vmatprep.subr.mxu0 0.0
      %2779 = vmatpush1.msra.mxu0 0.0
      %2780 = vmatprep.subr.mxu0 0.0
      %2781 = vmatpush1.msra.mxu0 0.0
      %2782 = vmatprep.subr.mxu0 0.0
      %2783 = vmatpush1.msra.mxu0 0.0
      %2784 = vmatprep.subr.mxu0 0.0
      %2785 = vmatpush1.msra.mxu0 0.0
      %2786 = vmatprep.mubr.f32.mxu0 0.0
      %2787 = vmatmul.mubr.f32.gmra.mrb[0].mxu0 %v2586
      %v2788 = vpop.f32.mrb[0].mxu0
      %v2789 = vadd.f32 0.0, %v2788
      %v2790 = vpop.f32.mrb[0].mxu0
      %v2791 = vadd.f32 0.0, %v2790
      %2792 = vdwg.mxu0
      %v2793 = vadd.f32 %v2582, %v2718
      %v2794 = vadd.f32 %v2583, %v2720
      %v2795 = vadd.f32 %v2584, %v2789
      %v2796 = vadd.f32 %v2585, %v2791
      %v2797 = vld [vmem:[#allocation3] sm:$0xff]
      %v2798 = vxor.u32 %v2573, 2147483648
      %v2799 = vmul.f32 %v2798, 1.442695
      %v2800 = vpow.pop %v2799
      %v2801 = vadd.f32 %v2800, 1.0
      %v2802 = vrcp.pop %v2801
      %v2803 = vmul.f32 1.0, %v2802
      %v2804 = vxor.u32 %v2574, 2147483648
      %v2805 = vmul.f32 %v2804, 1.442695
      %v2806 = vpow.pop %v2805
      %v2807 = vadd.f32 %v2806, 1.0
      %v2808 = vrcp.pop %v2807
      %v2809 = vmul.f32 1.0, %v2808
      %v2810 = vtanh.pop %v2575
      %v2811 = vxor.u32 %v2576, 2147483648
      %v2812 = vmul.f32 %v2811, 1.442695
      %v2813 = vpow.pop %v2812
      %v2814 = vadd.f32 %v2813, 1.0
      %v2815 = vrcp.pop %v2814
      %v2816 = vmul.f32 1.0, %v2815
      %v2817 = vmul.f32 %v2809, %v2797
      %v2818 = vmul.f32 %v2803, %v2810
      %v2819 = vadd.f32 %v2817, %v2818
      %v2820 = vtanh.pop %v2819
      %v2821 = vmul.f32 %v2816, %v2820
      %v2822 = vld [vmem:[#allocation5] sm:$0xff]
      %v2823 = vxor.u32 %v2793, 2147483648
      %v2824 = vmul.f32 %v2823, 1.442695
      %v2825 = vpow.pop %v2824
      %v2826 = vadd.f32 %v2825, 1.0
      %v2827 = vrcp.pop %v2826
      %v2828 = vmul.f32 1.0, %v2827
      %v2829 = vxor.u32 %v2794, 2147483648
      %v2830 = vmul.f32 %v2829, 1.442695
      %v2831 = vpow.pop %v2830
      %v2832 = vadd.f32 %v2831, 1.0
      %v2833 = vrcp.pop %v2832
      %v2834 = vmul.f32 1.0, %v2833
      %v2835 = vtanh.pop %v2795
      %v2836 = vxor.u32 %v2796, 2147483648
      %v2837 = vmul.f32 %v2836, 1.442695
      %v2838 = vpow.pop %v2837
      %v2839 = vadd.f32 %v2838, 1.0
      %v2840 = vrcp.pop %v2839
      %v2841 = vmul.f32 1.0, %v2840
      %v2842 = vmul.f32 %v2834, %v2822
      %v2843 = vmul.f32 %v2828, %v2835
      %v2844 = vadd.f32 %v2842, %v2843
      %v2845 = vtanh.pop %v2844
      %v2846 = vmul.f32 %v2841, %v2845
      %vm2847 = vcmp.gt.s32.totalorder %v185, 3
      %v2848 = vstv %s2357
      %vm2849 = vcmp.gt.s32.totalorder %v185, %v2848
      %v2850 = vsel %vm2847, 1, 0
      %2851 = vset.pattern.permute.xlu0 0
      %2852 = vperm.xlu0 %2851, %v2850
      %v2853 = vpop.permute.xlu0 %2852
      %vm2854 = vcmp.eq.s32.totalorder %v2853, 1
      %v2855 = vsel %vm2854, %v2821, %v2366
      %2856 = vst [vmem:[#allocation2] sm:$0xff] %v2855
      %v2857 = vld [vmem:[#allocation3] sm:$0xff]
      %v2858 = vsel %vm2854, %v2819, %v2857
      %2859 = vst [vmem:[#allocation3] sm:$0xff] %v2858
      %v2860 = vld [vmem:[#allocation4] sm:$0xff]
      %v2861 = vsel %vm2849, 1, 0
      %2862 = vset.pattern.permute.xlu0 0
      %2863 = vperm.xlu0 %2862, %v2861
      %v2864 = vpop.permute.xlu0 %2863
      %vm2865 = vcmp.eq.s32.totalorder %v2864, 1
      %v2866 = vsel %vm2865, %v2846, %v2860
      %2867 = vst [vmem:[#allocation4] sm:$0xff] %v2866
      %v2868 = vld [vmem:[#allocation5] sm:$0xff]
      %v2869 = vsel %vm2865, %v2844, %v2868
      %2870 = vst [vmem:[#allocation5] sm:$0xff] %v2869
    $region109: #{tpu_custom_call.1} parent=1 // pred_fallthru
      _
    %p2871 = scmp.gt.s32.totalorder %s184, 4
    // Predicated region
    $region110: #{tpu_custom_call.1} parent=1 // pred_check
      %p2872 = pneg %p2871
    $region111: #{tpu_custom_call.1} parent=1 // pred_check_branch
      %2874 = sbr.rel (%p2872) target = $region113
    $region112: #{tpu_custom_call.1} parent=1 // pred_region
      %s2875 = ssub.s32 %s184, 5
      %s2876 = smul.u32 %s2875, 8
      %s2877 = smul.u32 4, 4
      %s2878 = smul.addr %s2877, 8
      %s2879 = scalar_lea.vmem [#allocation6], %s2878
      %v2880 = vld [vmem:[%s2879] sm:$0xff]
      %v2881 = vld [vmem:[%s2879 + $0x8] sm:$0xff]
      %v2882 = vld [vmem:[%s2879 + $0x10] sm:$0xff]
      %v2883 = vld [vmem:[%s2879 + $0x18] sm:$0xff]
      %v2884 = vld [vmem:[#allocation2] sm:$0xff]
      %v2885 = vld [vmem:[#allocation15] sm:$0xff]
      %v2886 = vld [vmem:[#allocation15 + $0x8] sm:$0xff]
      %v2887 = vld [vmem:[#allocation15 + $0x10] sm:$0xff]
      %v2888 = vld [vmem:[#allocation15 + $0x18] sm:$0xff]
      %v2889 = vld [vmem:[#allocation15 + $0x20] sm:$0xff]
      %v2890 = vld [vmem:[#allocation15 + $0x28] sm:$0xff]
      %v2891 = vld [vmem:[#allocation15 + $0x30] sm:$0xff]
      %v2892 = vld [vmem:[#allocation15 + $0x38] sm:$0xff]
      %v2893 = vld [vmem:[#allocation15 + $0x40] sm:$0xff]
      %v2894 = vld [vmem:[#allocation15 + $0x48] sm:$0xff]
      %v2895 = vld [vmem:[#allocation15 + $0x50] sm:$0xff]
      %v2896 = vld [vmem:[#allocation15 + $0x58] sm:$0xff]
      %v2897 = vld [vmem:[#allocation15 + $0x60] sm:$0xff]
      %v2898 = vld [vmem:[#allocation15 + $0x68] sm:$0xff]
      %v2899 = vld [vmem:[#allocation15 + $0x70] sm:$0xff]
      %v2900 = vld [vmem:[#allocation15 + $0x78] sm:$0xff]
      %v2901 = vld [vmem:[#allocation15 + $0x80] sm:$0xff]
      %v2902 = vld [vmem:[#allocation15 + $0x88] sm:$0xff]
      %v2903 = vld [vmem:[#allocation15 + $0x90] sm:$0xff]
      %v2904 = vld [vmem:[#allocation15 + $0x98] sm:$0xff]
      %v2905 = vld [vmem:[#allocation15 + $0xa0] sm:$0xff]
      %v2906 = vld [vmem:[#allocation15 + $0xa8] sm:$0xff]
      %v2907 = vld [vmem:[#allocation15 + $0xb0] sm:$0xff]
      %v2908 = vld [vmem:[#allocation15 + $0xb8] sm:$0xff]
      %v2909 = vld [vmem:[#allocation15 + $0xc0] sm:$0xff]
      %v2910 = vld [vmem:[#allocation15 + $0xc8] sm:$0xff]
      %v2911 = vld [vmem:[#allocation15 + $0xd0] sm:$0xff]
      %v2912 = vld [vmem:[#allocation15 + $0xd8] sm:$0xff]
      %v2913 = vld [vmem:[#allocation15 + $0xe0] sm:$0xff]
      %v2914 = vld [vmem:[#allocation15 + $0xe8] sm:$0xff]
      %v2915 = vld [vmem:[#allocation15 + $0xf0] sm:$0xff]
      %v2916 = vld [vmem:[#allocation15 + $0xf8] sm:$0xff]
      %v2917 = vld [vmem:[#allocation15 + $0x100] sm:$0xff]
      %v2918 = vld [vmem:[#allocation15 + $0x108] sm:$0xff]
      %v2919 = vld [vmem:[#allocation15 + $0x110] sm:$0xff]
      %v2920 = vld [vmem:[#allocation15 + $0x118] sm:$0xff]
      %v2921 = vld [vmem:[#allocation15 + $0x120] sm:$0xff]
      %v2922 = vld [vmem:[#allocation15 + $0x128] sm:$0xff]
      %v2923 = vld [vmem:[#allocation15 + $0x130] sm:$0xff]
      %v2924 = vld [vmem:[#allocation15 + $0x138] sm:$0xff]
      %v2925 = vld [vmem:[#allocation15 + $0x140] sm:$0xff]
      %v2926 = vld [vmem:[#allocation15 + $0x148] sm:$0xff]
      %v2927 = vld [vmem:[#allocation15 + $0x150] sm:$0xff]
      %v2928 = vld [vmem:[#allocation15 + $0x158] sm:$0xff]
      %v2929 = vld [vmem:[#allocation15 + $0x160] sm:$0xff]
      %v2930 = vld [vmem:[#allocation15 + $0x168] sm:$0xff]
      %v2931 = vld [vmem:[#allocation15 + $0x170] sm:$0xff]
      %v2932 = vld [vmem:[#allocation15 + $0x178] sm:$0xff]
      %v2933 = vld [vmem:[#allocation15 + $0x180] sm:$0xff]
      %v2934 = vld [vmem:[#allocation15 + $0x188] sm:$0xff]
      %v2935 = vld [vmem:[#allocation15 + $0x190] sm:$0xff]
      %v2936 = vld [vmem:[#allocation15 + $0x198] sm:$0xff]
      %v2937 = vld [vmem:[#allocation15 + $0x1a0] sm:$0xff]
      %v2938 = vld [vmem:[#allocation15 + $0x1a8] sm:$0xff]
      %v2939 = vld [vmem:[#allocation15 + $0x1b0] sm:$0xff]
      %v2940 = vld [vmem:[#allocation15 + $0x1b8] sm:$0xff]
      %v2941 = vld [vmem:[#allocation15 + $0x1c0] sm:$0xff]
      %v2942 = vld [vmem:[#allocation15 + $0x1c8] sm:$0xff]
      %v2943 = vld [vmem:[#allocation15 + $0x1d0] sm:$0xff]
      %v2944 = vld [vmem:[#allocation15 + $0x1d8] sm:$0xff]
      %v2945 = vld [vmem:[#allocation15 + $0x1e0] sm:$0xff]
      %v2946 = vld [vmem:[#allocation15 + $0x1e8] sm:$0xff]
      %v2947 = vld [vmem:[#allocation15 + $0x1f0] sm:$0xff]
      %v2948 = vld [vmem:[#allocation15 + $0x1f8] sm:$0xff]
      %2949 = vmatprep.subr.mxu0 %v2886
      %2950 = vmatpush1.msra.mxu0 %v2885
      %2951 = vmatprep.subr.mxu0 %v2890
      %2952 = vmatpush1.msra.mxu0 %v2889
      %2953 = vmatprep.subr.mxu0 %v2894
      %2954 = vmatpush1.msra.mxu0 %v2893
      %2955 = vmatprep.subr.mxu0 %v2898
      %2956 = vmatpush1.msra.mxu0 %v2897
      %2957 = vmatprep.subr.mxu0 %v2902
      %2958 = vmatpush1.msra.mxu0 %v2901
      %2959 = vmatprep.subr.mxu0 %v2906
      %2960 = vmatpush1.msra.mxu0 %v2905
      %2961 = vmatprep.subr.mxu0 %v2910
      %2962 = vmatpush1.msra.mxu0 %v2909
      %2963 = vmatprep.subr.mxu0 %v2914
      %2964 = vmatpush1.msra.mxu0 %v2913
      %2965 = vmatprep.subr.mxu0 %v2918
      %2966 = vmatpush1.msra.mxu0 %v2917
      %2967 = vmatprep.subr.mxu0 %v2922
      %2968 = vmatpush1.msra.mxu0 %v2921
      %2969 = vmatprep.subr.mxu0 %v2926
      %2970 = vmatpush1.msra.mxu0 %v2925
      %2971 = vmatprep.subr.mxu0 %v2930
      %2972 = vmatpush1.msra.mxu0 %v2929
      %2973 = vmatprep.subr.mxu0 %v2934
      %2974 = vmatpush1.msra.mxu0 %v2933
      %2975 = vmatprep.subr.mxu0 %v2938
      %2976 = vmatpush1.msra.mxu0 %v2937
      %2977 = vmatprep.subr.mxu0 %v2942
      %2978 = vmatpush1.msra.mxu0 %v2941
      %2979 = vmatprep.subr.mxu0 %v2946
      %2980 = vmatpush1.msra.mxu0 %v2945
      %2981 = vmatprep.subr.mxu0 0.0
      %2982 = vmatpush1.msra.mxu0 0.0
      %2983 = vmatprep.subr.mxu0 0.0
      %2984 = vmatpush1.msra.mxu0 0.0
      %2985 = vmatprep.subr.mxu0 0.0
      %2986 = vmatpush1.msra.mxu0 0.0
      %2987 = vmatprep.subr.mxu0 0.0
      %2988 = vmatpush1.msra.mxu0 0.0
      %2989 = vmatprep.subr.mxu0 0.0
      %2990 = vmatpush1.msra.mxu0 0.0
      %2991 = vmatprep.subr.mxu0 0.0
      %2992 = vmatpush1.msra.mxu0 0.0
      %2993 = vmatprep.subr.mxu0 0.0
      %2994 = vmatpush1.msra.mxu0 0.0
      %2995 = vmatprep.subr.mxu0 0.0
      %2996 = vmatpush1.msra.mxu0 0.0
      %2997 = vmatprep.subr.mxu0 0.0
      %2998 = vmatpush1.msra.mxu0 0.0
      %2999 = vmatprep.subr.mxu0 0.0
      %3000 = vmatpush1.msra.mxu0 0.0
      %3001 = vmatprep.subr.mxu0 0.0
      %3002 = vmatpush1.msra.mxu0 0.0
      %3003 = vmatprep.subr.mxu0 0.0
      %3004 = vmatpush1.msra.mxu0 0.0
      %3005 = vmatprep.subr.mxu0 0.0
      %3006 = vmatpush1.msra.mxu0 0.0
      %3007 = vmatprep.subr.mxu0 0.0
      %3008 = vmatpush1.msra.mxu0 0.0
      %3009 = vmatprep.subr.mxu0 0.0
      %3010 = vmatpush1.msra.mxu0 0.0
      %3011 = vmatprep.subr.mxu0 0.0
      %3012 = vmatpush1.msra.mxu0 0.0
      %3013 = vmatprep.mubr.f32.mxu0 0.0
      %3014 = vmatmul.mubr.f32.gmra.mrb[0].mxu0 %v2884
      %v3015 = vpop.f32.mrb[0].mxu0
      %v3016 = vadd.f32 0.0, %v3015
      %v3017 = vpop.f32.mrb[0].mxu0
      %v3018 = vadd.f32 0.0, %v3017
      %3019 = vdwg.mxu0
      %3020 = vmatprep.subr.mxu0 %v2888
      %3021 = vmatpush1.msra.mxu0 %v2887
      %3022 = vmatprep.subr.mxu0 %v2892
      %3023 = vmatpush1.msra.mxu0 %v2891
      %3024 = vmatprep.subr.mxu0 %v2896
      %3025 = vmatpush1.msra.mxu0 %v2895
      %3026 = vmatprep.subr.mxu0 %v2900
      %3027 = vmatpush1.msra.mxu0 %v2899
      %3028 = vmatprep.subr.mxu0 %v2904
      %3029 = vmatpush1.msra.mxu0 %v2903
      %3030 = vmatprep.subr.mxu0 %v2908
      %3031 = vmatpush1.msra.mxu0 %v2907
      %3032 = vmatprep.subr.mxu0 %v2912
      %3033 = vmatpush1.msra.mxu0 %v2911
      %3034 = vmatprep.subr.mxu0 %v2916
      %3035 = vmatpush1.msra.mxu0 %v2915
      %3036 = vmatprep.subr.mxu0 %v2920
      %3037 = vmatpush1.msra.mxu0 %v2919
      %3038 = vmatprep.subr.mxu0 %v2924
      %3039 = vmatpush1.msra.mxu0 %v2923
      %3040 = vmatprep.subr.mxu0 %v2928
      %3041 = vmatpush1.msra.mxu0 %v2927
      %3042 = vmatprep.subr.mxu0 %v2932
      %3043 = vmatpush1.msra.mxu0 %v2931
      %3044 = vmatprep.subr.mxu0 %v2936
      %3045 = vmatpush1.msra.mxu0 %v2935
      %3046 = vmatprep.subr.mxu0 %v2940
      %3047 = vmatpush1.msra.mxu0 %v2939
      %3048 = vmatprep.subr.mxu0 %v2944
      %3049 = vmatpush1.msra.mxu0 %v2943
      %3050 = vmatprep.subr.mxu0 %v2948
      %3051 = vmatpush1.msra.mxu0 %v2947
      %3052 = vmatprep.subr.mxu0 0.0
      %3053 = vmatpush1.msra.mxu0 0.0
      %3054 = vmatprep.subr.mxu0 0.0
      %3055 = vmatpush1.msra.mxu0 0.0
      %3056 = vmatprep.subr.mxu0 0.0
      %3057 = vmatpush1.msra.mxu0 0.0
      %3058 = vmatprep.subr.mxu0 0.0
      %3059 = vmatpush1.msra.mxu0 0.0
      %3060 = vmatprep.subr.mxu0 0.0
      %3061 = vmatpush1.msra.mxu0 0.0
      %3062 = vmatprep.subr.mxu0 0.0
      %3063 = vmatpush1.msra.mxu0 0.0
      %3064 = vmatprep.subr.mxu0 0.0
      %3065 = vmatpush1.msra.mxu0 0.0
      %3066 = vmatprep.subr.mxu0 0.0
      %3067 = vmatpush1.msra.mxu0 0.0
      %3068 = vmatprep.subr.mxu0 0.0
      %3069 = vmatpush1.msra.mxu0 0.0
      %3070 = vmatprep.subr.mxu0 0.0
      %3071 = vmatpush1.msra.mxu0 0.0
      %3072 = vmatprep.subr.mxu0 0.0
      %3073 = vmatpush1.msra.mxu0 0.0
      %3074 = vmatprep.subr.mxu0 0.0
      %3075 = vmatpush1.msra.mxu0 0.0
      %3076 = vmatprep.subr.mxu0 0.0
      %3077 = vmatpush1.msra.mxu0 0.0
      %3078 = vmatprep.subr.mxu0 0.0
      %3079 = vmatpush1.msra.mxu0 0.0
      %3080 = vmatprep.subr.mxu0 0.0
      %3081 = vmatpush1.msra.mxu0 0.0
      %3082 = vmatprep.subr.mxu0 0.0
      %3083 = vmatpush1.msra.mxu0 0.0
      %3084 = vmatprep.mubr.f32.mxu0 0.0
      %3085 = vmatmul.mubr.f32.gmra.mrb[0].mxu0 %v2884
      %v3086 = vpop.f32.mrb[0].mxu0
      %v3087 = vadd.f32 0.0, %v3086
      %v3088 = vpop.f32.mrb[0].mxu0
      %v3089 = vadd.f32 0.0, %v3088
      %3090 = vdwg.mxu0
      %v3091 = vadd.f32 %v2880, %v3016
      %v3092 = vadd.f32 %v2881, %v3018
      %v3093 = vadd.f32 %v2882, %v3087
      %v3094 = vadd.f32 %v2883, %v3089
      %s3095 = sshra.s32 %s2876, 3
      %s3096 = sand.u32 %s2876, 7
      %s3097 = smul.u32 %s3095, 4
      %s3098 = smul.addr %s3097, 8
      %s3099 = scalar_lea.vmem [#allocation7], %s3098
      %v3100 = vld [vmem:[%s3099] sm:$0xff]
      %v3101 = vld [vmem:[%s3099 + $0x8] sm:$0xff]
      %v3102 = vld [vmem:[%s3099 + $0x10] sm:$0xff]
      %v3103 = vld [vmem:[%s3099 + $0x18] sm:$0xff]
      %v3104 = vld [vmem:[#allocation4] sm:$0xff]
      %v3105 = vld [vmem:[#allocation20] sm:$0xff]
      %v3106 = vld [vmem:[#allocation20 + $0x8] sm:$0xff]
      %v3107 = vld [vmem:[#allocation20 + $0x10] sm:$0xff]
      %v3108 = vld [vmem:[#allocation20 + $0x18] sm:$0xff]
      %v3109 = vld [vmem:[#allocation20 + $0x20] sm:$0xff]
      %v3110 = vld [vmem:[#allocation20 + $0x28] sm:$0xff]
      %v3111 = vld [vmem:[#allocation20 + $0x30] sm:$0xff]
      %v3112 = vld [vmem:[#allocation20 + $0x38] sm:$0xff]
      %v3113 = vld [vmem:[#allocation20 + $0x40] sm:$0xff]
      %v3114 = vld [vmem:[#allocation20 + $0x48] sm:$0xff]
      %v3115 = vld [vmem:[#allocation20 + $0x50] sm:$0xff]
      %v3116 = vld [vmem:[#allocation20 + $0x58] sm:$0xff]
      %v3117 = vld [vmem:[#allocation20 + $0x60] sm:$0xff]
      %v3118 = vld [vmem:[#allocation20 + $0x68] sm:$0xff]
      %v3119 = vld [vmem:[#allocation20 + $0x70] sm:$0xff]
      %v3120 = vld [vmem:[#allocation20 + $0x78] sm:$0xff]
      %v3121 = vld [vmem:[#allocation20 + $0x80] sm:$0xff]
      %v3122 = vld [vmem:[#allocation20 + $0x88] sm:$0xff]
      %v3123 = vld [vmem:[#allocation20 + $0x90] sm:$0xff]
      %v3124 = vld [vmem:[#allocation20 + $0x98] sm:$0xff]
      %v3125 = vld [vmem:[#allocation20 + $0xa0] sm:$0xff]
      %v3126 = vld [vmem:[#allocation20 + $0xa8] sm:$0xff]
      %v3127 = vld [vmem:[#allocation20 + $0xb0] sm:$0xff]
      %v3128 = vld [vmem:[#allocation20 + $0xb8] sm:$0xff]
      %v3129 = vld [vmem:[#allocation20 + $0xc0] sm:$0xff]
      %v3130 = vld [vmem:[#allocation20 + $0xc8] sm:$0xff]
      %v3131 = vld [vmem:[#allocation20 + $0xd0] sm:$0xff]
      %v3132 = vld [vmem:[#allocation20 + $0xd8] sm:$0xff]
      %v3133 = vld [vmem:[#allocation20 + $0xe0] sm:$0xff]
      %v3134 = vld [vmem:[#allocation20 + $0xe8] sm:$0xff]
      %v3135 = vld [vmem:[#allocation20 + $0xf0] sm:$0xff]
      %v3136 = vld [vmem:[#allocation20 + $0xf8] sm:$0xff]
      %v3137 = vld [vmem:[#allocation20 + $0x100] sm:$0xff]
      %v3138 = vld [vmem:[#allocation20 + $0x108] sm:$0xff]
      %v3139 = vld [vmem:[#allocation20 + $0x110] sm:$0xff]
      %v3140 = vld [vmem:[#allocation20 + $0x118] sm:$0xff]
      %v3141 = vld [vmem:[#allocation20 + $0x120] sm:$0xff]
      %v3142 = vld [vmem:[#allocation20 + $0x128] sm:$0xff]
      %v3143 = vld [vmem:[#allocation20 + $0x130] sm:$0xff]
      %v3144 = vld [vmem:[#allocation20 + $0x138] sm:$0xff]
      %v3145 = vld [vmem:[#allocation20 + $0x140] sm:$0xff]
      %v3146 = vld [vmem:[#allocation20 + $0x148] sm:$0xff]
      %v3147 = vld [vmem:[#allocation20 + $0x150] sm:$0xff]
      %v3148 = vld [vmem:[#allocation20 + $0x158] sm:$0xff]
      %v3149 = vld [vmem:[#allocation20 + $0x160] sm:$0xff]
      %v3150 = vld [vmem:[#allocation20 + $0x168] sm:$0xff]
      %v3151 = vld [vmem:[#allocation20 + $0x170] sm:$0xff]
      %v3152 = vld [vmem:[#allocation20 + $0x178] sm:$0xff]
      %v3153 = vld [vmem:[#allocation20 + $0x180] sm:$0xff]
      %v3154 = vld [vmem:[#allocation20 + $0x188] sm:$0xff]
      %v3155 = vld [vmem:[#allocation20 + $0x190] sm:$0xff]
      %v3156 = vld [vmem:[#allocation20 + $0x198] sm:$0xff]
      %v3157 = vld [vmem:[#allocation20 + $0x1a0] sm:$0xff]
      %v3158 = vld [vmem:[#allocation20 + $0x1a8] sm:$0xff]
      %v3159 = vld [vmem:[#allocation20 + $0x1b0] sm:$0xff]
      %v3160 = vld [vmem:[#allocation20 + $0x1b8] sm:$0xff]
      %v3161 = vld [vmem:[#allocation20 + $0x1c0] sm:$0xff]
      %v3162 = vld [vmem:[#allocation20 + $0x1c8] sm:$0xff]
      %v3163 = vld [vmem:[#allocation20 + $0x1d0] sm:$0xff]
      %v3164 = vld [vmem:[#allocation20 + $0x1d8] sm:$0xff]
      %v3165 = vld [vmem:[#allocation20 + $0x1e0] sm:$0xff]
      %v3166 = vld [vmem:[#allocation20 + $0x1e8] sm:$0xff]
      %v3167 = vld [vmem:[#allocation20 + $0x1f0] sm:$0xff]
      %v3168 = vld [vmem:[#allocation20 + $0x1f8] sm:$0xff]
      %3169 = vmatprep.subr.mxu0 %v3106
      %3170 = vmatpush1.msra.mxu0 %v3105
      %3171 = vmatprep.subr.mxu0 %v3110
      %3172 = vmatpush1.msra.mxu0 %v3109
      %3173 = vmatprep.subr.mxu0 %v3114
      %3174 = vmatpush1.msra.mxu0 %v3113
      %3175 = vmatprep.subr.mxu0 %v3118
      %3176 = vmatpush1.msra.mxu0 %v3117
      %3177 = vmatprep.subr.mxu0 %v3122
      %3178 = vmatpush1.msra.mxu0 %v3121
      %3179 = vmatprep.subr.mxu0 %v3126
      %3180 = vmatpush1.msra.mxu0 %v3125
      %3181 = vmatprep.subr.mxu0 %v3130
      %3182 = vmatpush1.msra.mxu0 %v3129
      %3183 = vmatprep.subr.mxu0 %v3134
      %3184 = vmatpush1.msra.mxu0 %v3133
      %3185 = vmatprep.subr.mxu0 %v3138
      %3186 = vmatpush1.msra.mxu0 %v3137
      %3187 = vmatprep.subr.mxu0 %v3142
      %3188 = vmatpush1.msra.mxu0 %v3141
      %3189 = vmatprep.subr.mxu0 %v3146
      %3190 = vmatpush1.msra.mxu0 %v3145
      %3191 = vmatprep.subr.mxu0 %v3150
      %3192 = vmatpush1.msra.mxu0 %v3149
      %3193 = vmatprep.subr.mxu0 %v3154
      %3194 = vmatpush1.msra.mxu0 %v3153
      %3195 = vmatprep.subr.mxu0 %v3158
      %3196 = vmatpush1.msra.mxu0 %v3157
      %3197 = vmatprep.subr.mxu0 %v3162
      %3198 = vmatpush1.msra.mxu0 %v3161
      %3199 = vmatprep.subr.mxu0 %v3166
      %3200 = vmatpush1.msra.mxu0 %v3165
      %3201 = vmatprep.subr.mxu0 0.0
      %3202 = vmatpush1.msra.mxu0 0.0
      %3203 = vmatprep.subr.mxu0 0.0
      %3204 = vmatpush1.msra.mxu0 0.0
      %3205 = vmatprep.subr.mxu0 0.0
      %3206 = vmatpush1.msra.mxu0 0.0
      %3207 = vmatprep.subr.mxu0 0.0
      %3208 = vmatpush1.msra.mxu0 0.0
      %3209 = vmatprep.subr.mxu0 0.0
      %3210 = vmatpush1.msra.mxu0 0.0
      %3211 = vmatprep.subr.mxu0 0.0
      %3212 = vmatpush1.msra.mxu0 0.0
      %3213 = vmatprep.subr.mxu0 0.0
      %3214 = vmatpush1.msra.mxu0 0.0
      %3215 = vmatprep.subr.mxu0 0.0
      %3216 = vmatpush1.msra.mxu0 0.0
      %3217 = vmatprep.subr.mxu0 0.0
      %3218 = vmatpush1.msra.mxu0 0.0
      %3219 = vmatprep.subr.mxu0 0.0
      %3220 = vmatpush1.msra.mxu0 0.0
      %3221 = vmatprep.subr.mxu0 0.0
      %3222 = vmatpush1.msra.mxu0 0.0
      %3223 = vmatprep.subr.mxu0 0.0
      %3224 = vmatpush1.msra.mxu0 0.0
      %3225 = vmatprep.subr.mxu0 0.0
      %3226 = vmatpush1.msra.mxu0 0.0
      %3227 = vmatprep.subr.mxu0 0.0
      %3228 = vmatpush1.msra.mxu0 0.0
      %3229 = vmatprep.subr.mxu0 0.0
      %3230 = vmatpush1.msra.mxu0 0.0
      %3231 = vmatprep.subr.mxu0 0.0
      %3232 = vmatpush1.msra.mxu0 0.0
      %3233 = vmatprep.mubr.f32.mxu0 0.0
      %3234 = vmatmul.mubr.f32.gmra.mrb[0].mxu0 %v3104
      %v3235 = vpop.f32.mrb[0].mxu0
      %v3236 = vadd.f32 0.0, %v3235
      %v3237 = vpop.f32.mrb[0].mxu0
      %v3238 = vadd.f32 0.0, %v3237
      %3239 = vdwg.mxu0
      %3240 = vmatprep.subr.mxu0 %v3108
      %3241 = vmatpush1.msra.mxu0 %v3107
      %3242 = vmatprep.subr.mxu0 %v3112
      %3243 = vmatpush1.msra.mxu0 %v3111
      %3244 = vmatprep.subr.mxu0 %v3116
      %3245 = vmatpush1.msra.mxu0 %v3115
      %3246 = vmatprep.subr.mxu0 %v3120
      %3247 = vmatpush1.msra.mxu0 %v3119
      %3248 = vmatprep.subr.mxu0 %v3124
      %3249 = vmatpush1.msra.mxu0 %v3123
      %3250 = vmatprep.subr.mxu0 %v3128
      %3251 = vmatpush1.msra.mxu0 %v3127
      %3252 = vmatprep.subr.mxu0 %v3132
      %3253 = vmatpush1.msra.mxu0 %v3131
      %3254 = vmatprep.subr.mxu0 %v3136
      %3255 = vmatpush1.msra.mxu0 %v3135
      %3256 = vmatprep.subr.mxu0 %v3140
      %3257 = vmatpush1.msra.mxu0 %v3139
      %3258 = vmatprep.subr.mxu0 %v3144
      %3259 = vmatpush1.msra.mxu0 %v3143
      %3260 = vmatprep.subr.mxu0 %v3148
      %3261 = vmatpush1.msra.mxu0 %v3147
      %3262 = vmatprep.subr.mxu0 %v3152
      %3263 = vmatpush1.msra.mxu0 %v3151
      %3264 = vmatprep.subr.mxu0 %v3156
      %3265 = vmatpush1.msra.mxu0 %v3155
      %3266 = vmatprep.subr.mxu0 %v3160
      %3267 = vmatpush1.msra.mxu0 %v3159
      %3268 = vmatprep.subr.mxu0 %v3164
      %3269 = vmatpush1.msra.mxu0 %v3163
      %3270 = vmatprep.subr.mxu0 %v3168
      %3271 = vmatpush1.msra.mxu0 %v3167
      %3272 = vmatprep.subr.mxu0 0.0
      %3273 = vmatpush1.msra.mxu0 0.0
      %3274 = vmatprep.subr.mxu0 0.0
      %3275 = vmatpush1.msra.mxu0 0.0
      %3276 = vmatprep.subr.mxu0 0.0
      %3277 = vmatpush1.msra.mxu0 0.0
      %3278 = vmatprep.subr.mxu0 0.0
      %3279 = vmatpush1.msra.mxu0 0.0
      %3280 = vmatprep.subr.mxu0 0.0
      %3281 = vmatpush1.msra.mxu0 0.0
      %3282 = vmatprep.subr.mxu0 0.0
      %3283 = vmatpush1.msra.mxu0 0.0
      %3284 = vmatprep.subr.mxu0 0.0
      %3285 = vmatpush1.msra.mxu0 0.0
      %3286 = vmatprep.subr.mxu0 0.0
      %3287 = vmatpush1.msra.mxu0 0.0
      %3288 = vmatprep.subr.mxu0 0.0
      %3289 = vmatpush1.msra.mxu0 0.0
      %3290 = vmatprep.subr.mxu0 0.0
      %3291 = vmatpush1.msra.mxu0 0.0
      %3292 = vmatprep.subr.mxu0 0.0
      %3293 = vmatpush1.msra.mxu0 0.0
      %3294 = vmatprep.subr.mxu0 0.0
      %3295 = vmatpush1.msra.mxu0 0.0
      %3296 = vmatprep.subr.mxu0 0.0
      %3297 = vmatpush1.msra.mxu0 0.0
      %3298 = vmatprep.subr.mxu0 0.0
      %3299 = vmatpush1.msra.mxu0 0.0
      %3300 = vmatprep.subr.mxu0 0.0
      %3301 = vmatpush1.msra.mxu0 0.0
      %3302 = vmatprep.subr.mxu0 0.0
      %3303 = vmatpush1.msra.mxu0 0.0
      %3304 = vmatprep.mubr.f32.mxu0 0.0
      %3305 = vmatmul.mubr.f32.gmra.mrb[0].mxu0 %v3104
      %v3306 = vpop.f32.mrb[0].mxu0
      %v3307 = vadd.f32 0.0, %v3306
      %v3308 = vpop.f32.mrb[0].mxu0
      %v3309 = vadd.f32 0.0, %v3308
      %3310 = vdwg.mxu0
      %v3311 = vadd.f32 %v3100, %v3236
      %v3312 = vadd.f32 %v3101, %v3238
      %v3313 = vadd.f32 %v3102, %v3307
      %v3314 = vadd.f32 %v3103, %v3309
      %v3315 = vld [vmem:[#allocation3] sm:$0xff]
      %v3316 = vxor.u32 %v3091, 2147483648
      %v3317 = vmul.f32 %v3316, 1.442695
      %v3318 = vpow.pop %v3317
      %v3319 = vadd.f32 %v3318, 1.0
      %v3320 = vrcp.pop %v3319
      %v3321 = vmul.f32 1.0, %v3320
      %v3322 = vxor.u32 %v3092, 2147483648
      %v3323 = vmul.f32 %v3322, 1.442695
      %v3324 = vpow.pop %v3323
      %v3325 = vadd.f32 %v3324, 1.0
      %v3326 = vrcp.pop %v3325
      %v3327 = vmul.f32 1.0, %v3326
      %v3328 = vtanh.pop %v3093
      %v3329 = vxor.u32 %v3094, 2147483648
      %v3330 = vmul.f32 %v3329, 1.442695
      %v3331 = vpow.pop %v3330
      %v3332 = vadd.f32 %v3331, 1.0
      %v3333 = vrcp.pop %v3332
      %v3334 = vmul.f32 1.0, %v3333
      %v3335 = vmul.f32 %v3327, %v3315
      %v3336 = vmul.f32 %v3321, %v3328
      %v3337 = vadd.f32 %v3335, %v3336
      %v3338 = vtanh.pop %v3337
      %v3339 = vmul.f32 %v3334, %v3338
      %v3340 = vld [vmem:[#allocation5] sm:$0xff]
      %v3341 = vxor.u32 %v3311, 2147483648
      %v3342 = vmul.f32 %v3341, 1.442695
      %v3343 = vpow.pop %v3342
      %v3344 = vadd.f32 %v3343, 1.0
      %v3345 = vrcp.pop %v3344
      %v3346 = vmul.f32 1.0, %v3345
      %v3347 = vxor.u32 %v3312, 2147483648
      %v3348 = vmul.f32 %v3347, 1.442695
      %v3349 = vpow.pop %v3348
      %v3350 = vadd.f32 %v3349, 1.0
      %v3351 = vrcp.pop %v3350
      %v3352 = vmul.f32 1.0, %v3351
      %v3353 = vtanh.pop %v3313
      %v3354 = vxor.u32 %v3314, 2147483648
      %v3355 = vmul.f32 %v3354, 1.442695
      %v3356 = vpow.pop %v3355
      %v3357 = vadd.f32 %v3356, 1.0
      %v3358 = vrcp.pop %v3357
      %v3359 = vmul.f32 1.0, %v3358
      %v3360 = vmul.f32 %v3352, %v3340
      %v3361 = vmul.f32 %v3346, %v3353
      %v3362 = vadd.f32 %v3360, %v3361
      %v3363 = vtanh.pop %v3362
      %v3364 = vmul.f32 %v3359, %v3363
      %vm3365 = vcmp.gt.s32.totalorder %v185, 4
      %v3366 = vstv %s2875
      %vm3367 = vcmp.gt.s32.totalorder %v185, %v3366
      %v3368 = vsel %vm3365, 1, 0
      %3369 = vset.pattern.permute.xlu0 0
      %3370 = vperm.xlu0 %3369, %v3368
      %v3371 = vpop.permute.xlu0 %3370
      %vm3372 = vcmp.eq.s32.totalorder %v3371, 1
      %v3373 = vsel %vm3372, %v3339, %v2884
      %3374 = vst [vmem:[#allocation2] sm:$0xff] %v3373
      %v3375 = vld [vmem:[#allocation3] sm:$0xff]
      %v3376 = vsel %vm3372, %v3337, %v3375
      %3377 = vst [vmem:[#allocation3] sm:$0xff] %v3376
      %v3378 = vld [vmem:[#allocation4] sm:$0xff]
      %v3379 = vsel %vm3367, 1, 0
      %3380 = vset.pattern.permute.xlu0 0
      %3381 = vperm.xlu0 %3380, %v3379
      %v3382 = vpop.permute.xlu0 %3381
      %vm3383 = vcmp.eq.s32.totalorder %v3382, 1
      %v3384 = vsel %vm3383, %v3364, %v3378
      %3385 = vst [vmem:[#allocation4] sm:$0xff] %v3384
      %v3386 = vld [vmem:[#allocation5] sm:$0xff]
      %v3387 = vsel %vm3383, %v3362, %v3386
      %3388 = vst [vmem:[#allocation5] sm:$0xff] %v3387
    $region113: #{tpu_custom_call.1} parent=1 // pred_fallthru
      _
    %p3389 = scmp.gt.s32.totalorder %s184, 5
    // Predicated region
    $region114: #{tpu_custom_call.1} parent=1 // pred_check
      %p3390 = pneg %p3389
    $region115: #{tpu_custom_call.1} parent=1 // pred_check_branch
      %3392 = sbr.rel (%p3390) target = $region117
    $region116: #{tpu_custom_call.1} parent=1 // pred_region
      %s3393 = ssub.s32 %s184, 6
      %s3394 = smul.u32 %s3393, 8
      %s3395 = smul.u32 5, 4
      %s3396 = smul.addr %s3395, 8
      %s3397 = scalar_lea.vmem [#allocation6], %s3396
      %v3398 = vld [vmem:[%s3397] sm:$0xff]
      %v3399 = vld [vmem:[%s3397 + $0x8] sm:$0xff]
      %v3400 = vld [vmem:[%s3397 + $0x10] sm:$0xff]
      %v3401 = vld [vmem:[%s3397 + $0x18] sm:$0xff]
      %v3402 = vld [vmem:[#allocation2] sm:$0xff]
      %v3403 = vld [vmem:[#allocation15] sm:$0xff]
      %v3404 = vld [vmem:[#allocation15 + $0x8] sm:$0xff]
      %v3405 = vld [vmem:[#allocation15 + $0x10] sm:$0xff]
      %v3406 = vld [vmem:[#allocation15 + $0x18] sm:$0xff]
      %v3407 = vld [vmem:[#allocation15 + $0x20] sm:$0xff]
      %v3408 = vld [vmem:[#allocation15 + $0x28] sm:$0xff]
      %v3409 = vld [vmem:[#allocation15 + $0x30] sm:$0xff]
      %v3410 = vld [vmem:[#allocation15 + $0x38] sm:$0xff]
      %v3411 = vld [vmem:[#allocation15 + $0x40] sm:$0xff]
      %v3412 = vld [vmem:[#allocation15 + $0x48] sm:$0xff]
      %v3413 = vld [vmem:[#allocation15 + $0x50] sm:$0xff]
      %v3414 = vld [vmem:[#allocation15 + $0x58] sm:$0xff]
      %v3415 = vld [vmem:[#allocation15 + $0x60] sm:$0xff]
      %v3416 = vld [vmem:[#allocation15 + $0x68] sm:$0xff]
      %v3417 = vld [vmem:[#allocation15 + $0x70] sm:$0xff]
      %v3418 = vld [vmem:[#allocation15 + $0x78] sm:$0xff]
      %v3419 = vld [vmem:[#allocation15 + $0x80] sm:$0xff]
      %v3420 = vld [vmem:[#allocation15 + $0x88] sm:$0xff]
      %v3421 = vld [vmem:[#allocation15 + $0x90] sm:$0xff]
      %v3422 = vld [vmem:[#allocation15 + $0x98] sm:$0xff]
      %v3423 = vld [vmem:[#allocation15 + $0xa0] sm:$0xff]
      %v3424 = vld [vmem:[#allocation15 + $0xa8] sm:$0xff]
      %v3425 = vld [vmem:[#allocation15 + $0xb0] sm:$0xff]
      %v3426 = vld [vmem:[#allocation15 + $0xb8] sm:$0xff]
      %v3427 = vld [vmem:[#allocation15 + $0xc0] sm:$0xff]
      %v3428 = vld [vmem:[#allocation15 + $0xc8] sm:$0xff]
      %v3429 = vld [vmem:[#allocation15 + $0xd0] sm:$0xff]
      %v3430 = vld [vmem:[#allocation15 + $0xd8] sm:$0xff]
      %v3431 = vld [vmem:[#allocation15 + $0xe0] sm:$0xff]
      %v3432 = vld [vmem:[#allocation15 + $0xe8] sm:$0xff]
      %v3433 = vld [vmem:[#allocation15 + $0xf0] sm:$0xff]
      %v3434 = vld [vmem:[#allocation15 + $0xf8] sm:$0xff]
      %v3435 = vld [vmem:[#allocation15 + $0x100] sm:$0xff]
      %v3436 = vld [vmem:[#allocation15 + $0x108] sm:$0xff]
      %v3437 = vld [vmem:[#allocation15 + $0x110] sm:$0xff]
      %v3438 = vld [vmem:[#allocation15 + $0x118] sm:$0xff]
      %v3439 = vld [vmem:[#allocation15 + $0x120] sm:$0xff]
      %v3440 = vld [vmem:[#allocation15 + $0x128] sm:$0xff]
      %v3441 = vld [vmem:[#allocation15 + $0x130] sm:$0xff]
      %v3442 = vld [vmem:[#allocation15 + $0x138] sm:$0xff]
      %v3443 = vld [vmem:[#allocation15 + $0x140] sm:$0xff]
      %v3444 = vld [vmem:[#allocation15 + $0x148] sm:$0xff]
      %v3445 = vld [vmem:[#allocation15 + $0x150] sm:$0xff]
      %v3446 = vld [vmem:[#allocation15 + $0x158] sm:$0xff]
      %v3447 = vld [vmem:[#allocation15 + $0x160] sm:$0xff]
      %v3448 = vld [vmem:[#allocation15 + $0x168] sm:$0xff]
      %v3449 = vld [vmem:[#allocation15 + $0x170] sm:$0xff]
      %v3450 = vld [vmem:[#allocation15 + $0x178] sm:$0xff]
      %v3451 = vld [vmem:[#allocation15 + $0x180] sm:$0xff]
      %v3452 = vld [vmem:[#allocation15 + $0x188] sm:$0xff]
      %v3453 = vld [vmem:[#allocation15 + $0x190] sm:$0xff]
      %v3454 = vld [vmem:[#allocation15 + $0x198] sm:$0xff]
      %v3455 = vld [vmem:[#allocation15 + $0x1a0] sm:$0xff]
      %v3456 = vld [vmem:[#allocation15 + $0x1a8] sm:$0xff]
      %v3457 = vld [vmem:[#allocation15 + $0x1b0] sm:$0xff]
      %v3458 = vld [vmem:[#allocation15 + $0x1b8] sm:$0xff]
      %v3459 = vld [vmem:[#allocation15 + $0x1c0] sm:$0xff]
      %v3460 = vld [vmem:[#allocation15 + $0x1c8] sm:$0xff]
      %v3461 = vld [vmem:[#allocation15 + $0x1d0] sm:$0xff]
      %v3462 = vld [vmem:[#allocation15 + $0x1d8] sm:$0xff]
      %v3463 = vld [vmem:[#allocation15 + $0x1e0] sm:$0xff]
      %v3464 = vld [vmem:[#allocation15 + $0x1e8] sm:$0xff]
      %v3465 = vld [vmem:[#allocation15 + $0x1f0] sm:$0xff]
      %v3466 = vld [vmem:[#allocation15 + $0x1f8] sm:$0xff]
      %3467 = vmatprep.subr.mxu0 %v3404
      %3468 = vmatpush1.msra.mxu0 %v3403
      %3469 = vmatprep.subr.mxu0 %v3408
      %3470 = vmatpush1.msra.mxu0 %v3407
      %3471 = vmatprep.subr.mxu0 %v3412
      %3472 = vmatpush1.msra.mxu0 %v3411
      %3473 = vmatprep.subr.mxu0 %v3416
      %3474 = vmatpush1.msra.mxu0 %v3415
      %3475 = vmatprep.subr.mxu0 %v3420
      %3476 = vmatpush1.msra.mxu0 %v3419
      %3477 = vmatprep.subr.mxu0 %v3424
      %3478 = vmatpush1.msra.mxu0 %v3423
      %3479 = vmatprep.subr.mxu0 %v3428
      %3480 = vmatpush1.msra.mxu0 %v3427
      %3481 = vmatprep.subr.mxu0 %v3432
      %3482 = vmatpush1.msra.mxu0 %v3431
      %3483 = vmatprep.subr.mxu0 %v3436
      %3484 = vmatpush1.msra.mxu0 %v3435
      %3485 = vmatprep.subr.mxu0 %v3440
      %3486 = vmatpush1.msra.mxu0 %v3439
      %3487 = vmatprep.subr.mxu0 %v3444
      %3488 = vmatpush1.msra.mxu0 %v3443
      %3489 = vmatprep.subr.mxu0 %v3448
      %3490 = vmatpush1.msra.mxu0 %v3447
      %3491 = vmatprep.subr.mxu0 %v3452
      %3492 = vmatpush1.msra.mxu0 %v3451
      %3493 = vmatprep.subr.mxu0 %v3456
      %3494 = vmatpush1.msra.mxu0 %v3455
      %3495 = vmatprep.subr.mxu0 %v3460
      %3496 = vmatpush1.msra.mxu0 %v3459
      %3497 = vmatprep.subr.mxu0 %v3464
      %3498 = vmatpush1.msra.mxu0 %v3463
      %3499 = vmatprep.subr.mxu0 0.0
      %3500 = vmatpush1.msra.mxu0 0.0
      %3501 = vmatprep.subr.mxu0 0.0
      %3502 = vmatpush1.msra.mxu0 0.0
      %3503 = vmatprep.subr.mxu0 0.0
      %3504 = vmatpush1.msra.mxu0 0.0
      %3505 = vmatprep.subr.mxu0 0.0
      %3506 = vmatpush1.msra.mxu0 0.0
      %3507 = vmatprep.subr.mxu0 0.0
      %3508 = vmatpush1.msra.mxu0 0.0
      %3509 = vmatprep.subr.mxu0 0.0
      %3510 = vmatpush1.msra.mxu0 0.0
      %3511 = vmatprep.subr.mxu0 0.0
      %3512 = vmatpush1.msra.mxu0 0.0
      %3513 = vmatprep.subr.mxu0 0.0
      %3514 = vmatpush1.msra.mxu0 0.0
      %3515 = vmatprep.subr.mxu0 0.0
      %3516 = vmatpush1.msra.mxu0 0.0
      %3517 = vmatprep.subr.mxu0 0.0
      %3518 = vmatpush1.msra.mxu0 0.0
      %3519 = vmatprep.subr.mxu0 0.0
      %3520 = vmatpush1.msra.mxu0 0.0
      %3521 = vmatprep.subr.mxu0 0.0
      %3522 = vmatpush1.msra.mxu0 0.0
      %3523 = vmatprep.subr.mxu0 0.0
      %3524 = vmatpush1.msra.mxu0 0.0
      %3525 = vmatprep.subr.mxu0 0.0
      %3526 = vmatpush1.msra.mxu0 0.0
      %3527 = vmatprep.subr.mxu0 0.0
      %3528 = vmatpush1.msra.mxu0 0.0
      %3529 = vmatprep.subr.mxu0 0.0
      %3530 = vmatpush1.msra.mxu0 0.0
      %3531 = vmatprep.mubr.f32.mxu0 0.0
      %3532 = vmatmul.mubr.f32.gmra.mrb[0].mxu0 %v3402
      %v3533 = vpop.f32.mrb[0].mxu0
      %v3534 = vadd.f32 0.0, %v3533
      %v3535 = vpop.f32.mrb[0].mxu0
      %v3536 = vadd.f32 0.0, %v3535
      %3537 = vdwg.mxu0
      %3538 = vmatprep.subr.mxu0 %v3406
      %3539 = vmatpush1.msra.mxu0 %v3405
      %3540 = vmatprep.subr.mxu0 %v3410
      %3541 = vmatpush1.msra.mxu0 %v3409
      %3542 = vmatprep.subr.mxu0 %v3414
      %3543 = vmatpush1.msra.mxu0 %v3413
      %3544 = vmatprep.subr.mxu0 %v3418
      %3545 = vmatpush1.msra.mxu0 %v3417
      %3546 = vmatprep.subr.mxu0 %v3422
      %3547 = vmatpush1.msra.mxu0 %v3421
      %3548 = vmatprep.subr.mxu0 %v3426
      %3549 = vmatpush1.msra.mxu0 %v3425
      %3550 = vmatprep.subr.mxu0 %v3430
      %3551 = vmatpush1.msra.mxu0 %v3429
      %3552 = vmatprep.subr.mxu0 %v3434
      %3553 = vmatpush1.msra.mxu0 %v3433
      %3554 = vmatprep.subr.mxu0 %v3438
      %3555 = vmatpush1.msra.mxu0 %v3437
      %3556 = vmatprep.subr.mxu0 %v3442
      %3557 = vmatpush1.msra.mxu0 %v3441
      %3558 = vmatprep.subr.mxu0 %v3446
      %3559 = vmatpush1.msra.mxu0 %v3445
      %3560 = vmatprep.subr.mxu0 %v3450
      %3561 = vmatpush1.msra.mxu0 %v3449
      %3562 = vmatprep.subr.mxu0 %v3454
      %3563 = vmatpush1.msra.mxu0 %v3453
      %3564 = vmatprep.subr.mxu0 %v3458
      %3565 = vmatpush1.msra.mxu0 %v3457
      %3566 = vmatprep.subr.mxu0 %v3462
      %3567 = vmatpush1.msra.mxu0 %v3461
      %3568 = vmatprep.subr.mxu0 %v3466
      %3569 = vmatpush1.msra.mxu0 %v3465
      %3570 = vmatprep.subr.mxu0 0.0
      %3571 = vmatpush1.msra.mxu0 0.0
      %3572 = vmatprep.subr.mxu0 0.0
      %3573 = vmatpush1.msra.mxu0 0.0
      %3574 = vmatprep.subr.mxu0 0.0
      %3575 = vmatpush1.msra.mxu0 0.0
      %3576 = vmatprep.subr.mxu0 0.0
      %3577 = vmatpush1.msra.mxu0 0.0
      %3578 = vmatprep.subr.mxu0 0.0
      %3579 = vmatpush1.msra.mxu0 0.0
      %3580 = vmatprep.subr.mxu0 0.0
      %3581 = vmatpush1.msra.mxu0 0.0
      %3582 = vmatprep.subr.mxu0 0.0
      %3583 = vmatpush1.msra.mxu0 0.0
      %3584 = vmatprep.subr.mxu0 0.0
      %3585 = vmatpush1.msra.mxu0 0.0
      %3586 = vmatprep.subr.mxu0 0.0
      %3587 = vmatpush1.msra.mxu0 0.0
      %3588 = vmatprep.subr.mxu0 0.0
      %3589 = vmatpush1.msra.mxu0 0.0
      %3590 = vmatprep.subr.mxu0 0.0
      %3591 = vmatpush1.msra.mxu0 0.0
      %3592 = vmatprep.subr.mxu0 0.0
      %3593 = vmatpush1.msra.mxu0 0.0
      %3594 = vmatprep.subr.mxu0 0.0
      %3595 = vmatpush1.msra.mxu0 0.0
      %3596 = vmatprep.subr.mxu0 0.0
      %3597 = vmatpush1.msra.mxu0 0.0
      %3598 = vmatprep.subr.mxu0 0.0
      %3599 = vmatpush1.msra.mxu0 0.0
      %3600 = vmatprep.subr.mxu0 0.0
      %3601 = vmatpush1.msra.mxu0 0.0
      %3602 = vmatprep.mubr.f32.mxu0 0.0
      %3603 = vmatmul.mubr.f32.gmra.mrb[0].mxu0 %v3402
      %v3604 = vpop.f32.mrb[0].mxu0
      %v3605 = vadd.f32 0.0, %v3604
      %v3606 = vpop.f32.mrb[0].mxu0
      %v3607 = vadd.f32 0.0, %v3606
      %3608 = vdwg.mxu0
      %v3609 = vadd.f32 %v3398, %v3534
      %v3610 = vadd.f32 %v3399, %v3536
      %v3611 = vadd.f32 %v3400, %v3605
      %v3612 = vadd.f32 %v3401, %v3607
      %s3613 = sshra.s32 %s3394, 3
      %s3614 = sand.u32 %s3394, 7
      %s3615 = smul.u32 %s3613, 4
      %s3616 = smul.addr %s3615, 8
      %s3617 = scalar_lea.vmem [#allocation7], %s3616
      %v3618 = vld [vmem:[%s3617] sm:$0xff]
      %v3619 = vld [vmem:[%s3617 + $0x8] sm:$0xff]
      %v3620 = vld [vmem:[%s3617 + $0x10] sm:$0xff]
      %v3621 = vld [vmem:[%s3617 + $0x18] sm:$0xff]
      %v3622 = vld [vmem:[#allocation4] sm:$0xff]
      %v3623 = vld [vmem:[#allocation20] sm:$0xff]
      %v3624 = vld [vmem:[#allocation20 + $0x8] sm:$0xff]
      %v3625 = vld [vmem:[#allocation20 + $0x10] sm:$0xff]
      %v3626 = vld [vmem:[#allocation20 + $0x18] sm:$0xff]
      %v3627 = vld [vmem:[#allocation20 + $0x20] sm:$0xff]
      %v3628 = vld [vmem:[#allocation20 + $0x28] sm:$0xff]
      %v3629 = vld [vmem:[#allocation20 + $0x30] sm:$0xff]
      %v3630 = vld [vmem:[#allocation20 + $0x38] sm:$0xff]
      %v3631 = vld [vmem:[#allocation20 + $0x40] sm:$0xff]
      %v3632 = vld [vmem:[#allocation20 + $0x48] sm:$0xff]
      %v3633 = vld [vmem:[#allocation20 + $0x50] sm:$0xff]
      %v3634 = vld [vmem:[#allocation20 + $0x58] sm:$0xff]
      %v3635 = vld [vmem:[#allocation20 + $0x60] sm:$0xff]
      %v3636 = vld [vmem:[#allocation20 + $0x68] sm:$0xff]
      %v3637 = vld [vmem:[#allocation20 + $0x70] sm:$0xff]
      %v3638 = vld [vmem:[#allocation20 + $0x78] sm:$0xff]
      %v3639 = vld [vmem:[#allocation20 + $0x80] sm:$0xff]
      %v3640 = vld [vmem:[#allocation20 + $0x88] sm:$0xff]
      %v3641 = vld [vmem:[#allocation20 + $0x90] sm:$0xff]
      %v3642 = vld [vmem:[#allocation20 + $0x98] sm:$0xff]
      %v3643 = vld [vmem:[#allocation20 + $0xa0] sm:$0xff]
      %v3644 = vld [vmem:[#allocation20 + $0xa8] sm:$0xff]
      %v3645 = vld [vmem:[#allocation20 + $0xb0] sm:$0xff]
      %v3646 = vld [vmem:[#allocation20 + $0xb8] sm:$0xff]
      %v3647 = vld [vmem:[#allocation20 + $0xc0] sm:$0xff]
      %v3648 = vld [vmem:[#allocation20 + $0xc8] sm:$0xff]
      %v3649 = vld [vmem:[#allocation20 + $0xd0] sm:$0xff]
      %v3650 = vld [vmem:[#allocation20 + $0xd8] sm:$0xff]
      %v3651 = vld [vmem:[#allocation20 + $0xe0] sm:$0xff]
      %v3652 = vld [vmem:[#allocation20 + $0xe8] sm:$0xff]
      %v3653 = vld [vmem:[#allocation20 + $0xf0] sm:$0xff]
      %v3654 = vld [vmem:[#allocation20 + $0xf8] sm:$0xff]
      %v3655 = vld [vmem:[#allocation20 + $0x100] sm:$0xff]
      %v3656 = vld [vmem:[#allocation20 + $0x108] sm:$0xff]
      %v3657 = vld [vmem:[#allocation20 + $0x110] sm:$0xff]
      %v3658 = vld [vmem:[#allocation20 + $0x118] sm:$0xff]
      %v3659 = vld [vmem:[#allocation20 + $0x120] sm:$0xff]
      %v3660 = vld [vmem:[#allocation20 + $0x128] sm:$0xff]
      %v3661 = vld [vmem:[#allocation20 + $0x130] sm:$0xff]
      %v3662 = vld [vmem:[#allocation20 + $0x138] sm:$0xff]
      %v3663 = vld [vmem:[#allocation20 + $0x140] sm:$0xff]
      %v3664 = vld [vmem:[#allocation20 + $0x148] sm:$0xff]
      %v3665 = vld [vmem:[#allocation20 + $0x150] sm:$0xff]
      %v3666 = vld [vmem:[#allocation20 + $0x158] sm:$0xff]
      %v3667 = vld [vmem:[#allocation20 + $0x160] sm:$0xff]
      %v3668 = vld [vmem:[#allocation20 + $0x168] sm:$0xff]
      %v3669 = vld [vmem:[#allocation20 + $0x170] sm:$0xff]
      %v3670 = vld [vmem:[#allocation20 + $0x178] sm:$0xff]
      %v3671 = vld [vmem:[#allocation20 + $0x180] sm:$0xff]
      %v3672 = vld [vmem:[#allocation20 + $0x188] sm:$0xff]
      %v3673 = vld [vmem:[#allocation20 + $0x190] sm:$0xff]
      %v3674 = vld [vmem:[#allocation20 + $0x198] sm:$0xff]
      %v3675 = vld [vmem:[#allocation20 + $0x1a0] sm:$0xff]
      %v3676 = vld [vmem:[#allocation20 + $0x1a8] sm:$0xff]
      %v3677 = vld [vmem:[#allocation20 + $0x1b0] sm:$0xff]
      %v3678 = vld [vmem:[#allocation20 + $0x1b8] sm:$0xff]
      %v3679 = vld [vmem:[#allocation20 + $0x1c0] sm:$0xff]
      %v3680 = vld [vmem:[#allocation20 + $0x1c8] sm:$0xff]
      %v3681 = vld [vmem:[#allocation20 + $0x1d0] sm:$0xff]
      %v3682 = vld [vmem:[#allocation20 + $0x1d8] sm:$0xff]
      %v3683 = vld [vmem:[#allocation20 + $0x1e0] sm:$0xff]
      %v3684 = vld [vmem:[#allocation20 + $0x1e8] sm:$0xff]
      %v3685 = vld [vmem:[#allocation20 + $0x1f0] sm:$0xff]
      %v3686 = vld [vmem:[#allocation20 + $0x1f8] sm:$0xff]
      %3687 = vmatprep.subr.mxu0 %v3624
      %3688 = vmatpush1.msra.mxu0 %v3623
      %3689 = vmatprep.subr.mxu0 %v3628
      %3690 = vmatpush1.msra.mxu0 %v3627
      %3691 = vmatprep.subr.mxu0 %v3632
      %3692 = vmatpush1.msra.mxu0 %v3631
      %3693 = vmatprep.subr.mxu0 %v3636
      %3694 = vmatpush1.msra.mxu0 %v3635
      %3695 = vmatprep.subr.mxu0 %v3640
      %3696 = vmatpush1.msra.mxu0 %v3639
      %3697 = vmatprep.subr.mxu0 %v3644
      %3698 = vmatpush1.msra.mxu0 %v3643
      %3699 = vmatprep.subr.mxu0 %v3648
      %3700 = vmatpush1.msra.mxu0 %v3647
      %3701 = vmatprep.subr.mxu0 %v3652
      %3702 = vmatpush1.msra.mxu0 %v3651
      %3703 = vmatprep.subr.mxu0 %v3656
      %3704 = vmatpush1.msra.mxu0 %v3655
      %3705 = vmatprep.subr.mxu0 %v3660
      %3706 = vmatpush1.msra.mxu0 %v3659
      %3707 = vmatprep.subr.mxu0 %v3664
      %3708 = vmatpush1.msra.mxu0 %v3663
      %3709 = vmatprep.subr.mxu0 %v3668
      %3710 = vmatpush1.msra.mxu0 %v3667
      %3711 = vmatprep.subr.mxu0 %v3672
      %3712 = vmatpush1.msra.mxu0 %v3671
      %3713 = vmatprep.subr.mxu0 %v3676
      %3714 = vmatpush1.msra.mxu0 %v3675
      %3715 = vmatprep.subr.mxu0 %v3680
      %3716 = vmatpush1.msra.mxu0 %v3679
      %3717 = vmatprep.subr.mxu0 %v3684
      %3718 = vmatpush1.msra.mxu0 %v3683
      %3719 = vmatprep.subr.mxu0 0.0
      %3720 = vmatpush1.msra.mxu0 0.0
      %3721 = vmatprep.subr.mxu0 0.0
      %3722 = vmatpush1.msra.mxu0 0.0
      %3723 = vmatprep.subr.mxu0 0.0
      %3724 = vmatpush1.msra.mxu0 0.0
      %3725 = vmatprep.subr.mxu0 0.0
      %3726 = vmatpush1.msra.mxu0 0.0
      %3727 = vmatprep.subr.mxu0 0.0
      %3728 = vmatpush1.msra.mxu0 0.0
      %3729 = vmatprep.subr.mxu0 0.0
      %3730 = vmatpush1.msra.mxu0 0.0
      %3731 = vmatprep.subr.mxu0 0.0
      %3732 = vmatpush1.msra.mxu0 0.0
      %3733 = vmatprep.subr.mxu0 0.0
      %3734 = vmatpush1.msra.mxu0 0.0
      %3735 = vmatprep.subr.mxu0 0.0
      %3736 = vmatpush1.msra.mxu0 0.0
      %3737 = vmatprep.subr.mxu0 0.0
      %3738 = vmatpush1.msra.mxu0 0.0
      %3739 = vmatprep.subr.mxu0 0.0
      %3740 = vmatpush1.msra.mxu0 0.0
      %3741 = vmatprep.subr.mxu0 0.0
      %3742 = vmatpush1.msra.mxu0 0.0
      %3743 = vmatprep.subr.mxu0 0.0
      %3744 = vmatpush1.msra.mxu0 0.0
      %3745 = vmatprep.subr.mxu0 0.0
      %3746 = vmatpush1.msra.mxu0 0.0
      %3747 = vmatprep.subr.mxu0 0.0
      %3748 = vmatpush1.msra.mxu0 0.0
      %3749 = vmatprep.subr.mxu0 0.0
      %3750 = vmatpush1.msra.mxu0 0.0
      %3751 = vmatprep.mubr.f32.mxu0 0.0
      %3752 = vmatmul.mubr.f32.gmra.mrb[0].mxu0 %v3622
      %v3753 = vpop.f32.mrb[0].mxu0
      %v3754 = vadd.f32 0.0, %v3753
      %v3755 = vpop.f32.mrb[0].mxu0
      %v3756 = vadd.f32 0.0, %v3755
      %3757 = vdwg.mxu0
      %3758 = vmatprep.subr.mxu0 %v3626
      %3759 = vmatpush1.msra.mxu0 %v3625
      %3760 = vmatprep.subr.mxu0 %v3630
      %3761 = vmatpush1.msra.mxu0 %v3629
      %3762 = vmatprep.subr.mxu0 %v3634
      %3763 = vmatpush1.msra.mxu0 %v3633
      %3764 = vmatprep.subr.mxu0 %v3638
      %3765 = vmatpush1.msra.mxu0 %v3637
      %3766 = vmatprep.subr.mxu0 %v3642
      %3767 = vmatpush1.msra.mxu0 %v3641
      %3768 = vmatprep.subr.mxu0 %v3646
      %3769 = vmatpush1.msra.mxu0 %v3645
      %3770 = vmatprep.subr.mxu0 %v3650
      %3771 = vmatpush1.msra.mxu0 %v3649
      %3772 = vmatprep.subr.mxu0 %v3654
      %3773 = vmatpush1.msra.mxu0 %v3653
      %3774 = vmatprep.subr.mxu0 %v3658
      %3775 = vmatpush1.msra.mxu0 %v3657
      %3776 = vmatprep.subr.mxu0 %v3662
      %3777 = vmatpush1.msra.mxu0 %v3661
      %3778 = vmatprep.subr.mxu0 %v3666
      %3779 = vmatpush1.msra.mxu0 %v3665
      %3780 = vmatprep.subr.mxu0 %v3670
      %3781 = vmatpush1.msra.mxu0 %v3669
      %3782 = vmatprep.subr.mxu0 %v3674
      %3783 = vmatpush1.msra.mxu0 %v3673
      %3784 = vmatprep.subr.mxu0 %v3678
      %3785 = vmatpush1.msra.mxu0 %v3677
      %3786 = vmatprep.subr.mxu0 %v3682
      %3787 = vmatpush1.msra.mxu0 %v3681
      %3788 = vmatprep.subr.mxu0 %v3686
      %3789 = vmatpush1.msra.mxu0 %v3685
      %3790 = vmatprep.subr.mxu0 0.0
      %3791 = vmatpush1.msra.mxu0 0.0
      %3792 = vmatprep.subr.mxu0 0.0
      %3793 = vmatpush1.msra.mxu0 0.0
      %3794 = vmatprep.subr.mxu0 0.0
      %3795 = vmatpush1.msra.mxu0 0.0
      %3796 = vmatprep.subr.mxu0 0.0
      %3797 = vmatpush1.msra.mxu0 0.0
      %3798 = vmatprep.subr.mxu0 0.0
      %3799 = vmatpush1.msra.mxu0 0.0
      %3800 = vmatprep.subr.mxu0 0.0
      %3801 = vmatpush1.msra.mxu0 0.0
      %3802 = vmatprep.subr.mxu0 0.0
      %3803 = vmatpush1.msra.mxu0 0.0
      %3804 = vmatprep.subr.mxu0 0.0
      %3805 = vmatpush1.msra.mxu0 0.0
      %3806 = vmatprep.subr.mxu0 0.0
      %3807 = vmatpush1.msra.mxu0 0.0
      %3808 = vmatprep.subr.mxu0 0.0
      %3809 = vmatpush1.msra.mxu0 0.0
      %3810 = vmatprep.subr.mxu0 0.0
      %3811 = vmatpush1.msra.mxu0 0.0
      %3812 = vmatprep.subr.mxu0 0.0
      %3813 = vmatpush1.msra.mxu0 0.0
      %3814 = vmatprep.subr.mxu0 0.0
      %3815 = vmatpush1.msra.mxu0 0.0
      %3816 = vmatprep.subr.mxu0 0.0
      %3817 = vmatpush1.msra.mxu0 0.0
      %3818 = vmatprep.subr.mxu0 0.0
      %3819 = vmatpush1.msra.mxu0 0.0
      %3820 = vmatprep.subr.mxu0 0.0
      %3821 = vmatpush1.msra.mxu0 0.0
      %3822 = vmatprep.mubr.f32.mxu0 0.0
      %3823 = vmatmul.mubr.f32.gmra.mrb[0].mxu0 %v3622
      %v3824 = vpop.f32.mrb[0].mxu0
      %v3825 = vadd.f32 0.0, %v3824
      %v3826 = vpop.f32.mrb[0].mxu0
      %v3827 = vadd.f32 0.0, %v3826
      %3828 = vdwg.mxu0
      %v3829 = vadd.f32 %v3618, %v3754
      %v3830 = vadd.f32 %v3619, %v3756
      %v3831 = vadd.f32 %v3620, %v3825
      %v3832 = vadd.f32 %v3621, %v3827
      %v3833 = vld [vmem:[#allocation3] sm:$0xff]
      %v3834 = vxor.u32 %v3609, 2147483648
      %v3835 = vmul.f32 %v3834, 1.442695
      %v3836 = vpow.pop %v3835
      %v3837 = vadd.f32 %v3836, 1.0
      %v3838 = vrcp.pop %v3837
      %v3839 = vmul.f32 1.0, %v3838
      %v3840 = vxor.u32 %v3610, 2147483648
      %v3841 = vmul.f32 %v3840, 1.442695
      %v3842 = vpow.pop %v3841
      %v3843 = vadd.f32 %v3842, 1.0
      %v3844 = vrcp.pop %v3843
      %v3845 = vmul.f32 1.0, %v3844
      %v3846 = vtanh.pop %v3611
      %v3847 = vxor.u32 %v3612, 2147483648
      %v3848 = vmul.f32 %v3847, 1.442695
      %v3849 = vpow.pop %v3848
      %v3850 = vadd.f32 %v3849, 1.0
      %v3851 = vrcp.pop %v3850
      %v3852 = vmul.f32 1.0, %v3851
      %v3853 = vmul.f32 %v3845, %v3833
      %v3854 = vmul.f32 %v3839, %v3846
      %v3855 = vadd.f32 %v3853, %v3854
      %v3856 = vtanh.pop %v3855
      %v3857 = vmul.f32 %v3852, %v3856
      %v3858 = vld [vmem:[#allocation5] sm:$0xff]
      %v3859 = vxor.u32 %v3829, 2147483648
      %v3860 = vmul.f32 %v3859, 1.442695
      %v3861 = vpow.pop %v3860
      %v3862 = vadd.f32 %v3861, 1.0
      %v3863 = vrcp.pop %v3862
      %v3864 = vmul.f32 1.0, %v3863
      %v3865 = vxor.u32 %v3830, 2147483648
      %v3866 = vmul.f32 %v3865, 1.442695
      %v3867 = vpow.pop %v3866
      %v3868 = vadd.f32 %v3867, 1.0
      %v3869 = vrcp.pop %v3868
      %v3870 = vmul.f32 1.0, %v3869
      %v3871 = vtanh.pop %v3831
      %v3872 = vxor.u32 %v3832, 2147483648
      %v3873 = vmul.f32 %v3872, 1.442695
      %v3874 = vpow.pop %v3873
      %v3875 = vadd.f32 %v3874, 1.0
      %v3876 = vrcp.pop %v3875
      %v3877 = vmul.f32 1.0, %v3876
      %v3878 = vmul.f32 %v3870, %v3858
      %v3879 = vmul.f32 %v3864, %v3871
      %v3880 = vadd.f32 %v3878, %v3879
      %v3881 = vtanh.pop %v3880
      %v3882 = vmul.f32 %v3877, %v3881
      %vm3883 = vcmp.gt.s32.totalorder %v185, 5
      %v3884 = vstv %s3393
      %vm3885 = vcmp.gt.s32.totalorder %v185, %v3884
      %v3886 = vsel %vm3883, 1, 0
      %3887 = vset.pattern.permute.xlu0 0
      %3888 = vperm.xlu0 %3887, %v3886
      %v3889 = vpop.permute.xlu0 %3888
      %vm3890 = vcmp.eq.s32.totalorder %v3889, 1
      %v3891 = vsel %vm3890, %v3857, %v3402
      %3892 = vst [vmem:[#allocation2] sm:$0xff] %v3891
      %v3893 = vld [vmem:[#allocation3] sm:$0xff]
      %v3894 = vsel %vm3890, %v3855, %v3893
      %3895 = vst [vmem:[#allocation3] sm:$0xff] %v3894
      %v3896 = vld [vmem:[#allocation4] sm:$0xff]
      %v3897 = vsel %vm3885, 1, 0
      %3898 = vset.pattern.permute.xlu0 0
      %3899 = vperm.xlu0 %3898, %v3897
      %v3900 = vpop.permute.xlu0 %3899
      %vm3901 = vcmp.eq.s32.totalorder %v3900, 1
      %v3902 = vsel %vm3901, %v3882, %v3896
      %3903 = vst [vmem:[#allocation4] sm:$0xff] %v3902
      %v3904 = vld [vmem:[#allocation5] sm:$0xff]
      %v3905 = vsel %vm3901, %v3880, %v3904
      %3906 = vst [vmem:[#allocation5] sm:$0xff] %v3905
    $region117: #{tpu_custom_call.1} parent=1 // pred_fallthru
      _
    %p3907 = scmp.gt.s32.totalorder %s184, 6
    // Predicated region
    $region118: #{tpu_custom_call.1} parent=1 // pred_check
      %p3908 = pneg %p3907
    $region119: #{tpu_custom_call.1} parent=1 // pred_check_branch
      %3910 = sbr.rel (%p3908) target = $region121
    $region120: #{tpu_custom_call.1} parent=1 // pred_region
      %s3911 = ssub.s32 %s184, 7
      %s3912 = smul.u32 %s3911, 8
      %s3913 = smul.u32 6, 4
      %s3914 = smul.addr %s3913, 8
      %s3915 = scalar_lea.vmem [#allocation6], %s3914
      %v3916 = vld [vmem:[%s3915] sm:$0xff]
      %v3917 = vld [vmem:[%s3915 + $0x8] sm:$0xff]
      %v3918 = vld [vmem:[%s3915 + $0x10] sm:$0xff]
      %v3919 = vld [vmem:[%s3915 + $0x18] sm:$0xff]
      %v3920 = vld [vmem:[#allocation2] sm:$0xff]
      %v3921 = vld [vmem:[#allocation15] sm:$0xff]
      %v3922 = vld [vmem:[#allocation15 + $0x8] sm:$0xff]
      %v3923 = vld [vmem:[#allocation15 + $0x10] sm:$0xff]
      %v3924 = vld [vmem:[#allocation15 + $0x18] sm:$0xff]
      %v3925 = vld [vmem:[#allocation15 + $0x20] sm:$0xff]
      %v3926 = vld [vmem:[#allocation15 + $0x28] sm:$0xff]
      %v3927 = vld [vmem:[#allocation15 + $0x30] sm:$0xff]
      %v3928 = vld [vmem:[#allocation15 + $0x38] sm:$0xff]
      %v3929 = vld [vmem:[#allocation15 + $0x40] sm:$0xff]
      %v3930 = vld [vmem:[#allocation15 + $0x48] sm:$0xff]
      %v3931 = vld [vmem:[#allocation15 + $0x50] sm:$0xff]
      %v3932 = vld [vmem:[#allocation15 + $0x58] sm:$0xff]
      %v3933 = vld [vmem:[#allocation15 + $0x60] sm:$0xff]
      %v3934 = vld [vmem:[#allocation15 + $0x68] sm:$0xff]
      %v3935 = vld [vmem:[#allocation15 + $0x70] sm:$0xff]
      %v3936 = vld [vmem:[#allocation15 + $0x78] sm:$0xff]
      %v3937 = vld [vmem:[#allocation15 + $0x80] sm:$0xff]
      %v3938 = vld [vmem:[#allocation15 + $0x88] sm:$0xff]
      %v3939 = vld [vmem:[#allocation15 + $0x90] sm:$0xff]
      %v3940 = vld [vmem:[#allocation15 + $0x98] sm:$0xff]
      %v3941 = vld [vmem:[#allocation15 + $0xa0] sm:$0xff]
      %v3942 = vld [vmem:[#allocation15 + $0xa8] sm:$0xff]
      %v3943 = vld [vmem:[#allocation15 + $0xb0] sm:$0xff]
      %v3944 = vld [vmem:[#allocation15 + $0xb8] sm:$0xff]
      %v3945 = vld [vmem:[#allocation15 + $0xc0] sm:$0xff]
      %v3946 = vld [vmem:[#allocation15 + $0xc8] sm:$0xff]
      %v3947 = vld [vmem:[#allocation15 + $0xd0] sm:$0xff]
      %v3948 = vld [vmem:[#allocation15 + $0xd8] sm:$0xff]
      %v3949 = vld [vmem:[#allocation15 + $0xe0] sm:$0xff]
      %v3950 = vld [vmem:[#allocation15 + $0xe8] sm:$0xff]
      %v3951 = vld [vmem:[#allocation15 + $0xf0] sm:$0xff]
      %v3952 = vld [vmem:[#allocation15 + $0xf8] sm:$0xff]
      %v3953 = vld [vmem:[#allocation15 + $0x100] sm:$0xff]
      %v3954 = vld [vmem:[#allocation15 + $0x108] sm:$0xff]
      %v3955 = vld [vmem:[#allocation15 + $0x110] sm:$0xff]
      %v3956 = vld [vmem:[#allocation15 + $0x118] sm:$0xff]
      %v3957 = vld [vmem:[#allocation15 + $0x120] sm:$0xff]
      %v3958 = vld [vmem:[#allocation15 + $0x128] sm:$0xff]
      %v3959 = vld [vmem:[#allocation15 + $0x130] sm:$0xff]
      %v3960 = vld [vmem:[#allocation15 + $0x138] sm:$0xff]
      %v3961 = vld [vmem:[#allocation15 + $0x140] sm:$0xff]
      %v3962 = vld [vmem:[#allocation15 + $0x148] sm:$0xff]
      %v3963 = vld [vmem:[#allocation15 + $0x150] sm:$0xff]
      %v3964 = vld [vmem:[#allocation15 + $0x158] sm:$0xff]
      %v3965 = vld [vmem:[#allocation15 + $0x160] sm:$0xff]
      %v3966 = vld [vmem:[#allocation15 + $0x168] sm:$0xff]
      %v3967 = vld [vmem:[#allocation15 + $0x170] sm:$0xff]
      %v3968 = vld [vmem:[#allocation15 + $0x178] sm:$0xff]
      %v3969 = vld [vmem:[#allocation15 + $0x180] sm:$0xff]
      %v3970 = vld [vmem:[#allocation15 + $0x188] sm:$0xff]
      %v3971 = vld [vmem:[#allocation15 + $0x190] sm:$0xff]
      %v3972 = vld [vmem:[#allocation15 + $0x198] sm:$0xff]
      %v3973 = vld [vmem:[#allocation15 + $0x1a0] sm:$0xff]
      %v3974 = vld [vmem:[#allocation15 + $0x1a8] sm:$0xff]
      %v3975 = vld [vmem:[#allocation15 + $0x1b0] sm:$0xff]
      %v3976 = vld [vmem:[#allocation15 + $0x1b8] sm:$0xff]
      %v3977 = vld [vmem:[#allocation15 + $0x1c0] sm:$0xff]
      %v3978 = vld [vmem:[#allocation15 + $0x1c8] sm:$0xff]
      %v3979 = vld [vmem:[#allocation15 + $0x1d0] sm:$0xff]
      %v3980 = vld [vmem:[#allocation15 + $0x1d8] sm:$0xff]
      %v3981 = vld [vmem:[#allocation15 + $0x1e0] sm:$0xff]
      %v3982 = vld [vmem:[#allocation15 + $0x1e8] sm:$0xff]
      %v3983 = vld [vmem:[#allocation15 + $0x1f0] sm:$0xff]
      %v3984 = vld [vmem:[#allocation15 + $0x1f8] sm:$0xff]
      %3985 = vmatprep.subr.mxu0 %v3922
      %3986 = vmatpush1.msra.mxu0 %v3921
      %3987 = vmatprep.subr.mxu0 %v3926
      %3988 = vmatpush1.msra.mxu0 %v3925
      %3989 = vmatprep.subr.mxu0 %v3930
      %3990 = vmatpush1.msra.mxu0 %v3929
      %3991 = vmatprep.subr.mxu0 %v3934
      %3992 = vmatpush1.msra.mxu0 %v3933
      %3993 = vmatprep.subr.mxu0 %v3938
      %3994 = vmatpush1.msra.mxu0 %v3937
      %3995 = vmatprep.subr.mxu0 %v3942
      %3996 = vmatpush1.msra.mxu0 %v3941
      %3997 = vmatprep.subr.mxu0 %v3946
      %3998 = vmatpush1.msra.mxu0 %v3945
      %3999 = vmatprep.subr.mxu0 %v3950
      %4000 = vmatpush1.msra.mxu0 %v3949
      %4001 = vmatprep.subr.mxu0 %v3954
      %4002 = vmatpush1.msra.mxu0 %v3953
      %4003 = vmatprep.subr.mxu0 %v3958
      %4004 = vmatpush1.msra.mxu0 %v3957
      %4005 = vmatprep.subr.mxu0 %v3962
      %4006 = vmatpush1.msra.mxu0 %v3961
      %4007 = vmatprep.subr.mxu0 %v3966
      %4008 = vmatpush1.msra.mxu0 %v3965
      %4009 = vmatprep.subr.mxu0 %v3970
      %4010 = vmatpush1.msra.mxu0 %v3969
      %4011 = vmatprep.subr.mxu0 %v3974
      %4012 = vmatpush1.msra.mxu0 %v3973
      %4013 = vmatprep.subr.mxu0 %v3978
      %4014 = vmatpush1.msra.mxu0 %v3977
      %4015 = vmatprep.subr.mxu0 %v3982
      %4016 = vmatpush1.msra.mxu0 %v3981
      %4017 = vmatprep.subr.mxu0 0.0
      %4018 = vmatpush1.msra.mxu0 0.0
      %4019 = vmatprep.subr.mxu0 0.0
      %4020 = vmatpush1.msra.mxu0 0.0
      %4021 = vmatprep.subr.mxu0 0.0
      %4022 = vmatpush1.msra.mxu0 0.0
      %4023 = vmatprep.subr.mxu0 0.0
      %4024 = vmatpush1.msra.mxu0 0.0
      %4025 = vmatprep.subr.mxu0 0.0
      %4026 = vmatpush1.msra.mxu0 0.0
      %4027 = vmatprep.subr.mxu0 0.0
      %4028 = vmatpush1.msra.mxu0 0.0
      %4029 = vmatprep.subr.mxu0 0.0
      %4030 = vmatpush1.msra.mxu0 0.0
      %4031 = vmatprep.subr.mxu0 0.0
      %4032 = vmatpush1.msra.mxu0 0.0
      %4033 = vmatprep.subr.mxu0 0.0
      %4034 = vmatpush1.msra.mxu0 0.0
      %4035 = vmatprep.subr.mxu0 0.0
      %4036 = vmatpush1.msra.mxu0 0.0
      %4037 = vmatprep.subr.mxu0 0.0
      %4038 = vmatpush1.msra.mxu0 0.0
      %4039 = vmatprep.subr.mxu0 0.0
      %4040 = vmatpush1.msra.mxu0 0.0
      %4041 = vmatprep.subr.mxu0 0.0
      %4042 = vmatpush1.msra.mxu0 0.0
      %4043 = vmatprep.subr.mxu0 0.0
      %4044 = vmatpush1.msra.mxu0 0.0
      %4045 = vmatprep.subr.mxu0 0.0
      %4046 = vmatpush1.msra.mxu0 0.0
      %4047 = vmatprep.subr.mxu0 0.0
      %4048 = vmatpush1.msra.mxu0 0.0
      %4049 = vmatprep.mubr.f32.mxu0 0.0
      %4050 = vmatmul.mubr.f32.gmra.mrb[0].mxu0 %v3920
      %v4051 = vpop.f32.mrb[0].mxu0
      %v4052 = vadd.f32 0.0, %v4051
      %v4053 = vpop.f32.mrb[0].mxu0
      %v4054 = vadd.f32 0.0, %v4053
      %4055 = vdwg.mxu0
      %4056 = vmatprep.subr.mxu0 %v3924
      %4057 = vmatpush1.msra.mxu0 %v3923
      %4058 = vmatprep.subr.mxu0 %v3928
      %4059 = vmatpush1.msra.mxu0 %v3927
      %4060 = vmatprep.subr.mxu0 %v3932
      %4061 = vmatpush1.msra.mxu0 %v3931
      %4062 = vmatprep.subr.mxu0 %v3936
      %4063 = vmatpush1.msra.mxu0 %v3935
      %4064 = vmatprep.subr.mxu0 %v3940
      %4065 = vmatpush1.msra.mxu0 %v3939
      %4066 = vmatprep.subr.mxu0 %v3944
      %4067 = vmatpush1.msra.mxu0 %v3943
      %4068 = vmatprep.subr.mxu0 %v3948
      %4069 = vmatpush1.msra.mxu0 %v3947
      %4070 = vmatprep.subr.mxu0 %v3952
      %4071 = vmatpush1.msra.mxu0 %v3951
      %4072 = vmatprep.subr.mxu0 %v3956
      %4073 = vmatpush1.msra.mxu0 %v3955
      %4074 = vmatprep.subr.mxu0 %v3960
      %4075 = vmatpush1.msra.mxu0 %v3959
      %4076 = vmatprep.subr.mxu0 %v3964
      %4077 = vmatpush1.msra.mxu0 %v3963
      %4078 = vmatprep.subr.mxu0 %v3968
      %4079 = vmatpush1.msra.mxu0 %v3967
      %4080 = vmatprep.subr.mxu0 %v3972
      %4081 = vmatpush1.msra.mxu0 %v3971
      %4082 = vmatprep.subr.mxu0 %v3976
      %4083 = vmatpush1.msra.mxu0 %v3975
      %4084 = vmatprep.subr.mxu0 %v3980
      %4085 = vmatpush1.msra.mxu0 %v3979
      %4086 = vmatprep.subr.mxu0 %v3984
      %4087 = vmatpush1.msra.mxu0 %v3983
      %4088 = vmatprep.subr.mxu0 0.0
      %4089 = vmatpush1.msra.mxu0 0.0
      %4090 = vmatprep.subr.mxu0 0.0
      %4091 = vmatpush1.msra.mxu0 0.0
      %4092 = vmatprep.subr.mxu0 0.0
      %4093 = vmatpush1.msra.mxu0 0.0
      %4094 = vmatprep.subr.mxu0 0.0
      %4095 = vmatpush1.msra.mxu0 0.0
      %4096 = vmatprep.subr.mxu0 0.0
      %4097 = vmatpush1.msra.mxu0 0.0
      %4098 = vmatprep.subr.mxu0 0.0
      %4099 = vmatpush1.msra.mxu0 0.0
      %4100 = vmatprep.subr.mxu0 0.0
      %4101 = vmatpush1.msra.mxu0 0.0
      %4102 = vmatprep.subr.mxu0 0.0
      %4103 = vmatpush1.msra.mxu0 0.0
      %4104 = vmatprep.subr.mxu0 0.0
      %4105 = vmatpush1.msra.mxu0 0.0
      %4106 = vmatprep.subr.mxu0 0.0
      %4107 = vmatpush1.msra.mxu0 0.0
      %4108 = vmatprep.subr.mxu0 0.0
      %4109 = vmatpush1.msra.mxu0 0.0
      %4110 = vmatprep.subr.mxu0 0.0
      %4111 = vmatpush1.msra.mxu0 0.0
      %4112 = vmatprep.subr.mxu0 0.0
      %4113 = vmatpush1.msra.mxu0 0.0
      %4114 = vmatprep.subr.mxu0 0.0
      %4115 = vmatpush1.msra.mxu0 0.0
      %4116 = vmatprep.subr.mxu0 0.0
      %4117 = vmatpush1.msra.mxu0 0.0
      %4118 = vmatprep.subr.mxu0 0.0
      %4119 = vmatpush1.msra.mxu0 0.0
      %4120 = vmatprep.mubr.f32.mxu0 0.0
      %4121 = vmatmul.mubr.f32.gmra.mrb[0].mxu0 %v3920
      %v4122 = vpop.f32.mrb[0].mxu0
      %v4123 = vadd.f32 0.0, %v4122
      %v4124 = vpop.f32.mrb[0].mxu0
      %v4125 = vadd.f32 0.0, %v4124
      %4126 = vdwg.mxu0
      %v4127 = vadd.f32 %v3916, %v4052
      %v4128 = vadd.f32 %v3917, %v4054
      %v4129 = vadd.f32 %v3918, %v4123
      %v4130 = vadd.f32 %v3919, %v4125
      %s4131 = sshra.s32 %s3912, 3
      %s4132 = sand.u32 %s3912, 7
      %s4133 = smul.u32 %s4131, 4
      %s4134 = smul.addr %s4133, 8
      %s4135 = scalar_lea.vmem [#allocation7], %s4134
      %v4136 = vld [vmem:[%s4135] sm:$0xff]
      %v4137 = vld [vmem:[%s4135 + $0x8] sm:$0xff]
      %v4138 = vld [vmem:[%s4135 + $0x10] sm:$0xff]
      %v4139 = vld [vmem:[%s4135 + $0x18] sm:$0xff]
      %v4140 = vld [vmem:[#allocation4] sm:$0xff]
      %v4141 = vld [vmem:[#allocation20] sm:$0xff]
      %v4142 = vld [vmem:[#allocation20 + $0x8] sm:$0xff]
      %v4143 = vld [vmem:[#allocation20 + $0x10] sm:$0xff]
      %v4144 = vld [vmem:[#allocation20 + $0x18] sm:$0xff]
      %v4145 = vld [vmem:[#allocation20 + $0x20] sm:$0xff]
      %v4146 = vld [vmem:[#allocation20 + $0x28] sm:$0xff]
      %v4147 = vld [vmem:[#allocation20 + $0x30] sm:$0xff]
      %v4148 = vld [vmem:[#allocation20 + $0x38] sm:$0xff]
      %v4149 = vld [vmem:[#allocation20 + $0x40] sm:$0xff]
      %v4150 = vld [vmem:[#allocation20 + $0x48] sm:$0xff]
      %v4151 = vld [vmem:[#allocation20 + $0x50] sm:$0xff]
      %v4152 = vld [vmem:[#allocation20 + $0x58] sm:$0xff]
      %v4153 = vld [vmem:[#allocation20 + $0x60] sm:$0xff]
      %v4154 = vld [vmem:[#allocation20 + $0x68] sm:$0xff]
      %v4155 = vld [vmem:[#allocation20 + $0x70] sm:$0xff]
      %v4156 = vld [vmem:[#allocation20 + $0x78] sm:$0xff]
      %v4157 = vld [vmem:[#allocation20 + $0x80] sm:$0xff]
      %v4158 = vld [vmem:[#allocation20 + $0x88] sm:$0xff]
      %v4159 = vld [vmem:[#allocation20 + $0x90] sm:$0xff]
      %v4160 = vld [vmem:[#allocation20 + $0x98] sm:$0xff]
      %v4161 = vld [vmem:[#allocation20 + $0xa0] sm:$0xff]
      %v4162 = vld [vmem:[#allocation20 + $0xa8] sm:$0xff]
      %v4163 = vld [vmem:[#allocation20 + $0xb0] sm:$0xff]
      %v4164 = vld [vmem:[#allocation20 + $0xb8] sm:$0xff]
      %v4165 = vld [vmem:[#allocation20 + $0xc0] sm:$0xff]
      %v4166 = vld [vmem:[#allocation20 + $0xc8] sm:$0xff]
      %v4167 = vld [vmem:[#allocation20 + $0xd0] sm:$0xff]
      %v4168 = vld [vmem:[#allocation20 + $0xd8] sm:$0xff]
      %v4169 = vld [vmem:[#allocation20 + $0xe0] sm:$0xff]
      %v4170 = vld [vmem:[#allocation20 + $0xe8] sm:$0xff]
      %v4171 = vld [vmem:[#allocation20 + $0xf0] sm:$0xff]
      %v4172 = vld [vmem:[#allocation20 + $0xf8] sm:$0xff]
      %v4173 = vld [vmem:[#allocation20 + $0x100] sm:$0xff]
      %v4174 = vld [vmem:[#allocation20 + $0x108] sm:$0xff]
      %v4175 = vld [vmem:[#allocation20 + $0x110] sm:$0xff]
      %v4176 = vld [vmem:[#allocation20 + $0x118] sm:$0xff]
      %v4177 = vld [vmem:[#allocation20 + $0x120] sm:$0xff]
      %v4178 = vld [vmem:[#allocation20 + $0x128] sm:$0xff]
      %v4179 = vld [vmem:[#allocation20 + $0x130] sm:$0xff]
      %v4180 = vld [vmem:[#allocation20 + $0x138] sm:$0xff]
      %v4181 = vld [vmem:[#allocation20 + $0x140] sm:$0xff]
      %v4182 = vld [vmem:[#allocation20 + $0x148] sm:$0xff]
      %v4183 = vld [vmem:[#allocation20 + $0x150] sm:$0xff]
      %v4184 = vld [vmem:[#allocation20 + $0x158] sm:$0xff]
      %v4185 = vld [vmem:[#allocation20 + $0x160] sm:$0xff]
      %v4186 = vld [vmem:[#allocation20 + $0x168] sm:$0xff]
      %v4187 = vld [vmem:[#allocation20 + $0x170] sm:$0xff]
      %v4188 = vld [vmem:[#allocation20 + $0x178] sm:$0xff]
      %v4189 = vld [vmem:[#allocation20 + $0x180] sm:$0xff]
      %v4190 = vld [vmem:[#allocation20 + $0x188] sm:$0xff]
      %v4191 = vld [vmem:[#allocation20 + $0x190] sm:$0xff]
      %v4192 = vld [vmem:[#allocation20 + $0x198] sm:$0xff]
      %v4193 = vld [vmem:[#allocation20 + $0x1a0] sm:$0xff]
      %v4194 = vld [vmem:[#allocation20 + $0x1a8] sm:$0xff]
      %v4195 = vld [vmem:[#allocation20 + $0x1b0] sm:$0xff]
      %v4196 = vld [vmem:[#allocation20 + $0x1b8] sm:$0xff]
      %v4197 = vld [vmem:[#allocation20 + $0x1c0] sm:$0xff]
      %v4198 = vld [vmem:[#allocation20 + $0x1c8] sm:$0xff]
      %v4199 = vld [vmem:[#allocation20 + $0x1d0] sm:$0xff]
      %v4200 = vld [vmem:[#allocation20 + $0x1d8] sm:$0xff]
      %v4201 = vld [vmem:[#allocation20 + $0x1e0] sm:$0xff]
      %v4202 = vld [vmem:[#allocation20 + $0x1e8] sm:$0xff]
      %v4203 = vld [vmem:[#allocation20 + $0x1f0] sm:$0xff]
      %v4204 = vld [vmem:[#allocation20 + $0x1f8] sm:$0xff]
      %4205 = vmatprep.subr.mxu0 %v4142
      %4206 = vmatpush1.msra.mxu0 %v4141
      %4207 = vmatprep.subr.mxu0 %v4146
      %4208 = vmatpush1.msra.mxu0 %v4145
      %4209 = vmatprep.subr.mxu0 %v4150
      %4210 = vmatpush1.msra.mxu0 %v4149
      %4211 = vmatprep.subr.mxu0 %v4154
      %4212 = vmatpush1.msra.mxu0 %v4153
      %4213 = vmatprep.subr.mxu0 %v4158
      %4214 = vmatpush1.msra.mxu0 %v4157
      %4215 = vmatprep.subr.mxu0 %v4162
      %4216 = vmatpush1.msra.mxu0 %v4161
      %4217 = vmatprep.subr.mxu0 %v4166
      %4218 = vmatpush1.msra.mxu0 %v4165
      %4219 = vmatprep.subr.mxu0 %v4170
      %4220 = vmatpush1.msra.mxu0 %v4169
      %4221 = vmatprep.subr.mxu0 %v4174
      %4222 = vmatpush1.msra.mxu0 %v4173
      %4223 = vmatprep.subr.mxu0 %v4178
      %4224 = vmatpush1.msra.mxu0 %v4177
      %4225 = vmatprep.subr.mxu0 %v4182
      %4226 = vmatpush1.msra.mxu0 %v4181
      %4227 = vmatprep.subr.mxu0 %v4186
      %4228 = vmatpush1.msra.mxu0 %v4185
      %4229 = vmatprep.subr.mxu0 %v4190
      %4230 = vmatpush1.msra.mxu0 %v4189
      %4231 = vmatprep.subr.mxu0 %v4194
      %4232 = vmatpush1.msra.mxu0 %v4193
      %4233 = vmatprep.subr.mxu0 %v4198
      %4234 = vmatpush1.msra.mxu0 %v4197
      %4235 = vmatprep.subr.mxu0 %v4202
      %4236 = vmatpush1.msra.mxu0 %v4201
      %4237 = vmatprep.subr.mxu0 0.0
      %4238 = vmatpush1.msra.mxu0 0.0
      %4239 = vmatprep.subr.mxu0 0.0
      %4240 = vmatpush1.msra.mxu0 0.0
      %4241 = vmatprep.subr.mxu0 0.0
      %4242 = vmatpush1.msra.mxu0 0.0
      %4243 = vmatprep.subr.mxu0 0.0
      %4244 = vmatpush1.msra.mxu0 0.0
      %4245 = vmatprep.subr.mxu0 0.0
      %4246 = vmatpush1.msra.mxu0 0.0
      %4247 = vmatprep.subr.mxu0 0.0
      %4248 = vmatpush1.msra.mxu0 0.0
      %4249 = vmatprep.subr.mxu0 0.0
      %4250 = vmatpush1.msra.mxu0 0.0
      %4251 = vmatprep.subr.mxu0 0.0
      %4252 = vmatpush1.msra.mxu0 0.0
      %4253 = vmatprep.subr.mxu0 0.0
      %4254 = vmatpush1.msra.mxu0 0.0
      %4255 = vmatprep.subr.mxu0 0.0
      %4256 = vmatpush1.msra.mxu0 0.0
      %4257 = vmatprep.subr.mxu0 0.0
      %4258 = vmatpush1.msra.mxu0 0.0
      %4259 = vmatprep.subr.mxu0 0.0
      %4260 = vmatpush1.msra.mxu0 0.0
      %4261 = vmatprep.subr.mxu0 0.0
      %4262 = vmatpush1.msra.mxu0 0.0
      %4263 = vmatprep.subr.mxu0 0.0
      %4264 = vmatpush1.msra.mxu0 0.0
      %4265 = vmatprep.subr.mxu0 0.0
      %4266 = vmatpush1.msra.mxu0 0.0
      %4267 = vmatprep.subr.mxu0 0.0
      %4268 = vmatpush1.msra.mxu0 0.0
      %4269 = vmatprep.mubr.f32.mxu0 0.0
      %4270 = vmatmul.mubr.f32.gmra.mrb[0].mxu0 %v4140
      %v4271 = vpop.f32.mrb[0].mxu0
      %v4272 = vadd.f32 0.0, %v4271
      %v4273 = vpop.f32.mrb[0].mxu0
      %v4274 = vadd.f32 0.0, %v4273
      %4275 = vdwg.mxu0
      %4276 = vmatprep.subr.mxu0 %v4144
      %4277 = vmatpush1.msra.mxu0 %v4143
      %4278 = vmatprep.subr.mxu0 %v4148
      %4279 = vmatpush1.msra.mxu0 %v4147
      %4280 = vmatprep.subr.mxu0 %v4152
      %4281 = vmatpush1.msra.mxu0 %v4151
      %4282 = vmatprep.subr.mxu0 %v4156
      %4283 = vmatpush1.msra.mxu0 %v4155
      %4284 = vmatprep.subr.mxu0 %v4160
      %4285 = vmatpush1.msra.mxu0 %v4159
      %4286 = vmatprep.subr.mxu0 %v4164
      %4287 = vmatpush1.msra.mxu0 %v4163
      %4288 = vmatprep.subr.mxu0 %v4168
      %4289 = vmatpush1.msra.mxu0 %v4167
      %4290 = vmatprep.subr.mxu0 %v4172
      %4291 = vmatpush1.msra.mxu0 %v4171
      %4292 = vmatprep.subr.mxu0 %v4176
      %4293 = vmatpush1.msra.mxu0 %v4175
      %4294 = vmatprep.subr.mxu0 %v4180
      %4295 = vmatpush1.msra.mxu0 %v4179
      %4296 = vmatprep.subr.mxu0 %v4184
      %4297 = vmatpush1.msra.mxu0 %v4183
      %4298 = vmatprep.subr.mxu0 %v4188
      %4299 = vmatpush1.msra.mxu0 %v4187
      %4300 = vmatprep.subr.mxu0 %v4192
      %4301 = vmatpush1.msra.mxu0 %v4191
      %4302 = vmatprep.subr.mxu0 %v4196
      %4303 = vmatpush1.msra.mxu0 %v4195
      %4304 = vmatprep.subr.mxu0 %v4200
      %4305 = vmatpush1.msra.mxu0 %v4199
      %4306 = vmatprep.subr.mxu0 %v4204
      %4307 = vmatpush1.msra.mxu0 %v4203
      %4308 = vmatprep.subr.mxu0 0.0
      %4309 = vmatpush1.msra.mxu0 0.0
      %4310 = vmatprep.subr.mxu0 0.0
      %4311 = vmatpush1.msra.mxu0 0.0
      %4312 = vmatprep.subr.mxu0 0.0
      %4313 = vmatpush1.msra.mxu0 0.0
      %4314 = vmatprep.subr.mxu0 0.0
      %4315 = vmatpush1.msra.mxu0 0.0
      %4316 = vmatprep.subr.mxu0 0.0
      %4317 = vmatpush1.msra.mxu0 0.0
      %4318 = vmatprep.subr.mxu0 0.0
      %4319 = vmatpush1.msra.mxu0 0.0
      %4320 = vmatprep.subr.mxu0 0.0
      %4321 = vmatpush1.msra.mxu0 0.0
      %4322 = vmatprep.subr.mxu0 0.0
      %4323 = vmatpush1.msra.mxu0 0.0
      %4324 = vmatprep.subr.mxu0 0.0
      %4325 = vmatpush1.msra.mxu0 0.0
      %4326 = vmatprep.subr.mxu0 0.0
      %4327 = vmatpush1.msra.mxu0 0.0
      %4328 = vmatprep.subr.mxu0 0.0
      %4329 = vmatpush1.msra.mxu0 0.0
      %4330 = vmatprep.subr.mxu0 0.0
      %4331 = vmatpush1.msra.mxu0 0.0
      %4332 = vmatprep.subr.mxu0 0.0
      %4333 = vmatpush1.msra.mxu0 0.0
      %4334 = vmatprep.subr.mxu0 0.0
      %4335 = vmatpush1.msra.mxu0 0.0
      %4336 = vmatprep.subr.mxu0 0.0
      %4337 = vmatpush1.msra.mxu0 0.0
      %4338 = vmatprep.subr.mxu0 0.0
      %4339 = vmatpush1.msra.mxu0 0.0
      %4340 = vmatprep.mubr.f32.mxu0 0.0
      %4341 = vmatmul.mubr.f32.gmra.mrb[0].mxu0 %v4140
      %v4342 = vpop.f32.mrb[0].mxu0
      %v4343 = vadd.f32 0.0, %v4342
      %v4344 = vpop.f32.mrb[0].mxu0
      %v4345 = vadd.f32 0.0, %v4344
      %4346 = vdwg.mxu0
      %v4347 = vadd.f32 %v4136, %v4272
      %v4348 = vadd.f32 %v4137, %v4274
      %v4349 = vadd.f32 %v4138, %v4343
      %v4350 = vadd.f32 %v4139, %v4345
      %v4351 = vld [vmem:[#allocation3] sm:$0xff]
      %v4352 = vxor.u32 %v4127, 2147483648
      %v4353 = vmul.f32 %v4352, 1.442695
      %v4354 = vpow.pop %v4353
      %v4355 = vadd.f32 %v4354, 1.0
      %v4356 = vrcp.pop %v4355
      %v4357 = vmul.f32 1.0, %v4356
      %v4358 = vxor.u32 %v4128, 2147483648
      %v4359 = vmul.f32 %v4358, 1.442695
      %v4360 = vpow.pop %v4359
      %v4361 = vadd.f32 %v4360, 1.0
      %v4362 = vrcp.pop %v4361
      %v4363 = vmul.f32 1.0, %v4362
      %v4364 = vtanh.pop %v4129
      %v4365 = vxor.u32 %v4130, 2147483648
      %v4366 = vmul.f32 %v4365, 1.442695
      %v4367 = vpow.pop %v4366
      %v4368 = vadd.f32 %v4367, 1.0
      %v4369 = vrcp.pop %v4368
      %v4370 = vmul.f32 1.0, %v4369
      %v4371 = vmul.f32 %v4363, %v4351
      %v4372 = vmul.f32 %v4357, %v4364
      %v4373 = vadd.f32 %v4371, %v4372
      %v4374 = vtanh.pop %v4373
      %v4375 = vmul.f32 %v4370, %v4374
      %v4376 = vld [vmem:[#allocation5] sm:$0xff]
      %v4377 = vxor.u32 %v4347, 2147483648
      %v4378 = vmul.f32 %v4377, 1.442695
      %v4379 = vpow.pop %v4378
      %v4380 = vadd.f32 %v4379, 1.0
      %v4381 = vrcp.pop %v4380
      %v4382 = vmul.f32 1.0, %v4381
      %v4383 = vxor.u32 %v4348, 2147483648
      %v4384 = vmul.f32 %v4383, 1.442695
      %v4385 = vpow.pop %v4384
      %v4386 = vadd.f32 %v4385, 1.0
      %v4387 = vrcp.pop %v4386
      %v4388 = vmul.f32 1.0, %v4387
      %v4389 = vtanh.pop %v4349
      %v4390 = vxor.u32 %v4350, 2147483648
      %v4391 = vmul.f32 %v4390, 1.442695
      %v4392 = vpow.pop %v4391
      %v4393 = vadd.f32 %v4392, 1.0
      %v4394 = vrcp.pop %v4393
      %v4395 = vmul.f32 1.0, %v4394
      %v4396 = vmul.f32 %v4388, %v4376
      %v4397 = vmul.f32 %v4382, %v4389
      %v4398 = vadd.f32 %v4396, %v4397
      %v4399 = vtanh.pop %v4398
      %v4400 = vmul.f32 %v4395, %v4399
      %vm4401 = vcmp.gt.s32.totalorder %v185, 6
      %v4402 = vstv %s3911
      %vm4403 = vcmp.gt.s32.totalorder %v185, %v4402
      %v4404 = vsel %vm4401, 1, 0
      %4405 = vset.pattern.permute.xlu0 0
      %4406 = vperm.xlu0 %4405, %v4404
      %v4407 = vpop.permute.xlu0 %4406
      %vm4408 = vcmp.eq.s32.totalorder %v4407, 1
      %v4409 = vsel %vm4408, %v4375, %v3920
      %4410 = vst [vmem:[#allocation2] sm:$0xff] %v4409
      %v4411 = vld [vmem:[#allocation3] sm:$0xff]
      %v4412 = vsel %vm4408, %v4373, %v4411
      %4413 = vst [vmem:[#allocation3] sm:$0xff] %v4412
      %v4414 = vld [vmem:[#allocation4] sm:$0xff]
      %v4415 = vsel %vm4403, 1, 0
      %4416 = vset.pattern.permute.xlu0 0
      %4417 = vperm.xlu0 %4416, %v4415
      %v4418 = vpop.permute.xlu0 %4417
      %vm4419 = vcmp.eq.s32.totalorder %v4418, 1
      %v4420 = vsel %vm4419, %v4400, %v4414
      %4421 = vst [vmem:[#allocation4] sm:$0xff] %v4420
      %v4422 = vld [vmem:[#allocation5] sm:$0xff]
      %v4423 = vsel %vm4419, %v4398, %v4422
      %4424 = vst [vmem:[#allocation5] sm:$0xff] %v4423
    $region121: #{tpu_custom_call.1} parent=1 // pred_fallthru
      _
    %p4425 = scmp.gt.s32.totalorder %s184, 7
    // Predicated region
    $region122: #{tpu_custom_call.1} parent=1 // pred_check
      %p4426 = pneg %p4425
    $region123: #{tpu_custom_call.1} parent=1 // pred_check_branch
      %4428 = sbr.rel (%p4426) target = $region125
    $region124: #{tpu_custom_call.1} parent=1 // pred_region
      %s4429 = ssub.s32 %s184, 8
      %s4430 = smul.u32 %s4429, 8
      %s4431 = smul.u32 7, 4
      %s4432 = smul.addr %s4431, 8
      %s4433 = scalar_lea.vmem [#allocation6], %s4432
      %v4434 = vld [vmem:[%s4433] sm:$0xff]
      %v4435 = vld [vmem:[%s4433 + $0x8] sm:$0xff]
      %v4436 = vld [vmem:[%s4433 + $0x10] sm:$0xff]
      %v4437 = vld [vmem:[%s4433 + $0x18] sm:$0xff]
      %v4438 = vld [vmem:[#allocation2] sm:$0xff]
      %v4439 = vld [vmem:[#allocation15] sm:$0xff]
      %v4440 = vld [vmem:[#allocation15 + $0x8] sm:$0xff]
      %v4441 = vld [vmem:[#allocation15 + $0x10] sm:$0xff]
      %v4442 = vld [vmem:[#allocation15 + $0x18] sm:$0xff]
      %v4443 = vld [vmem:[#allocation15 + $0x20] sm:$0xff]
      %v4444 = vld [vmem:[#allocation15 + $0x28] sm:$0xff]
      %v4445 = vld [vmem:[#allocation15 + $0x30] sm:$0xff]
      %v4446 = vld [vmem:[#allocation15 + $0x38] sm:$0xff]
      %v4447 = vld [vmem:[#allocation15 + $0x40] sm:$0xff]
      %v4448 = vld [vmem:[#allocation15 + $0x48] sm:$0xff]
      %v4449 = vld [vmem:[#allocation15 + $0x50] sm:$0xff]
      %v4450 = vld [vmem:[#allocation15 + $0x58] sm:$0xff]
      %v4451 = vld [vmem:[#allocation15 + $0x60] sm:$0xff]
      %v4452 = vld [vmem:[#allocation15 + $0x68] sm:$0xff]
      %v4453 = vld [vmem:[#allocation15 + $0x70] sm:$0xff]
      %v4454 = vld [vmem:[#allocation15 + $0x78] sm:$0xff]
      %v4455 = vld [vmem:[#allocation15 + $0x80] sm:$0xff]
      %v4456 = vld [vmem:[#allocation15 + $0x88] sm:$0xff]
      %v4457 = vld [vmem:[#allocation15 + $0x90] sm:$0xff]
      %v4458 = vld [vmem:[#allocation15 + $0x98] sm:$0xff]
      %v4459 = vld [vmem:[#allocation15 + $0xa0] sm:$0xff]
      %v4460 = vld [vmem:[#allocation15 + $0xa8] sm:$0xff]
      %v4461 = vld [vmem:[#allocation15 + $0xb0] sm:$0xff]
      %v4462 = vld [vmem:[#allocation15 + $0xb8] sm:$0xff]
      %v4463 = vld [vmem:[#allocation15 + $0xc0] sm:$0xff]
      %v4464 = vld [vmem:[#allocation15 + $0xc8] sm:$0xff]
      %v4465 = vld [vmem:[#allocation15 + $0xd0] sm:$0xff]
      %v4466 = vld [vmem:[#allocation15 + $0xd8] sm:$0xff]
      %v4467 = vld [vmem:[#allocation15 + $0xe0] sm:$0xff]
      %v4468 = vld [vmem:[#allocation15 + $0xe8] sm:$0xff]
      %v4469 = vld [vmem:[#allocation15 + $0xf0] sm:$0xff]
      %v4470 = vld [vmem:[#allocation15 + $0xf8] sm:$0xff]
      %v4471 = vld [vmem:[#allocation15 + $0x100] sm:$0xff]
      %v4472 = vld [vmem:[#allocation15 + $0x108] sm:$0xff]
      %v4473 = vld [vmem:[#allocation15 + $0x110] sm:$0xff]
      %v4474 = vld [vmem:[#allocation15 + $0x118] sm:$0xff]
      %v4475 = vld [vmem:[#allocation15 + $0x120] sm:$0xff]
      %v4476 = vld [vmem:[#allocation15 + $0x128] sm:$0xff]
      %v4477 = vld [vmem:[#allocation15 + $0x130] sm:$0xff]
      %v4478 = vld [vmem:[#allocation15 + $0x138] sm:$0xff]
      %v4479 = vld [vmem:[#allocation15 + $0x140] sm:$0xff]
      %v4480 = vld [vmem:[#allocation15 + $0x148] sm:$0xff]
      %v4481 = vld [vmem:[#allocation15 + $0x150] sm:$0xff]
      %v4482 = vld [vmem:[#allocation15 + $0x158] sm:$0xff]
      %v4483 = vld [vmem:[#allocation15 + $0x160] sm:$0xff]
      %v4484 = vld [vmem:[#allocation15 + $0x168] sm:$0xff]
      %v4485 = vld [vmem:[#allocation15 + $0x170] sm:$0xff]
      %v4486 = vld [vmem:[#allocation15 + $0x178] sm:$0xff]
      %v4487 = vld [vmem:[#allocation15 + $0x180] sm:$0xff]
      %v4488 = vld [vmem:[#allocation15 + $0x188] sm:$0xff]
      %v4489 = vld [vmem:[#allocation15 + $0x190] sm:$0xff]
      %v4490 = vld [vmem:[#allocation15 + $0x198] sm:$0xff]
      %v4491 = vld [vmem:[#allocation15 + $0x1a0] sm:$0xff]
      %v4492 = vld [vmem:[#allocation15 + $0x1a8] sm:$0xff]
      %v4493 = vld [vmem:[#allocation15 + $0x1b0] sm:$0xff]
      %v4494 = vld [vmem:[#allocation15 + $0x1b8] sm:$0xff]
      %v4495 = vld [vmem:[#allocation15 + $0x1c0] sm:$0xff]
      %v4496 = vld [vmem:[#allocation15 + $0x1c8] sm:$0xff]
      %v4497 = vld [vmem:[#allocation15 + $0x1d0] sm:$0xff]
      %v4498 = vld [vmem:[#allocation15 + $0x1d8] sm:$0xff]
      %v4499 = vld [vmem:[#allocation15 + $0x1e0] sm:$0xff]
      %v4500 = vld [vmem:[#allocation15 + $0x1e8] sm:$0xff]
      %v4501 = vld [vmem:[#allocation15 + $0x1f0] sm:$0xff]
      %v4502 = vld [vmem:[#allocation15 + $0x1f8] sm:$0xff]
      %4503 = vmatprep.subr.mxu0 %v4440
      %4504 = vmatpush1.msra.mxu0 %v4439
      %4505 = vmatprep.subr.mxu0 %v4444
      %4506 = vmatpush1.msra.mxu0 %v4443
      %4507 = vmatprep.subr.mxu0 %v4448
      %4508 = vmatpush1.msra.mxu0 %v4447
      %4509 = vmatprep.subr.mxu0 %v4452
      %4510 = vmatpush1.msra.mxu0 %v4451
      %4511 = vmatprep.subr.mxu0 %v4456
      %4512 = vmatpush1.msra.mxu0 %v4455
      %4513 = vmatprep.subr.mxu0 %v4460
      %4514 = vmatpush1.msra.mxu0 %v4459
      %4515 = vmatprep.subr.mxu0 %v4464
      %4516 = vmatpush1.msra.mxu0 %v4463
      %4517 = vmatprep.subr.mxu0 %v4468
      %4518 = vmatpush1.msra.mxu0 %v4467
      %4519 = vmatprep.subr.mxu0 %v4472
      %4520 = vmatpush1.msra.mxu0 %v4471
      %4521 = vmatprep.subr.mxu0 %v4476
      %4522 = vmatpush1.msra.mxu0 %v4475
      %4523 = vmatprep.subr.mxu0 %v4480
      %4524 = vmatpush1.msra.mxu0 %v4479
      %4525 = vmatprep.subr.mxu0 %v4484
      %4526 = vmatpush1.msra.mxu0 %v4483
      %4527 = vmatprep.subr.mxu0 %v4488
      %4528 = vmatpush1.msra.mxu0 %v4487
      %4529 = vmatprep.subr.mxu0 %v4492
      %4530 = vmatpush1.msra.mxu0 %v4491
      %4531 = vmatprep.subr.mxu0 %v4496
      %4532 = vmatpush1.msra.mxu0 %v4495
      %4533 = vmatprep.subr.mxu0 %v4500
      %4534 = vmatpush1.msra.mxu0 %v4499
      %4535 = vmatprep.subr.mxu0 0.0
      %4536 = vmatpush1.msra.mxu0 0.0
      %4537 = vmatprep.subr.mxu0 0.0
      %4538 = vmatpush1.msra.mxu0 0.0
      %4539 = vmatprep.subr.mxu0 0.0
      %4540 = vmatpush1.msra.mxu0 0.0
      %4541 = vmatprep.subr.mxu0 0.0
      %4542 = vmatpush1.msra.mxu0 0.0
      %4543 = vmatprep.subr.mxu0 0.0
      %4544 = vmatpush1.msra.mxu0 0.0
      %4545 = vmatprep.subr.mxu0 0.0
      %4546 = vmatpush1.msra.mxu0 0.0
      %4547 = vmatprep.subr.mxu0 0.0
      %4548 = vmatpush1.msra.mxu0 0.0
      %4549 = vmatprep.subr.mxu0 0.0
      %4550 = vmatpush1.msra.mxu0 0.0
      %4551 = vmatprep.subr.mxu0 0.0
      %4552 = vmatpush1.msra.mxu0 0.0
      %4553 = vmatprep.subr.mxu0 0.0
      %4554 = vmatpush1.msra.mxu0 0.0
      %4555 = vmatprep.subr.mxu0 0.0
      %4556 = vmatpush1.msra.mxu0 0.0
      %4557 = vmatprep.subr.mxu0 0.0
      %4558 = vmatpush1.msra.mxu0 0.0
      %4559 = vmatprep.subr.mxu0 0.0
      %4560 = vmatpush1.msra.mxu0 0.0
      %4561 = vmatprep.subr.mxu0 0.0
      %4562 = vmatpush1.msra.mxu0 0.0
      %4563 = vmatprep.subr.mxu0 0.0
      %4564 = vmatpush1.msra.mxu0 0.0
      %4565 = vmatprep.subr.mxu0 0.0
      %4566 = vmatpush1.msra.mxu0 0.0
      %4567 = vmatprep.mubr.f32.mxu0 0.0
      %4568 = vmatmul.mubr.f32.gmra.mrb[0].mxu0 %v4438
      %v4569 = vpop.f32.mrb[0].mxu0
      %v4570 = vadd.f32 0.0, %v4569
      %v4571 = vpop.f32.mrb[0].mxu0
      %v4572 = vadd.f32 0.0, %v4571
      %4573 = vdwg.mxu0
      %4574 = vmatprep.subr.mxu0 %v4442
      %4575 = vmatpush1.msra.mxu0 %v4441
      %4576 = vmatprep.subr.mxu0 %v4446
      %4577 = vmatpush1.msra.mxu0 %v4445
      %4578 = vmatprep.subr.mxu0 %v4450
      %4579 = vmatpush1.msra.mxu0 %v4449
      %4580 = vmatprep.subr.mxu0 %v4454
      %4581 = vmatpush1.msra.mxu0 %v4453
      %4582 = vmatprep.subr.mxu0 %v4458
      %4583 = vmatpush1.msra.mxu0 %v4457
      %4584 = vmatprep.subr.mxu0 %v4462
      %4585 = vmatpush1.msra.mxu0 %v4461
      %4586 = vmatprep.subr.mxu0 %v4466
      %4587 = vmatpush1.msra.mxu0 %v4465
      %4588 = vmatprep.subr.mxu0 %v4470
      %4589 = vmatpush1.msra.mxu0 %v4469
      %4590 = vmatprep.subr.mxu0 %v4474
      %4591 = vmatpush1.msra.mxu0 %v4473
      %4592 = vmatprep.subr.mxu0 %v4478
      %4593 = vmatpush1.msra.mxu0 %v4477
      %4594 = vmatprep.subr.mxu0 %v4482
      %4595 = vmatpush1.msra.mxu0 %v4481
      %4596 = vmatprep.subr.mxu0 %v4486
      %4597 = vmatpush1.msra.mxu0 %v4485
      %4598 = vmatprep.subr.mxu0 %v4490
      %4599 = vmatpush1.msra.mxu0 %v4489
      %4600 = vmatprep.subr.mxu0 %v4494
      %4601 = vmatpush1.msra.mxu0 %v4493
      %4602 = vmatprep.subr.mxu0 %v4498
      %4603 = vmatpush1.msra.mxu0 %v4497
      %4604 = vmatprep.subr.mxu0 %v4502
      %4605 = vmatpush1.msra.mxu0 %v4501
      %4606 = vmatprep.subr.mxu0 0.0
      %4607 = vmatpush1.msra.mxu0 0.0
      %4608 = vmatprep.subr.mxu0 0.0
      %4609 = vmatpush1.msra.mxu0 0.0
      %4610 = vmatprep.subr.mxu0 0.0
      %4611 = vmatpush1.msra.mxu0 0.0
      %4612 = vmatprep.subr.mxu0 0.0
      %4613 = vmatpush1.msra.mxu0 0.0
      %4614 = vmatprep.subr.mxu0 0.0
      %4615 = vmatpush1.msra.mxu0 0.0
      %4616 = vmatprep.subr.mxu0 0.0
      %4617 = vmatpush1.msra.mxu0 0.0
      %4618 = vmatprep.subr.mxu0 0.0
      %4619 = vmatpush1.msra.mxu0 0.0
      %4620 = vmatprep.subr.mxu0 0.0
      %4621 = vmatpush1.msra.mxu0 0.0
      %4622 = vmatprep.subr.mxu0 0.0
      %4623 = vmatpush1.msra.mxu0 0.0
      %4624 = vmatprep.subr.mxu0 0.0
      %4625 = vmatpush1.msra.mxu0 0.0
      %4626 = vmatprep.subr.mxu0 0.0
      %4627 = vmatpush1.msra.mxu0 0.0
      %4628 = vmatprep.subr.mxu0 0.0
      %4629 = vmatpush1.msra.mxu0 0.0
      %4630 = vmatprep.subr.mxu0 0.0
      %4631 = vmatpush1.msra.mxu0 0.0
      %4632 = vmatprep.subr.mxu0 0.0
      %4633 = vmatpush1.msra.mxu0 0.0
      %4634 = vmatprep.subr.mxu0 0.0
      %4635 = vmatpush1.msra.mxu0 0.0
      %4636 = vmatprep.subr.mxu0 0.0
      %4637 = vmatpush1.msra.mxu0 0.0
      %4638 = vmatprep.mubr.f32.mxu0 0.0
      %4639 = vmatmul.mubr.f32.gmra.mrb[0].mxu0 %v4438
      %v4640 = vpop.f32.mrb[0].mxu0
      %v4641 = vadd.f32 0.0, %v4640
      %v4642 = vpop.f32.mrb[0].mxu0
      %v4643 = vadd.f32 0.0, %v4642
      %4644 = vdwg.mxu0
      %v4645 = vadd.f32 %v4434, %v4570
      %v4646 = vadd.f32 %v4435, %v4572
      %v4647 = vadd.f32 %v4436, %v4641
      %v4648 = vadd.f32 %v4437, %v4643
      %s4649 = sshra.s32 %s4430, 3
      %s4650 = sand.u32 %s4430, 7
      %s4651 = smul.u32 %s4649, 4
      %s4652 = smul.addr %s4651, 8
      %s4653 = scalar_lea.vmem [#allocation7], %s4652
      %v4654 = vld [vmem:[%s4653] sm:$0xff]
      %v4655 = vld [vmem:[%s4653 + $0x8] sm:$0xff]
      %v4656 = vld [vmem:[%s4653 + $0x10] sm:$0xff]
      %v4657 = vld [vmem:[%s4653 + $0x18] sm:$0xff]
      %v4658 = vld [vmem:[#allocation4] sm:$0xff]
      %v4659 = vld [vmem:[#allocation20] sm:$0xff]
      %v4660 = vld [vmem:[#allocation20 + $0x8] sm:$0xff]
      %v4661 = vld [vmem:[#allocation20 + $0x10] sm:$0xff]
      %v4662 = vld [vmem:[#allocation20 + $0x18] sm:$0xff]
      %v4663 = vld [vmem:[#allocation20 + $0x20] sm:$0xff]
      %v4664 = vld [vmem:[#allocation20 + $0x28] sm:$0xff]
      %v4665 = vld [vmem:[#allocation20 + $0x30] sm:$0xff]
      %v4666 = vld [vmem:[#allocation20 + $0x38] sm:$0xff]
      %v4667 = vld [vmem:[#allocation20 + $0x40] sm:$0xff]
      %v4668 = vld [vmem:[#allocation20 + $0x48] sm:$0xff]
      %v4669 = vld [vmem:[#allocation20 + $0x50] sm:$0xff]
      %v4670 = vld [vmem:[#allocation20 + $0x58] sm:$0xff]
      %v4671 = vld [vmem:[#allocation20 + $0x60] sm:$0xff]
      %v4672 = vld [vmem:[#allocation20 + $0x68] sm:$0xff]
      %v4673 = vld [vmem:[#allocation20 + $0x70] sm:$0xff]
      %v4674 = vld [vmem:[#allocation20 + $0x78] sm:$0xff]
      %v4675 = vld [vmem:[#allocation20 + $0x80] sm:$0xff]
      %v4676 = vld [vmem:[#allocation20 + $0x88] sm:$0xff]
      %v4677 = vld [vmem:[#allocation20 + $0x90] sm:$0xff]
      %v4678 = vld [vmem:[#allocation20 + $0x98] sm:$0xff]
      %v4679 = vld [vmem:[#allocation20 + $0xa0] sm:$0xff]
      %v4680 = vld [vmem:[#allocation20 + $0xa8] sm:$0xff]
      %v4681 = vld [vmem:[#allocation20 + $0xb0] sm:$0xff]
      %v4682 = vld [vmem:[#allocation20 + $0xb8] sm:$0xff]
      %v4683 = vld [vmem:[#allocation20 + $0xc0] sm:$0xff]
      %v4684 = vld [vmem:[#allocation20 + $0xc8] sm:$0xff]
      %v4685 = vld [vmem:[#allocation20 + $0xd0] sm:$0xff]
      %v4686 = vld [vmem:[#allocation20 + $0xd8] sm:$0xff]
      %v4687 = vld [vmem:[#allocation20 + $0xe0] sm:$0xff]
      %v4688 = vld [vmem:[#allocation20 + $0xe8] sm:$0xff]
      %v4689 = vld [vmem:[#allocation20 + $0xf0] sm:$0xff]
      %v4690 = vld [vmem:[#allocation20 + $0xf8] sm:$0xff]
      %v4691 = vld [vmem:[#allocation20 + $0x100] sm:$0xff]
      %v4692 = vld [vmem:[#allocation20 + $0x108] sm:$0xff]
      %v4693 = vld [vmem:[#allocation20 + $0x110] sm:$0xff]
      %v4694 = vld [vmem:[#allocation20 + $0x118] sm:$0xff]
      %v4695 = vld [vmem:[#allocation20 + $0x120] sm:$0xff]
      %v4696 = vld [vmem:[#allocation20 + $0x128] sm:$0xff]
      %v4697 = vld [vmem:[#allocation20 + $0x130] sm:$0xff]
      %v4698 = vld [vmem:[#allocation20 + $0x138] sm:$0xff]
      %v4699 = vld [vmem:[#allocation20 + $0x140] sm:$0xff]
      %v4700 = vld [vmem:[#allocation20 + $0x148] sm:$0xff]
      %v4701 = vld [vmem:[#allocation20 + $0x150] sm:$0xff]
      %v4702 = vld [vmem:[#allocation20 + $0x158] sm:$0xff]
      %v4703 = vld [vmem:[#allocation20 + $0x160] sm:$0xff]
      %v4704 = vld [vmem:[#allocation20 + $0x168] sm:$0xff]
      %v4705 = vld [vmem:[#allocation20 + $0x170] sm:$0xff]
      %v4706 = vld [vmem:[#allocation20 + $0x178] sm:$0xff]
      %v4707 = vld [vmem:[#allocation20 + $0x180] sm:$0xff]
      %v4708 = vld [vmem:[#allocation20 + $0x188] sm:$0xff]
      %v4709 = vld [vmem:[#allocation20 + $0x190] sm:$0xff]
      %v4710 = vld [vmem:[#allocation20 + $0x198] sm:$0xff]
      %v4711 = vld [vmem:[#allocation20 + $0x1a0] sm:$0xff]
      %v4712 = vld [vmem:[#allocation20 + $0x1a8] sm:$0xff]
      %v4713 = vld [vmem:[#allocation20 + $0x1b0] sm:$0xff]
      %v4714 = vld [vmem:[#allocation20 + $0x1b8] sm:$0xff]
      %v4715 = vld [vmem:[#allocation20 + $0x1c0] sm:$0xff]
      %v4716 = vld [vmem:[#allocation20 + $0x1c8] sm:$0xff]
      %v4717 = vld [vmem:[#allocation20 + $0x1d0] sm:$0xff]
      %v4718 = vld [vmem:[#allocation20 + $0x1d8] sm:$0xff]
      %v4719 = vld [vmem:[#allocation20 + $0x1e0] sm:$0xff]
      %v4720 = vld [vmem:[#allocation20 + $0x1e8] sm:$0xff]
      %v4721 = vld [vmem:[#allocation20 + $0x1f0] sm:$0xff]
      %v4722 = vld [vmem:[#allocation20 + $0x1f8] sm:$0xff]
      %4723 = vmatprep.subr.mxu0 %v4660
      %4724 = vmatpush1.msra.mxu0 %v4659
      %4725 = vmatprep.subr.mxu0 %v4664
      %4726 = vmatpush1.msra.mxu0 %v4663
      %4727 = vmatprep.subr.mxu0 %v4668
      %4728 = vmatpush1.msra.mxu0 %v4667
      %4729 = vmatprep.subr.mxu0 %v4672
      %4730 = vmatpush1.msra.mxu0 %v4671
      %4731 = vmatprep.subr.mxu0 %v4676
      %4732 = vmatpush1.msra.mxu0 %v4675
      %4733 = vmatprep.subr.mxu0 %v4680
      %4734 = vmatpush1.msra.mxu0 %v4679
      %4735 = vmatprep.subr.mxu0 %v4684
      %4736 = vmatpush1.msra.mxu0 %v4683
      %4737 = vmatprep.subr.mxu0 %v4688
      %4738 = vmatpush1.msra.mxu0 %v4687
      %4739 = vmatprep.subr.mxu0 %v4692
      %4740 = vmatpush1.msra.mxu0 %v4691
      %4741 = vmatprep.subr.mxu0 %v4696
      %4742 = vmatpush1.msra.mxu0 %v4695
      %4743 = vmatprep.subr.mxu0 %v4700
      %4744 = vmatpush1.msra.mxu0 %v4699
      %4745 = vmatprep.subr.mxu0 %v4704
      %4746 = vmatpush1.msra.mxu0 %v4703
      %4747 = vmatprep.subr.mxu0 %v4708
      %4748 = vmatpush1.msra.mxu0 %v4707
      %4749 = vmatprep.subr.mxu0 %v4712
      %4750 = vmatpush1.msra.mxu0 %v4711
      %4751 = vmatprep.subr.mxu0 %v4716
      %4752 = vmatpush1.msra.mxu0 %v4715
      %4753 = vmatprep.subr.mxu0 %v4720
      %4754 = vmatpush1.msra.mxu0 %v4719
      %4755 = vmatprep.subr.mxu0 0.0
      %4756 = vmatpush1.msra.mxu0 0.0
      %4757 = vmatprep.subr.mxu0 0.0
      %4758 = vmatpush1.msra.mxu0 0.0
      %4759 = vmatprep.subr.mxu0 0.0
      %4760 = vmatpush1.msra.mxu0 0.0
      %4761 = vmatprep.subr.mxu0 0.0
      %4762 = vmatpush1.msra.mxu0 0.0
      %4763 = vmatprep.subr.mxu0 0.0
      %4764 = vmatpush1.msra.mxu0 0.0
      %4765 = vmatprep.subr.mxu0 0.0
      %4766 = vmatpush1.msra.mxu0 0.0
      %4767 = vmatprep.subr.mxu0 0.0
      %4768 = vmatpush1.msra.mxu0 0.0
      %4769 = vmatprep.subr.mxu0 0.0
      %4770 = vmatpush1.msra.mxu0 0.0
      %4771 = vmatprep.subr.mxu0 0.0
      %4772 = vmatpush1.msra.mxu0 0.0
      %4773 = vmatprep.subr.mxu0 0.0
      %4774 = vmatpush1.msra.mxu0 0.0
      %4775 = vmatprep.subr.mxu0 0.0
      %4776 = vmatpush1.msra.mxu0 0.0
      %4777 = vmatprep.subr.mxu0 0.0
      %4778 = vmatpush1.msra.mxu0 0.0
      %4779 = vmatprep.subr.mxu0 0.0
      %4780 = vmatpush1.msra.mxu0 0.0
      %4781 = vmatprep.subr.mxu0 0.0
      %4782 = vmatpush1.msra.mxu0 0.0
      %4783 = vmatprep.subr.mxu0 0.0
      %4784 = vmatpush1.msra.mxu0 0.0
      %4785 = vmatprep.subr.mxu0 0.0
      %4786 = vmatpush1.msra.mxu0 0.0
      %4787 = vmatprep.mubr.f32.mxu0 0.0
      %4788 = vmatmul.mubr.f32.gmra.mrb[0].mxu0 %v4658
      %v4789 = vpop.f32.mrb[0].mxu0
      %v4790 = vadd.f32 0.0, %v4789
      %v4791 = vpop.f32.mrb[0].mxu0
      %v4792 = vadd.f32 0.0, %v4791
      %4793 = vdwg.mxu0
      %4794 = vmatprep.subr.mxu0 %v4662
      %4795 = vmatpush1.msra.mxu0 %v4661
      %4796 = vmatprep.subr.mxu0 %v4666
      %4797 = vmatpush1.msra.mxu0 %v4665
      %4798 = vmatprep.subr.mxu0 %v4670
      %4799 = vmatpush1.msra.mxu0 %v4669
      %4800 = vmatprep.subr.mxu0 %v4674
      %4801 = vmatpush1.msra.mxu0 %v4673
      %4802 = vmatprep.subr.mxu0 %v4678
      %4803 = vmatpush1.msra.mxu0 %v4677
      %4804 = vmatprep.subr.mxu0 %v4682
      %4805 = vmatpush1.msra.mxu0 %v4681
      %4806 = vmatprep.subr.mxu0 %v4686
      %4807 = vmatpush1.msra.mxu0 %v4685
      %4808 = vmatprep.subr.mxu0 %v4690
      %4809 = vmatpush1.msra.mxu0 %v4689
      %4810 = vmatprep.subr.mxu0 %v4694
      %4811 = vmatpush1.msra.mxu0 %v4693
      %4812 = vmatprep.subr.mxu0 %v4698
      %4813 = vmatpush1.msra.mxu0 %v4697
      %4814 = vmatprep.subr.mxu0 %v4702
      %4815 = vmatpush1.msra.mxu0 %v4701
      %4816 = vmatprep.subr.mxu0 %v4706
      %4817 = vmatpush1.msra.mxu0 %v4705
      %4818 = vmatprep.subr.mxu0 %v4710
      %4819 = vmatpush1.msra.mxu0 %v4709
      %4820 = vmatprep.subr.mxu0 %v4714
      %4821 = vmatpush1.msra.mxu0 %v4713
      %4822 = vmatprep.subr.mxu0 %v4718
      %4823 = vmatpush1.msra.mxu0 %v4717
      %4824 = vmatprep.subr.mxu0 %v4722
      %4825 = vmatpush1.msra.mxu0 %v4721
      %4826 = vmatprep.subr.mxu0 0.0
      %4827 = vmatpush1.msra.mxu0 0.0
      %4828 = vmatprep.subr.mxu0 0.0
      %4829 = vmatpush1.msra.mxu0 0.0
      %4830 = vmatprep.subr.mxu0 0.0
      %4831 = vmatpush1.msra.mxu0 0.0
      %4832 = vmatprep.subr.mxu0 0.0
      %4833 = vmatpush1.msra.mxu0 0.0
      %4834 = vmatprep.subr.mxu0 0.0
      %4835 = vmatpush1.msra.mxu0 0.0
      %4836 = vmatprep.subr.mxu0 0.0
      %4837 = vmatpush1.msra.mxu0 0.0
      %4838 = vmatprep.subr.mxu0 0.0
      %4839 = vmatpush1.msra.mxu0 0.0
      %4840 = vmatprep.subr.mxu0 0.0
      %4841 = vmatpush1.msra.mxu0 0.0
      %4842 = vmatprep.subr.mxu0 0.0
      %4843 = vmatpush1.msra.mxu0 0.0
      %4844 = vmatprep.subr.mxu0 0.0
      %4845 = vmatpush1.msra.mxu0 0.0
      %4846 = vmatprep.subr.mxu0 0.0
      %4847 = vmatpush1.msra.mxu0 0.0
      %4848 = vmatprep.subr.mxu0 0.0
      %4849 = vmatpush1.msra.mxu0 0.0
      %4850 = vmatprep.subr.mxu0 0.0
      %4851 = vmatpush1.msra.mxu0 0.0
      %4852 = vmatprep.subr.mxu0 0.0
      %4853 = vmatpush1.msra.mxu0 0.0
      %4854 = vmatprep.subr.mxu0 0.0
      %4855 = vmatpush1.msra.mxu0 0.0
      %4856 = vmatprep.subr.mxu0 0.0
      %4857 = vmatpush1.msra.mxu0 0.0
      %4858 = vmatprep.mubr.f32.mxu0 0.0
      %4859 = vmatmul.mubr.f32.gmra.mrb[0].mxu0 %v4658
      %v4860 = vpop.f32.mrb[0].mxu0
      %v4861 = vadd.f32 0.0, %v4860
      %v4862 = vpop.f32.mrb[0].mxu0
      %v4863 = vadd.f32 0.0, %v4862
      %4864 = vdwg.mxu0
      %v4865 = vadd.f32 %v4654, %v4790
      %v4866 = vadd.f32 %v4655, %v4792
      %v4867 = vadd.f32 %v4656, %v4861
      %v4868 = vadd.f32 %v4657, %v4863
      %v4869 = vld [vmem:[#allocation3] sm:$0xff]
      %v4870 = vxor.u32 %v4645, 2147483648
      %v4871 = vmul.f32 %v4870, 1.442695
      %v4872 = vpow.pop %v4871
      %v4873 = vadd.f32 %v4872, 1.0
      %v4874 = vrcp.pop %v4873
      %v4875 = vmul.f32 1.0, %v4874
      %v4876 = vxor.u32 %v4646, 2147483648
      %v4877 = vmul.f32 %v4876, 1.442695
      %v4878 = vpow.pop %v4877
      %v4879 = vadd.f32 %v4878, 1.0
      %v4880 = vrcp.pop %v4879
      %v4881 = vmul.f32 1.0, %v4880
      %v4882 = vtanh.pop %v4647
      %v4883 = vxor.u32 %v4648, 2147483648
      %v4884 = vmul.f32 %v4883, 1.442695
      %v4885 = vpow.pop %v4884
      %v4886 = vadd.f32 %v4885, 1.0
      %v4887 = vrcp.pop %v4886
      %v4888 = vmul.f32 1.0, %v4887
      %v4889 = vmul.f32 %v4881, %v4869
      %v4890 = vmul.f32 %v4875, %v4882
      %v4891 = vadd.f32 %v4889, %v4890
      %v4892 = vtanh.pop %v4891
      %v4893 = vmul.f32 %v4888, %v4892
      %v4894 = vld [vmem:[#allocation5] sm:$0xff]
      %v4895 = vxor.u32 %v4865, 2147483648
      %v4896 = vmul.f32 %v4895, 1.442695
      %v4897 = vpow.pop %v4896
      %v4898 = vadd.f32 %v4897, 1.0
      %v4899 = vrcp.pop %v4898
      %v4900 = vmul.f32 1.0, %v4899
      %v4901 = vxor.u32 %v4866, 2147483648
      %v4902 = vmul.f32 %v4901, 1.442695
      %v4903 = vpow.pop %v4902
      %v4904 = vadd.f32 %v4903, 1.0
      %v4905 = vrcp.pop %v4904
      %v4906 = vmul.f32 1.0, %v4905
      %v4907 = vtanh.pop %v4867
      %v4908 = vxor.u32 %v4868, 2147483648
      %v4909 = vmul.f32 %v4908, 1.442695
      %v4910 = vpow.pop %v4909
      %v4911 = vadd.f32 %v4910, 1.0
      %v4912 = vrcp.pop %v4911
      %v4913 = vmul.f32 1.0, %v4912
      %v4914 = vmul.f32 %v4906, %v4894
      %v4915 = vmul.f32 %v4900, %v4907
      %v4916 = vadd.f32 %v4914, %v4915
      %v4917 = vtanh.pop %v4916
      %v4918 = vmul.f32 %v4913, %v4917
      %vm4919 = vcmp.gt.s32.totalorder %v185, 7
      %v4920 = vstv %s4429
      %vm4921 = vcmp.gt.s32.totalorder %v185, %v4920
      %v4922 = vsel %vm4919, 1, 0
      %4923 = vset.pattern.permute.xlu0 0
      %4924 = vperm.xlu0 %4923, %v4922
      %v4925 = vpop.permute.xlu0 %4924
      %vm4926 = vcmp.eq.s32.totalorder %v4925, 1
      %v4927 = vsel %vm4926, %v4893, %v4438
      %4928 = vst [vmem:[#allocation2] sm:$0xff] %v4927
      %v4929 = vld [vmem:[#allocation3] sm:$0xff]
      %v4930 = vsel %vm4926, %v4891, %v4929
      %4931 = vst [vmem:[#allocation3] sm:$0xff] %v4930
      %v4932 = vld [vmem:[#allocation4] sm:$0xff]
      %v4933 = vsel %vm4921, 1, 0
      %4934 = vset.pattern.permute.xlu0 0
      %4935 = vperm.xlu0 %4934, %v4933
      %v4936 = vpop.permute.xlu0 %4935
      %vm4937 = vcmp.eq.s32.totalorder %v4936, 1
      %v4938 = vsel %vm4937, %v4918, %v4932
      %4939 = vst [vmem:[#allocation4] sm:$0xff] %v4938
      %v4940 = vld [vmem:[#allocation5] sm:$0xff]
      %v4941 = vsel %vm4937, %v4916, %v4940
      %4942 = vst [vmem:[#allocation5] sm:$0xff] %v4941
    $region125: #{tpu_custom_call.1} parent=1 // pred_fallthru
      _
    %v4943 = vld [vmem:[#allocation2] sm:$0xff]
    %v4944 = vld [vmem:[#allocation23] sm:$0xff]
    %v4945 = vld [vmem:[#allocation23 + $0x8] sm:$0xff]
    %v4946 = vld [vmem:[#allocation23 + $0x10] sm:$0xff]
    %v4947 = vld [vmem:[#allocation23 + $0x18] sm:$0xff]
    %v4948 = vld [vmem:[#allocation23 + $0x20] sm:$0xff]
    %v4949 = vld [vmem:[#allocation23 + $0x28] sm:$0xff]
    %v4950 = vld [vmem:[#allocation23 + $0x30] sm:$0xff]
    %v4951 = vld [vmem:[#allocation23 + $0x38] sm:$0xff]
    %v4952 = vld [vmem:[#allocation23 + $0x40] sm:$0xff]
    %v4953 = vld [vmem:[#allocation23 + $0x48] sm:$0xff]
    %v4954 = vld [vmem:[#allocation23 + $0x50] sm:$0xff]
    %v4955 = vld [vmem:[#allocation23 + $0x58] sm:$0xff]
    %v4956 = vld [vmem:[#allocation23 + $0x60] sm:$0xff]
    %v4957 = vld [vmem:[#allocation23 + $0x68] sm:$0xff]
    %v4958 = vld [vmem:[#allocation23 + $0x70] sm:$0xff]
    %v4959 = vld [vmem:[#allocation23 + $0x78] sm:$0xff]
    %v4960 = vld [vmem:[#allocation4] sm:$0xff]
    %v4961 = vld [vmem:[#allocation24] sm:$0xff]
    %v4962 = vld [vmem:[#allocation24 + $0x8] sm:$0xff]
    %v4963 = vld [vmem:[#allocation24 + $0x10] sm:$0xff]
    %v4964 = vld [vmem:[#allocation24 + $0x18] sm:$0xff]
    %v4965 = vld [vmem:[#allocation24 + $0x20] sm:$0xff]
    %v4966 = vld [vmem:[#allocation24 + $0x28] sm:$0xff]
    %v4967 = vld [vmem:[#allocation24 + $0x30] sm:$0xff]
    %v4968 = vld [vmem:[#allocation24 + $0x38] sm:$0xff]
    %v4969 = vld [vmem:[#allocation24 + $0x40] sm:$0xff]
    %v4970 = vld [vmem:[#allocation24 + $0x48] sm:$0xff]
    %v4971 = vld [vmem:[#allocation24 + $0x50] sm:$0xff]
    %v4972 = vld [vmem:[#allocation24 + $0x58] sm:$0xff]
    %v4973 = vld [vmem:[#allocation24 + $0x60] sm:$0xff]
    %v4974 = vld [vmem:[#allocation24 + $0x68] sm:$0xff]
    %v4975 = vld [vmem:[#allocation24 + $0x70] sm:$0xff]
    %v4976 = vld [vmem:[#allocation24 + $0x78] sm:$0xff]
    %4977 = vmatprep.subr.mxu0 0.0
    %4978 = vmatpush1.msra.mxu0 %v4961
    %4979 = vmatprep.subr.mxu0 0.0
    %4980 = vmatpush1.msra.mxu0 %v4962
    %4981 = vmatprep.subr.mxu0 0.0
    %4982 = vmatpush1.msra.mxu0 %v4963
    %4983 = vmatprep.subr.mxu0 0.0
    %4984 = vmatpush1.msra.mxu0 %v4964
    %4985 = vmatprep.subr.mxu0 0.0
    %4986 = vmatpush1.msra.mxu0 %v4965
    %4987 = vmatprep.subr.mxu0 0.0
    %4988 = vmatpush1.msra.mxu0 %v4966
    %4989 = vmatprep.subr.mxu0 0.0
    %4990 = vmatpush1.msra.mxu0 %v4967
    %4991 = vmatprep.subr.mxu0 0.0
    %4992 = vmatpush1.msra.mxu0 %v4968
    %4993 = vmatprep.subr.mxu0 0.0
    %4994 = vmatpush1.msra.mxu0 %v4969
    %4995 = vmatprep.subr.mxu0 0.0
    %4996 = vmatpush1.msra.mxu0 %v4970
    %4997 = vmatprep.subr.mxu0 0.0
    %4998 = vmatpush1.msra.mxu0 %v4971
    %4999 = vmatprep.subr.mxu0 0.0
    %5000 = vmatpush1.msra.mxu0 %v4972
    %5001 = vmatprep.subr.mxu0 0.0
    %5002 = vmatpush1.msra.mxu0 %v4973
    %5003 = vmatprep.subr.mxu0 0.0
    %5004 = vmatpush1.msra.mxu0 %v4974
    %5005 = vmatprep.subr.mxu0 0.0
    %5006 = vmatpush1.msra.mxu0 %v4975
    %5007 = vmatprep.subr.mxu0 0.0
    %5008 = vmatpush1.msra.mxu0 %v4976
    %5009 = vmatprep.subr.mxu0 0.0
    %5010 = vmatpush1.msra.mxu0 0.0
    %5011 = vmatprep.subr.mxu0 0.0
    %5012 = vmatpush1.msra.mxu0 0.0
    %5013 = vmatprep.subr.mxu0 0.0
    %5014 = vmatpush1.msra.mxu0 0.0
    %5015 = vmatprep.subr.mxu0 0.0
    %5016 = vmatpush1.msra.mxu0 0.0
    %5017 = vmatprep.subr.mxu0 0.0
    %5018 = vmatpush1.msra.mxu0 0.0
    %5019 = vmatprep.subr.mxu0 0.0
    %5020 = vmatpush1.msra.mxu0 0.0
    %5021 = vmatprep.subr.mxu0 0.0
    %5022 = vmatpush1.msra.mxu0 0.0
    %5023 = vmatprep.subr.mxu0 0.0
    %5024 = vmatpush1.msra.mxu0 0.0
    %5025 = vmatprep.subr.mxu0 0.0
    %5026 = vmatpush1.msra.mxu0 0.0
    %5027 = vmatprep.subr.mxu0 0.0
    %5028 = vmatpush1.msra.mxu0 0.0
    %5029 = vmatprep.subr.mxu0 0.0
    %5030 = vmatpush1.msra.mxu0 0.0
    %5031 = vmatprep.subr.mxu0 0.0
    %5032 = vmatpush1.msra.mxu0 0.0
    %5033 = vmatprep.subr.mxu0 0.0
    %5034 = vmatpush1.msra.mxu0 0.0
    %5035 = vmatprep.subr.mxu0 0.0
    %5036 = vmatpush1.msra.mxu0 0.0
    %5037 = vmatprep.subr.mxu0 0.0
    %5038 = vmatpush1.msra.mxu0 0.0
    %5039 = vmatprep.subr.mxu0 0.0
    %5040 = vmatpush1.msra.mxu0 0.0
    %5041 = vmatprep.mubr.f32.mxu0 0.0
    %5042 = vmatmul.mubr.f32.gmra.mrb[0].mxu0 %v4960
    %v5043 = vpop.f32.mrb[0].mxu0
    %v5044 = vadd.f32 0.0, %v5043
    %v5045 = vpop.f32.mrb[0].mxu0
    %5046 = vdwg.mxu0
    %5047 = vmatprep.subr.mxu0 0.0
    %5048 = vmatpush1.msra.mxu0 %v4944
    %5049 = vmatprep.subr.mxu0 0.0
    %5050 = vmatpush1.msra.mxu0 %v4945
    %5051 = vmatprep.subr.mxu0 0.0
    %5052 = vmatpush1.msra.mxu0 %v4946
    %5053 = vmatprep.subr.mxu0 0.0
    %5054 = vmatpush1.msra.mxu0 %v4947
    %5055 = vmatprep.subr.mxu0 0.0
    %5056 = vmatpush1.msra.mxu0 %v4948
    %5057 = vmatprep.subr.mxu0 0.0
    %5058 = vmatpush1.msra.mxu0 %v4949
    %5059 = vmatprep.subr.mxu0 0.0
    %5060 = vmatpush1.msra.mxu0 %v4950
    %5061 = vmatprep.subr.mxu0 0.0
    %5062 = vmatpush1.msra.mxu0 %v4951
    %5063 = vmatprep.subr.mxu0 0.0
    %5064 = vmatpush1.msra.mxu0 %v4952
    %5065 = vmatprep.subr.mxu0 0.0
    %5066 = vmatpush1.msra.mxu0 %v4953
    %5067 = vmatprep.subr.mxu0 0.0
    %5068 = vmatpush1.msra.mxu0 %v4954
    %5069 = vmatprep.subr.mxu0 0.0
    %5070 = vmatpush1.msra.mxu0 %v4955
    %5071 = vmatprep.subr.mxu0 0.0
    %5072 = vmatpush1.msra.mxu0 %v4956
    %5073 = vmatprep.subr.mxu0 0.0
    %5074 = vmatpush1.msra.mxu0 %v4957
    %5075 = vmatprep.subr.mxu0 0.0
    %5076 = vmatpush1.msra.mxu0 %v4958
    %5077 = vmatprep.subr.mxu0 0.0
    %5078 = vmatpush1.msra.mxu0 %v4959
    %5079 = vmatprep.subr.mxu0 0.0
    %5080 = vmatpush1.msra.mxu0 0.0
    %5081 = vmatprep.subr.mxu0 0.0
    %5082 = vmatpush1.msra.mxu0 0.0
    %5083 = vmatprep.subr.mxu0 0.0
    %5084 = vmatpush1.msra.mxu0 0.0
    %5085 = vmatprep.subr.mxu0 0.0
    %5086 = vmatpush1.msra.mxu0 0.0
    %5087 = vmatprep.subr.mxu0 0.0
    %5088 = vmatpush1.msra.mxu0 0.0
    %5089 = vmatprep.subr.mxu0 0.0
    %5090 = vmatpush1.msra.mxu0 0.0
    %5091 = vmatprep.subr.mxu0 0.0
    %5092 = vmatpush1.msra.mxu0 0.0
    %5093 = vmatprep.subr.mxu0 0.0
    %5094 = vmatpush1.msra.mxu0 0.0
    %5095 = vmatprep.subr.mxu0 0.0
    %5096 = vmatpush1.msra.mxu0 0.0
    %5097 = vmatprep.subr.mxu0 0.0
    %5098 = vmatpush1.msra.mxu0 0.0
    %5099 = vmatprep.subr.mxu0 0.0
    %5100 = vmatpush1.msra.mxu0 0.0
    %5101 = vmatprep.subr.mxu0 0.0
    %5102 = vmatpush1.msra.mxu0 0.0
    %5103 = vmatprep.subr.mxu0 0.0
    %5104 = vmatpush1.msra.mxu0 0.0
    %5105 = vmatprep.subr.mxu0 0.0
    %5106 = vmatpush1.msra.mxu0 0.0
    %5107 = vmatprep.subr.mxu0 0.0
    %5108 = vmatpush1.msra.mxu0 0.0
    %5109 = vmatprep.subr.mxu0 0.0
    %5110 = vmatpush1.msra.mxu0 0.0
    %5111 = vmatprep.mubr.f32.mxu0 0.0
    %5112 = vmatmul.mubr.f32.gmra.mrb[0].mxu0 %v4943
    %v5113 = vpop.f32.mrb[0].mxu0
    %v5114 = vadd.f32 %v5044, %v5113
    %v5115 = vpop.f32.mrb[0].mxu0
    %5116 = vdwg.mxu0
    %v5117 = vld [vmem:[#allocation26] sm:$0x1]
    %v5119 = vlaneseq
    %v5120 = vshrl.u32 %v5119, 7
    %v5121 = vsub.s32 0, %v5120
    %v5122 = vrot.slane %v5117, %v5121
    %v5124 = vadd.f32 %v5114, %v5122
    %5125 = vst [vmem:[#allocation27] sm:$0xff] %v5124
    // Predicated region
    $region126: #{tpu_custom_call.1} parent=1 // pred_check
      _
    $region127: #{tpu_custom_call.1} parent=1 // pred_check_branch
      %5127 = sbr.rel (0) target = $region129
    $region128: #{tpu_custom_call.1} parent=1 // pred_region
      %s5129 = ssub.s32 128, 128
      %5130 = vsyncadd [#allocation11], %s5129
      %s5132 = sshll.u32 [#allocation27], 4
      %s5133 = int_to_ptr.vmem [resolvable:$true] %s5132
      %5135 = dma.vmem_to_hbm [thread:$0]  %s5133, 128, %s12, [#allocation11]
    $region129: #{tpu_custom_call.1} parent=1 // pred_fallthru
      _
    // Predicated region
    $region130: #{tpu_custom_call.1} parent=1 // pred_check
      _
    $region131: #{tpu_custom_call.1} parent=1 // pred_check_branch
      %5137 = sbr.rel (0) target = $region133
    $region132: #{tpu_custom_call.1} parent=1 // pred_region
      %5138 = dma.done [#allocation11], 128
    $region133: #{tpu_custom_call.1} parent=1 // pred_fallthru
      _
    %5139 = vsyncpa [#allocation10], 1
    %5140 = vsyncpa [#allocation13], 1
    %5141 = vsyncpa [#allocation16], 1
    %5142 = vsyncpa [#allocation19], 1
    %5143 = vsyncpa [#allocation22], 1
    %5144 = vsyncpa [#allocation25], 1
    %5145 = vsyncpa [#allocation11], 1

</llo_original>
